<compile_context>
chip_gen: v6e
topology: v6e:2x2x1
jax: 0.10.0
libtpu: 0.0.40
codegen_flags: <defaults>
</compile_context>

<pallas_src>
import numpy as np
import jax
import jax.numpy as jnp
from jax import lax
from jax.experimental import pallas as pl
from jax.experimental.pallas import tpu as pltpu


# conv2 taps as row offsets in the flattened 26x26 grid (k = dy*26 + dx),
# enumerated (dy, dx) row-major to match the conv2 weight repack.
_TAPS = tuple(dy * 26 + dx for dy in range(3) for dx in range(3))


def conv_pool_kernel(p_ref, w1_ref, b1_ref, w2_ref, b2_ref, o_ref,
                     a1_scr, a2_scr, m_scr):
    # p_ref:  (1, Bt*676, 9)  bf16 im2col patches of Bt stacked 28x28 images
    # w1_ref: (9, 32) bf16,   b1_ref: (1, 32) f32
    # w2_ref: (288, 64) bf16, b2_ref: (1, 64) f32   (tap-major [t*32 + c_in, c_out])
    # o_ref:  (1, Bt*144, 64) f32 pooled map, row = b*144 + i*12 + j, lane = c
    Mt = p_ref.shape[1]
    Bt = Mt // 676
    half = Mt // 2

    # conv1 + bias + ReLU  -> (Mt, 32) f32; row r = b*676 + i*26 + j.
    a1 = jnp.dot(p_ref[0], w1_ref[...], preferred_element_type=jnp.float32)
    a1 = jnp.maximum(a1 + b1_ref[...], 0.0)

    # Stage a1 in a tail-padded scratch so the 9 conv2 row shifts are plain
    # static-offset reads (no concatenate copies per tap, no roll).  Rows fed
    # by the zeroed tail (or by the next image's block) only ever reach conv2
    # output positions that the pool below never reads.
    a1_scr[pl.ds(0, Mt), :] = a1
    a1_scr[pl.ds(Mt, 56), :] = jnp.zeros((56, 32), jnp.float32)

    # conv2 as ONE wide matmul: build a (Mt, 288) bf16 im2col and hit the MXU
    # once with K=288 instead of nine K=32 matmuls.
    cols = [a1.astype(jnp.bfloat16)]
    for k in _TAPS[1:]:
        cols.append(a1_scr[pl.ds(k, Mt), :].astype(jnp.bfloat16))
    wide = jnp.concatenate(cols, axis=1)                                 # (Mt, 288)
    a2 = jnp.dot(wide, w2_ref[...], preferred_element_type=jnp.float32)  # (Mt, 64)
    a2 = jnp.maximum(a2 + b2_ref[...], 0.0)

    # 2x2 / stride-2 max pool: pooled(b,i,j) = max of a2 rows r, r+1, r+26,
    # r+27 with r = b*676 + 52*i + 2*j.  Stride-2 reads over even rows only
    # (half the work of a full-map max), then direct row gathers -- no
    # selection matmul.
    a2_scr[pl.ds(0, Mt), :] = a2
    a2_scr[pl.ds(Mt, 32), :] = jnp.zeros((32, 64), jnp.float32)
    m_even = jnp.maximum(
        jnp.maximum(a2_scr[pl.ds(0, half, stride=2), :],
                    a2_scr[pl.ds(1, half, stride=2), :]),
        jnp.maximum(a2_scr[pl.ds(26, half, stride=2), :],
                    a2_scr[pl.ds(27, half, stride=2), :]))
    m_scr[...] = m_even                                                  # (Mt/2, 64)

    # m_even row s = b*338 + 26*i + j  ->  output row b*144 + 12*i + j
    # (static 12-row copies; garbage rows i>=12 / j>=12 are skipped).
    for b in range(Bt):
        for i in range(12):
            o_ref[0, pl.ds(b * 144 + 12 * i, 12), :] = (
                m_scr[pl.ds(b * 338 + 26 * i, 12), :])


def mlp_kernel(x_ref, w1_ref, b1_ref, w2_ref, b2_ref, o_ref, acc_ref):
    # K-blocked linear_1 (f32 accumulator scratch), ReLU + linear_2 fused on
    # the last step.  x_ref: (B, KT) bf16, w1_ref: (KT, 128) bf16.
    k = pl.program_id(0)

    @pl.when(k == 0)
    def _():
        acc_ref[...] = jnp.zeros_like(acc_ref)

    acc_ref[...] += jnp.dot(x_ref[...], w1_ref[...],
                            preferred_element_type=jnp.float32)

    @pl.when(k == pl.num_programs(0) - 1)
    def _():
        h = jnp.maximum(acc_ref[...] + b1_ref[...], 0.0).astype(jnp.bfloat16)
        o_ref[...] = (jnp.dot(h, w2_ref[...],
                              preferred_element_type=jnp.float32)
                      + b2_ref[...])


def prepare_params(params):
    """One-time repacking of PyTorch-layout params (hoisted out of the forward)."""
    w1, b1, w2, b2, wl1, bl1, wl2, bl2 = params
    n_out = wl2.shape[0]
    w1_k = jnp.transpose(w1[:, 0], (1, 2, 0)).reshape(9, 32).astype(jnp.bfloat16)
    b1_k = b1.reshape(1, 32).astype(jnp.float32)
    w2_k = jnp.transpose(w2, (2, 3, 1, 0)).reshape(288, 64).astype(jnp.bfloat16)
    b2_k = b2.reshape(1, 64).astype(jnp.float32)
    # Kernel flatten order is (h, w, c); permute linear_1 weights once so the
    # result matches PyTorch's NCHW (c, h, w) flatten exactly.
    wl1_k = jnp.transpose(wl1.reshape(128, 64, 12, 12), (0, 2, 3, 1))
    wl1_k = wl1_k.reshape(128, 9216).T.astype(jnp.bfloat16)               # (9216, 128)
    bl1_k = bl1.reshape(1, 128).astype(jnp.float32)
    wl2_k = wl2.T.astype(jnp.bfloat16)                                    # (128, n_out)
    bl2_k = bl2.reshape(1, n_out).astype(jnp.float32)
    return (w1_k, b1_k, w2_k, b2_k, wl1_k, bl1_k, wl2_k, bl2_k)


@jax.jit
def cnn_dropout_forward(x, kparams):
    """x: (B, 28, 28) float32.  Dropout layers are identity (inference mode)."""
    w1_k, b1_k, w2_k, b2_k, wl1_k, bl1_k, wl2_k, bl2_k = kparams
    B = x.shape[0]
    n_out = wl2_k.shape[1]

    # Bt images per grid step, stacked along the sublane (row) axis; Bt kept
    # even so Bt*676 rows stay 8-aligned.
    Bt = min(8, ((B + 1) // 2) * 2)
    Bp = pl.cdiv(B, Bt) * Bt
    G = Bp // Bt  # TODO(synk): on v7x prefer batches giving G >= 2 so both TCs get work.
    if Bp != B:
        x = jnp.concatenate([x, jnp.zeros((Bp - B,) + x.shape[1:], x.dtype)], axis=0)

    # Jitted glue: im2col of the raw input, 3x3 valid taps -> 26x26 grid.
    taps = [x[:, dy:dy + 26, dx:dx + 26].reshape(Bp, 676)
            for dy in range(3) for dx in range(3)]
    patches = jnp.stack(taps, axis=-1).astype(jnp.bfloat16)               # (Bp, 676, 9)
    patches = patches.reshape(G, Bt * 676, 9)

    Mt = Bt * 676
    pooled = pl.pallas_call(
        conv_pool_kernel,
        out_shape=jax.ShapeDtypeStruct((G, Bt * 144, 64), jnp.float32),
        grid=(G,),
        in_specs=[
            pl.BlockSpec((1, Mt, 9), lambda g: (g, 0, 0)),
            pl.BlockSpec((9, 32), lambda g: (0, 0)),
            pl.BlockSpec((1, 32), lambda g: (0, 0)),
            pl.BlockSpec((288, 64), lambda g: (0, 0)),
            pl.BlockSpec((1, 64), lambda g: (0, 0)),
        ],
        out_specs=pl.BlockSpec((1, Bt * 144, 64), lambda g: (g, 0, 0)),
        scratch_shapes=[
            pltpu.VMEM((Mt + 56, 32), jnp.float32),   # a1 staging (tail-padded)
            pltpu.VMEM((Mt + 32, 64), jnp.float32),   # a2 staging (tail-padded)
            pltpu.VMEM((Mt // 2, 64), jnp.float32),   # even-row pool max
        ],
        compiler_params=pltpu.CompilerParams(
            dimension_semantics=("parallel",),
            vmem_limit_bytes=40 * 1024 * 1024,
        ),
    )(patches, w1_k, b1_k, w2_k, b2_k)

    # dropout_1: identity (inference).  Flatten in (h, w, c) order; linear_1's
    # weights were permuted once in prepare_params() to match.
    flat = pooled.reshape(Bp, 9216)[:B].astype(jnp.bfloat16)

    # linear_1 -> ReLU -> linear_2, K-blocked so the linear_1 weight DMA
    # double-buffers against the MXU.
    KT = 2304
    nk = 9216 // KT
    out = pl.pallas_call(
        mlp_kernel,
        out_shape=jax.ShapeDtypeStruct((B, n_out), jnp.float32),
        grid=(nk,),
        in_specs=[
            pl.BlockSpec((B, KT), lambda k: (0, k)),
            pl.BlockSpec((KT, 128), lambda k: (k, 0)),
            pl.BlockSpec((1, 128), lambda k: (0, 0)),
            pl.BlockSpec((128, n_out), lambda k: (0, 0)),
            pl.BlockSpec((1, n_out), lambda k: (0, 0)),
        ],
        out_specs=pl.BlockSpec((B, n_out), lambda k: (0, 0)),
        scratch_shapes=[pltpu.VMEM((B, 128), jnp.float32)],
        compiler_params=pltpu.CompilerParams(
            dimension_semantics=("arbitrary",),
        ),
    )(flat, wl1_k, bl1_k, wl2_k, bl2_k)
    # dropout_2: identity (inference).
    return out


def reference_forward(x, params):
    """Pure-JAX f32 reference with PyTorch semantics (NCHW, eval-mode dropout)."""
    w1, b1, w2, b2, wl1, bl1, wl2, bl2 = params
    B = x.shape[0]
    dn = ("NCHW", "OIHW", "NCHW")
    y = x[:, None, :, :]
    y = lax.conv_general_dilated(y, w1, (1, 1), "VALID", dimension_numbers=dn)
    y = jnp.maximum(y + b1[None, :, None, None], 0.0)
    y = lax.conv_general_dilated(y, w2, (1, 1), "VALID", dimension_numbers=dn)
    y = jnp.maximum(y + b2[None, :, None, None], 0.0)
    y = y.reshape(B, 64, 12, 2, 12, 2).max(axis=(3, 5))
    y = y.reshape(B, 9216)
    y = jnp.maximum(y @ wl1.T + bl1, 0.0)
    return y @ wl2.T + bl2


if __name__ == "__main__":
    key = jax.random.PRNGKey(0)
    keys = jax.random.split(key, 9)
    B, n_out = 2, 10  # only_digits=True

    x = jax.random.normal(keys[0], (B, 28, 28), jnp.float32)
    params = (
        jax.random.normal(keys[1], (32, 1, 3, 3), jnp.float32) * 0.2,    # conv2d_1.weight
        jax.random.normal(keys[2], (32,), jnp.float32) * 0.1,            # conv2d_1.bias
        jax.random.normal(keys[3], (64, 32, 3, 3), jnp.float32) * 0.05,  # conv2d_2.weight
        jax.random.normal(keys[4], (64,), jnp.float32) * 0.1,            # conv2d_2.bias
        jax.random.normal(keys[5], (128, 9216), jnp.float32) * 0.01,     # linear_1.weight
        jax.random.normal(keys[6], (128,), jnp.float32) * 0.1,           # linear_1.bias
        jax.random.normal(keys[7], (n_out, 128), jnp.float32) * 0.05,    # linear_2.weight
        jax.random.normal(keys[8], (n_out,), jnp.float32) * 0.1,         # linear_2.bias
    )

    # Hoisted, one-time parameter repacking (bf16 matmul operands).
    kparams = jax.tree_util.tree_map(jax.block_until_ready, prepare_params(params))

    out = jax.block_until_ready(cnn_dropout_forward(x, kparams))
    ref = jax.block_until_ready(reference_forward(x, params))

    assert out.shape == (B, n_out), out.shape
    max_err = float(jnp.max(jnp.abs(out - ref)))
    if not np.isfinite(max_err) or max_err > 5e-2:
        raise AssertionError(f"mismatch vs reference: max abs err = {max_err}")
    print("KERNEL_OK")
</pallas_src>

<mosaic_0001>
module attributes {stable_mosaic.version = 11 : i64} {
  func.func @conv_pool_kernel(%arg0: i32, %arg1: memref<1x1352x9xbf16, #tpu.memory_space<vmem>>, %arg2: memref<9x32xbf16, #tpu.memory_space<vmem>>, %arg3: memref<1x32xf32, #tpu.memory_space<vmem>>, %arg4: memref<288x64xbf16, #tpu.memory_space<vmem>>, %arg5: memref<1x64xf32, #tpu.memory_space<vmem>>, %arg6: memref<1x288x64xf32, #tpu.memory_space<vmem>>, %arg7: memref<1408x32xf32, #tpu.memory_space<vmem>>, %arg8: memref<1384x64xf32, #tpu.memory_space<vmem>>, %arg9: memref<676x64xf32, #tpu.memory_space<vmem>>) attributes {dimension_semantics = [#tpu.dimension_semantics<parallel>], iteration_bounds = array<i64: 1>, scalar_prefetch = 0 : i64, scratch_operands = 3 : i64, tpu.core_type = #tpu.core_type<tc>, window_params = [{transform_indices = @transform_0, window_bounds = array<i64: 1, 1352, 9>}, {pipeline_mode = #tpu.pipeline_mode<synchronous>, transform_indices = @transform_1, window_bounds = array<i64: 9, 32>}, {pipeline_mode = #tpu.pipeline_mode<synchronous>, transform_indices = @transform_2, window_bounds = array<i64: 1, 32>}, {pipeline_mode = #tpu.pipeline_mode<synchronous>, transform_indices = @transform_3, window_bounds = array<i64: 288, 64>}, {pipeline_mode = #tpu.pipeline_mode<synchronous>, transform_indices = @transform_4, window_bounds = array<i64: 1, 64>}, {transform_indices = @transform_5, window_bounds = array<i64: 1, 288, 64>}]} {
    %c0 = arith.constant 0 : index
    %c0_0 = arith.constant 0 : index
    %c0_1 = arith.constant 0 : index
    %0 = vector.load %arg1[%c0, %c0_0, %c0_1] : memref<1x1352x9xbf16, #tpu.memory_space<vmem>>, vector<1x1352x9xbf16>
    %1 = vector.shape_cast %0 : vector<1x1352x9xbf16> to vector<1352x9xbf16>
    %c0_2 = arith.constant 0 : index
    %c0_3 = arith.constant 0 : index
    %2 = vector.load %arg2[%c0_2, %c0_3] : memref<9x32xbf16, #tpu.memory_space<vmem>>, vector<9x32xbf16>
    %cst = arith.constant dense<0.000000e+00> : vector<1352x32xf32>
    %3 = tpu.matmul %1, %2, %cst {dimension_numbers = #tpu.dot_dimension_numbers<[1], [0], [0], [1], [0, 0, 1, 1], [], []>} : vector<1352x9xbf16>, vector<9x32xbf16>, vector<1352x32xf32> -> vector<1352x32xf32>
    %c0_4 = arith.constant 0 : index
    %c0_5 = arith.constant 0 : index
    %4 = vector.load %arg3[%c0_4, %c0_5] : memref<1x32xf32, #tpu.memory_space<vmem>>, vector<1x32xf32>
    %5 = vector.broadcast %4 : vector<1x32xf32> to vector<1352x32xf32>
    %6 = arith.addf %3, %5 : vector<1352x32xf32>
    %cst_6 = arith.constant 0.000000e+00 : f32
    %7 = vector.broadcast %cst_6 : f32 to vector<1352x32xf32>
    %8 = arith.maximumf %6, %7 : vector<1352x32xf32>
    %c0_7 = arith.constant 0 : index
    %c0_8 = arith.constant 0 : index
    %9 = vector.load %arg7[%c0_7, %c0_8] : memref<1408x32xf32, #tpu.memory_space<vmem>>, vector<1352x32xf32>
    tpu.vector_store %arg7[%c0_7, %c0_8], %8 {strides = array<i32>} : memref<1408x32xf32, #tpu.memory_space<vmem>>, vector<1352x32xf32>,
    %cst_9 = arith.constant 0.000000e+00 : f32
    %10 = vector.broadcast %cst_9 : f32 to vector<56x32xf32>
    %c1352 = arith.constant 1352 : index
    %c0_10 = arith.constant 0 : index
    %11 = vector.load %arg7[%c1352, %c0_10] : memref<1408x32xf32, #tpu.memory_space<vmem>>, vector<56x32xf32>
    tpu.vector_store %arg7[%c1352, %c0_10], %10 {strides = array<i32>} : memref<1408x32xf32, #tpu.memory_space<vmem>>, vector<56x32xf32>,
    %12 = arith.truncf %8 : vector<1352x32xf32> to vector<1352x32xbf16>
    %c1 = arith.constant 1 : index
    %c0_11 = arith.constant 0 : index
    %13 = vector.load %arg7[%c1, %c0_11] : memref<1408x32xf32, #tpu.memory_space<vmem>>, vector<1352x32xf32>
    %14 = arith.truncf %13 : vector<1352x32xf32> to vector<1352x32xbf16>
    %c2 = arith.constant 2 : index
    %c0_12 = arith.constant 0 : index
    %15 = vector.load %arg7[%c2, %c0_12] : memref<1408x32xf32, #tpu.memory_space<vmem>>, vector<1352x32xf32>
    %16 = arith.truncf %15 : vector<1352x32xf32> to vector<1352x32xbf16>
    %c26 = arith.constant 26 : index
    %c0_13 = arith.constant 0 : index
    %17 = vector.load %arg7[%c26, %c0_13] : memref<1408x32xf32, #tpu.memory_space<vmem>>, vector<1352x32xf32>
    %18 = arith.truncf %17 : vector<1352x32xf32> to vector<1352x32xbf16>
    %c27 = arith.constant 27 : index
    %c0_14 = arith.constant 0 : index
    %19 = vector.load %arg7[%c27, %c0_14] : memref<1408x32xf32, #tpu.memory_space<vmem>>, vector<1352x32xf32>
    %20 = arith.truncf %19 : vector<1352x32xf32> to vector<1352x32xbf16>
    %c28 = arith.constant 28 : index
    %c0_15 = arith.constant 0 : index
    %21 = vector.load %arg7[%c28, %c0_15] : memref<1408x32xf32, #tpu.memory_space<vmem>>, vector<1352x32xf32>
    %22 = arith.truncf %21 : vector<1352x32xf32> to vector<1352x32xbf16>
    %c52 = arith.constant 52 : index
    %c0_16 = arith.constant 0 : index
    %23 = vector.load %arg7[%c52, %c0_16] : memref<1408x32xf32, #tpu.memory_space<vmem>>, vector<1352x32xf32>
    %24 = arith.truncf %23 : vector<1352x32xf32> to vector<1352x32xbf16>
    %c53 = arith.constant 53 : index
    %c0_17 = arith.constant 0 : index
    %25 = vector.load %arg7[%c53, %c0_17] : memref<1408x32xf32, #tpu.memory_space<vmem>>, vector<1352x32xf32>
    %26 = arith.truncf %25 : vector<1352x32xf32> to vector<1352x32xbf16>
    %c54 = arith.constant 54 : index
    %c0_18 = arith.constant 0 : index
    %27 = vector.load %arg7[%c54, %c0_18] : memref<1408x32xf32, #tpu.memory_space<vmem>>, vector<1352x32xf32>
    %28 = arith.truncf %27 : vector<1352x32xf32> to vector<1352x32xbf16>
    %29 = tpu.concatenate %12, %14, %16, %18, %20, %22, %24, %26, %28 in 1 : vector<1352x32xbf16>, vector<1352x32xbf16>, vector<1352x32xbf16>, vector<1352x32xbf16>, vector<1352x32xbf16>, vector<1352x32xbf16>, vector<1352x32xbf16>, vector<1352x32xbf16>, vector<1352x32xbf16> -> vector<1352x288xbf16>
    %c0_19 = arith.constant 0 : index
    %c0_20 = arith.constant 0 : index
    %30 = vector.load %arg4[%c0_19, %c0_20] : memref<288x64xbf16, #tpu.memory_space<vmem>>, vector<288x64xbf16>
    %cst_21 = arith.constant dense<0.000000e+00> : vector<1352x64xf32>
    %31 = tpu.matmul %29, %30, %cst_21 {dimension_numbers = #tpu.dot_dimension_numbers<[1], [0], [0], [1], [0, 0, 1, 1], [], []>} : vector<1352x288xbf16>, vector<288x64xbf16>, vector<1352x64xf32> -> vector<1352x64xf32>
    %c0_22 = arith.constant 0 : index
    %c0_23 = arith.constant 0 : index
    %32 = vector.load %arg5[%c0_22, %c0_23] : memref<1x64xf32, #tpu.memory_space<vmem>>, vector<1x64xf32>
    %33 = vector.broadcast %32 : vector<1x64xf32> to vector<1352x64xf32>
    %34 = arith.addf %31, %33 : vector<1352x64xf32>
    %cst_24 = arith.constant 0.000000e+00 : f32
    %35 = vector.broadcast %cst_24 : f32 to vector<1352x64xf32>
    %36 = arith.maximumf %34, %35 : vector<1352x64xf32>
    %c0_25 = arith.constant 0 : index
    %c0_26 = arith.constant 0 : index
    %37 = vector.load %arg8[%c0_25, %c0_26] : memref<1384x64xf32, #tpu.memory_space<vmem>>, vector<1352x64xf32>
    tpu.vector_store %arg8[%c0_25, %c0_26], %36 {strides = array<i32>} : memref<1384x64xf32, #tpu.memory_space<vmem>>, vector<1352x64xf32>,
    %cst_27 = arith.constant 0.000000e+00 : f32
    %38 = vector.broadcast %cst_27 : f32 to vector<32x64xf32>
    %c1352_28 = arith.constant 1352 : index
    %c0_29 = arith.constant 0 : index
    %39 = vector.load %arg8[%c1352_28, %c0_29] : memref<1384x64xf32, #tpu.memory_space<vmem>>, vector<32x64xf32>
    tpu.vector_store %arg8[%c1352_28, %c0_29], %38 {strides = array<i32>} : memref<1384x64xf32, #tpu.memory_space<vmem>>, vector<32x64xf32>,
    %c0_30 = arith.constant 0 : index
    %c0_31 = arith.constant 0 : index
    %40 = tpu.strided_load %arg8[%c0_30, %c0_31] {strides = array<i32: 2, 1>} : memref<1384x64xf32, #tpu.memory_space<vmem>>, vector<676x64xf32>
    %c1_32 = arith.constant 1 : index
    %c0_33 = arith.constant 0 : index
    %41 = tpu.strided_load %arg8[%c1_32, %c0_33] {strides = array<i32: 2, 1>} : memref<1384x64xf32, #tpu.memory_space<vmem>>, vector<676x64xf32>
    %42 = arith.maximumf %40, %41 : vector<676x64xf32>
    %c26_34 = arith.constant 26 : index
    %c0_35 = arith.constant 0 : index
    %43 = tpu.strided_load %arg8[%c26_34, %c0_35] {strides = array<i32: 2, 1>} : memref<1384x64xf32, #tpu.memory_space<vmem>>, vector<676x64xf32>
    %c27_36 = arith.constant 27 : index
    %c0_37 = arith.constant 0 : index
    %44 = tpu.strided_load %arg8[%c27_36, %c0_37] {strides = array<i32: 2, 1>} : memref<1384x64xf32, #tpu.memory_space<vmem>>, vector<676x64xf32>
    %45 = arith.maximumf %43, %44 : vector<676x64xf32>
    %46 = arith.maximumf %42, %45 : vector<676x64xf32>
    %c0_38 = arith.constant 0 : index
    %c0_39 = arith.constant 0 : index
    %47 = vector.load %arg9[%c0_38, %c0_39] : memref<676x64xf32, #tpu.memory_space<vmem>>, vector<676x64xf32>
    tpu.vector_store %arg9[%c0_38, %c0_39], %46 {strides = array<i32>} : memref<676x64xf32, #tpu.memory_space<vmem>>, vector<676x64xf32>,
    %c0_40 = arith.constant 0 : index
    %c0_41 = arith.constant 0 : index
    %48 = vector.load %arg9[%c0_40, %c0_41] : memref<676x64xf32, #tpu.memory_space<vmem>>, vector<12x64xf32>
    %c0_42 = arith.constant 0 : index
    %c0_43 = arith.constant 0 : index
    %c0_44 = arith.constant 0 : index
    %49 = vector.load %arg6[%c0_42, %c0_43, %c0_44] : memref<1x288x64xf32, #tpu.memory_space<vmem>>, vector<1x12x64xf32>
    %50 = vector.shape_cast %49 : vector<1x12x64xf32> to vector<12x64xf32>
    %51 = vector.shape_cast %48 : vector<12x64xf32> to vector<1x12x64xf32>
    tpu.vector_store %arg6[%c0_42, %c0_43, %c0_44], %51 {strides = array<i32>} : memref<1x288x64xf32, #tpu.memory_space<vmem>>, vector<1x12x64xf32>,
    %c26_45 = arith.constant 26 : index
    %c0_46 = arith.constant 0 : index
    %52 = vector.load %arg9[%c26_45, %c0_46] : memref<676x64xf32, #tpu.memory_space<vmem>>, vector<12x64xf32>
    %c0_47 = arith.constant 0 : index
    %c12 = arith.constant 12 : index
    %c0_48 = arith.constant 0 : index
    %53 = vector.load %arg6[%c0_47, %c12, %c0_48] : memref<1x288x64xf32, #tpu.memory_space<vmem>>, vector<1x12x64xf32>
    %54 = vector.shape_cast %53 : vector<1x12x64xf32> to vector<12x64xf32>
    %55 = vector.shape_cast %52 : vector<12x64xf32> to vector<1x12x64xf32>
    tpu.vector_store %arg6[%c0_47, %c12, %c0_48], %55 {strides = array<i32>} : memref<1x288x64xf32, #tpu.memory_space<vmem>>, vector<1x12x64xf32>,
    %c52_49 = arith.constant 52 : index
    %c0_50 = arith.constant 0 : index
    %56 = vector.load %arg9[%c52_49, %c0_50] : memref<676x64xf32, #tpu.memory_space<vmem>>, vector<12x64xf32>
    %c0_51 = arith.constant 0 : index
    %c24 = arith.constant 24 : index
    %c0_52 = arith.constant 0 : index
    %57 = vector.load %arg6[%c0_51, %c24, %c0_52] : memref<1x288x64xf32, #tpu.memory_space<vmem>>, vector<1x12x64xf32>
    %58 = vector.shape_cast %57 : vector<1x12x64xf32> to vector<12x64xf32>
    %59 = vector.shape_cast %56 : vector<12x64xf32> to vector<1x12x64xf32>
    tpu.vector_store %arg6[%c0_51, %c24, %c0_52], %59 {strides = array<i32>} : memref<1x288x64xf32, #tpu.memory_space<vmem>>, vector<1x12x64xf32>,
    %c78 = arith.constant 78 : index
    %c0_53 = arith.constant 0 : index
    %60 = vector.load %arg9[%c78, %c0_53] : memref<676x64xf32, #tpu.memory_space<vmem>>, vector<12x64xf32>
    %c0_54 = arith.constant 0 : index
    %c36 = arith.constant 36 : index
    %c0_55 = arith.constant 0 : index
    %61 = vector.load %arg6[%c0_54, %c36, %c0_55] : memref<1x288x64xf32, #tpu.memory_space<vmem>>, vector<1x12x64xf32>
    %62 = vector.shape_cast %61 : vector<1x12x64xf32> to vector<12x64xf32>
    %63 = vector.shape_cast %60 : vector<12x64xf32> to vector<1x12x64xf32>
    tpu.vector_store %arg6[%c0_54, %c36, %c0_55], %63 {strides = array<i32>} : memref<1x288x64xf32, #tpu.memory_space<vmem>>, vector<1x12x64xf32>,
    %c104 = arith.constant 104 : index
    %c0_56 = arith.constant 0 : index
    %64 = vector.load %arg9[%c104, %c0_56] : memref<676x64xf32, #tpu.memory_space<vmem>>, vector<12x64xf32>
    %c0_57 = arith.constant 0 : index
    %c48 = arith.constant 48 : index
    %c0_58 = arith.constant 0 : index
    %65 = vector.load %arg6[%c0_57, %c48, %c0_58] : memref<1x288x64xf32, #tpu.memory_space<vmem>>, vector<1x12x64xf32>
    %66 = vector.shape_cast %65 : vector<1x12x64xf32> to vector<12x64xf32>
    %67 = vector.shape_cast %64 : vector<12x64xf32> to vector<1x12x64xf32>
    tpu.vector_store %arg6[%c0_57, %c48, %c0_58], %67 {strides = array<i32>} : memref<1x288x64xf32, #tpu.memory_space<vmem>>, vector<1x12x64xf32>,
    %c130 = arith.constant 130 : index
    %c0_59 = arith.constant 0 : index
    %68 = vector.load %arg9[%c130, %c0_59] : memref<676x64xf32, #tpu.memory_space<vmem>>, vector<12x64xf32>
    %c0_60 = arith.constant 0 : index
    %c60 = arith.constant 60 : index
    %c0_61 = arith.constant 0 : index
    %69 = vector.load %arg6[%c0_60, %c60, %c0_61] : memref<1x288x64xf32, #tpu.memory_space<vmem>>, vector<1x12x64xf32>
    %70 = vector.shape_cast %69 : vector<1x12x64xf32> to vector<12x64xf32>
    %71 = vector.shape_cast %68 : vector<12x64xf32> to vector<1x12x64xf32>
    tpu.vector_store %arg6[%c0_60, %c60, %c0_61], %71 {strides = array<i32>} : memref<1x288x64xf32, #tpu.memory_space<vmem>>, vector<1x12x64xf32>,
    %c156 = arith.constant 156 : index
    %c0_62 = arith.constant 0 : index
    %72 = vector.load %arg9[%c156, %c0_62] : memref<676x64xf32, #tpu.memory_space<vmem>>, vector<12x64xf32>
    %c0_63 = arith.constant 0 : index
    %c72 = arith.constant 72 : index
    %c0_64 = arith.constant 0 : index
    %73 = vector.load %arg6[%c0_63, %c72, %c0_64] : memref<1x288x64xf32, #tpu.memory_space<vmem>>, vector<1x12x64xf32>
    %74 = vector.shape_cast %73 : vector<1x12x64xf32> to vector<12x64xf32>
    %75 = vector.shape_cast %72 : vector<12x64xf32> to vector<1x12x64xf32>
    tpu.vector_store %arg6[%c0_63, %c72, %c0_64], %75 {strides = array<i32>} : memref<1x288x64xf32, #tpu.memory_space<vmem>>, vector<1x12x64xf32>,
    %c182 = arith.constant 182 : index
    %c0_65 = arith.constant 0 : index
    %76 = vector.load %arg9[%c182, %c0_65] : memref<676x64xf32, #tpu.memory_space<vmem>>, vector<12x64xf32>
    %c0_66 = arith.constant 0 : index
    %c84 = arith.constant 84 : index
    %c0_67 = arith.constant 0 : index
    %77 = vector.load %arg6[%c0_66, %c84, %c0_67] : memref<1x288x64xf32, #tpu.memory_space<vmem>>, vector<1x12x64xf32>
    %78 = vector.shape_cast %77 : vector<1x12x64xf32> to vector<12x64xf32>
    %79 = vector.shape_cast %76 : vector<12x64xf32> to vector<1x12x64xf32>
    tpu.vector_store %arg6[%c0_66, %c84, %c0_67], %79 {strides = array<i32>} : memref<1x288x64xf32, #tpu.memory_space<vmem>>, vector<1x12x64xf32>,
    %c208 = arith.constant 208 : index
    %c0_68 = arith.constant 0 : index
    %80 = vector.load %arg9[%c208, %c0_68] : memref<676x64xf32, #tpu.memory_space<vmem>>, vector<12x64xf32>
    %c0_69 = arith.constant 0 : index
    %c96 = arith.constant 96 : index
    %c0_70 = arith.constant 0 : index
    %81 = vector.load %arg6[%c0_69, %c96, %c0_70] : memref<1x288x64xf32, #tpu.memory_space<vmem>>, vector<1x12x64xf32>
    %82 = vector.shape_cast %81 : vector<1x12x64xf32> to vector<12x64xf32>
    %83 = vector.shape_cast %80 : vector<12x64xf32> to vector<1x12x64xf32>
    tpu.vector_store %arg6[%c0_69, %c96, %c0_70], %83 {strides = array<i32>} : memref<1x288x64xf32, #tpu.memory_space<vmem>>, vector<1x12x64xf32>,
    %c234 = arith.constant 234 : index
    %c0_71 = arith.constant 0 : index
    %84 = vector.load %arg9[%c234, %c0_71] : memref<676x64xf32, #tpu.memory_space<vmem>>, vector<12x64xf32>
    %c0_72 = arith.constant 0 : index
    %c108 = arith.constant 108 : index
    %c0_73 = arith.constant 0 : index
    %85 = vector.load %arg6[%c0_72, %c108, %c0_73] : memref<1x288x64xf32, #tpu.memory_space<vmem>>, vector<1x12x64xf32>
    %86 = vector.shape_cast %85 : vector<1x12x64xf32> to vector<12x64xf32>
    %87 = vector.shape_cast %84 : vector<12x64xf32> to vector<1x12x64xf32>
    tpu.vector_store %arg6[%c0_72, %c108, %c0_73], %87 {strides = array<i32>} : memref<1x288x64xf32, #tpu.memory_space<vmem>>, vector<1x12x64xf32>,
    %c260 = arith.constant 260 : index
    %c0_74 = arith.constant 0 : index
    %88 = vector.load %arg9[%c260, %c0_74] : memref<676x64xf32, #tpu.memory_space<vmem>>, vector<12x64xf32>
    %c0_75 = arith.constant 0 : index
    %c120 = arith.constant 120 : index
    %c0_76 = arith.constant 0 : index
    %89 = vector.load %arg6[%c0_75, %c120, %c0_76] : memref<1x288x64xf32, #tpu.memory_space<vmem>>, vector<1x12x64xf32>
    %90 = vector.shape_cast %89 : vector<1x12x64xf32> to vector<12x64xf32>
    %91 = vector.shape_cast %88 : vector<12x64xf32> to vector<1x12x64xf32>
    tpu.vector_store %arg6[%c0_75, %c120, %c0_76], %91 {strides = array<i32>} : memref<1x288x64xf32, #tpu.memory_space<vmem>>, vector<1x12x64xf32>,
    %c286 = arith.constant 286 : index
    %c0_77 = arith.constant 0 : index
    %92 = vector.load %arg9[%c286, %c0_77] : memref<676x64xf32, #tpu.memory_space<vmem>>, vector<12x64xf32>
    %c0_78 = arith.constant 0 : index
    %c132 = arith.constant 132 : index
    %c0_79 = arith.constant 0 : index
    %93 = vector.load %arg6[%c0_78, %c132, %c0_79] : memref<1x288x64xf32, #tpu.memory_space<vmem>>, vector<1x12x64xf32>
    %94 = vector.shape_cast %93 : vector<1x12x64xf32> to vector<12x64xf32>
    %95 = vector.shape_cast %92 : vector<12x64xf32> to vector<1x12x64xf32>
    tpu.vector_store %arg6[%c0_78, %c132, %c0_79], %95 {strides = array<i32>} : memref<1x288x64xf32, #tpu.memory_space<vmem>>, vector<1x12x64xf32>,
    %c338 = arith.constant 338 : index
    %c0_80 = arith.constant 0 : index
    %96 = vector.load %arg9[%c338, %c0_80] : memref<676x64xf32, #tpu.memory_space<vmem>>, vector<12x64xf32>
    %c0_81 = arith.constant 0 : index
    %c144 = arith.constant 144 : index
    %c0_82 = arith.constant 0 : index
    %97 = vector.load %arg6[%c0_81, %c144, %c0_82] : memref<1x288x64xf32, #tpu.memory_space<vmem>>, vector<1x12x64xf32>
    %98 = vector.shape_cast %97 : vector<1x12x64xf32> to vector<12x64xf32>
    %99 = vector.shape_cast %96 : vector<12x64xf32> to vector<1x12x64xf32>
    tpu.vector_store %arg6[%c0_81, %c144, %c0_82], %99 {strides = array<i32>} : memref<1x288x64xf32, #tpu.memory_space<vmem>>, vector<1x12x64xf32>,
    %c364 = arith.constant 364 : index
    %c0_83 = arith.constant 0 : index
    %100 = vector.load %arg9[%c364, %c0_83] : memref<676x64xf32, #tpu.memory_space<vmem>>, vector<12x64xf32>
    %c0_84 = arith.constant 0 : index
    %c156_85 = arith.constant 156 : index
    %c0_86 = arith.constant 0 : index
    %101 = vector.load %arg6[%c0_84, %c156_85, %c0_86] : memref<1x288x64xf32, #tpu.memory_space<vmem>>, vector<1x12x64xf32>
    %102 = vector.shape_cast %101 : vector<1x12x64xf32> to vector<12x64xf32>
    %103 = vector.shape_cast %100 : vector<12x64xf32> to vector<1x12x64xf32>
    tpu.vector_store %arg6[%c0_84, %c156_85, %c0_86], %103 {strides = array<i32>} : memref<1x288x64xf32, #tpu.memory_space<vmem>>, vector<1x12x64xf32>,
    %c390 = arith.constant 390 : index
    %c0_87 = arith.constant 0 : index
    %104 = vector.load %arg9[%c390, %c0_87] : memref<676x64xf32, #tpu.memory_space<vmem>>, vector<12x64xf32>
    %c0_88 = arith.constant 0 : index
    %c168 = arith.constant 168 : index
    %c0_89 = arith.constant 0 : index
    %105 = vector.load %arg6[%c0_88, %c168, %c0_89] : memref<1x288x64xf32, #tpu.memory_space<vmem>>, vector<1x12x64xf32>
    %106 = vector.shape_cast %105 : vector<1x12x64xf32> to vector<12x64xf32>
    %107 = vector.shape_cast %104 : vector<12x64xf32> to vector<1x12x64xf32>
    tpu.vector_store %arg6[%c0_88, %c168, %c0_89], %107 {strides = array<i32>} : memref<1x288x64xf32, #tpu.memory_space<vmem>>, vector<1x12x64xf32>,
    %c416 = arith.constant 416 : index
    %c0_90 = arith.constant 0 : index
    %108 = vector.load %arg9[%c416, %c0_90] : memref<676x64xf32, #tpu.memory_space<vmem>>, vector<12x64xf32>
    %c0_91 = arith.constant 0 : index
    %c180 = arith.constant 180 : index
    %c0_92 = arith.constant 0 : index
    %109 = vector.load %arg6[%c0_91, %c180, %c0_92] : memref<1x288x64xf32, #tpu.memory_space<vmem>>, vector<1x12x64xf32>
    %110 = vector.shape_cast %109 : vector<1x12x64xf32> to vector<12x64xf32>
    %111 = vector.shape_cast %108 : vector<12x64xf32> to vector<1x12x64xf32>
    tpu.vector_store %arg6[%c0_91, %c180, %c0_92], %111 {strides = array<i32>} : memref<1x288x64xf32, #tpu.memory_space<vmem>>, vector<1x12x64xf32>,
    %c442 = arith.constant 442 : index
    %c0_93 = arith.constant 0 : index
    %112 = vector.load %arg9[%c442, %c0_93] : memref<676x64xf32, #tpu.memory_space<vmem>>, vector<12x64xf32>
    %c0_94 = arith.constant 0 : index
    %c192 = arith.constant 192 : index
    %c0_95 = arith.constant 0 : index
    %113 = vector.load %arg6[%c0_94, %c192, %c0_95] : memref<1x288x64xf32, #tpu.memory_space<vmem>>, vector<1x12x64xf32>
    %114 = vector.shape_cast %113 : vector<1x12x64xf32> to vector<12x64xf32>
    %115 = vector.shape_cast %112 : vector<12x64xf32> to vector<1x12x64xf32>
    tpu.vector_store %arg6[%c0_94, %c192, %c0_95], %115 {strides = array<i32>} : memref<1x288x64xf32, #tpu.memory_space<vmem>>, vector<1x12x64xf32>,
    %c468 = arith.constant 468 : index
    %c0_96 = arith.constant 0 : index
    %116 = vector.load %arg9[%c468, %c0_96] : memref<676x64xf32, #tpu.memory_space<vmem>>, vector<12x64xf32>
    %c0_97 = arith.constant 0 : index
    %c204 = arith.constant 204 : index
    %c0_98 = arith.constant 0 : index
    %117 = vector.load %arg6[%c0_97, %c204, %c0_98] : memref<1x288x64xf32, #tpu.memory_space<vmem>>, vector<1x12x64xf32>
    %118 = vector.shape_cast %117 : vector<1x12x64xf32> to vector<12x64xf32>
    %119 = vector.shape_cast %116 : vector<12x64xf32> to vector<1x12x64xf32>
    tpu.vector_store %arg6[%c0_97, %c204, %c0_98], %119 {strides = array<i32>} : memref<1x288x64xf32, #tpu.memory_space<vmem>>, vector<1x12x64xf32>,
    %c494 = arith.constant 494 : index
    %c0_99 = arith.constant 0 : index
    %120 = vector.load %arg9[%c494, %c0_99] : memref<676x64xf32, #tpu.memory_space<vmem>>, vector<12x64xf32>
    %c0_100 = arith.constant 0 : index
    %c216 = arith.constant 216 : index
    %c0_101 = arith.constant 0 : index
    %121 = vector.load %arg6[%c0_100, %c216, %c0_101] : memref<1x288x64xf32, #tpu.memory_space<vmem>>, vector<1x12x64xf32>
    %122 = vector.shape_cast %121 : vector<1x12x64xf32> to vector<12x64xf32>
    %123 = vector.shape_cast %120 : vector<12x64xf32> to vector<1x12x64xf32>
    tpu.vector_store %arg6[%c0_100, %c216, %c0_101], %123 {strides = array<i32>} : memref<1x288x64xf32, #tpu.memory_space<vmem>>, vector<1x12x64xf32>,
    %c520 = arith.constant 520 : index
    %c0_102 = arith.constant 0 : index
    %124 = vector.load %arg9[%c520, %c0_102] : memref<676x64xf32, #tpu.memory_space<vmem>>, vector<12x64xf32>
    %c0_103 = arith.constant 0 : index
    %c228 = arith.constant 228 : index
    %c0_104 = arith.constant 0 : index
    %125 = vector.load %arg6[%c0_103, %c228, %c0_104] : memref<1x288x64xf32, #tpu.memory_space<vmem>>, vector<1x12x64xf32>
    %126 = vector.shape_cast %125 : vector<1x12x64xf32> to vector<12x64xf32>
    %127 = vector.shape_cast %124 : vector<12x64xf32> to vector<1x12x64xf32>
    tpu.vector_store %arg6[%c0_103, %c228, %c0_104], %127 {strides = array<i32>} : memref<1x288x64xf32, #tpu.memory_space<vmem>>, vector<1x12x64xf32>,
    %c546 = arith.constant 546 : index
    %c0_105 = arith.constant 0 : index
    %128 = vector.load %arg9[%c546, %c0_105] : memref<676x64xf32, #tpu.memory_space<vmem>>, vector<12x64xf32>
    %c0_106 = arith.constant 0 : index
    %c240 = arith.constant 240 : index
    %c0_107 = arith.constant 0 : index
    %129 = vector.load %arg6[%c0_106, %c240, %c0_107] : memref<1x288x64xf32, #tpu.memory_space<vmem>>, vector<1x12x64xf32>
    %130 = vector.shape_cast %129 : vector<1x12x64xf32> to vector<12x64xf32>
    %131 = vector.shape_cast %128 : vector<12x64xf32> to vector<1x12x64xf32>
    tpu.vector_store %arg6[%c0_106, %c240, %c0_107], %131 {strides = array<i32>} : memref<1x288x64xf32, #tpu.memory_space<vmem>>, vector<1x12x64xf32>,
    %c572 = arith.constant 572 : index
    %c0_108 = arith.constant 0 : index
    %132 = vector.load %arg9[%c572, %c0_108] : memref<676x64xf32, #tpu.memory_space<vmem>>, vector<12x64xf32>
    %c0_109 = arith.constant 0 : index
    %c252 = arith.constant 252 : index
    %c0_110 = arith.constant 0 : index
    %133 = vector.load %arg6[%c0_109, %c252, %c0_110] : memref<1x288x64xf32, #tpu.memory_space<vmem>>, vector<1x12x64xf32>
    %134 = vector.shape_cast %133 : vector<1x12x64xf32> to vector<12x64xf32>
    %135 = vector.shape_cast %132 : vector<12x64xf32> to vector<1x12x64xf32>
    tpu.vector_store %arg6[%c0_109, %c252, %c0_110], %135 {strides = array<i32>} : memref<1x288x64xf32, #tpu.memory_space<vmem>>, vector<1x12x64xf32>,
    %c598 = arith.constant 598 : index
    %c0_111 = arith.constant 0 : index
    %136 = vector.load %arg9[%c598, %c0_111] : memref<676x64xf32, #tpu.memory_space<vmem>>, vector<12x64xf32>
    %c0_112 = arith.constant 0 : index
    %c264 = arith.constant 264 : index
    %c0_113 = arith.constant 0 : index
    %137 = vector.load %arg6[%c0_112, %c264, %c0_113] : memref<1x288x64xf32, #tpu.memory_space<vmem>>, vector<1x12x64xf32>
    %138 = vector.shape_cast %137 : vector<1x12x64xf32> to vector<12x64xf32>
    %139 = vector.shape_cast %136 : vector<12x64xf32> to vector<1x12x64xf32>
    tpu.vector_store %arg6[%c0_112, %c264, %c0_113], %139 {strides = array<i32>} : memref<1x288x64xf32, #tpu.memory_space<vmem>>, vector<1x12x64xf32>,
    %c624 = arith.constant 624 : index
    %c0_114 = arith.constant 0 : index
    %140 = vector.load %arg9[%c624, %c0_114] : memref<676x64xf32, #tpu.memory_space<vmem>>, vector<12x64xf32>
    %c0_115 = arith.constant 0 : index
    %c276 = arith.constant 276 : index
    %c0_116 = arith.constant 0 : index
    %141 = vector.load %arg6[%c0_115, %c276, %c0_116] : memref<1x288x64xf32, #tpu.memory_space<vmem>>, vector<1x12x64xf32>
    %142 = vector.shape_cast %141 : vector<1x12x64xf32> to vector<12x64xf32>
    %143 = vector.shape_cast %140 : vector<12x64xf32> to vector<1x12x64xf32>
    tpu.vector_store %arg6[%c0_115, %c276, %c0_116], %143 {strides = array<i32>} : memref<1x288x64xf32, #tpu.memory_space<vmem>>, vector<1x12x64xf32>,
    return
  }
  func.func @transform_0(%arg0: i32) -> (i32, i32, i32) {
    %c0_i32 = arith.constant 0 : i32
    %c0_i32_0 = arith.constant 0 : i32
    %c0_i32_1 = arith.constant 0 : i32
    return %arg0, %c0_i32, %c0_i32_0 : i32, i32, i32
  }
  func.func @transform_1(%arg0: i32) -> (i32, i32) {
    %c0_i32 = arith.constant 0 : i32
    %c0_i32_0 = arith.constant 0 : i32
    %c0_i32_1 = arith.constant 0 : i32
    return %c0_i32, %c0_i32_0 : i32, i32
  }
  func.func @transform_2(%arg0: i32) -> (i32, i32) {
    %c0_i32 = arith.constant 0 : i32
    %c0_i32_0 = arith.constant 0 : i32
    %c0_i32_1 = arith.constant 0 : i32
    return %c0_i32, %c0_i32_0 : i32, i32
  }
  func.func @transform_3(%arg0: i32) -> (i32, i32) {
    %c0_i32 = arith.constant 0 : i32
    %c0_i32_0 = arith.constant 0 : i32
    %c0_i32_1 = arith.constant 0 : i32
    return %c0_i32, %c0_i32_0 : i32, i32
  }
  func.func @transform_4(%arg0: i32) -> (i32, i32) {
    %c0_i32 = arith.constant 0 : i32
    %c0_i32_0 = arith.constant 0 : i32
    %c0_i32_1 = arith.constant 0 : i32
    return %c0_i32, %c0_i32_0 : i32, i32
  }
  func.func @transform_5(%arg0: i32) -> (i32, i32, i32) {
    %c0_i32 = arith.constant 0 : i32
    %c0_i32_0 = arith.constant 0 : i32
    %c0_i32_1 = arith.constant 0 : i32
    return %arg0, %c0_i32, %c0_i32_0 : i32, i32, i32
  }
}

module attributes {stable_mosaic.version = 11 : i64} {
  func.func @mlp_kernel(%arg0: i32, %arg1: memref<2x2304xbf16, #tpu.memory_space<vmem>>, %arg2: memref<2304x128xbf16, #tpu.memory_space<vmem>>, %arg3: memref<1x128xf32, #tpu.memory_space<vmem>>, %arg4: memref<128x10xbf16, #tpu.memory_space<vmem>>, %arg5: memref<1x10xf32, #tpu.memory_space<vmem>>, %arg6: memref<2x10xf32, #tpu.memory_space<vmem>>, %arg7: memref<2x128xf32, #tpu.memory_space<vmem>>) attributes {dimension_semantics = [#tpu.dimension_semantics<arbitrary>], iteration_bounds = array<i64: 4>, scalar_prefetch = 0 : i64, scratch_operands = 1 : i64, tpu.core_type = #tpu.core_type<tc>, window_params = [{transform_indices = @transform_0, window_bounds = array<i64: 2, 2304>}, {transform_indices = @transform_1, window_bounds = array<i64: 2304, 128>}, {pipeline_mode = #tpu.pipeline_mode<synchronous>, transform_indices = @transform_2, window_bounds = array<i64: 1, 128>}, {pipeline_mode = #tpu.pipeline_mode<synchronous>, transform_indices = @transform_3, window_bounds = array<i64: 128, 10>}, {pipeline_mode = #tpu.pipeline_mode<synchronous>, transform_indices = @transform_4, window_bounds = array<i64: 1, 10>}, {pipeline_mode = #tpu.pipeline_mode<synchronous>, transform_indices = @transform_5, window_bounds = array<i64: 2, 10>}]} {
    %c0_i32 = arith.constant 0 : i32
    %0 = arith.cmpi eq, %arg0, %c0_i32 : i32
    %1 = arith.extui %0 : i1 to i32
    %c0_i32_0 = arith.constant 0 : i32
    %2 = arith.cmpi ne, %1, %c0_i32_0 : i32
    scf.if %2 {
      %cst_9 = arith.constant 0.000000e+00 : f32
      %12 = vector.broadcast %cst_9 : f32 to vector<2x128xf32>
      %c0_10 = arith.constant 0 : index
      %c0_11 = arith.constant 0 : index
      %13 = vector.load %arg7[%c0_10, %c0_11] : memref<2x128xf32, #tpu.memory_space<vmem>>, vector<2x128xf32>
      tpu.vector_store %arg7[%c0_10, %c0_11], %12 {strides = array<i32>} : memref<2x128xf32, #tpu.memory_space<vmem>>, vector<2x128xf32>,
    } else {
    }
    %c0 = arith.constant 0 : index
    %c0_1 = arith.constant 0 : index
    %3 = vector.load %arg7[%c0, %c0_1] : memref<2x128xf32, #tpu.memory_space<vmem>>, vector<2x128xf32>
    %c0_2 = arith.constant 0 : index
    %c0_3 = arith.constant 0 : index
    %4 = vector.load %arg1[%c0_2, %c0_3] : memref<2x2304xbf16, #tpu.memory_space<vmem>>, vector<2x2304xbf16>
    %c0_4 = arith.constant 0 : index
    %c0_5 = arith.constant 0 : index
    %5 = vector.load %arg2[%c0_4, %c0_5] : memref<2304x128xbf16, #tpu.memory_space<vmem>>, vector<2304x128xbf16>
    %cst = arith.constant dense<0.000000e+00> : vector<2x128xf32>
    %6 = tpu.matmul %4, %5, %cst {dimension_numbers = #tpu.dot_dimension_numbers<[1], [0], [0], [1], [0, 0, 1, 1], [], []>} : vector<2x2304xbf16>, vector<2304x128xbf16>, vector<2x128xf32> -> vector<2x128xf32>
    %7 = arith.addf %3, %6 : vector<2x128xf32>
    %c0_6 = arith.constant 0 : index
    %c0_7 = arith.constant 0 : index
    %8 = vector.load %arg7[%c0_6, %c0_7] : memref<2x128xf32, #tpu.memory_space<vmem>>, vector<2x128xf32>
    tpu.vector_store %arg7[%c0_6, %c0_7], %7 {strides = array<i32>} : memref<2x128xf32, #tpu.memory_space<vmem>>, vector<2x128xf32>,
    %c3_i32 = arith.constant 3 : i32
    %9 = arith.cmpi eq, %arg0, %c3_i32 : i32
    %10 = arith.extui %9 : i1 to i32
    %c0_i32_8 = arith.constant 0 : i32
    %11 = arith.cmpi ne, %10, %c0_i32_8 : i32
    scf.if %11 {
      %c0_9 = arith.constant 0 : index
      %c0_10 = arith.constant 0 : index
      %12 = vector.load %arg7[%c0_9, %c0_10] : memref<2x128xf32, #tpu.memory_space<vmem>>, vector<2x128xf32>
      %c0_11 = arith.constant 0 : index
      %c0_12 = arith.constant 0 : index
      %13 = vector.load %arg3[%c0_11, %c0_12] : memref<1x128xf32, #tpu.memory_space<vmem>>, vector<1x128xf32>
      %14 = vector.broadcast %13 : vector<1x128xf32> to vector<2x128xf32>
      %15 = arith.addf %12, %14 : vector<2x128xf32>
      %cst_13 = arith.constant 0.000000e+00 : f32
      %16 = vector.broadcast %cst_13 : f32 to vector<2x128xf32>
      %17 = arith.maximumf %15, %16 : vector<2x128xf32>
      %18 = arith.truncf %17 : vector<2x128xf32> to vector<2x128xbf16>
      %c0_14 = arith.constant 0 : index
      %c0_15 = arith.constant 0 : index
      %19 = vector.load %arg4[%c0_14, %c0_15] : memref<128x10xbf16, #tpu.memory_space<vmem>>, vector<128x10xbf16>
      %cst_16 = arith.constant dense<0.000000e+00> : vector<2x10xf32>
      %20 = tpu.matmul %18, %19, %cst_16 {dimension_numbers = #tpu.dot_dimension_numbers<[1], [0], [0], [1], [0, 0, 1, 1], [], []>} : vector<2x128xbf16>, vector<128x10xbf16>, vector<2x10xf32> -> vector<2x10xf32>
      %c0_17 = arith.constant 0 : index
      %c0_18 = arith.constant 0 : index
      %21 = vector.load %arg5[%c0_17, %c0_18] : memref<1x10xf32, #tpu.memory_space<vmem>>, vector<1x10xf32>
      %22 = vector.broadcast %21 : vector<1x10xf32> to vector<2x10xf32>
      %23 = arith.addf %20, %22 : vector<2x10xf32>
      %c0_19 = arith.constant 0 : index
      %c0_20 = arith.constant 0 : index
      %24 = vector.load %arg6[%c0_19, %c0_20] : memref<2x10xf32, #tpu.memory_space<vmem>>, vector<2x10xf32>
      tpu.vector_store %arg6[%c0_19, %c0_20], %23 {strides = array<i32>} : memref<2x10xf32, #tpu.memory_space<vmem>>, vector<2x10xf32>,
    } else {
    }
    return
  }
  func.func @transform_0(%arg0: i32) -> (i32, i32) {
    %c0_i32 = arith.constant 0 : i32
    %c0_i32_0 = arith.constant 0 : i32
    return %c0_i32, %arg0 : i32, i32
  }
  func.func @transform_1(%arg0: i32) -> (i32, i32) {
    %c0_i32 = arith.constant 0 : i32
    %c0_i32_0 = arith.constant 0 : i32
    return %arg0, %c0_i32 : i32, i32
  }
  func.func @transform_2(%arg0: i32) -> (i32, i32) {
    %c0_i32 = arith.constant 0 : i32
    %c0_i32_0 = arith.constant 0 : i32
    %c0_i32_1 = arith.constant 0 : i32
    return %c0_i32, %c0_i32_0 : i32, i32
  }
  func.func @transform_3(%arg0: i32) -> (i32, i32) {
    %c0_i32 = arith.constant 0 : i32
    %c0_i32_0 = arith.constant 0 : i32
    %c0_i32_1 = arith.constant 0 : i32
    return %c0_i32, %c0_i32_0 : i32, i32
  }
  func.func @transform_4(%arg0: i32) -> (i32, i32) {
    %c0_i32 = arith.constant 0 : i32
    %c0_i32_0 = arith.constant 0 : i32
    %c0_i32_1 = arith.constant 0 : i32
    return %c0_i32, %c0_i32_0 : i32, i32
  }
  func.func @transform_5(%arg0: i32) -> (i32, i32) {
    %c0_i32 = arith.constant 0 : i32
    %c0_i32_0 = arith.constant 0 : i32
    %c0_i32_1 = arith.constant 0 : i32
    return %c0_i32, %c0_i32_0 : i32, i32
  }
}

</mosaic_0001>

<llo_original>
// kernel: cnn_dropout_forward.3
$region0: #{cnn_dropout_forward.3}
  #allocation0 [shape = 'u32[]', space=smem, size = 0x4, offset = 0x4, fixed_abs, tag = 'smem constant byte address 0x4 - core index']
  #allocation1 [shape = 'u32[144,128]{1,0:T(1,128)}', space=vmem, size = 0x12000, scoped, tag = 'internal scratch']
  #allocation2 [shape = 'f32[2,128]{1,0:T(2,128)}', space=vmem, size = 0x400, scoped, tag = 'scratch operand']
  %s0 = inlined_call_operand.vmem [shape: bf16[2,9216], index: 0, kind: input, shape index: {}]
  %s1 = inlined_call_operand.hbm [shape: bf16[9216,128], index: 1, kind: input, shape index: {}]
  %s2 = inlined_call_operand.hbm [shape: f32[1,128], index: 2, kind: input, shape index: {}]
  %s3 = inlined_call_operand.vmem [shape: bf16[128,10], index: 3, kind: input, shape index: {}]
  %s4 = inlined_call_operand.hbm [shape: f32[1,10], index: 4, kind: input, shape index: {}]
  %s5 = inlined_call_operand.hbm [shape: f32[2,10], index: 5, kind: output, shape index: {}]
  %s6 = sld [smem:[#allocation0]]
  $region73: #{cnn_dropout_forward.3} parent=0
    _
  %s8 = ssub.s32 1, %s6
  %s9 = scalar_select 0, %s8, %s6
  $region1: #{cnn_dropout_forward.3} parent=0
    #allocation3 [shape = 'u8[1179648]{0}', space=vmem, size = 0x120000, scoped, tag = 'input window, operand 1']
    #allocation4 [shape = 's32[2]{0}', space=sflag, size = 0x8, scoped, tag = 'scoped memory for cnn_dropout_forward.3']
    #allocation5 [shape = 's32[2]{0}', space=sflag, size = 0x8, scoped, tag = 'scoped memory for cnn_dropout_forward.3']
    #allocation6 [shape = 'u8[512]{0}', space=vmem, size = 0x400, scoped, tag = 'input window, operand 2, single buffered']
    #allocation7 [shape = 's32[1]{0}', space=sflag, size = 0x4, scoped, tag = 'scoped memory for cnn_dropout_forward.3']
    #allocation8 [shape = 'u8[512]{0}', space=vmem, size = 0x400, scoped, tag = 'input window, operand 4, single buffered']
    #allocation9 [shape = 'u8[1024]{0}', space=vmem, size = 0x400, scoped, tag = 'output window, operand 0, single buffered']
    %10 = vsyncpa [#allocation4], 0
    %s11 = scalar_lea.sflag [#allocation4], 1
    %12 = vsyncpa %s11, 0
    %13 = vsyncpa [#allocation7], 0
    %14 = vsyncpa [#allocation5], 0
    loop: start=0, step=1, limit=6
    $region2: #{cnn_dropout_forward.3} parent=1 // loop_pre_header
      _
    $region3: #{cnn_dropout_forward.3} parent=1 // loop_header
      %s16 = sphi 0, %s20
      %p17 = scmp.ge.s32.totalorder %s16, 6
      %s26 = sphi 0, %s28
      %s29 = sphi 0, %s26
      %s30 = sphi 0, %s29
      %s46 = sphi 0, %s30
      %s52 = sphi 0, %s54
      %s55 = sphi 0, %s52
      %s56 = sphi 0, %s55
      %s72 = sphi 0, %s56
      %s76 = sphi 0, %s76
      %s78 = sphi 0, %s76
      %s79 = sphi 0, %s78
      %s93 = sphi 0, %s79
      %s97 = sphi 0, %s97
      %s99 = sphi 0, %s97
      %s100 = sphi 0, %s99
      %s114 = sphi 0, %s100
      %s118 = sphi 0, %s118
      %s120 = sphi 0, %s118
      %s121 = sphi 0, %s120
      %s135 = sphi 0, %s121
      %s139 = sphi 0, %s139
      %s141 = sphi 0, %s139
      %s142 = sphi 0, %s141
      %s156 = sphi 0, %s142
    $region4: #{cnn_dropout_forward.3} parent=1 // loop_header_branch
      %19 = sbr.rel (%p17) target = $region8
    $region5: #{cnn_dropout_forward.3} parent=1 // loop_body
      %s21 = ssub.s32 %s16, 1
      %s22 = ssub.s32 %s16, 2
      %s23 = sadd.s32 %s16, 1
      %s24 = ssub.s32 %s16, %s23
      %p25 = scmp.eq.s32.totalorder %s24, 0
      %s27 = sadd.s32 %s26, 1
      %s28 = scalar_select %p25, %s26, %s27
      %p31 = pneg %p25
      %p32 = scmp.eq.s32.totalorder %s16, 3
      %p33 = por %p31, %p32
      %p34 = scmp.ne.s32.totalorder %s26, %s29
      %p35 = scmp.eq.s32.totalorder %s16, 0
      %p36 = por %p34, %p35
      %p37 = scmp.ne.s32.totalorder %s26, %s29
      %p38 = scmp.eq.s32.totalorder %s21, 3
      %p39 = por %p37, %p38
      %p40 = scmp.ne.s32.totalorder %s29, %s30
      %p41 = scmp.eq.s32.totalorder %s21, 0
      %p42 = por %p40, %p41
      %p43 = scmp.ne.s32.totalorder %s29, %s30
      %p44 = scmp.eq.s32.totalorder %s22, 3
      %p45 = por %p43, %p44
      %p47 = scmp.ne.s32.totalorder %s30, %s46
      %p48 = scmp.eq.s32.totalorder %s22, 0
      %p49 = por %p47, %p48
      %s50 = ssub.s32 %s16, %s23
      %p51 = scmp.eq.s32.totalorder %s50, 0
      %s53 = sadd.s32 %s52, 1
      %s54 = scalar_select %p51, %s52, %s53
      %p57 = pneg %p51
      %p58 = scmp.eq.s32.totalorder %s16, 3
      %p59 = por %p57, %p58
      %p60 = scmp.ne.s32.totalorder %s52, %s55
      %p61 = scmp.eq.s32.totalorder %s16, 0
      %p62 = por %p60, %p61
      %p63 = scmp.ne.s32.totalorder %s52, %s55
      %p64 = scmp.eq.s32.totalorder %s21, 3
      %p65 = por %p63, %p64
      %p66 = scmp.ne.s32.totalorder %s55, %s56
      %p67 = scmp.eq.s32.totalorder %s21, 0
      %p68 = por %p66, %p67
      %p69 = scmp.ne.s32.totalorder %s55, %s56
      %p70 = scmp.eq.s32.totalorder %s22, 3
      %p71 = por %p69, %p70
      %p73 = scmp.ne.s32.totalorder %s56, %s72
      %p74 = scmp.eq.s32.totalorder %s22, 0
      %p75 = por %p73, %p74
      %s77 = sadd.s32 %s76, 1
      %p80 = scmp.eq.s32.totalorder %s16, 3
      %p81 = scmp.ne.s32.totalorder %s76, %s78
      %p82 = scmp.eq.s32.totalorder %s16, 0
      %p83 = por %p81, %p82
      %p84 = scmp.ne.s32.totalorder %s76, %s78
      %p85 = scmp.eq.s32.totalorder %s21, 3
      %p86 = por %p84, %p85
      %p87 = scmp.ne.s32.totalorder %s78, %s79
      %p88 = scmp.eq.s32.totalorder %s21, 0
      %p89 = por %p87, %p88
      %p90 = scmp.ne.s32.totalorder %s78, %s79
      %p91 = scmp.eq.s32.totalorder %s22, 3
      %p92 = por %p90, %p91
      %p94 = scmp.ne.s32.totalorder %s79, %s93
      %p95 = scmp.eq.s32.totalorder %s22, 0
      %p96 = por %p94, %p95
      %s98 = sadd.s32 %s97, 1
      %p101 = scmp.eq.s32.totalorder %s16, 3
      %p102 = scmp.ne.s32.totalorder %s97, %s99
      %p103 = scmp.eq.s32.totalorder %s16, 0
      %p104 = por %p102, %p103
      %p105 = scmp.ne.s32.totalorder %s97, %s99
      %p106 = scmp.eq.s32.totalorder %s21, 3
      %p107 = por %p105, %p106
      %p108 = scmp.ne.s32.totalorder %s99, %s100
      %p109 = scmp.eq.s32.totalorder %s21, 0
      %p110 = por %p108, %p109
      %p111 = scmp.ne.s32.totalorder %s99, %s100
      %p112 = scmp.eq.s32.totalorder %s22, 3
      %p113 = por %p111, %p112
      %p115 = scmp.ne.s32.totalorder %s100, %s114
      %p116 = scmp.eq.s32.totalorder %s22, 0
      %p117 = por %p115, %p116
      %s119 = sadd.s32 %s118, 1
      %p122 = scmp.eq.s32.totalorder %s16, 3
      %p123 = scmp.ne.s32.totalorder %s118, %s120
      %p124 = scmp.eq.s32.totalorder %s16, 0
      %p125 = por %p123, %p124
      %p126 = scmp.ne.s32.totalorder %s118, %s120
      %p127 = scmp.eq.s32.totalorder %s21, 3
      %p128 = por %p126, %p127
      %p129 = scmp.ne.s32.totalorder %s120, %s121
      %p130 = scmp.eq.s32.totalorder %s21, 0
      %p131 = por %p129, %p130
      %p132 = scmp.ne.s32.totalorder %s120, %s121
      %p133 = scmp.eq.s32.totalorder %s22, 3
      %p134 = por %p132, %p133
      %p136 = scmp.ne.s32.totalorder %s121, %s135
      %p137 = scmp.eq.s32.totalorder %s22, 0
      %p138 = por %p136, %p137
      %s140 = sadd.s32 %s139, 1
      %p143 = scmp.eq.s32.totalorder %s16, 3
      %p144 = scmp.ne.s32.totalorder %s139, %s141
      %p145 = scmp.eq.s32.totalorder %s16, 0
      %p146 = por %p144, %p145
      %p147 = scmp.ne.s32.totalorder %s139, %s141
      %p148 = scmp.eq.s32.totalorder %s21, 3
      %p149 = por %p147, %p148
      %p150 = scmp.ne.s32.totalorder %s141, %s142
      %p151 = scmp.eq.s32.totalorder %s21, 0
      %p152 = por %p150, %p151
      %p153 = scmp.ne.s32.totalorder %s141, %s142
      %p154 = scmp.eq.s32.totalorder %s22, 3
      %p155 = por %p153, %p154
      %p157 = scmp.ne.s32.totalorder %s142, %s156
      %p158 = scmp.eq.s32.totalorder %s22, 0
      %p159 = por %p157, %p158
      %p160 = scmp.le.s32.totalorder 1, %s16
      %p161 = scmp.lt.s32.totalorder %s16, 5
      %p162 = pnand %p160, %p161
      %p163 = pneg %p162
      // Predicated region
      $region9: #{cnn_dropout_forward.3} parent=5 // pred_check
        _
      $region10: #{cnn_dropout_forward.3} parent=5 // pred_check_branch
        %165 = sbr.rel (%p162) target = $region12
      $region11: #{cnn_dropout_forward.3} parent=5 // pred_region
        %s166 = ssub.s32 %s16, 1
        // Predicated region
        $region13: #{cnn_dropout_forward.3} parent=11 // pred_check
          %p167 = pneg %p89
        $region14: #{cnn_dropout_forward.3} parent=11 // pred_check_branch
          %169 = sbr.rel (%p167) target = $region16
        $region15: #{cnn_dropout_forward.3} parent=11 // pred_region
          %s171 = ssub.s32 16, 16
          %172 = vsyncadd [#allocation7], %s171
          %s174 = sshll.u32 [#allocation6], 4
          %s175 = int_to_ptr.vmem [resolvable:$true] %s174
          %177 = dma.hbm_to_vmem [thread:$0]  %s2, 16, %s175, [#allocation7]
        $region16: #{cnn_dropout_forward.3} parent=11 // pred_fallthru
          _
        // Predicated region
        $region17: #{cnn_dropout_forward.3} parent=11 // pred_check
          %p178 = pneg %p110
        $region18: #{cnn_dropout_forward.3} parent=11 // pred_check_branch
          %180 = sbr.rel (%p178) target = $region20
        $region19: #{cnn_dropout_forward.3} parent=11 // pred_region
          _
        $region20: #{cnn_dropout_forward.3} parent=11 // pred_fallthru
          _
        // Predicated region
        $region21: #{cnn_dropout_forward.3} parent=11 // pred_check
          %p181 = pneg %p131
        $region22: #{cnn_dropout_forward.3} parent=11 // pred_check_branch
          %183 = sbr.rel (%p181) target = $region24
        $region23: #{cnn_dropout_forward.3} parent=11 // pred_region
          %s185 = ssub.s32 16, 16
          %186 = vsyncadd [#allocation7], %s185
          %s188 = sshll.u32 [#allocation8], 4
          %s189 = int_to_ptr.vmem [resolvable:$true] %s188
          %191 = dma.hbm_to_vmem [thread:$0]  %s4, 16, %s189, [#allocation7]
        $region24: #{cnn_dropout_forward.3} parent=11 // pred_fallthru
          _
      $region12: #{cnn_dropout_forward.3} parent=5 // pred_fallthru
        _
      %p192 = scmp.lt.s32.totalorder %s16, 4
      // Predicated region
      $region25: #{cnn_dropout_forward.3} parent=5 // pred_check
        %p193 = pneg %p192
      $region26: #{cnn_dropout_forward.3} parent=5 // pred_check_branch
        %195 = sbr.rel (%p193) target = $region28
      $region27: #{cnn_dropout_forward.3} parent=5 // pred_region
        // Predicated region
        $region29: #{cnn_dropout_forward.3} parent=27 // pred_check
          %p196 = pneg %p36
        $region30: #{cnn_dropout_forward.3} parent=27 // pred_check_branch
          %198 = sbr.rel (%p196) target = $region32
        $region31: #{cnn_dropout_forward.3} parent=27 // pred_region
          %s199 = smul.u32 18, %s16
          %p200 = scmp.lt.s32.totalorder %s199, 71
          %s201 = scalar_select %p200, %s199, 71
          %s202 = scalar_lea.vmem %s0, %s201
          %s203 = smul.u32 18, %s16
        $region32: #{cnn_dropout_forward.3} parent=27 // pred_fallthru
          _
        // Predicated region
        $region33: #{cnn_dropout_forward.3} parent=27 // pred_check
          %p204 = pneg %p62
        $region34: #{cnn_dropout_forward.3} parent=27 // pred_check_branch
          %206 = sbr.rel (%p204) target = $region36
        $region35: #{cnn_dropout_forward.3} parent=27 // pred_region
          %s207 = sand.u32 %s52, 1
          %s208 = scalar_lea.sflag [#allocation4], %s207
          %s209 = sand.u32 %s52, 1
          %s210 = smul.addr %s209, 1152
          %s211 = scalar_lea.vmem [#allocation3], %s210
          %s212 = smul.u32 288, %s16
          %s214 = ssub.s32 18432, 18432
          %215 = vsyncadd %s208, %s214
          %s216 = smul.addr %s212, 64
          %s217 = scalar_lea.hbm %s1, %s216
          %s218 = sshll.u32 %s211, 4
          %s219 = int_to_ptr.vmem [resolvable:$true] %s218
          %224 = dma.hbm_to_vmem [thread:$0]  %s217, 18432, %s219, %s208, 64, 64, 4
        $region36: #{cnn_dropout_forward.3} parent=27 // pred_fallthru
          _
      $region28: #{cnn_dropout_forward.3} parent=5 // pred_fallthru
        _
      %p225 = scmp.le.s32.totalorder 1, %s16
      %p226 = scmp.lt.s32.totalorder %s16, 5
      %p227 = pnand %p225, %p226
      %p228 = pneg %p227
      // Predicated region
      $region37: #{cnn_dropout_forward.3} parent=5 // pred_check
        _
      $region38: #{cnn_dropout_forward.3} parent=5 // pred_check_branch
        %230 = sbr.rel (%p227) target = $region40
      $region39: #{cnn_dropout_forward.3} parent=5 // pred_region
        %s231 = ssub.s32 %s16, 1
        %s232 = sand.u32 %s55, 1
        %s233 = scalar_lea.sflag [#allocation4], %s232
        %s234 = sand.u32 %s55, 1
        %s235 = smul.addr %s234, 1152
        %s236 = scalar_lea.vmem [#allocation3], %s235
        // Predicated region
        $region41: #{cnn_dropout_forward.3} parent=39 // pred_check
          %p237 = pneg %p68
        $region42: #{cnn_dropout_forward.3} parent=39 // pred_check_branch
          %239 = sbr.rel (%p237) target = $region44
        $region43: #{cnn_dropout_forward.3} parent=39 // pred_region
          %240 = dma.done %s233, 18432
        $region44: #{cnn_dropout_forward.3} parent=39 // pred_fallthru
          _
        // Predicated region
        $region45: #{cnn_dropout_forward.3} parent=39 // pred_check
          %p241 = pneg %p89
        $region46: #{cnn_dropout_forward.3} parent=39 // pred_check_branch
          %243 = sbr.rel (%p241) target = $region48
        $region47: #{cnn_dropout_forward.3} parent=39 // pred_region
          %244 = dma.done [#allocation7], 16
        $region48: #{cnn_dropout_forward.3} parent=39 // pred_fallthru
          _
        // Predicated region
        $region49: #{cnn_dropout_forward.3} parent=39 // pred_check
          %p245 = pneg %p131
        $region50: #{cnn_dropout_forward.3} parent=39 // pred_check_branch
          %247 = sbr.rel (%p245) target = $region52
        $region51: #{cnn_dropout_forward.3} parent=39 // pred_region
          %248 = dma.done [#allocation7], 16
        $region52: #{cnn_dropout_forward.3} parent=39 // pred_fallthru
          _
        %s249 = smul.u32 18, %s21
        %p250 = scmp.lt.s32.totalorder %s249, 71
        %s251 = scalar_select %p250, %s249, 71
        %s252 = scalar_lea.vmem %s0, %s251
        %p253 = pneg %p42
        %p254 = pneg %p39
        %s255 = sand.u32 %s55, 1
        %s256 = scalar_lea.sflag [#allocation4], %s255
        %s257 = sand.u32 %s55, 1
        %s258 = smul.addr %s257, 1152
        %s259 = scalar_lea.vmem [#allocation3], %s258
        %p260 = pneg %p68
        %p261 = pneg %p65
        %p262 = pneg %p89
        %p263 = pneg %p86
        %p264 = pneg %p110
        %p265 = pneg %p107
        %p266 = pneg %p131
        %p267 = pneg %p128
        %p268 = pneg %p152
        %p269 = pneg %p149
        %s270 = smul.u32 18, %s21
        %p271 = scmp.lt.s32.totalorder %s270, 71
        %s272 = scalar_select %p271, %s270, 71
        %s273 = scalar_lea.vmem %s0, %s272
        %s274 = smul.u32 18, %s21
        %s275 = smul.u32 288, %s21
        %p277 = scmp.eq.s32.totalorder %s21, 0
        // Predicated region
        $region53: #{cnn_dropout_forward.3} parent=39 // pred_check
          %p278 = pneg %p277
        $region54: #{cnn_dropout_forward.3} parent=39 // pred_check_branch
          %280 = sbr.rel (%p278) target = $region56
        $region55: #{cnn_dropout_forward.3} parent=39 // pred_region
          %281 = vst [vmem:[#allocation2] sm:$0x3] 0.0
        $region56: #{cnn_dropout_forward.3} parent=39 // pred_fallthru
          _
        %v282 = vld [vmem:[#allocation2] sm:$0x3]
        %v283 = vld [vmem:[%s273] sm:$0xff]
        %v284 = vld [vmem:[%s273 + $0x8] sm:$0xff]
        %v285 = vld [vmem:[%s273 + $0x10] sm:$0x3]
        %v286 = vld [vmem:[%s236] sm:$0xf]
        %v287 = vld [vmem:[%s236 + $0x4] sm:$0xf]
        %v288 = vld [vmem:[%s236 + $0x8] sm:$0xf]
        %v289 = vld [vmem:[%s236 + $0xc] sm:$0xf]
        %v290 = vld [vmem:[%s236 + $0x10] sm:$0xf]
        %v291 = vld [vmem:[%s236 + $0x14] sm:$0xf]
        %v292 = vld [vmem:[%s236 + $0x18] sm:$0xf]
        %v293 = vld [vmem:[%s236 + $0x1c] sm:$0xf]
        %v294 = vld [vmem:[%s236 + $0x20] sm:$0xf]
        %v295 = vld [vmem:[%s236 + $0x24] sm:$0xf]
        %v296 = vld [vmem:[%s236 + $0x28] sm:$0xf]
        %v297 = vld [vmem:[%s236 + $0x2c] sm:$0xf]
        %v298 = vld [vmem:[%s236 + $0x30] sm:$0xf]
        %v299 = vld [vmem:[%s236 + $0x34] sm:$0xf]
        %v300 = vld [vmem:[%s236 + $0x38] sm:$0xf]
        %v301 = vld [vmem:[%s236 + $0x3c] sm:$0xf]
        %v302 = vld [vmem:[%s236 + $0x40] sm:$0xf]
        %v303 = vld [vmem:[%s236 + $0x44] sm:$0xf]
        %v304 = vld [vmem:[%s236 + $0x48] sm:$0xf]
        %v305 = vld [vmem:[%s236 + $0x4c] sm:$0xf]
        %v306 = vld [vmem:[%s236 + $0x50] sm:$0xf]
        %v307 = vld [vmem:[%s236 + $0x54] sm:$0xf]
        %v308 = vld [vmem:[%s236 + $0x58] sm:$0xf]
        %v309 = vld [vmem:[%s236 + $0x5c] sm:$0xf]
        %v310 = vld [vmem:[%s236 + $0x60] sm:$0xf]
        %v311 = vld [vmem:[%s236 + $0x64] sm:$0xf]
        %v312 = vld [vmem:[%s236 + $0x68] sm:$0xf]
        %v313 = vld [vmem:[%s236 + $0x6c] sm:$0xf]
        %v314 = vld [vmem:[%s236 + $0x70] sm:$0xf]
        %v315 = vld [vmem:[%s236 + $0x74] sm:$0xf]
        %v316 = vld [vmem:[%s236 + $0x78] sm:$0xf]
        %v317 = vld [vmem:[%s236 + $0x7c] sm:$0xf]
        %v318 = vld [vmem:[%s236 + $0x80] sm:$0xf]
        %v319 = vld [vmem:[%s236 + $0x84] sm:$0xf]
        %v320 = vld [vmem:[%s236 + $0x88] sm:$0xf]
        %v321 = vld [vmem:[%s236 + $0x8c] sm:$0xf]
        %v322 = vld [vmem:[%s236 + $0x90] sm:$0xf]
        %v323 = vld [vmem:[%s236 + $0x94] sm:$0xf]
        %v324 = vld [vmem:[%s236 + $0x98] sm:$0xf]
        %v325 = vld [vmem:[%s236 + $0x9c] sm:$0xf]
        %v326 = vld [vmem:[%s236 + $0xa0] sm:$0xf]
        %v327 = vld [vmem:[%s236 + $0xa4] sm:$0xf]
        %v328 = vld [vmem:[%s236 + $0xa8] sm:$0xf]
        %v329 = vld [vmem:[%s236 + $0xac] sm:$0xf]
        %v330 = vld [vmem:[%s236 + $0xb0] sm:$0xf]
        %v331 = vld [vmem:[%s236 + $0xb4] sm:$0xf]
        %v332 = vld [vmem:[%s236 + $0xb8] sm:$0xf]
        %v333 = vld [vmem:[%s236 + $0xbc] sm:$0xf]
        %v334 = vld [vmem:[%s236 + $0xc0] sm:$0xf]
        %v335 = vld [vmem:[%s236 + $0xc4] sm:$0xf]
        %v336 = vld [vmem:[%s236 + $0xc8] sm:$0xf]
        %v337 = vld [vmem:[%s236 + $0xcc] sm:$0xf]
        %v338 = vld [vmem:[%s236 + $0xd0] sm:$0xf]
        %v339 = vld [vmem:[%s236 + $0xd4] sm:$0xf]
        %v340 = vld [vmem:[%s236 + $0xd8] sm:$0xf]
        %v341 = vld [vmem:[%s236 + $0xdc] sm:$0xf]
        %v342 = vld [vmem:[%s236 + $0xe0] sm:$0xf]
        %v343 = vld [vmem:[%s236 + $0xe4] sm:$0xf]
        %v344 = vld [vmem:[%s236 + $0xe8] sm:$0xf]
        %v345 = vld [vmem:[%s236 + $0xec] sm:$0xf]
        %v346 = vld [vmem:[%s236 + $0xf0] sm:$0xf]
        %v347 = vld [vmem:[%s236 + $0xf4] sm:$0xf]
        %v348 = vld [vmem:[%s236 + $0xf8] sm:$0xf]
        %v349 = vld [vmem:[%s236 + $0xfc] sm:$0xf]
        %v350 = vld [vmem:[%s236 + $0x100] sm:$0xf]
        %v351 = vld [vmem:[%s236 + $0x104] sm:$0xf]
        %v352 = vld [vmem:[%s236 + $0x108] sm:$0xf]
        %v353 = vld [vmem:[%s236 + $0x10c] sm:$0xf]
        %v354 = vld [vmem:[%s236 + $0x110] sm:$0xf]
        %v355 = vld [vmem:[%s236 + $0x114] sm:$0xf]
        %v356 = vld [vmem:[%s236 + $0x118] sm:$0xf]
        %v357 = vld [vmem:[%s236 + $0x11c] sm:$0xf]
        %v358 = vld [vmem:[%s236 + $0x120] sm:$0xf]
        %v359 = vld [vmem:[%s236 + $0x124] sm:$0xf]
        %v360 = vld [vmem:[%s236 + $0x128] sm:$0xf]
        %v361 = vld [vmem:[%s236 + $0x12c] sm:$0xf]
        %v362 = vld [vmem:[%s236 + $0x130] sm:$0xf]
        %v363 = vld [vmem:[%s236 + $0x134] sm:$0xf]
        %v364 = vld [vmem:[%s236 + $0x138] sm:$0xf]
        %v365 = vld [vmem:[%s236 + $0x13c] sm:$0xf]
        %v366 = vld [vmem:[%s236 + $0x140] sm:$0xf]
        %v367 = vld [vmem:[%s236 + $0x144] sm:$0xf]
        %v368 = vld [vmem:[%s236 + $0x148] sm:$0xf]
        %v369 = vld [vmem:[%s236 + $0x14c] sm:$0xf]
        %v370 = vld [vmem:[%s236 + $0x150] sm:$0xf]
        %v371 = vld [vmem:[%s236 + $0x154] sm:$0xf]
        %v372 = vld [vmem:[%s236 + $0x158] sm:$0xf]
        %v373 = vld [vmem:[%s236 + $0x15c] sm:$0xf]
        %v374 = vld [vmem:[%s236 + $0x160] sm:$0xf]
        %v375 = vld [vmem:[%s236 + $0x164] sm:$0xf]
        %v376 = vld [vmem:[%s236 + $0x168] sm:$0xf]
        %v377 = vld [vmem:[%s236 + $0x16c] sm:$0xf]
        %v378 = vld [vmem:[%s236 + $0x170] sm:$0xf]
        %v379 = vld [vmem:[%s236 + $0x174] sm:$0xf]
        %v380 = vld [vmem:[%s236 + $0x178] sm:$0xf]
        %v381 = vld [vmem:[%s236 + $0x17c] sm:$0xf]
        %v382 = vld [vmem:[%s236 + $0x180] sm:$0xf]
        %v383 = vld [vmem:[%s236 + $0x184] sm:$0xf]
        %v384 = vld [vmem:[%s236 + $0x188] sm:$0xf]
        %v385 = vld [vmem:[%s236 + $0x18c] sm:$0xf]
        %v386 = vld [vmem:[%s236 + $0x190] sm:$0xf]
        %v387 = vld [vmem:[%s236 + $0x194] sm:$0xf]
        %v388 = vld [vmem:[%s236 + $0x198] sm:$0xf]
        %v389 = vld [vmem:[%s236 + $0x19c] sm:$0xf]
        %v390 = vld [vmem:[%s236 + $0x1a0] sm:$0xf]
        %v391 = vld [vmem:[%s236 + $0x1a4] sm:$0xf]
        %v392 = vld [vmem:[%s236 + $0x1a8] sm:$0xf]
        %v393 = vld [vmem:[%s236 + $0x1ac] sm:$0xf]
        %v394 = vld [vmem:[%s236 + $0x1b0] sm:$0xf]
        %v395 = vld [vmem:[%s236 + $0x1b4] sm:$0xf]
        %v396 = vld [vmem:[%s236 + $0x1b8] sm:$0xf]
        %v397 = vld [vmem:[%s236 + $0x1bc] sm:$0xf]
        %v398 = vld [vmem:[%s236 + $0x1c0] sm:$0xf]
        %v399 = vld [vmem:[%s236 + $0x1c4] sm:$0xf]
        %v400 = vld [vmem:[%s236 + $0x1c8] sm:$0xf]
        %v401 = vld [vmem:[%s236 + $0x1cc] sm:$0xf]
        %v402 = vld [vmem:[%s236 + $0x1d0] sm:$0xf]
        %v403 = vld [vmem:[%s236 + $0x1d4] sm:$0xf]
        %v404 = vld [vmem:[%s236 + $0x1d8] sm:$0xf]
        %v405 = vld [vmem:[%s236 + $0x1dc] sm:$0xf]
        %v406 = vld [vmem:[%s236 + $0x1e0] sm:$0xf]
        %v407 = vld [vmem:[%s236 + $0x1e4] sm:$0xf]
        %v408 = vld [vmem:[%s236 + $0x1e8] sm:$0xf]
        %v409 = vld [vmem:[%s236 + $0x1ec] sm:$0xf]
        %v410 = vld [vmem:[%s236 + $0x1f0] sm:$0xf]
        %v411 = vld [vmem:[%s236 + $0x1f4] sm:$0xf]
        %v412 = vld [vmem:[%s236 + $0x1f8] sm:$0xf]
        %v413 = vld [vmem:[%s236 + $0x1fc] sm:$0xf]
        %v414 = vld [vmem:[%s236 + $0x200] sm:$0xf]
        %v415 = vld [vmem:[%s236 + $0x204] sm:$0xf]
        %v416 = vld [vmem:[%s236 + $0x208] sm:$0xf]
        %v417 = vld [vmem:[%s236 + $0x20c] sm:$0xf]
        %v418 = vld [vmem:[%s236 + $0x210] sm:$0xf]
        %v419 = vld [vmem:[%s236 + $0x214] sm:$0xf]
        %v420 = vld [vmem:[%s236 + $0x218] sm:$0xf]
        %v421 = vld [vmem:[%s236 + $0x21c] sm:$0xf]
        %v422 = vld [vmem:[%s236 + $0x220] sm:$0xf]
        %v423 = vld [vmem:[%s236 + $0x224] sm:$0xf]
        %v424 = vld [vmem:[%s236 + $0x228] sm:$0xf]
        %v425 = vld [vmem:[%s236 + $0x22c] sm:$0xf]
        %v426 = vld [vmem:[%s236 + $0x230] sm:$0xf]
        %v427 = vld [vmem:[%s236 + $0x234] sm:$0xf]
        %v428 = vld [vmem:[%s236 + $0x238] sm:$0xf]
        %v429 = vld [vmem:[%s236 + $0x23c] sm:$0xf]
        %v430 = vld [vmem:[%s236 + $0x240] sm:$0xf]
        %v431 = vld [vmem:[%s236 + $0x244] sm:$0xf]
        %v432 = vld [vmem:[%s236 + $0x248] sm:$0xf]
        %v433 = vld [vmem:[%s236 + $0x24c] sm:$0xf]
        %v434 = vld [vmem:[%s236 + $0x250] sm:$0xf]
        %v435 = vld [vmem:[%s236 + $0x254] sm:$0xf]
        %v436 = vld [vmem:[%s236 + $0x258] sm:$0xf]
        %v437 = vld [vmem:[%s236 + $0x25c] sm:$0xf]
        %v438 = vld [vmem:[%s236 + $0x260] sm:$0xf]
        %v439 = vld [vmem:[%s236 + $0x264] sm:$0xf]
        %v440 = vld [vmem:[%s236 + $0x268] sm:$0xf]
        %v441 = vld [vmem:[%s236 + $0x26c] sm:$0xf]
        %v442 = vld [vmem:[%s236 + $0x270] sm:$0xf]
        %v443 = vld [vmem:[%s236 + $0x274] sm:$0xf]
        %v444 = vld [vmem:[%s236 + $0x278] sm:$0xf]
        %v445 = vld [vmem:[%s236 + $0x27c] sm:$0xf]
        %v446 = vld [vmem:[%s236 + $0x280] sm:$0xf]
        %v447 = vld [vmem:[%s236 + $0x284] sm:$0xf]
        %v448 = vld [vmem:[%s236 + $0x288] sm:$0xf]
        %v449 = vld [vmem:[%s236 + $0x28c] sm:$0xf]
        %v450 = vld [vmem:[%s236 + $0x290] sm:$0xf]
        %v451 = vld [vmem:[%s236 + $0x294] sm:$0xf]
        %v452 = vld [vmem:[%s236 + $0x298] sm:$0xf]
        %v453 = vld [vmem:[%s236 + $0x29c] sm:$0xf]
        %v454 = vld [vmem:[%s236 + $0x2a0] sm:$0xf]
        %v455 = vld [vmem:[%s236 + $0x2a4] sm:$0xf]
        %v456 = vld [vmem:[%s236 + $0x2a8] sm:$0xf]
        %v457 = vld [vmem:[%s236 + $0x2ac] sm:$0xf]
        %v458 = vld [vmem:[%s236 + $0x2b0] sm:$0xf]
        %v459 = vld [vmem:[%s236 + $0x2b4] sm:$0xf]
        %v460 = vld [vmem:[%s236 + $0x2b8] sm:$0xf]
        %v461 = vld [vmem:[%s236 + $0x2bc] sm:$0xf]
        %v462 = vld [vmem:[%s236 + $0x2c0] sm:$0xf]
        %v463 = vld [vmem:[%s236 + $0x2c4] sm:$0xf]
        %v464 = vld [vmem:[%s236 + $0x2c8] sm:$0xf]
        %v465 = vld [vmem:[%s236 + $0x2cc] sm:$0xf]
        %v466 = vld [vmem:[%s236 + $0x2d0] sm:$0xf]
        %v467 = vld [vmem:[%s236 + $0x2d4] sm:$0xf]
        %v468 = vld [vmem:[%s236 + $0x2d8] sm:$0xf]
        %v469 = vld [vmem:[%s236 + $0x2dc] sm:$0xf]
        %v470 = vld [vmem:[%s236 + $0x2e0] sm:$0xf]
        %v471 = vld [vmem:[%s236 + $0x2e4] sm:$0xf]
        %v472 = vld [vmem:[%s236 + $0x2e8] sm:$0xf]
        %v473 = vld [vmem:[%s236 + $0x2ec] sm:$0xf]
        %v474 = vld [vmem:[%s236 + $0x2f0] sm:$0xf]
        %v475 = vld [vmem:[%s236 + $0x2f4] sm:$0xf]
        %v476 = vld [vmem:[%s236 + $0x2f8] sm:$0xf]
        %v477 = vld [vmem:[%s236 + $0x2fc] sm:$0xf]
        %v478 = vld [vmem:[%s236 + $0x300] sm:$0xf]
        %v479 = vld [vmem:[%s236 + $0x304] sm:$0xf]
        %v480 = vld [vmem:[%s236 + $0x308] sm:$0xf]
        %v481 = vld [vmem:[%s236 + $0x30c] sm:$0xf]
        %v482 = vld [vmem:[%s236 + $0x310] sm:$0xf]
        %v483 = vld [vmem:[%s236 + $0x314] sm:$0xf]
        %v484 = vld [vmem:[%s236 + $0x318] sm:$0xf]
        %v485 = vld [vmem:[%s236 + $0x31c] sm:$0xf]
        %v486 = vld [vmem:[%s236 + $0x320] sm:$0xf]
        %v487 = vld [vmem:[%s236 + $0x324] sm:$0xf]
        %v488 = vld [vmem:[%s236 + $0x328] sm:$0xf]
        %v489 = vld [vmem:[%s236 + $0x32c] sm:$0xf]
        %v490 = vld [vmem:[%s236 + $0x330] sm:$0xf]
        %v491 = vld [vmem:[%s236 + $0x334] sm:$0xf]
        %v492 = vld [vmem:[%s236 + $0x338] sm:$0xf]
        %v493 = vld [vmem:[%s236 + $0x33c] sm:$0xf]
        %v494 = vld [vmem:[%s236 + $0x340] sm:$0xf]
        %v495 = vld [vmem:[%s236 + $0x344] sm:$0xf]
        %v496 = vld [vmem:[%s236 + $0x348] sm:$0xf]
        %v497 = vld [vmem:[%s236 + $0x34c] sm:$0xf]
        %v498 = vld [vmem:[%s236 + $0x350] sm:$0xf]
        %v499 = vld [vmem:[%s236 + $0x354] sm:$0xf]
        %v500 = vld [vmem:[%s236 + $0x358] sm:$0xf]
        %v501 = vld [vmem:[%s236 + $0x35c] sm:$0xf]
        %v502 = vld [vmem:[%s236 + $0x360] sm:$0xf]
        %v503 = vld [vmem:[%s236 + $0x364] sm:$0xf]
        %v504 = vld [vmem:[%s236 + $0x368] sm:$0xf]
        %v505 = vld [vmem:[%s236 + $0x36c] sm:$0xf]
        %v506 = vld [vmem:[%s236 + $0x370] sm:$0xf]
        %v507 = vld [vmem:[%s236 + $0x374] sm:$0xf]
        %v508 = vld [vmem:[%s236 + $0x378] sm:$0xf]
        %v509 = vld [vmem:[%s236 + $0x37c] sm:$0xf]
        %v510 = vld [vmem:[%s236 + $0x380] sm:$0xf]
        %v511 = vld [vmem:[%s236 + $0x384] sm:$0xf]
        %v512 = vld [vmem:[%s236 + $0x388] sm:$0xf]
        %v513 = vld [vmem:[%s236 + $0x38c] sm:$0xf]
        %v514 = vld [vmem:[%s236 + $0x390] sm:$0xf]
        %v515 = vld [vmem:[%s236 + $0x394] sm:$0xf]
        %v516 = vld [vmem:[%s236 + $0x398] sm:$0xf]
        %v517 = vld [vmem:[%s236 + $0x39c] sm:$0xf]
        %v518 = vld [vmem:[%s236 + $0x3a0] sm:$0xf]
        %v519 = vld [vmem:[%s236 + $0x3a4] sm:$0xf]
        %v520 = vld [vmem:[%s236 + $0x3a8] sm:$0xf]
        %v521 = vld [vmem:[%s236 + $0x3ac] sm:$0xf]
        %v522 = vld [vmem:[%s236 + $0x3b0] sm:$0xf]
        %v523 = vld [vmem:[%s236 + $0x3b4] sm:$0xf]
        %v524 = vld [vmem:[%s236 + $0x3b8] sm:$0xf]
        %v525 = vld [vmem:[%s236 + $0x3bc] sm:$0xf]
        %v526 = vld [vmem:[%s236 + $0x3c0] sm:$0xf]
        %v527 = vld [vmem:[%s236 + $0x3c4] sm:$0xf]
        %v528 = vld [vmem:[%s236 + $0x3c8] sm:$0xf]
        %v529 = vld [vmem:[%s236 + $0x3cc] sm:$0xf]
        %v530 = vld [vmem:[%s236 + $0x3d0] sm:$0xf]
        %v531 = vld [vmem:[%s236 + $0x3d4] sm:$0xf]
        %v532 = vld [vmem:[%s236 + $0x3d8] sm:$0xf]
        %v533 = vld [vmem:[%s236 + $0x3dc] sm:$0xf]
        %v534 = vld [vmem:[%s236 + $0x3e0] sm:$0xf]
        %v535 = vld [vmem:[%s236 + $0x3e4] sm:$0xf]
        %v536 = vld [vmem:[%s236 + $0x3e8] sm:$0xf]
        %v537 = vld [vmem:[%s236 + $0x3ec] sm:$0xf]
        %v538 = vld [vmem:[%s236 + $0x3f0] sm:$0xf]
        %v539 = vld [vmem:[%s236 + $0x3f4] sm:$0xf]
        %v540 = vld [vmem:[%s236 + $0x3f8] sm:$0xf]
        %v541 = vld [vmem:[%s236 + $0x3fc] sm:$0xf]
        %v542 = vld [vmem:[%s236 + $0x400] sm:$0xf]
        %v543 = vld [vmem:[%s236 + $0x404] sm:$0xf]
        %v544 = vld [vmem:[%s236 + $0x408] sm:$0xf]
        %v545 = vld [vmem:[%s236 + $0x40c] sm:$0xf]
        %v546 = vld [vmem:[%s236 + $0x410] sm:$0xf]
        %v547 = vld [vmem:[%s236 + $0x414] sm:$0xf]
        %v548 = vld [vmem:[%s236 + $0x418] sm:$0xf]
        %v549 = vld [vmem:[%s236 + $0x41c] sm:$0xf]
        %v550 = vld [vmem:[%s236 + $0x420] sm:$0xf]
        %v551 = vld [vmem:[%s236 + $0x424] sm:$0xf]
        %v552 = vld [vmem:[%s236 + $0x428] sm:$0xf]
        %v553 = vld [vmem:[%s236 + $0x42c] sm:$0xf]
        %v554 = vld [vmem:[%s236 + $0x430] sm:$0xf]
        %v555 = vld [vmem:[%s236 + $0x434] sm:$0xf]
        %v556 = vld [vmem:[%s236 + $0x438] sm:$0xf]
        %v557 = vld [vmem:[%s236 + $0x43c] sm:$0xf]
        %v558 = vld [vmem:[%s236 + $0x440] sm:$0xf]
        %v559 = vld [vmem:[%s236 + $0x444] sm:$0xf]
        %v560 = vld [vmem:[%s236 + $0x448] sm:$0xf]
        %v561 = vld [vmem:[%s236 + $0x44c] sm:$0xf]
        %v562 = vld [vmem:[%s236 + $0x450] sm:$0xf]
        %v563 = vld [vmem:[%s236 + $0x454] sm:$0xf]
        %v564 = vld [vmem:[%s236 + $0x458] sm:$0xf]
        %v565 = vld [vmem:[%s236 + $0x45c] sm:$0xf]
        %v566 = vld [vmem:[%s236 + $0x460] sm:$0xf]
        %v567 = vld [vmem:[%s236 + $0x464] sm:$0xf]
        %v568 = vld [vmem:[%s236 + $0x468] sm:$0xf]
        %v569 = vld [vmem:[%s236 + $0x46c] sm:$0xf]
        %v570 = vld [vmem:[%s236 + $0x470] sm:$0xf]
        %v571 = vld [vmem:[%s236 + $0x474] sm:$0xf]
        %v572 = vld [vmem:[%s236 + $0x478] sm:$0xf]
        %v573 = vld [vmem:[%s236 + $0x47c] sm:$0xf]
        %v577 = vcombine.high %v283, %v283
        %v579 = vunpack.c.l.s4 1966171168
        %v580 = vunpack.c.0.s8 %v579
        %v581 = vlaneseq
        %v582 = vshrl.u32 %v581, 7
        %v583 = vsub.s32 %v580, %v582
        %v584 = vrot.slane %v283, %v583
        %v586 = vunpack.c.l.s4 1966171168
        %v587 = vunpack.c.0.s8 %v586
        %v588 = vlaneseq
        %v589 = vshrl.u32 %v588, 7
        %v590 = vsub.s32 %v587, %v589
        %v591 = vrot.slane %v577, %v590
        %v592 = vcombine.high %v584, %v584
        %v593 = vcombine.high %v591, %v591
        %v595 = vunpack.c.l.s4 1966171168
        %v596 = vunpack.c.0.s8 %v595
        %v597 = vlaneseq
        %v598 = vshrl.u32 %v597, 7
        %v599 = vsub.s32 %v596, %v598
        %v600 = vrot.slane %v584, %v599
        %v602 = vunpack.c.l.s4 1966171168
        %v603 = vunpack.c.0.s8 %v602
        %v604 = vlaneseq
        %v605 = vshrl.u32 %v604, 7
        %v606 = vsub.s32 %v603, %v605
        %v607 = vrot.slane %v591, %v606
        %v609 = vunpack.c.l.s4 1966171168
        %v610 = vunpack.c.0.s8 %v609
        %v611 = vlaneseq
        %v612 = vshrl.u32 %v611, 7
        %v613 = vsub.s32 %v610, %v612
        %v614 = vrot.slane %v592, %v613
        %v616 = vunpack.c.l.s4 1966171168
        %v617 = vunpack.c.0.s8 %v616
        %v618 = vlaneseq
        %v619 = vshrl.u32 %v618, 7
        %v620 = vsub.s32 %v617, %v619
        %v621 = vrot.slane %v593, %v620
        %v622 = vcombine.high %v600, %v600
        %v623 = vcombine.high %v607, %v607
        %v624 = vcombine.high %v614, %v614
        %v625 = vcombine.high %v621, %v621
        %v626 = vcombine.high %v284, %v284
        %v628 = vunpack.c.l.s4 1966171168
        %v629 = vunpack.c.0.s8 %v628
        %v630 = vlaneseq
        %v631 = vshrl.u32 %v630, 7
        %v632 = vsub.s32 %v629, %v631
        %v633 = vrot.slane %v284, %v632
        %v635 = vunpack.c.l.s4 1966171168
        %v636 = vunpack.c.0.s8 %v635
        %v637 = vlaneseq
        %v638 = vshrl.u32 %v637, 7
        %v639 = vsub.s32 %v636, %v638
        %v640 = vrot.slane %v626, %v639
        %v641 = vcombine.high %v633, %v633
        %v642 = vcombine.high %v640, %v640
        %v644 = vunpack.c.l.s4 1966171168
        %v645 = vunpack.c.0.s8 %v644
        %v646 = vlaneseq
        %v647 = vshrl.u32 %v646, 7
        %v648 = vsub.s32 %v645, %v647
        %v649 = vrot.slane %v633, %v648
        %v651 = vunpack.c.l.s4 1966171168
        %v652 = vunpack.c.0.s8 %v651
        %v653 = vlaneseq
        %v654 = vshrl.u32 %v653, 7
        %v655 = vsub.s32 %v652, %v654
        %v656 = vrot.slane %v640, %v655
        %v658 = vunpack.c.l.s4 1966171168
        %v659 = vunpack.c.0.s8 %v658
        %v660 = vlaneseq
        %v661 = vshrl.u32 %v660, 7
        %v662 = vsub.s32 %v659, %v661
        %v663 = vrot.slane %v641, %v662
        %v665 = vunpack.c.l.s4 1966171168
        %v666 = vunpack.c.0.s8 %v665
        %v667 = vlaneseq
        %v668 = vshrl.u32 %v667, 7
        %v669 = vsub.s32 %v666, %v668
        %v670 = vrot.slane %v642, %v669
        %v671 = vcombine.high %v649, %v649
        %v672 = vcombine.high %v656, %v656
        %v673 = vcombine.high %v663, %v663
        %v674 = vcombine.high %v670, %v670
        %v676 = vunpack.c.l.s4 1966171168
        %v677 = vunpack.c.0.s8 %v676
        %v678 = vlaneseq
        %v679 = vshrl.u32 %v678, 7
        %v680 = vsub.s32 %v677, %v679
        %v681 = vrot.slane %v285, %v680
        %v682 = vcombine.high %v681, %v681
        %v684 = vunpack.c.l.s4 1966171168
        %v685 = vunpack.c.0.s8 %v684
        %v686 = vlaneseq
        %v687 = vshrl.u32 %v686, 7
        %v688 = vsub.s32 %v685, %v687
        %v689 = vrot.slane %v681, %v688
        %v691 = vunpack.c.l.s4 1966171168
        %v692 = vunpack.c.0.s8 %v691
        %v693 = vlaneseq
        %v694 = vshrl.u32 %v693, 7
        %v695 = vsub.s32 %v692, %v694
        %v696 = vrot.slane %v682, %v695
        %v1003 = vunpack.c.l.b16 %v286
        %v1004 = vunpack.c.l.b16 %v287
        %v1005 = vunpack.c.l.b16 %v288
        %v1006 = vunpack.c.l.b16 %v289
        %v1007 = vunpack.c.l.b16 %v290
        %v1008 = vunpack.c.l.b16 %v291
        %v1009 = vunpack.c.l.b16 %v292
        %v1010 = vunpack.c.l.b16 %v293
        %v1011 = vunpack.c.l.b16 %v294
        %v1012 = vunpack.c.l.b16 %v295
        %v1013 = vunpack.c.l.b16 %v296
        %v1014 = vunpack.c.l.b16 %v297
        %v1015 = vunpack.c.l.b16 %v298
        %v1016 = vunpack.c.l.b16 %v299
        %v1017 = vunpack.c.l.b16 %v300
        %v1018 = vunpack.c.l.b16 %v301
        %v1019 = vunpack.c.l.b16 %v302
        %v1020 = vunpack.c.l.b16 %v303
        %v1021 = vunpack.c.l.b16 %v304
        %v1022 = vunpack.c.l.b16 %v305
        %v1023 = vunpack.c.l.b16 %v306
        %v1024 = vunpack.c.l.b16 %v307
        %v1025 = vunpack.c.l.b16 %v308
        %v1026 = vunpack.c.l.b16 %v309
        %v1027 = vunpack.c.l.b16 %v310
        %v1028 = vunpack.c.l.b16 %v311
        %v1029 = vunpack.c.l.b16 %v312
        %v1030 = vunpack.c.l.b16 %v313
        %v1031 = vunpack.c.l.b16 %v314
        %v1032 = vunpack.c.l.b16 %v315
        %v1033 = vunpack.c.l.b16 %v316
        %v1034 = vunpack.c.l.b16 %v317
        %v1035 = vunpack.c.l.b16 %v318
        %v1036 = vunpack.c.l.b16 %v319
        %v1037 = vunpack.c.l.b16 %v320
        %v1038 = vunpack.c.l.b16 %v321
        %v1039 = vunpack.c.l.b16 %v322
        %v1040 = vunpack.c.l.b16 %v323
        %v1041 = vunpack.c.l.b16 %v324
        %v1042 = vunpack.c.l.b16 %v325
        %v1043 = vunpack.c.l.b16 %v326
        %v1044 = vunpack.c.l.b16 %v327
        %v1045 = vunpack.c.l.b16 %v328
        %v1046 = vunpack.c.l.b16 %v329
        %v1047 = vunpack.c.l.b16 %v330
        %v1048 = vunpack.c.l.b16 %v331
        %v1049 = vunpack.c.l.b16 %v332
        %v1050 = vunpack.c.l.b16 %v333
        %v1051 = vunpack.c.l.b16 %v334
        %v1052 = vunpack.c.l.b16 %v335
        %v1053 = vunpack.c.l.b16 %v336
        %v1054 = vunpack.c.l.b16 %v337
        %v1055 = vunpack.c.l.b16 %v338
        %v1056 = vunpack.c.l.b16 %v339
        %v1057 = vunpack.c.l.b16 %v340
        %v1058 = vunpack.c.l.b16 %v341
        %v1059 = vunpack.c.l.b16 %v342
        %v1060 = vunpack.c.l.b16 %v343
        %v1061 = vunpack.c.l.b16 %v344
        %v1062 = vunpack.c.l.b16 %v345
        %v1063 = vunpack.c.l.b16 %v346
        %v1064 = vunpack.c.l.b16 %v347
        %v1065 = vunpack.c.l.b16 %v348
        %v1066 = vunpack.c.l.b16 %v349
        %v1067 = vunpack.c.l.b16 %v350
        %v1068 = vunpack.c.l.b16 %v351
        %v1069 = vunpack.c.l.b16 %v352
        %v1070 = vunpack.c.l.b16 %v353
        %v1071 = vunpack.c.l.b16 %v354
        %v1072 = vunpack.c.l.b16 %v355
        %v1073 = vunpack.c.l.b16 %v356
        %v1074 = vunpack.c.l.b16 %v357
        %v1075 = vunpack.c.l.b16 %v358
        %v1076 = vunpack.c.l.b16 %v359
        %v1077 = vunpack.c.l.b16 %v360
        %v1078 = vunpack.c.l.b16 %v361
        %v1079 = vunpack.c.l.b16 %v362
        %v1080 = vunpack.c.l.b16 %v363
        %v1081 = vunpack.c.l.b16 %v364
        %v1082 = vunpack.c.l.b16 %v365
        %v1083 = vunpack.c.l.b16 %v366
        %v1084 = vunpack.c.l.b16 %v367
        %v1085 = vunpack.c.l.b16 %v368
        %v1086 = vunpack.c.l.b16 %v369
        %v1087 = vunpack.c.l.b16 %v370
        %v1088 = vunpack.c.l.b16 %v371
        %v1089 = vunpack.c.l.b16 %v372
        %v1090 = vunpack.c.l.b16 %v373
        %v1091 = vunpack.c.l.b16 %v374
        %v1092 = vunpack.c.l.b16 %v375
        %v1093 = vunpack.c.l.b16 %v376
        %v1094 = vunpack.c.l.b16 %v377
        %v1095 = vunpack.c.l.b16 %v378
        %v1096 = vunpack.c.l.b16 %v379
        %v1097 = vunpack.c.l.b16 %v380
        %v1098 = vunpack.c.l.b16 %v381
        %v1099 = vunpack.c.l.b16 %v382
        %v1100 = vunpack.c.l.b16 %v383
        %v1101 = vunpack.c.l.b16 %v384
        %v1102 = vunpack.c.l.b16 %v385
        %v1103 = vunpack.c.l.b16 %v386
        %v1104 = vunpack.c.l.b16 %v387
        %v1105 = vunpack.c.l.b16 %v388
        %v1106 = vunpack.c.l.b16 %v389
        %v1107 = vunpack.c.l.b16 %v390
        %v1108 = vunpack.c.l.b16 %v391
        %v1109 = vunpack.c.l.b16 %v392
        %v1110 = vunpack.c.l.b16 %v393
        %v1111 = vunpack.c.l.b16 %v394
        %v1112 = vunpack.c.l.b16 %v395
        %v1113 = vunpack.c.l.b16 %v396
        %v1114 = vunpack.c.l.b16 %v397
        %v1115 = vunpack.c.l.b16 %v398
        %v1116 = vunpack.c.l.b16 %v399
        %v1117 = vunpack.c.l.b16 %v400
        %v1118 = vunpack.c.l.b16 %v401
        %v1119 = vunpack.c.l.b16 %v402
        %v1120 = vunpack.c.l.b16 %v403
        %v1121 = vunpack.c.l.b16 %v404
        %v1122 = vunpack.c.l.b16 %v405
        %v1123 = vunpack.c.l.b16 %v406
        %v1124 = vunpack.c.l.b16 %v407
        %v1125 = vunpack.c.l.b16 %v408
        %v1126 = vunpack.c.l.b16 %v409
        %v1127 = vunpack.c.l.b16 %v410
        %v1128 = vunpack.c.l.b16 %v411
        %v1129 = vunpack.c.l.b16 %v412
        %v1130 = vunpack.c.l.b16 %v413
        %v1131 = vunpack.c.l.b16 %v414
        %v1132 = vunpack.c.l.b16 %v415
        %v1133 = vunpack.c.l.b16 %v416
        %v1134 = vunpack.c.l.b16 %v417
        %v1135 = vunpack.c.l.b16 %v418
        %v1136 = vunpack.c.l.b16 %v419
        %v1137 = vunpack.c.l.b16 %v420
        %v1138 = vunpack.c.l.b16 %v421
        %v1139 = vunpack.c.l.b16 %v422
        %v1140 = vunpack.c.l.b16 %v423
        %v1141 = vunpack.c.l.b16 %v424
        %v1142 = vunpack.c.l.b16 %v425
        %v1143 = vunpack.c.l.b16 %v426
        %v1144 = vunpack.c.l.b16 %v427
        %v1145 = vunpack.c.l.b16 %v428
        %v1146 = vunpack.c.l.b16 %v429
        %v1147 = vunpack.c.l.b16 %v430
        %v1148 = vunpack.c.l.b16 %v431
        %v1149 = vunpack.c.l.b16 %v432
        %v1150 = vunpack.c.l.b16 %v433
        %v1151 = vunpack.c.l.b16 %v434
        %v1152 = vunpack.c.l.b16 %v435
        %v1153 = vunpack.c.l.b16 %v436
        %v1154 = vunpack.c.l.b16 %v437
        %v1155 = vunpack.c.l.b16 %v438
        %v1156 = vunpack.c.l.b16 %v439
        %v1157 = vunpack.c.l.b16 %v440
        %v1158 = vunpack.c.l.b16 %v441
        %v1159 = vunpack.c.l.b16 %v442
        %v1160 = vunpack.c.l.b16 %v443
        %v1161 = vunpack.c.l.b16 %v444
        %v1162 = vunpack.c.l.b16 %v445
        %v1163 = vunpack.c.l.b16 %v446
        %v1164 = vunpack.c.l.b16 %v447
        %v1165 = vunpack.c.l.b16 %v448
        %v1166 = vunpack.c.l.b16 %v449
        %v1167 = vunpack.c.l.b16 %v450
        %v1168 = vunpack.c.l.b16 %v451
        %v1169 = vunpack.c.l.b16 %v452
        %v1170 = vunpack.c.l.b16 %v453
        %v1171 = vunpack.c.l.b16 %v454
        %v1172 = vunpack.c.l.b16 %v455
        %v1173 = vunpack.c.l.b16 %v456
        %v1174 = vunpack.c.l.b16 %v457
        %v1175 = vunpack.c.l.b16 %v458
        %v1176 = vunpack.c.l.b16 %v459
        %v1177 = vunpack.c.l.b16 %v460
        %v1178 = vunpack.c.l.b16 %v461
        %v1179 = vunpack.c.l.b16 %v462
        %v1180 = vunpack.c.l.b16 %v463
        %v1181 = vunpack.c.l.b16 %v464
        %v1182 = vunpack.c.l.b16 %v465
        %v1183 = vunpack.c.l.b16 %v466
        %v1184 = vunpack.c.l.b16 %v467
        %v1185 = vunpack.c.l.b16 %v468
        %v1186 = vunpack.c.l.b16 %v469
        %v1187 = vunpack.c.l.b16 %v470
        %v1188 = vunpack.c.l.b16 %v471
        %v1189 = vunpack.c.l.b16 %v472
        %v1190 = vunpack.c.l.b16 %v473
        %v1191 = vunpack.c.l.b16 %v474
        %v1192 = vunpack.c.l.b16 %v475
        %v1193 = vunpack.c.l.b16 %v476
        %v1194 = vunpack.c.l.b16 %v477
        %v1195 = vunpack.c.l.b16 %v478
        %v1196 = vunpack.c.l.b16 %v479
        %v1197 = vunpack.c.l.b16 %v480
        %v1198 = vunpack.c.l.b16 %v481
        %v1199 = vunpack.c.l.b16 %v482
        %v1200 = vunpack.c.l.b16 %v483
        %v1201 = vunpack.c.l.b16 %v484
        %v1202 = vunpack.c.l.b16 %v485
        %v1203 = vunpack.c.l.b16 %v486
        %v1204 = vunpack.c.l.b16 %v487
        %v1205 = vunpack.c.l.b16 %v488
        %v1206 = vunpack.c.l.b16 %v489
        %v1207 = vunpack.c.l.b16 %v490
        %v1208 = vunpack.c.l.b16 %v491
        %v1209 = vunpack.c.l.b16 %v492
        %v1210 = vunpack.c.l.b16 %v493
        %v1211 = vunpack.c.l.b16 %v494
        %v1212 = vunpack.c.l.b16 %v495
        %v1213 = vunpack.c.l.b16 %v496
        %v1214 = vunpack.c.l.b16 %v497
        %v1215 = vunpack.c.l.b16 %v498
        %v1216 = vunpack.c.l.b16 %v499
        %v1217 = vunpack.c.l.b16 %v500
        %v1218 = vunpack.c.l.b16 %v501
        %v1219 = vunpack.c.l.b16 %v502
        %v1220 = vunpack.c.l.b16 %v503
        %v1221 = vunpack.c.l.b16 %v504
        %v1222 = vunpack.c.l.b16 %v505
        %v1223 = vunpack.c.l.b16 %v506
        %v1224 = vunpack.c.l.b16 %v507
        %v1225 = vunpack.c.l.b16 %v508
        %v1226 = vunpack.c.l.b16 %v509
        %v1227 = vunpack.c.l.b16 %v510
        %v1228 = vunpack.c.l.b16 %v511
        %v1229 = vunpack.c.l.b16 %v512
        %v1230 = vunpack.c.l.b16 %v513
        %v1231 = vunpack.c.l.b16 %v514
        %v1232 = vunpack.c.l.b16 %v515
        %v1233 = vunpack.c.l.b16 %v516
        %v1234 = vunpack.c.l.b16 %v517
        %v1235 = vunpack.c.l.b16 %v518
        %v1236 = vunpack.c.l.b16 %v519
        %v1237 = vunpack.c.l.b16 %v520
        %v1238 = vunpack.c.l.b16 %v521
        %v1239 = vunpack.c.l.b16 %v522
        %v1240 = vunpack.c.l.b16 %v523
        %v1241 = vunpack.c.l.b16 %v524
        %v1242 = vunpack.c.l.b16 %v525
        %v1243 = vunpack.c.l.b16 %v526
        %v1244 = vunpack.c.l.b16 %v527
        %v1245 = vunpack.c.l.b16 %v528
        %v1246 = vunpack.c.l.b16 %v529
        %v1247 = vunpack.c.l.b16 %v530
        %v1248 = vunpack.c.l.b16 %v531
        %v1249 = vunpack.c.l.b16 %v532
        %v1250 = vunpack.c.l.b16 %v533
        %v1251 = vunpack.c.l.b16 %v534
        %v1252 = vunpack.c.l.b16 %v535
        %v1253 = vunpack.c.l.b16 %v536
        %v1254 = vunpack.c.l.b16 %v537
        %v1255 = vunpack.c.l.b16 %v538
        %v1256 = vunpack.c.l.b16 %v539
        %v1257 = vunpack.c.l.b16 %v540
        %v1258 = vunpack.c.l.b16 %v541
        %v1259 = vunpack.c.l.b16 %v542
        %v1260 = vunpack.c.l.b16 %v543
        %v1261 = vunpack.c.l.b16 %v544
        %v1262 = vunpack.c.l.b16 %v545
        %v1263 = vunpack.c.l.b16 %v546
        %v1264 = vunpack.c.l.b16 %v547
        %v1265 = vunpack.c.l.b16 %v548
        %v1266 = vunpack.c.l.b16 %v549
        %v1267 = vunpack.c.l.b16 %v550
        %v1268 = vunpack.c.l.b16 %v551
        %v1269 = vunpack.c.l.b16 %v552
        %v1270 = vunpack.c.l.b16 %v553
        %v1271 = vunpack.c.l.b16 %v554
        %v1272 = vunpack.c.l.b16 %v555
        %v1273 = vunpack.c.l.b16 %v556
        %v1274 = vunpack.c.l.b16 %v557
        %v1275 = vunpack.c.l.b16 %v558
        %v1276 = vunpack.c.l.b16 %v559
        %v1277 = vunpack.c.l.b16 %v560
        %v1278 = vunpack.c.l.b16 %v561
        %v1279 = vunpack.c.l.b16 %v562
        %v1280 = vunpack.c.l.b16 %v563
        %v1281 = vunpack.c.l.b16 %v564
        %v1282 = vunpack.c.l.b16 %v565
        %v1283 = vunpack.c.l.b16 %v566
        %v1284 = vunpack.c.l.b16 %v567
        %v1285 = vunpack.c.l.b16 %v568
        %v1286 = vunpack.c.l.b16 %v569
        %v1287 = vunpack.c.l.b16 %v570
        %v1288 = vunpack.c.l.b16 %v571
        %v1289 = vunpack.c.l.b16 %v572
        %v1290 = vunpack.c.l.b16 %v573
        %v1291 = vpack.c.b16 %v1004, %v1003
        %v1292 = vpack.c.b16 %v1006, %v1005
        %v1293 = vpack.c.b16 %v1008, %v1007
        %v1294 = vpack.c.b16 %v1010, %v1009
        %v1295 = vpack.c.b16 %v1012, %v1011
        %v1296 = vpack.c.b16 %v1014, %v1013
        %v1297 = vpack.c.b16 %v1016, %v1015
        %v1298 = vpack.c.b16 %v1018, %v1017
        %v1299 = vpack.c.b16 %v1020, %v1019
        %v1300 = vpack.c.b16 %v1022, %v1021
        %v1301 = vpack.c.b16 %v1024, %v1023
        %v1302 = vpack.c.b16 %v1026, %v1025
        %v1303 = vpack.c.b16 %v1028, %v1027
        %v1304 = vpack.c.b16 %v1030, %v1029
        %v1305 = vpack.c.b16 %v1032, %v1031
        %v1306 = vpack.c.b16 %v1034, %v1033
        %v1307 = vpack.c.b16 %v1036, %v1035
        %v1308 = vpack.c.b16 %v1038, %v1037
        %v1309 = vpack.c.b16 %v1040, %v1039
        %v1310 = vpack.c.b16 %v1042, %v1041
        %v1311 = vpack.c.b16 %v1044, %v1043
        %v1312 = vpack.c.b16 %v1046, %v1045
        %v1313 = vpack.c.b16 %v1048, %v1047
        %v1314 = vpack.c.b16 %v1050, %v1049
        %v1315 = vpack.c.b16 %v1052, %v1051
        %v1316 = vpack.c.b16 %v1054, %v1053
        %v1317 = vpack.c.b16 %v1056, %v1055
        %v1318 = vpack.c.b16 %v1058, %v1057
        %v1319 = vpack.c.b16 %v1060, %v1059
        %v1320 = vpack.c.b16 %v1062, %v1061
        %v1321 = vpack.c.b16 %v1064, %v1063
        %v1322 = vpack.c.b16 %v1066, %v1065
        %v1323 = vpack.c.b16 %v1068, %v1067
        %v1324 = vpack.c.b16 %v1070, %v1069
        %v1325 = vpack.c.b16 %v1072, %v1071
        %v1326 = vpack.c.b16 %v1074, %v1073
        %v1327 = vpack.c.b16 %v1076, %v1075
        %v1328 = vpack.c.b16 %v1078, %v1077
        %v1329 = vpack.c.b16 %v1080, %v1079
        %v1330 = vpack.c.b16 %v1082, %v1081
        %v1331 = vpack.c.b16 %v1084, %v1083
        %v1332 = vpack.c.b16 %v1086, %v1085
        %v1333 = vpack.c.b16 %v1088, %v1087
        %v1334 = vpack.c.b16 %v1090, %v1089
        %v1335 = vpack.c.b16 %v1092, %v1091
        %v1336 = vpack.c.b16 %v1094, %v1093
        %v1337 = vpack.c.b16 %v1096, %v1095
        %v1338 = vpack.c.b16 %v1098, %v1097
        %v1339 = vpack.c.b16 %v1100, %v1099
        %v1340 = vpack.c.b16 %v1102, %v1101
        %v1341 = vpack.c.b16 %v1104, %v1103
        %v1342 = vpack.c.b16 %v1106, %v1105
        %v1343 = vpack.c.b16 %v1108, %v1107
        %v1344 = vpack.c.b16 %v1110, %v1109
        %v1345 = vpack.c.b16 %v1112, %v1111
        %v1346 = vpack.c.b16 %v1114, %v1113
        %v1347 = vpack.c.b16 %v1116, %v1115
        %v1348 = vpack.c.b16 %v1118, %v1117
        %v1349 = vpack.c.b16 %v1120, %v1119
        %v1350 = vpack.c.b16 %v1122, %v1121
        %v1351 = vpack.c.b16 %v1124, %v1123
        %v1352 = vpack.c.b16 %v1126, %v1125
        %v1353 = vpack.c.b16 %v1128, %v1127
        %v1354 = vpack.c.b16 %v1130, %v1129
        %v1355 = vpack.c.b16 %v1132, %v1131
        %v1356 = vpack.c.b16 %v1134, %v1133
        %v1357 = vpack.c.b16 %v1136, %v1135
        %v1358 = vpack.c.b16 %v1138, %v1137
        %v1359 = vpack.c.b16 %v1140, %v1139
        %v1360 = vpack.c.b16 %v1142, %v1141
        %v1361 = vpack.c.b16 %v1144, %v1143
        %v1362 = vpack.c.b16 %v1146, %v1145
        %v1363 = vpack.c.b16 %v1148, %v1147
        %v1364 = vpack.c.b16 %v1150, %v1149
        %v1365 = vpack.c.b16 %v1152, %v1151
        %v1366 = vpack.c.b16 %v1154, %v1153
        %v1367 = vpack.c.b16 %v1156, %v1155
        %v1368 = vpack.c.b16 %v1158, %v1157
        %v1369 = vpack.c.b16 %v1160, %v1159
        %v1370 = vpack.c.b16 %v1162, %v1161
        %v1371 = vpack.c.b16 %v1164, %v1163
        %v1372 = vpack.c.b16 %v1166, %v1165
        %v1373 = vpack.c.b16 %v1168, %v1167
        %v1374 = vpack.c.b16 %v1170, %v1169
        %v1375 = vpack.c.b16 %v1172, %v1171
        %v1376 = vpack.c.b16 %v1174, %v1173
        %v1377 = vpack.c.b16 %v1176, %v1175
        %v1378 = vpack.c.b16 %v1178, %v1177
        %v1379 = vpack.c.b16 %v1180, %v1179
        %v1380 = vpack.c.b16 %v1182, %v1181
        %v1381 = vpack.c.b16 %v1184, %v1183
        %v1382 = vpack.c.b16 %v1186, %v1185
        %v1383 = vpack.c.b16 %v1188, %v1187
        %v1384 = vpack.c.b16 %v1190, %v1189
        %v1385 = vpack.c.b16 %v1192, %v1191
        %v1386 = vpack.c.b16 %v1194, %v1193
        %v1387 = vpack.c.b16 %v1196, %v1195
        %v1388 = vpack.c.b16 %v1198, %v1197
        %v1389 = vpack.c.b16 %v1200, %v1199
        %v1390 = vpack.c.b16 %v1202, %v1201
        %v1391 = vpack.c.b16 %v1204, %v1203
        %v1392 = vpack.c.b16 %v1206, %v1205
        %v1393 = vpack.c.b16 %v1208, %v1207
        %v1394 = vpack.c.b16 %v1210, %v1209
        %v1395 = vpack.c.b16 %v1212, %v1211
        %v1396 = vpack.c.b16 %v1214, %v1213
        %v1397 = vpack.c.b16 %v1216, %v1215
        %v1398 = vpack.c.b16 %v1218, %v1217
        %v1399 = vpack.c.b16 %v1220, %v1219
        %v1400 = vpack.c.b16 %v1222, %v1221
        %v1401 = vpack.c.b16 %v1224, %v1223
        %v1402 = vpack.c.b16 %v1226, %v1225
        %v1403 = vpack.c.b16 %v1228, %v1227
        %v1404 = vpack.c.b16 %v1230, %v1229
        %v1405 = vpack.c.b16 %v1232, %v1231
        %v1406 = vpack.c.b16 %v1234, %v1233
        %v1407 = vpack.c.b16 %v1236, %v1235
        %v1408 = vpack.c.b16 %v1238, %v1237
        %v1409 = vpack.c.b16 %v1240, %v1239
        %v1410 = vpack.c.b16 %v1242, %v1241
        %v1411 = vpack.c.b16 %v1244, %v1243
        %v1412 = vpack.c.b16 %v1246, %v1245
        %v1413 = vpack.c.b16 %v1248, %v1247
        %v1414 = vpack.c.b16 %v1250, %v1249
        %v1415 = vpack.c.b16 %v1252, %v1251
        %v1416 = vpack.c.b16 %v1254, %v1253
        %v1417 = vpack.c.b16 %v1256, %v1255
        %v1418 = vpack.c.b16 %v1258, %v1257
        %v1419 = vpack.c.b16 %v1260, %v1259
        %v1420 = vpack.c.b16 %v1262, %v1261
        %v1421 = vpack.c.b16 %v1264, %v1263
        %v1422 = vpack.c.b16 %v1266, %v1265
        %v1423 = vpack.c.b16 %v1268, %v1267
        %v1424 = vpack.c.b16 %v1270, %v1269
        %v1425 = vpack.c.b16 %v1272, %v1271
        %v1426 = vpack.c.b16 %v1274, %v1273
        %v1427 = vpack.c.b16 %v1276, %v1275
        %v1428 = vpack.c.b16 %v1278, %v1277
        %v1429 = vpack.c.b16 %v1280, %v1279
        %v1430 = vpack.c.b16 %v1282, %v1281
        %v1431 = vpack.c.b16 %v1284, %v1283
        %v1432 = vpack.c.b16 %v1286, %v1285
        %v1433 = vpack.c.b16 %v1288, %v1287
        %v1434 = vpack.c.b16 %v1290, %v1289
        %1579 = vmatprep.subr.bf16.mxu0 0
        %1580 = vmatpush1.bf16.msra.mxu0 %v1298
        %1581 = vmatprep.subr.bf16.mxu0 0
        %1582 = vmatpush1.bf16.msra.mxu0 %v1297
        %1583 = vmatprep.subr.bf16.mxu0 0
        %1584 = vmatpush1.bf16.msra.mxu0 %v1296
        %1585 = vmatprep.subr.bf16.mxu0 0
        %1586 = vmatpush1.bf16.msra.mxu0 %v1295
        %1587 = vmatprep.subr.bf16.mxu0 0
        %1588 = vmatpush1.bf16.msra.mxu0 %v1294
        %1589 = vmatprep.subr.bf16.mxu0 0
        %1590 = vmatpush1.bf16.msra.mxu0 %v1293
        %1591 = vmatprep.subr.bf16.mxu0 0
        %1592 = vmatpush1.bf16.msra.mxu0 %v1292
        %1593 = vmatprep.subr.bf16.mxu0 0
        %1594 = vmatpush1.bf16.msra.mxu0 %v1291
        %1595 = vmatprep.subr.bf16.mxu0 0
        %1596 = vmatpush2.bf16.msra.mxu0 %v1306
        %1597 = vmatprep.subr.bf16.mxu0 0
        %1598 = vmatpush2.bf16.msra.mxu0 %v1305
        %1599 = vmatprep.subr.bf16.mxu0 0
        %1600 = vmatpush2.bf16.msra.mxu0 %v1304
        %1601 = vmatprep.subr.bf16.mxu0 0
        %1602 = vmatpush2.bf16.msra.mxu0 %v1303
        %1603 = vmatprep.subr.bf16.mxu0 0
        %1604 = vmatpush2.bf16.msra.mxu0 %v1302
        %1605 = vmatprep.subr.bf16.mxu0 0
        %1606 = vmatpush2.bf16.msra.mxu0 %v1301
        %1607 = vmatprep.subr.bf16.mxu0 0
        %1608 = vmatpush2.bf16.msra.mxu0 %v1300
        %1609 = vmatprep.subr.bf16.mxu0 0
        %1610 = vmatpush2.bf16.msra.mxu0 %v1299
        %1611 = vmatprep.mubr.bf16.mxu0 %v614
        %1612 = vmatmul.mubr.bf16.gmra.mxu0 %v600
        %v1613 = vpop.f32.mrf.mxu0
        %v1614 = vadd.f32 0.0, %v1613
        %v1615 = vpop.f32.mrf.mxu0
        %v1616 = vpop.f32.mrf.mxu0
        %v1617 = vpop.f32.mrf.mxu0
        %1618 = vdwg.mxu0
        %1619 = vmatprep.subr.bf16.mxu0 0
        %1620 = vmatpush1.bf16.msra.mxu0 %v1314
        %1621 = vmatprep.subr.bf16.mxu0 0
        %1622 = vmatpush1.bf16.msra.mxu0 %v1313
        %1623 = vmatprep.subr.bf16.mxu0 0
        %1624 = vmatpush1.bf16.msra.mxu0 %v1312
        %1625 = vmatprep.subr.bf16.mxu0 0
        %1626 = vmatpush1.bf16.msra.mxu0 %v1311
        %1627 = vmatprep.subr.bf16.mxu0 0
        %1628 = vmatpush1.bf16.msra.mxu0 %v1310
        %1629 = vmatprep.subr.bf16.mxu0 0
        %1630 = vmatpush1.bf16.msra.mxu0 %v1309
        %1631 = vmatprep.subr.bf16.mxu0 0
        %1632 = vmatpush1.bf16.msra.mxu0 %v1308
        %1633 = vmatprep.subr.bf16.mxu0 0
        %1634 = vmatpush1.bf16.msra.mxu0 %v1307
        %1635 = vmatprep.subr.bf16.mxu0 0
        %1636 = vmatpush2.bf16.msra.mxu0 %v1322
        %1637 = vmatprep.subr.bf16.mxu0 0
        %1638 = vmatpush2.bf16.msra.mxu0 %v1321
        %1639 = vmatprep.subr.bf16.mxu0 0
        %1640 = vmatpush2.bf16.msra.mxu0 %v1320
        %1641 = vmatprep.subr.bf16.mxu0 0
        %1642 = vmatpush2.bf16.msra.mxu0 %v1319
        %1643 = vmatprep.subr.bf16.mxu0 0
        %1644 = vmatpush2.bf16.msra.mxu0 %v1318
        %1645 = vmatprep.subr.bf16.mxu0 0
        %1646 = vmatpush2.bf16.msra.mxu0 %v1317
        %1647 = vmatprep.subr.bf16.mxu0 0
        %1648 = vmatpush2.bf16.msra.mxu0 %v1316
        %1649 = vmatprep.subr.bf16.mxu0 0
        %1650 = vmatpush2.bf16.msra.mxu0 %v1315
        %1651 = vmatprep.mubr.bf16.mxu0 %v624
        %1652 = vmatmul.mubr.bf16.gmra.mxu0 %v622
        %v1653 = vpop.f32.mrf.mxu0
        %v1654 = vadd.f32 %v1614, %v1653
        %v1655 = vpop.f32.mrf.mxu0
        %v1656 = vpop.f32.mrf.mxu0
        %v1657 = vpop.f32.mrf.mxu0
        %1658 = vdwg.mxu0
        %1659 = vmatprep.subr.bf16.mxu0 0
        %1660 = vmatpush1.bf16.msra.mxu0 %v1330
        %1661 = vmatprep.subr.bf16.mxu0 0
        %1662 = vmatpush1.bf16.msra.mxu0 %v1329
        %1663 = vmatprep.subr.bf16.mxu0 0
        %1664 = vmatpush1.bf16.msra.mxu0 %v1328
        %1665 = vmatprep.subr.bf16.mxu0 0
        %1666 = vmatpush1.bf16.msra.mxu0 %v1327
        %1667 = vmatprep.subr.bf16.mxu0 0
        %1668 = vmatpush1.bf16.msra.mxu0 %v1326
        %1669 = vmatprep.subr.bf16.mxu0 0
        %1670 = vmatpush1.bf16.msra.mxu0 %v1325
        %1671 = vmatprep.subr.bf16.mxu0 0
        %1672 = vmatpush1.bf16.msra.mxu0 %v1324
        %1673 = vmatprep.subr.bf16.mxu0 0
        %1674 = vmatpush1.bf16.msra.mxu0 %v1323
        %1675 = vmatprep.subr.bf16.mxu0 0
        %1676 = vmatpush2.bf16.msra.mxu0 %v1338
        %1677 = vmatprep.subr.bf16.mxu0 0
        %1678 = vmatpush2.bf16.msra.mxu0 %v1337
        %1679 = vmatprep.subr.bf16.mxu0 0
        %1680 = vmatpush2.bf16.msra.mxu0 %v1336
        %1681 = vmatprep.subr.bf16.mxu0 0
        %1682 = vmatpush2.bf16.msra.mxu0 %v1335
        %1683 = vmatprep.subr.bf16.mxu0 0
        %1684 = vmatpush2.bf16.msra.mxu0 %v1334
        %1685 = vmatprep.subr.bf16.mxu0 0
        %1686 = vmatpush2.bf16.msra.mxu0 %v1333
        %1687 = vmatprep.subr.bf16.mxu0 0
        %1688 = vmatpush2.bf16.msra.mxu0 %v1332
        %1689 = vmatprep.subr.bf16.mxu0 0
        %1690 = vmatpush2.bf16.msra.mxu0 %v1331
        %1691 = vmatprep.mubr.bf16.mxu0 %v621
        %1692 = vmatmul.mubr.bf16.gmra.mxu0 %v607
        %v1693 = vpop.f32.mrf.mxu0
        %v1694 = vadd.f32 %v1654, %v1693
        %v1695 = vpop.f32.mrf.mxu0
        %v1696 = vpop.f32.mrf.mxu0
        %v1697 = vpop.f32.mrf.mxu0
        %1698 = vdwg.mxu0
        %1699 = vmatprep.subr.bf16.mxu0 0
        %1700 = vmatpush1.bf16.msra.mxu0 %v1346
        %1701 = vmatprep.subr.bf16.mxu0 0
        %1702 = vmatpush1.bf16.msra.mxu0 %v1345
        %1703 = vmatprep.subr.bf16.mxu0 0
        %1704 = vmatpush1.bf16.msra.mxu0 %v1344
        %1705 = vmatprep.subr.bf16.mxu0 0
        %1706 = vmatpush1.bf16.msra.mxu0 %v1343
        %1707 = vmatprep.subr.bf16.mxu0 0
        %1708 = vmatpush1.bf16.msra.mxu0 %v1342
        %1709 = vmatprep.subr.bf16.mxu0 0
        %1710 = vmatpush1.bf16.msra.mxu0 %v1341
        %1711 = vmatprep.subr.bf16.mxu0 0
        %1712 = vmatpush1.bf16.msra.mxu0 %v1340
        %1713 = vmatprep.subr.bf16.mxu0 0
        %1714 = vmatpush1.bf16.msra.mxu0 %v1339
        %1715 = vmatprep.subr.bf16.mxu0 0
        %1716 = vmatpush2.bf16.msra.mxu0 %v1354
        %1717 = vmatprep.subr.bf16.mxu0 0
        %1718 = vmatpush2.bf16.msra.mxu0 %v1353
        %1719 = vmatprep.subr.bf16.mxu0 0
        %1720 = vmatpush2.bf16.msra.mxu0 %v1352
        %1721 = vmatprep.subr.bf16.mxu0 0
        %1722 = vmatpush2.bf16.msra.mxu0 %v1351
        %1723 = vmatprep.subr.bf16.mxu0 0
        %1724 = vmatpush2.bf16.msra.mxu0 %v1350
        %1725 = vmatprep.subr.bf16.mxu0 0
        %1726 = vmatpush2.bf16.msra.mxu0 %v1349
        %1727 = vmatprep.subr.bf16.mxu0 0
        %1728 = vmatpush2.bf16.msra.mxu0 %v1348
        %1729 = vmatprep.subr.bf16.mxu0 0
        %1730 = vmatpush2.bf16.msra.mxu0 %v1347
        %1731 = vmatprep.mubr.bf16.mxu0 %v625
        %1732 = vmatmul.mubr.bf16.gmra.mxu0 %v623
        %v1733 = vpop.f32.mrf.mxu0
        %v1734 = vadd.f32 %v1694, %v1733
        %v1735 = vpop.f32.mrf.mxu0
        %v1736 = vpop.f32.mrf.mxu0
        %v1737 = vpop.f32.mrf.mxu0
        %1738 = vdwg.mxu0
        %1739 = vmatprep.subr.bf16.mxu0 0
        %1740 = vmatpush1.bf16.msra.mxu0 %v1362
        %1741 = vmatprep.subr.bf16.mxu0 0
        %1742 = vmatpush1.bf16.msra.mxu0 %v1361
        %1743 = vmatprep.subr.bf16.mxu0 0
        %1744 = vmatpush1.bf16.msra.mxu0 %v1360
        %1745 = vmatprep.subr.bf16.mxu0 0
        %1746 = vmatpush1.bf16.msra.mxu0 %v1359
        %1747 = vmatprep.subr.bf16.mxu0 0
        %1748 = vmatpush1.bf16.msra.mxu0 %v1358
        %1749 = vmatprep.subr.bf16.mxu0 0
        %1750 = vmatpush1.bf16.msra.mxu0 %v1357
        %1751 = vmatprep.subr.bf16.mxu0 0
        %1752 = vmatpush1.bf16.msra.mxu0 %v1356
        %1753 = vmatprep.subr.bf16.mxu0 0
        %1754 = vmatpush1.bf16.msra.mxu0 %v1355
        %1755 = vmatprep.subr.bf16.mxu0 0
        %1756 = vmatpush2.bf16.msra.mxu0 %v1370
        %1757 = vmatprep.subr.bf16.mxu0 0
        %1758 = vmatpush2.bf16.msra.mxu0 %v1369
        %1759 = vmatprep.subr.bf16.mxu0 0
        %1760 = vmatpush2.bf16.msra.mxu0 %v1368
        %1761 = vmatprep.subr.bf16.mxu0 0
        %1762 = vmatpush2.bf16.msra.mxu0 %v1367
        %1763 = vmatprep.subr.bf16.mxu0 0
        %1764 = vmatpush2.bf16.msra.mxu0 %v1366
        %1765 = vmatprep.subr.bf16.mxu0 0
        %1766 = vmatpush2.bf16.msra.mxu0 %v1365
        %1767 = vmatprep.subr.bf16.mxu0 0
        %1768 = vmatpush2.bf16.msra.mxu0 %v1364
        %1769 = vmatprep.subr.bf16.mxu0 0
        %1770 = vmatpush2.bf16.msra.mxu0 %v1363
        %1771 = vmatprep.mubr.bf16.mxu0 %v663
        %1772 = vmatmul.mubr.bf16.gmra.mxu0 %v649
        %v1773 = vpop.f32.mrf.mxu0
        %v1774 = vadd.f32 %v1734, %v1773
        %v1775 = vpop.f32.mrf.mxu0
        %v1776 = vpop.f32.mrf.mxu0
        %v1777 = vpop.f32.mrf.mxu0
        %1778 = vdwg.mxu0
        %1779 = vmatprep.subr.bf16.mxu0 0
        %1780 = vmatpush1.bf16.msra.mxu0 %v1378
        %1781 = vmatprep.subr.bf16.mxu0 0
        %1782 = vmatpush1.bf16.msra.mxu0 %v1377
        %1783 = vmatprep.subr.bf16.mxu0 0
        %1784 = vmatpush1.bf16.msra.mxu0 %v1376
        %1785 = vmatprep.subr.bf16.mxu0 0
        %1786 = vmatpush1.bf16.msra.mxu0 %v1375
        %1787 = vmatprep.subr.bf16.mxu0 0
        %1788 = vmatpush1.bf16.msra.mxu0 %v1374
        %1789 = vmatprep.subr.bf16.mxu0 0
        %1790 = vmatpush1.bf16.msra.mxu0 %v1373
        %1791 = vmatprep.subr.bf16.mxu0 0
        %1792 = vmatpush1.bf16.msra.mxu0 %v1372
        %1793 = vmatprep.subr.bf16.mxu0 0
        %1794 = vmatpush1.bf16.msra.mxu0 %v1371
        %1795 = vmatprep.subr.bf16.mxu0 0
        %1796 = vmatpush2.bf16.msra.mxu0 %v1386
        %1797 = vmatprep.subr.bf16.mxu0 0
        %1798 = vmatpush2.bf16.msra.mxu0 %v1385
        %1799 = vmatprep.subr.bf16.mxu0 0
        %1800 = vmatpush2.bf16.msra.mxu0 %v1384
        %1801 = vmatprep.subr.bf16.mxu0 0
        %1802 = vmatpush2.bf16.msra.mxu0 %v1383
        %1803 = vmatprep.subr.bf16.mxu0 0
        %1804 = vmatpush2.bf16.msra.mxu0 %v1382
        %1805 = vmatprep.subr.bf16.mxu0 0
        %1806 = vmatpush2.bf16.msra.mxu0 %v1381
        %1807 = vmatprep.subr.bf16.mxu0 0
        %1808 = vmatpush2.bf16.msra.mxu0 %v1380
        %1809 = vmatprep.subr.bf16.mxu0 0
        %1810 = vmatpush2.bf16.msra.mxu0 %v1379
        %1811 = vmatprep.mubr.bf16.mxu0 %v673
        %1812 = vmatmul.mubr.bf16.gmra.mxu0 %v671
        %v1813 = vpop.f32.mrf.mxu0
        %v1814 = vadd.f32 %v1774, %v1813
        %v1815 = vpop.f32.mrf.mxu0
        %v1816 = vpop.f32.mrf.mxu0
        %v1817 = vpop.f32.mrf.mxu0
        %1818 = vdwg.mxu0
        %1819 = vmatprep.subr.bf16.mxu0 0
        %1820 = vmatpush1.bf16.msra.mxu0 %v1394
        %1821 = vmatprep.subr.bf16.mxu0 0
        %1822 = vmatpush1.bf16.msra.mxu0 %v1393
        %1823 = vmatprep.subr.bf16.mxu0 0
        %1824 = vmatpush1.bf16.msra.mxu0 %v1392
        %1825 = vmatprep.subr.bf16.mxu0 0
        %1826 = vmatpush1.bf16.msra.mxu0 %v1391
        %1827 = vmatprep.subr.bf16.mxu0 0
        %1828 = vmatpush1.bf16.msra.mxu0 %v1390
        %1829 = vmatprep.subr.bf16.mxu0 0
        %1830 = vmatpush1.bf16.msra.mxu0 %v1389
        %1831 = vmatprep.subr.bf16.mxu0 0
        %1832 = vmatpush1.bf16.msra.mxu0 %v1388
        %1833 = vmatprep.subr.bf16.mxu0 0
        %1834 = vmatpush1.bf16.msra.mxu0 %v1387
        %1835 = vmatprep.subr.bf16.mxu0 0
        %1836 = vmatpush2.bf16.msra.mxu0 %v1402
        %1837 = vmatprep.subr.bf16.mxu0 0
        %1838 = vmatpush2.bf16.msra.mxu0 %v1401
        %1839 = vmatprep.subr.bf16.mxu0 0
        %1840 = vmatpush2.bf16.msra.mxu0 %v1400
        %1841 = vmatprep.subr.bf16.mxu0 0
        %1842 = vmatpush2.bf16.msra.mxu0 %v1399
        %1843 = vmatprep.subr.bf16.mxu0 0
        %1844 = vmatpush2.bf16.msra.mxu0 %v1398
        %1845 = vmatprep.subr.bf16.mxu0 0
        %1846 = vmatpush2.bf16.msra.mxu0 %v1397
        %1847 = vmatprep.subr.bf16.mxu0 0
        %1848 = vmatpush2.bf16.msra.mxu0 %v1396
        %1849 = vmatprep.subr.bf16.mxu0 0
        %1850 = vmatpush2.bf16.msra.mxu0 %v1395
        %1851 = vmatprep.mubr.bf16.mxu0 %v670
        %1852 = vmatmul.mubr.bf16.gmra.mxu0 %v656
        %v1853 = vpop.f32.mrf.mxu0
        %v1854 = vadd.f32 %v1814, %v1853
        %v1855 = vpop.f32.mrf.mxu0
        %v1856 = vpop.f32.mrf.mxu0
        %v1857 = vpop.f32.mrf.mxu0
        %1858 = vdwg.mxu0
        %1859 = vmatprep.subr.bf16.mxu0 0
        %1860 = vmatpush1.bf16.msra.mxu0 %v1410
        %1861 = vmatprep.subr.bf16.mxu0 0
        %1862 = vmatpush1.bf16.msra.mxu0 %v1409
        %1863 = vmatprep.subr.bf16.mxu0 0
        %1864 = vmatpush1.bf16.msra.mxu0 %v1408
        %1865 = vmatprep.subr.bf16.mxu0 0
        %1866 = vmatpush1.bf16.msra.mxu0 %v1407
        %1867 = vmatprep.subr.bf16.mxu0 0
        %1868 = vmatpush1.bf16.msra.mxu0 %v1406
        %1869 = vmatprep.subr.bf16.mxu0 0
        %1870 = vmatpush1.bf16.msra.mxu0 %v1405
        %1871 = vmatprep.subr.bf16.mxu0 0
        %1872 = vmatpush1.bf16.msra.mxu0 %v1404
        %1873 = vmatprep.subr.bf16.mxu0 0
        %1874 = vmatpush1.bf16.msra.mxu0 %v1403
        %1875 = vmatprep.subr.bf16.mxu0 0
        %1876 = vmatpush2.bf16.msra.mxu0 %v1418
        %1877 = vmatprep.subr.bf16.mxu0 0
        %1878 = vmatpush2.bf16.msra.mxu0 %v1417
        %1879 = vmatprep.subr.bf16.mxu0 0
        %1880 = vmatpush2.bf16.msra.mxu0 %v1416
        %1881 = vmatprep.subr.bf16.mxu0 0
        %1882 = vmatpush2.bf16.msra.mxu0 %v1415
        %1883 = vmatprep.subr.bf16.mxu0 0
        %1884 = vmatpush2.bf16.msra.mxu0 %v1414
        %1885 = vmatprep.subr.bf16.mxu0 0
        %1886 = vmatpush2.bf16.msra.mxu0 %v1413
        %1887 = vmatprep.subr.bf16.mxu0 0
        %1888 = vmatpush2.bf16.msra.mxu0 %v1412
        %1889 = vmatprep.subr.bf16.mxu0 0
        %1890 = vmatpush2.bf16.msra.mxu0 %v1411
        %1891 = vmatprep.mubr.bf16.mxu0 %v674
        %1892 = vmatmul.mubr.bf16.gmra.mxu0 %v672
        %v1893 = vpop.f32.mrf.mxu0
        %v1894 = vadd.f32 %v1854, %v1893
        %v1895 = vpop.f32.mrf.mxu0
        %v1896 = vpop.f32.mrf.mxu0
        %v1897 = vpop.f32.mrf.mxu0
        %1898 = vdwg.mxu0
        %1899 = vmatprep.subr.bf16.mxu0 0
        %1900 = vmatpush1.bf16.msra.mxu0 %v1426
        %1901 = vmatprep.subr.bf16.mxu0 0
        %1902 = vmatpush1.bf16.msra.mxu0 %v1425
        %1903 = vmatprep.subr.bf16.mxu0 0
        %1904 = vmatpush1.bf16.msra.mxu0 %v1424
        %1905 = vmatprep.subr.bf16.mxu0 0
        %1906 = vmatpush1.bf16.msra.mxu0 %v1423
        %1907 = vmatprep.subr.bf16.mxu0 0
        %1908 = vmatpush1.bf16.msra.mxu0 %v1422
        %1909 = vmatprep.subr.bf16.mxu0 0
        %1910 = vmatpush1.bf16.msra.mxu0 %v1421
        %1911 = vmatprep.subr.bf16.mxu0 0
        %1912 = vmatpush1.bf16.msra.mxu0 %v1420
        %1913 = vmatprep.subr.bf16.mxu0 0
        %1914 = vmatpush1.bf16.msra.mxu0 %v1419
        %1915 = vmatprep.subr.bf16.mxu0 0
        %1916 = vmatpush2.bf16.msra.mxu0 %v1434
        %1917 = vmatprep.subr.bf16.mxu0 0
        %1918 = vmatpush2.bf16.msra.mxu0 %v1433
        %1919 = vmatprep.subr.bf16.mxu0 0
        %1920 = vmatpush2.bf16.msra.mxu0 %v1432
        %1921 = vmatprep.subr.bf16.mxu0 0
        %1922 = vmatpush2.bf16.msra.mxu0 %v1431
        %1923 = vmatprep.subr.bf16.mxu0 0
        %1924 = vmatpush2.bf16.msra.mxu0 %v1430
        %1925 = vmatprep.subr.bf16.mxu0 0
        %1926 = vmatpush2.bf16.msra.mxu0 %v1429
        %1927 = vmatprep.subr.bf16.mxu0 0
        %1928 = vmatpush2.bf16.msra.mxu0 %v1428
        %1929 = vmatprep.subr.bf16.mxu0 0
        %1930 = vmatpush2.bf16.msra.mxu0 %v1427
        %1931 = vmatprep.mubr.bf16.mxu0 %v696
        %1932 = vmatmul.mubr.bf16.gmra.mxu0 %v689
        %v1933 = vpop.f32.mrf.mxu0
        %v1934 = vadd.f32 %v1894, %v1933
        %v1935 = vpop.f32.mrf.mxu0
        %v1936 = vpop.f32.mrf.mxu0
        %v1937 = vpop.f32.mrf.mxu0
        %1938 = vdwg.mxu0
        %v1939 = vadd.f32 %v282, %v1934
        %1940 = vst [vmem:[#allocation2] sm:$0x3] %v1939
        %p1941 = scmp.eq.s32.totalorder %s21, 3
        // Predicated region
        $region57: #{cnn_dropout_forward.3} parent=39 // pred_check
          %p1942 = pneg %p1941
        $region58: #{cnn_dropout_forward.3} parent=39 // pred_check_branch
          %1944 = sbr.rel (%p1942) target = $region60
        $region59: #{cnn_dropout_forward.3} parent=39 // pred_region
          %v1945 = vld [vmem:[#allocation2] sm:$0x3]
          %v1946 = vld [vmem:[#allocation6] sm:$0x1]
          %v1948 = vlaneseq
          %v1949 = vshrl.u32 %v1948, 7
          %v1950 = vsub.s32 0, %v1949
          %v1951 = vrot.slane %v1946, %v1950
          %v1953 = vadd.f32 %v1945, %v1951
          %v1954 = vmax.f32 %v1953, 0.0
          %v1955 = vpack.c.bf16 %v1954, %v1954
          %v1956 = vld [vmem:[%s3] sm:$0xf]
          %v1957 = vld [vmem:[%s3 + $0x4] sm:$0xf]
          %v1958 = vld [vmem:[%s3 + $0x8] sm:$0xf]
          %v1959 = vld [vmem:[%s3 + $0xc] sm:$0xf]
          %v1960 = vld [vmem:[%s3 + $0x10] sm:$0xf]
          %v1961 = vld [vmem:[%s3 + $0x14] sm:$0xf]
          %v1962 = vld [vmem:[%s3 + $0x18] sm:$0xf]
          %v1963 = vld [vmem:[%s3 + $0x1c] sm:$0xf]
          %v1964 = vld [vmem:[%s3 + $0x20] sm:$0xf]
          %v1965 = vld [vmem:[%s3 + $0x24] sm:$0xf]
          %v1966 = vld [vmem:[%s3 + $0x28] sm:$0xf]
          %v1967 = vld [vmem:[%s3 + $0x2c] sm:$0xf]
          %v1968 = vld [vmem:[%s3 + $0x30] sm:$0xf]
          %v1969 = vld [vmem:[%s3 + $0x34] sm:$0xf]
          %v1970 = vld [vmem:[%s3 + $0x38] sm:$0xf]
          %v1971 = vld [vmem:[%s3 + $0x3c] sm:$0xf]
          %v1972 = vld [vmem:[#allocation8] sm:$0x1]
          %v1974 = vlaneseq
          %v1975 = vshrl.u32 %v1974, 7
          %v1976 = vsub.s32 0, %v1975
          %v1977 = vrot.slane %v1972, %v1976
          %v1995 = vunpack.c.l.b16 %v1956
          %v1996 = vunpack.c.l.b16 %v1957
          %v1997 = vunpack.c.l.b16 %v1958
          %v1998 = vunpack.c.l.b16 %v1959
          %v1999 = vunpack.c.l.b16 %v1960
          %v2000 = vunpack.c.l.b16 %v1961
          %v2001 = vunpack.c.l.b16 %v1962
          %v2002 = vunpack.c.l.b16 %v1963
          %v2003 = vunpack.c.l.b16 %v1964
          %v2004 = vunpack.c.l.b16 %v1965
          %v2005 = vunpack.c.l.b16 %v1966
          %v2006 = vunpack.c.l.b16 %v1967
          %v2007 = vunpack.c.l.b16 %v1968
          %v2008 = vunpack.c.l.b16 %v1969
          %v2009 = vunpack.c.l.b16 %v1970
          %v2010 = vunpack.c.l.b16 %v1971
          %v2011 = vpack.c.b16 %v1996, %v1995
          %v2012 = vpack.c.b16 %v1998, %v1997
          %v2013 = vpack.c.b16 %v2000, %v1999
          %v2014 = vpack.c.b16 %v2002, %v2001
          %v2015 = vpack.c.b16 %v2004, %v2003
          %v2016 = vpack.c.b16 %v2006, %v2005
          %v2017 = vpack.c.b16 %v2008, %v2007
          %v2018 = vpack.c.b16 %v2010, %v2009
          %2027 = vmatprep.subr.bf16.mxu0 0
          %2028 = vmatpush1.bf16.msra.mxu0 %v2018
          %2029 = vmatprep.subr.bf16.mxu0 0
          %2030 = vmatpush1.bf16.msra.mxu0 %v2017
          %2031 = vmatprep.subr.bf16.mxu0 0
          %2032 = vmatpush1.bf16.msra.mxu0 %v2016
          %2033 = vmatprep.subr.bf16.mxu0 0
          %2034 = vmatpush1.bf16.msra.mxu0 %v2015
          %2035 = vmatprep.subr.bf16.mxu0 0
          %2036 = vmatpush1.bf16.msra.mxu0 %v2014
          %2037 = vmatprep.subr.bf16.mxu0 0
          %2038 = vmatpush1.bf16.msra.mxu0 %v2013
          %2039 = vmatprep.subr.bf16.mxu0 0
          %2040 = vmatpush1.bf16.msra.mxu0 %v2012
          %2041 = vmatprep.subr.bf16.mxu0 0
          %2042 = vmatpush1.bf16.msra.mxu0 %v2011
          %2043 = vmatprep.subr.bf16.mxu0 0
          %2044 = vmatpush2.bf16.msra.mxu0 0
          %2045 = vmatprep.subr.bf16.mxu0 0
          %2046 = vmatpush2.bf16.msra.mxu0 0
          %2047 = vmatprep.subr.bf16.mxu0 0
          %2048 = vmatpush2.bf16.msra.mxu0 0
          %2049 = vmatprep.subr.bf16.mxu0 0
          %2050 = vmatpush2.bf16.msra.mxu0 0
          %2051 = vmatprep.subr.bf16.mxu0 0
          %2052 = vmatpush2.bf16.msra.mxu0 0
          %2053 = vmatprep.subr.bf16.mxu0 0
          %2054 = vmatpush2.bf16.msra.mxu0 0
          %2055 = vmatprep.subr.bf16.mxu0 0
          %2056 = vmatpush2.bf16.msra.mxu0 0
          %2057 = vmatprep.subr.bf16.mxu0 0
          %2058 = vmatpush2.bf16.msra.mxu0 0
          %2059 = vmatprep.mubr.bf16.mxu0 0
          %2060 = vmatmul.mubr.bf16.gmra.mxu0 %v1955
          %v2061 = vpop.f32.mrf.mxu0
          %v2062 = vadd.f32 %v1977, %v2061
          %v2063 = vpop.f32.mrf.mxu0
          %v2064 = vpop.f32.mrf.mxu0
          %v2065 = vpop.f32.mrf.mxu0
          %2066 = vdwg.mxu0
          %vm2067 = vcmask 74752
          %2068 = vst.msk [vmem:[#allocation9] sm:$0x3] %vm2067, %v2062
        $region60: #{cnn_dropout_forward.3} parent=39 // pred_fallthru
          _
        // Predicated region
        $region61: #{cnn_dropout_forward.3} parent=39 // pred_check
          %p2069 = pneg %p149
        $region62: #{cnn_dropout_forward.3} parent=39 // pred_check_branch
          %2071 = sbr.rel (%p2069) target = $region64
        $region63: #{cnn_dropout_forward.3} parent=39 // pred_region
          %s2073 = ssub.s32 32, 32
          %2074 = vsyncadd [#allocation5], %s2073
          %s2076 = sshll.u32 [#allocation9], 4
          %s2077 = int_to_ptr.vmem [resolvable:$true] %s2076
          %2079 = dma.vmem_to_hbm [thread:$0]  %s2077, 32, %s5, [#allocation5]
        $region64: #{cnn_dropout_forward.3} parent=39 // pred_fallthru
          _
        // Predicated region
        $region65: #{cnn_dropout_forward.3} parent=39 // pred_check
          %p2080 = pneg %p149
        $region66: #{cnn_dropout_forward.3} parent=39 // pred_check_branch
          %2082 = sbr.rel (%p2080) target = $region68
        $region67: #{cnn_dropout_forward.3} parent=39 // pred_region
          %2083 = dma.done [#allocation5], 32
        $region68: #{cnn_dropout_forward.3} parent=39 // pred_fallthru
          _
      $region40: #{cnn_dropout_forward.3} parent=5 // pred_fallthru
        _
      %p2084 = scmp.le.s32.totalorder 2, %s16
      // Predicated region
      $region69: #{cnn_dropout_forward.3} parent=5 // pred_check
        %p2085 = pneg %p2084
      $region70: #{cnn_dropout_forward.3} parent=5 // pred_check_branch
        %2087 = sbr.rel (%p2085) target = $region72
      $region71: #{cnn_dropout_forward.3} parent=5 // pred_region
        %s2088 = ssub.s32 %s16, 2
      $region72: #{cnn_dropout_forward.3} parent=5 // pred_fallthru
        _
    $region6: #{cnn_dropout_forward.3} parent=1 // loop_footer
      %s20 = sadd.s32 1, %s16
    $region7: #{cnn_dropout_forward.3} parent=1 // loop_footer_branch
      %15 = sbr.rel target = $region3
    $region8: #{cnn_dropout_forward.3} parent=1 // loop_exit
      _
    %2089 = vsyncpa [#allocation4], 1
    %s2090 = scalar_lea.sflag [#allocation4], 1
    %2091 = vsyncpa %s2090, 1
    %2092 = vsyncpa [#allocation7], 1
    %2093 = vsyncpa [#allocation5], 1
    %s2094 = scalar_lea.sflag [#allocation5], 1
    %2095 = vsyncpa %s2094, 1

// kernel: cnn_dropout_forward.2
$region0: #{cnn_dropout_forward.2}
  #allocation0 [shape = 'u32[]', space=smem, size = 0x4, offset = 0x4, fixed_abs, tag = 'smem constant byte address 0x4 - core index']
  #allocation1 [shape = 'u32[144,128]{1,0:T(1,128)}', space=vmem, size = 0x12000, scoped, tag = 'internal scratch']
  #allocation2 [shape = 'f32[1408,32]{1,0:T(8,128)}', space=vmem, size = 0xb0000, scoped, tag = 'scratch operand']
  #allocation3 [shape = 'f32[1384,64]{1,0:T(8,128)}', space=vmem, size = 0xad000, scoped, tag = 'scratch operand']
  #allocation4 [shape = 'f32[676,64]{1,0:T(8,128)}', space=vmem, size = 0x55000, scoped, tag = 'scratch operand']
  %s0 = inlined_call_operand.vmem [shape: bf16[1,1352,9], index: 0, kind: input, shape index: {}]
  %s1 = inlined_call_operand.hbm [shape: bf16[9,32], index: 1, kind: input, shape index: {}]
  %s2 = inlined_call_operand.hbm [shape: f32[1,32], index: 2, kind: input, shape index: {}]
  %s3 = inlined_call_operand.vmem [shape: bf16[288,64], index: 3, kind: input, shape index: {}]
  %s4 = inlined_call_operand.hbm [shape: f32[1,64], index: 4, kind: input, shape index: {}]
  %s5 = inlined_call_operand.vmem [shape: f32[1,288,64], index: 5, kind: output, shape index: {}]
  %s6 = sld [smem:[#allocation0]]
  $region42: #{cnn_dropout_forward.2} parent=0
    _
  %s8 = ssub.s32 1, %s6
  %s9 = scalar_select 0, %s8, %s6
  $region1: #{cnn_dropout_forward.2} parent=0
    #allocation5 [shape = 'u8[4096]{0}', space=vmem, size = 0x1000, scoped, tag = 'input window, operand 1, single buffered']
    #allocation6 [shape = 's32[1]{0}', space=sflag, size = 0x4, scoped, tag = 'scoped memory for cnn_dropout_forward.2']
    #allocation7 [shape = 'u8[512]{0}', space=vmem, size = 0x400, scoped, tag = 'input window, operand 2, single buffered']
    #allocation8 [shape = 's32[1]{0}', space=sflag, size = 0x4, scoped, tag = 'scoped memory for cnn_dropout_forward.2']
    #allocation9 [shape = 'u8[512]{0}', space=vmem, size = 0x400, scoped, tag = 'input window, operand 4, single buffered']
    %10 = vsyncpa [#allocation6], 0
    %11 = vsyncpa [#allocation8], 0
    // Predicated region
    $region2: #{cnn_dropout_forward.2} parent=1 // pred_check
      _
    $region3: #{cnn_dropout_forward.2} parent=1 // pred_check_branch
      %13 = sbr.rel (0) target = $region5
    $region4: #{cnn_dropout_forward.2} parent=1 // pred_region
      _
    $region5: #{cnn_dropout_forward.2} parent=1 // pred_fallthru
      _
    // Predicated region
    $region6: #{cnn_dropout_forward.2} parent=1 // pred_check
      _
    $region7: #{cnn_dropout_forward.2} parent=1 // pred_check_branch
      %15 = sbr.rel (0) target = $region9
    $region8: #{cnn_dropout_forward.2} parent=1 // pred_region
      %s17 = ssub.s32 128, 128
      %18 = vsyncadd [#allocation6], %s17
      %s19 = sshll.u32 [#allocation5], 4
      %s20 = int_to_ptr.vmem [resolvable:$true] %s19
      %25 = dma.hbm_to_vmem [thread:$0]  %s1, 128, %s20, [#allocation6], 64, 64, 4
    $region9: #{cnn_dropout_forward.2} parent=1 // pred_fallthru
      _
    // Predicated region
    $region10: #{cnn_dropout_forward.2} parent=1 // pred_check
      _
    $region11: #{cnn_dropout_forward.2} parent=1 // pred_check_branch
      %27 = sbr.rel (0) target = $region13
    $region12: #{cnn_dropout_forward.2} parent=1 // pred_region
      %s29 = ssub.s32 16, 16
      %30 = vsyncadd [#allocation8], %s29
      %s32 = sshll.u32 [#allocation7], 4
      %s33 = int_to_ptr.vmem [resolvable:$true] %s32
      %35 = dma.hbm_to_vmem [thread:$0]  %s2, 16, %s33, [#allocation8]
    $region13: #{cnn_dropout_forward.2} parent=1 // pred_fallthru
      _
    // Predicated region
    $region14: #{cnn_dropout_forward.2} parent=1 // pred_check
      _
    $region15: #{cnn_dropout_forward.2} parent=1 // pred_check_branch
      %37 = sbr.rel (0) target = $region17
    $region16: #{cnn_dropout_forward.2} parent=1 // pred_region
      _
    $region17: #{cnn_dropout_forward.2} parent=1 // pred_fallthru
      _
    // Predicated region
    $region18: #{cnn_dropout_forward.2} parent=1 // pred_check
      _
    $region19: #{cnn_dropout_forward.2} parent=1 // pred_check_branch
      %39 = sbr.rel (0) target = $region21
    $region20: #{cnn_dropout_forward.2} parent=1 // pred_region
      %s41 = ssub.s32 16, 16
      %42 = vsyncadd [#allocation8], %s41
      %s44 = sshll.u32 [#allocation9], 4
      %s45 = int_to_ptr.vmem [resolvable:$true] %s44
      %47 = dma.hbm_to_vmem [thread:$0]  %s4, 16, %s45, [#allocation8]
    $region21: #{cnn_dropout_forward.2} parent=1 // pred_fallthru
      _
    // Predicated region
    $region22: #{cnn_dropout_forward.2} parent=1 // pred_check
      _
    $region23: #{cnn_dropout_forward.2} parent=1 // pred_check_branch
      %49 = sbr.rel (0) target = $region25
    $region24: #{cnn_dropout_forward.2} parent=1 // pred_region
      %50 = dma.done [#allocation6], 128
    $region25: #{cnn_dropout_forward.2} parent=1 // pred_fallthru
      _
    // Predicated region
    $region26: #{cnn_dropout_forward.2} parent=1 // pred_check
      _
    $region27: #{cnn_dropout_forward.2} parent=1 // pred_check_branch
      %52 = sbr.rel (0) target = $region29
    $region28: #{cnn_dropout_forward.2} parent=1 // pred_region
      %53 = dma.done [#allocation8], 16
    $region29: #{cnn_dropout_forward.2} parent=1 // pred_fallthru
      _
    // Predicated region
    $region30: #{cnn_dropout_forward.2} parent=1 // pred_check
      _
    $region31: #{cnn_dropout_forward.2} parent=1 // pred_check_branch
      %55 = sbr.rel (0) target = $region33
    $region32: #{cnn_dropout_forward.2} parent=1 // pred_region
      %56 = dma.done [#allocation8], 16
    $region33: #{cnn_dropout_forward.2} parent=1 // pred_fallthru
      _
    %v58 = vld [vmem:[%s0] sm:$0xf]
    %v59 = vld [vmem:[%s0 + $0x4] sm:$0xf]
    %v60 = vld [vmem:[%s0 + $0x8] sm:$0xf]
    %v61 = vld [vmem:[%s0 + $0xc] sm:$0xf]
    %v62 = vld [vmem:[%s0 + $0x10] sm:$0xf]
    %v63 = vld [vmem:[%s0 + $0x14] sm:$0xf]
    %v64 = vld [vmem:[%s0 + $0x18] sm:$0xf]
    %v65 = vld [vmem:[%s0 + $0x1c] sm:$0xf]
    %v66 = vld [vmem:[%s0 + $0x20] sm:$0xf]
    %v67 = vld [vmem:[%s0 + $0x24] sm:$0xf]
    %v68 = vld [vmem:[%s0 + $0x28] sm:$0xf]
    %v69 = vld [vmem:[%s0 + $0x2c] sm:$0xf]
    %v70 = vld [vmem:[%s0 + $0x30] sm:$0xf]
    %v71 = vld [vmem:[%s0 + $0x34] sm:$0xf]
    %v72 = vld [vmem:[%s0 + $0x38] sm:$0xf]
    %v73 = vld [vmem:[%s0 + $0x3c] sm:$0xf]
    %v74 = vld [vmem:[%s0 + $0x40] sm:$0xf]
    %v75 = vld [vmem:[%s0 + $0x44] sm:$0xf]
    %v76 = vld [vmem:[%s0 + $0x48] sm:$0xf]
    %v77 = vld [vmem:[%s0 + $0x4c] sm:$0xf]
    %v78 = vld [vmem:[%s0 + $0x50] sm:$0xf]
    %v79 = vld [vmem:[%s0 + $0x54] sm:$0xf]
    %v80 = vld [vmem:[%s0 + $0x58] sm:$0xf]
    %v81 = vld [vmem:[%s0 + $0x5c] sm:$0xf]
    %v82 = vld [vmem:[%s0 + $0x60] sm:$0xf]
    %v83 = vld [vmem:[%s0 + $0x64] sm:$0xf]
    %v84 = vld [vmem:[%s0 + $0x68] sm:$0xf]
    %v85 = vld [vmem:[%s0 + $0x6c] sm:$0xf]
    %v86 = vld [vmem:[%s0 + $0x70] sm:$0xf]
    %v87 = vld [vmem:[%s0 + $0x74] sm:$0xf]
    %v88 = vld [vmem:[%s0 + $0x78] sm:$0xf]
    %v89 = vld [vmem:[%s0 + $0x7c] sm:$0xf]
    %v90 = vld [vmem:[%s0 + $0x80] sm:$0xf]
    %v91 = vld [vmem:[%s0 + $0x84] sm:$0xf]
    %v92 = vld [vmem:[%s0 + $0x88] sm:$0xf]
    %v93 = vld [vmem:[%s0 + $0x8c] sm:$0xf]
    %v94 = vld [vmem:[%s0 + $0x90] sm:$0xf]
    %v95 = vld [vmem:[%s0 + $0x94] sm:$0xf]
    %v96 = vld [vmem:[%s0 + $0x98] sm:$0xf]
    %v97 = vld [vmem:[%s0 + $0x9c] sm:$0xf]
    %v98 = vld [vmem:[%s0 + $0xa0] sm:$0xf]
    %v99 = vld [vmem:[%s0 + $0xa4] sm:$0xf]
    %v100 = vld [vmem:[%s0 + $0xa8] sm:$0xf]
    %v101 = vld [vmem:[%s0 + $0xac] sm:$0xf]
    %v102 = vld [vmem:[%s0 + $0xb0] sm:$0xf]
    %v103 = vld [vmem:[%s0 + $0xb4] sm:$0xf]
    %v104 = vld [vmem:[%s0 + $0xb8] sm:$0xf]
    %v105 = vld [vmem:[%s0 + $0xbc] sm:$0xf]
    %v106 = vld [vmem:[%s0 + $0xc0] sm:$0xf]
    %v107 = vld [vmem:[%s0 + $0xc4] sm:$0xf]
    %v108 = vld [vmem:[%s0 + $0xc8] sm:$0xf]
    %v109 = vld [vmem:[%s0 + $0xcc] sm:$0xf]
    %v110 = vld [vmem:[%s0 + $0xd0] sm:$0xf]
    %v111 = vld [vmem:[%s0 + $0xd4] sm:$0xf]
    %v112 = vld [vmem:[%s0 + $0xd8] sm:$0xf]
    %v113 = vld [vmem:[%s0 + $0xdc] sm:$0xf]
    %v114 = vld [vmem:[%s0 + $0xe0] sm:$0xf]
    %v115 = vld [vmem:[%s0 + $0xe4] sm:$0xf]
    %v116 = vld [vmem:[%s0 + $0xe8] sm:$0xf]
    %v117 = vld [vmem:[%s0 + $0xec] sm:$0xf]
    %v118 = vld [vmem:[%s0 + $0xf0] sm:$0xf]
    %v119 = vld [vmem:[%s0 + $0xf4] sm:$0xf]
    %v120 = vld [vmem:[%s0 + $0xf8] sm:$0xf]
    %v121 = vld [vmem:[%s0 + $0xfc] sm:$0xf]
    %v122 = vld [vmem:[%s0 + $0x100] sm:$0xf]
    %v123 = vld [vmem:[%s0 + $0x104] sm:$0xf]
    %v124 = vld [vmem:[%s0 + $0x108] sm:$0xf]
    %v125 = vld [vmem:[%s0 + $0x10c] sm:$0xf]
    %v126 = vld [vmem:[%s0 + $0x110] sm:$0xf]
    %v127 = vld [vmem:[%s0 + $0x114] sm:$0xf]
    %v128 = vld [vmem:[%s0 + $0x118] sm:$0xf]
    %v129 = vld [vmem:[%s0 + $0x11c] sm:$0xf]
    %v130 = vld [vmem:[%s0 + $0x120] sm:$0xf]
    %v131 = vld [vmem:[%s0 + $0x124] sm:$0xf]
    %v132 = vld [vmem:[%s0 + $0x128] sm:$0xf]
    %v133 = vld [vmem:[%s0 + $0x12c] sm:$0xf]
    %v134 = vld [vmem:[%s0 + $0x130] sm:$0xf]
    %v135 = vld [vmem:[%s0 + $0x134] sm:$0xf]
    %v136 = vld [vmem:[%s0 + $0x138] sm:$0xf]
    %v137 = vld [vmem:[%s0 + $0x13c] sm:$0xf]
    %v138 = vld [vmem:[%s0 + $0x140] sm:$0xf]
    %v139 = vld [vmem:[%s0 + $0x144] sm:$0xf]
    %v140 = vld [vmem:[%s0 + $0x148] sm:$0xf]
    %v141 = vld [vmem:[%s0 + $0x14c] sm:$0xf]
    %v142 = vld [vmem:[%s0 + $0x150] sm:$0xf]
    %v143 = vld [vmem:[%s0 + $0x154] sm:$0xf]
    %v144 = vld [vmem:[%s0 + $0x158] sm:$0xf]
    %v145 = vld [vmem:[%s0 + $0x15c] sm:$0xf]
    %v146 = vld [vmem:[%s0 + $0x160] sm:$0xf]
    %v147 = vld [vmem:[%s0 + $0x164] sm:$0xf]
    %v148 = vld [vmem:[%s0 + $0x168] sm:$0xf]
    %v149 = vld [vmem:[%s0 + $0x16c] sm:$0xf]
    %v150 = vld [vmem:[%s0 + $0x170] sm:$0xf]
    %v151 = vld [vmem:[%s0 + $0x174] sm:$0xf]
    %v152 = vld [vmem:[%s0 + $0x178] sm:$0xf]
    %v153 = vld [vmem:[%s0 + $0x17c] sm:$0xf]
    %v154 = vld [vmem:[%s0 + $0x180] sm:$0xf]
    %v155 = vld [vmem:[%s0 + $0x184] sm:$0xf]
    %v156 = vld [vmem:[%s0 + $0x188] sm:$0xf]
    %v157 = vld [vmem:[%s0 + $0x18c] sm:$0xf]
    %v158 = vld [vmem:[%s0 + $0x190] sm:$0xf]
    %v159 = vld [vmem:[%s0 + $0x194] sm:$0xf]
    %v160 = vld [vmem:[%s0 + $0x198] sm:$0xf]
    %v161 = vld [vmem:[%s0 + $0x19c] sm:$0xf]
    %v162 = vld [vmem:[%s0 + $0x1a0] sm:$0xf]
    %v163 = vld [vmem:[%s0 + $0x1a4] sm:$0xf]
    %v164 = vld [vmem:[%s0 + $0x1a8] sm:$0xf]
    %v165 = vld [vmem:[%s0 + $0x1ac] sm:$0xf]
    %v166 = vld [vmem:[%s0 + $0x1b0] sm:$0xf]
    %v167 = vld [vmem:[%s0 + $0x1b4] sm:$0xf]
    %v168 = vld [vmem:[%s0 + $0x1b8] sm:$0xf]
    %v169 = vld [vmem:[%s0 + $0x1bc] sm:$0xf]
    %v170 = vld [vmem:[%s0 + $0x1c0] sm:$0xf]
    %v171 = vld [vmem:[%s0 + $0x1c4] sm:$0xf]
    %v172 = vld [vmem:[%s0 + $0x1c8] sm:$0xf]
    %v173 = vld [vmem:[%s0 + $0x1cc] sm:$0xf]
    %v174 = vld [vmem:[%s0 + $0x1d0] sm:$0xf]
    %v175 = vld [vmem:[%s0 + $0x1d4] sm:$0xf]
    %v176 = vld [vmem:[%s0 + $0x1d8] sm:$0xf]
    %v177 = vld [vmem:[%s0 + $0x1dc] sm:$0xf]
    %v178 = vld [vmem:[%s0 + $0x1e0] sm:$0xf]
    %v179 = vld [vmem:[%s0 + $0x1e4] sm:$0xf]
    %v180 = vld [vmem:[%s0 + $0x1e8] sm:$0xf]
    %v181 = vld [vmem:[%s0 + $0x1ec] sm:$0xf]
    %v182 = vld [vmem:[%s0 + $0x1f0] sm:$0xf]
    %v183 = vld [vmem:[%s0 + $0x1f4] sm:$0xf]
    %v184 = vld [vmem:[%s0 + $0x1f8] sm:$0xf]
    %v185 = vld [vmem:[%s0 + $0x1fc] sm:$0xf]
    %v186 = vld [vmem:[%s0 + $0x200] sm:$0xf]
    %v187 = vld [vmem:[%s0 + $0x204] sm:$0xf]
    %v188 = vld [vmem:[%s0 + $0x208] sm:$0xf]
    %v189 = vld [vmem:[%s0 + $0x20c] sm:$0xf]
    %v190 = vld [vmem:[%s0 + $0x210] sm:$0xf]
    %v191 = vld [vmem:[%s0 + $0x214] sm:$0xf]
    %v192 = vld [vmem:[%s0 + $0x218] sm:$0xf]
    %v193 = vld [vmem:[%s0 + $0x21c] sm:$0xf]
    %v194 = vld [vmem:[%s0 + $0x220] sm:$0xf]
    %v195 = vld [vmem:[%s0 + $0x224] sm:$0xf]
    %v196 = vld [vmem:[%s0 + $0x228] sm:$0xf]
    %v197 = vld [vmem:[%s0 + $0x22c] sm:$0xf]
    %v198 = vld [vmem:[%s0 + $0x230] sm:$0xf]
    %v199 = vld [vmem:[%s0 + $0x234] sm:$0xf]
    %v200 = vld [vmem:[%s0 + $0x238] sm:$0xf]
    %v201 = vld [vmem:[%s0 + $0x23c] sm:$0xf]
    %v202 = vld [vmem:[%s0 + $0x240] sm:$0xf]
    %v203 = vld [vmem:[%s0 + $0x244] sm:$0xf]
    %v204 = vld [vmem:[%s0 + $0x248] sm:$0xf]
    %v205 = vld [vmem:[%s0 + $0x24c] sm:$0xf]
    %v206 = vld [vmem:[%s0 + $0x250] sm:$0xf]
    %v207 = vld [vmem:[%s0 + $0x254] sm:$0xf]
    %v208 = vld [vmem:[%s0 + $0x258] sm:$0xf]
    %v209 = vld [vmem:[%s0 + $0x25c] sm:$0xf]
    %v210 = vld [vmem:[%s0 + $0x260] sm:$0xf]
    %v211 = vld [vmem:[%s0 + $0x264] sm:$0xf]
    %v212 = vld [vmem:[%s0 + $0x268] sm:$0xf]
    %v213 = vld [vmem:[%s0 + $0x26c] sm:$0xf]
    %v214 = vld [vmem:[%s0 + $0x270] sm:$0xf]
    %v215 = vld [vmem:[%s0 + $0x274] sm:$0xf]
    %v216 = vld [vmem:[%s0 + $0x278] sm:$0xf]
    %v217 = vld [vmem:[%s0 + $0x27c] sm:$0xf]
    %v218 = vld [vmem:[%s0 + $0x280] sm:$0xf]
    %v219 = vld [vmem:[%s0 + $0x284] sm:$0xf]
    %v220 = vld [vmem:[%s0 + $0x288] sm:$0xf]
    %v221 = vld [vmem:[%s0 + $0x28c] sm:$0xf]
    %v222 = vld [vmem:[%s0 + $0x290] sm:$0xf]
    %v223 = vld [vmem:[%s0 + $0x294] sm:$0xf]
    %v224 = vld [vmem:[%s0 + $0x298] sm:$0xf]
    %v225 = vld [vmem:[%s0 + $0x29c] sm:$0xf]
    %v226 = vld [vmem:[%s0 + $0x2a0] sm:$0xf]
    %v227 = vld [vmem:[#allocation5] sm:$0xf]
    %v228 = vld [vmem:[#allocation5 + $0x4] sm:$0x1]
    %v229 = vld [vmem:[#allocation7] sm:$0x1]
    %v231 = vlaneseq
    %v232 = vshrl.u32 %v231, 7
    %v233 = vsub.s32 0, %v232
    %v234 = vrot.slane %v229, %v233
    %v405 = vunpack.c.l.b16 %v58
    %v406 = vunpack.c.l.b16 %v59
    %v407 = vunpack.c.l.b16 %v60
    %v408 = vunpack.c.l.b16 %v61
    %v409 = vunpack.c.l.b16 %v62
    %v410 = vunpack.c.l.b16 %v63
    %v411 = vunpack.c.l.b16 %v64
    %v412 = vunpack.c.l.b16 %v65
    %v413 = vunpack.c.l.b16 %v66
    %v414 = vunpack.c.l.b16 %v67
    %v415 = vunpack.c.l.b16 %v68
    %v416 = vunpack.c.l.b16 %v69
    %v417 = vunpack.c.l.b16 %v70
    %v418 = vunpack.c.l.b16 %v71
    %v419 = vunpack.c.l.b16 %v72
    %v420 = vunpack.c.l.b16 %v73
    %v421 = vunpack.c.l.b16 %v74
    %v422 = vunpack.c.l.b16 %v75
    %v423 = vunpack.c.l.b16 %v76
    %v424 = vunpack.c.l.b16 %v77
    %v425 = vunpack.c.l.b16 %v78
    %v426 = vunpack.c.l.b16 %v79
    %v427 = vunpack.c.l.b16 %v80
    %v428 = vunpack.c.l.b16 %v81
    %v429 = vunpack.c.l.b16 %v82
    %v430 = vunpack.c.l.b16 %v83
    %v431 = vunpack.c.l.b16 %v84
    %v432 = vunpack.c.l.b16 %v85
    %v433 = vunpack.c.l.b16 %v86
    %v434 = vunpack.c.l.b16 %v87
    %v435 = vunpack.c.l.b16 %v88
    %v436 = vunpack.c.l.b16 %v89
    %v437 = vunpack.c.l.b16 %v90
    %v438 = vunpack.c.l.b16 %v91
    %v439 = vunpack.c.l.b16 %v92
    %v440 = vunpack.c.l.b16 %v93
    %v441 = vunpack.c.l.b16 %v94
    %v442 = vunpack.c.l.b16 %v95
    %v443 = vunpack.c.l.b16 %v96
    %v444 = vunpack.c.l.b16 %v97
    %v445 = vunpack.c.l.b16 %v98
    %v446 = vunpack.c.l.b16 %v99
    %v447 = vunpack.c.l.b16 %v100
    %v448 = vunpack.c.l.b16 %v101
    %v449 = vunpack.c.l.b16 %v102
    %v450 = vunpack.c.l.b16 %v103
    %v451 = vunpack.c.l.b16 %v104
    %v452 = vunpack.c.l.b16 %v105
    %v453 = vunpack.c.l.b16 %v106
    %v454 = vunpack.c.l.b16 %v107
    %v455 = vunpack.c.l.b16 %v108
    %v456 = vunpack.c.l.b16 %v109
    %v457 = vunpack.c.l.b16 %v110
    %v458 = vunpack.c.l.b16 %v111
    %v459 = vunpack.c.l.b16 %v112
    %v460 = vunpack.c.l.b16 %v113
    %v461 = vunpack.c.l.b16 %v114
    %v462 = vunpack.c.l.b16 %v115
    %v463 = vunpack.c.l.b16 %v116
    %v464 = vunpack.c.l.b16 %v117
    %v465 = vunpack.c.l.b16 %v118
    %v466 = vunpack.c.l.b16 %v119
    %v467 = vunpack.c.l.b16 %v120
    %v468 = vunpack.c.l.b16 %v121
    %v469 = vunpack.c.l.b16 %v122
    %v470 = vunpack.c.l.b16 %v123
    %v471 = vunpack.c.l.b16 %v124
    %v472 = vunpack.c.l.b16 %v125
    %v473 = vunpack.c.l.b16 %v126
    %v474 = vunpack.c.l.b16 %v127
    %v475 = vunpack.c.l.b16 %v128
    %v476 = vunpack.c.l.b16 %v129
    %v477 = vunpack.c.l.b16 %v130
    %v478 = vunpack.c.l.b16 %v131
    %v479 = vunpack.c.l.b16 %v132
    %v480 = vunpack.c.l.b16 %v133
    %v481 = vunpack.c.l.b16 %v134
    %v482 = vunpack.c.l.b16 %v135
    %v483 = vunpack.c.l.b16 %v136
    %v484 = vunpack.c.l.b16 %v137
    %v485 = vunpack.c.l.b16 %v138
    %v486 = vunpack.c.l.b16 %v139
    %v487 = vunpack.c.l.b16 %v140
    %v488 = vunpack.c.l.b16 %v141
    %v489 = vunpack.c.l.b16 %v142
    %v490 = vunpack.c.l.b16 %v143
    %v491 = vunpack.c.l.b16 %v144
    %v492 = vunpack.c.l.b16 %v145
    %v493 = vunpack.c.l.b16 %v146
    %v494 = vunpack.c.l.b16 %v147
    %v495 = vunpack.c.l.b16 %v148
    %v496 = vunpack.c.l.b16 %v149
    %v497 = vunpack.c.l.b16 %v150
    %v498 = vunpack.c.l.b16 %v151
    %v499 = vunpack.c.l.b16 %v152
    %v500 = vunpack.c.l.b16 %v153
    %v501 = vunpack.c.l.b16 %v154
    %v502 = vunpack.c.l.b16 %v155
    %v503 = vunpack.c.l.b16 %v156
    %v504 = vunpack.c.l.b16 %v157
    %v505 = vunpack.c.l.b16 %v158
    %v506 = vunpack.c.l.b16 %v159
    %v507 = vunpack.c.l.b16 %v160
    %v508 = vunpack.c.l.b16 %v161
    %v509 = vunpack.c.l.b16 %v162
    %v510 = vunpack.c.l.b16 %v163
    %v511 = vunpack.c.l.b16 %v164
    %v512 = vunpack.c.l.b16 %v165
    %v513 = vunpack.c.l.b16 %v166
    %v514 = vunpack.c.l.b16 %v167
    %v515 = vunpack.c.l.b16 %v168
    %v516 = vunpack.c.l.b16 %v169
    %v517 = vunpack.c.l.b16 %v170
    %v518 = vunpack.c.l.b16 %v171
    %v519 = vunpack.c.l.b16 %v172
    %v520 = vunpack.c.l.b16 %v173
    %v521 = vunpack.c.l.b16 %v174
    %v522 = vunpack.c.l.b16 %v175
    %v523 = vunpack.c.l.b16 %v176
    %v524 = vunpack.c.l.b16 %v177
    %v525 = vunpack.c.l.b16 %v178
    %v526 = vunpack.c.l.b16 %v179
    %v527 = vunpack.c.l.b16 %v180
    %v528 = vunpack.c.l.b16 %v181
    %v529 = vunpack.c.l.b16 %v182
    %v530 = vunpack.c.l.b16 %v183
    %v531 = vunpack.c.l.b16 %v184
    %v532 = vunpack.c.l.b16 %v185
    %v533 = vunpack.c.l.b16 %v186
    %v534 = vunpack.c.l.b16 %v187
    %v535 = vunpack.c.l.b16 %v188
    %v536 = vunpack.c.l.b16 %v189
    %v537 = vunpack.c.l.b16 %v190
    %v538 = vunpack.c.l.b16 %v191
    %v539 = vunpack.c.l.b16 %v192
    %v540 = vunpack.c.l.b16 %v193
    %v541 = vunpack.c.l.b16 %v194
    %v542 = vunpack.c.l.b16 %v195
    %v543 = vunpack.c.l.b16 %v196
    %v544 = vunpack.c.l.b16 %v197
    %v545 = vunpack.c.l.b16 %v198
    %v546 = vunpack.c.l.b16 %v199
    %v547 = vunpack.c.l.b16 %v200
    %v548 = vunpack.c.l.b16 %v201
    %v549 = vunpack.c.l.b16 %v202
    %v550 = vunpack.c.l.b16 %v203
    %v551 = vunpack.c.l.b16 %v204
    %v552 = vunpack.c.l.b16 %v205
    %v553 = vunpack.c.l.b16 %v206
    %v554 = vunpack.c.l.b16 %v207
    %v555 = vunpack.c.l.b16 %v208
    %v556 = vunpack.c.l.b16 %v209
    %v557 = vunpack.c.l.b16 %v210
    %v558 = vunpack.c.l.b16 %v211
    %v559 = vunpack.c.l.b16 %v212
    %v560 = vunpack.c.l.b16 %v213
    %v561 = vunpack.c.l.b16 %v214
    %v562 = vunpack.c.l.b16 %v215
    %v563 = vunpack.c.l.b16 %v216
    %v564 = vunpack.c.l.b16 %v217
    %v565 = vunpack.c.l.b16 %v218
    %v566 = vunpack.c.l.b16 %v219
    %v567 = vunpack.c.l.b16 %v220
    %v568 = vunpack.c.l.b16 %v221
    %v569 = vunpack.c.l.b16 %v222
    %v570 = vunpack.c.l.b16 %v223
    %v571 = vunpack.c.l.b16 %v224
    %v572 = vunpack.c.l.b16 %v225
    %v573 = vunpack.c.l.b16 %v226
    %v574 = vpack.c.b16 %v406, %v405
    %v575 = vpack.c.b16 %v408, %v407
    %v576 = vpack.c.b16 %v410, %v409
    %v577 = vpack.c.b16 %v412, %v411
    %v578 = vpack.c.b16 %v414, %v413
    %v579 = vpack.c.b16 %v416, %v415
    %v580 = vpack.c.b16 %v418, %v417
    %v581 = vpack.c.b16 %v420, %v419
    %v582 = vpack.c.b16 %v422, %v421
    %v583 = vpack.c.b16 %v424, %v423
    %v584 = vpack.c.b16 %v426, %v425
    %v585 = vpack.c.b16 %v428, %v427
    %v586 = vpack.c.b16 %v430, %v429
    %v587 = vpack.c.b16 %v432, %v431
    %v588 = vpack.c.b16 %v434, %v433
    %v589 = vpack.c.b16 %v436, %v435
    %v590 = vpack.c.b16 %v438, %v437
    %v591 = vpack.c.b16 %v440, %v439
    %v592 = vpack.c.b16 %v442, %v441
    %v593 = vpack.c.b16 %v444, %v443
    %v594 = vpack.c.b16 %v446, %v445
    %v595 = vpack.c.b16 %v448, %v447
    %v596 = vpack.c.b16 %v450, %v449
    %v597 = vpack.c.b16 %v452, %v451
    %v598 = vpack.c.b16 %v454, %v453
    %v599 = vpack.c.b16 %v456, %v455
    %v600 = vpack.c.b16 %v458, %v457
    %v601 = vpack.c.b16 %v460, %v459
    %v602 = vpack.c.b16 %v462, %v461
    %v603 = vpack.c.b16 %v464, %v463
    %v604 = vpack.c.b16 %v466, %v465
    %v605 = vpack.c.b16 %v468, %v467
    %v606 = vpack.c.b16 %v470, %v469
    %v607 = vpack.c.b16 %v472, %v471
    %v608 = vpack.c.b16 %v474, %v473
    %v609 = vpack.c.b16 %v476, %v475
    %v610 = vpack.c.b16 %v478, %v477
    %v611 = vpack.c.b16 %v480, %v479
    %v612 = vpack.c.b16 %v482, %v481
    %v613 = vpack.c.b16 %v484, %v483
    %v614 = vpack.c.b16 %v486, %v485
    %v615 = vpack.c.b16 %v488, %v487
    %v616 = vpack.c.b16 %v490, %v489
    %v617 = vpack.c.b16 %v492, %v491
    %v618 = vpack.c.b16 %v494, %v493
    %v619 = vpack.c.b16 %v496, %v495
    %v620 = vpack.c.b16 %v498, %v497
    %v621 = vpack.c.b16 %v500, %v499
    %v622 = vpack.c.b16 %v502, %v501
    %v623 = vpack.c.b16 %v504, %v503
    %v624 = vpack.c.b16 %v506, %v505
    %v625 = vpack.c.b16 %v508, %v507
    %v626 = vpack.c.b16 %v510, %v509
    %v627 = vpack.c.b16 %v512, %v511
    %v628 = vpack.c.b16 %v514, %v513
    %v629 = vpack.c.b16 %v516, %v515
    %v630 = vpack.c.b16 %v518, %v517
    %v631 = vpack.c.b16 %v520, %v519
    %v632 = vpack.c.b16 %v522, %v521
    %v633 = vpack.c.b16 %v524, %v523
    %v634 = vpack.c.b16 %v526, %v525
    %v635 = vpack.c.b16 %v528, %v527
    %v636 = vpack.c.b16 %v530, %v529
    %v637 = vpack.c.b16 %v532, %v531
    %v638 = vpack.c.b16 %v534, %v533
    %v639 = vpack.c.b16 %v536, %v535
    %v640 = vpack.c.b16 %v538, %v537
    %v641 = vpack.c.b16 %v540, %v539
    %v642 = vpack.c.b16 %v542, %v541
    %v643 = vpack.c.b16 %v544, %v543
    %v644 = vpack.c.b16 %v546, %v545
    %v645 = vpack.c.b16 %v548, %v547
    %v646 = vpack.c.b16 %v550, %v549
    %v647 = vpack.c.b16 %v552, %v551
    %v648 = vpack.c.b16 %v554, %v553
    %v649 = vpack.c.b16 %v556, %v555
    %v650 = vpack.c.b16 %v558, %v557
    %v651 = vpack.c.b16 %v560, %v559
    %v652 = vpack.c.b16 %v562, %v561
    %v653 = vpack.c.b16 %v564, %v563
    %v654 = vpack.c.b16 %v566, %v565
    %v655 = vpack.c.b16 %v568, %v567
    %v656 = vpack.c.b16 %v570, %v569
    %v657 = vpack.c.b16 %v572, %v571
    %v658 = vpack.c.b16 %v573, %v573
    %v661 = vunpack.c.l.b16 %v227
    %v662 = vunpack.c.l.b16 %v228
    %v663 = vpack.c.b16 %v662, %v661
    %vm664 = vcmask 72704
    %v666 = vsel %vm664, %v574, 0
    %v669 = vsel %vm664, %v575, 0
    %v672 = vsel %vm664, %v576, 0
    %v675 = vsel %vm664, %v577, 0
    %v678 = vsel %vm664, %v578, 0
    %v681 = vsel %vm664, %v579, 0
    %v684 = vsel %vm664, %v580, 0
    %v687 = vsel %vm664, %v581, 0
    %v690 = vsel %vm664, %v582, 0
    %v693 = vsel %vm664, %v583, 0
    %v696 = vsel %vm664, %v584, 0
    %v699 = vsel %vm664, %v585, 0
    %v702 = vsel %vm664, %v586, 0
    %v705 = vsel %vm664, %v587, 0
    %v708 = vsel %vm664, %v588, 0
    %v711 = vsel %vm664, %v589, 0
    %v714 = vsel %vm664, %v590, 0
    %v717 = vsel %vm664, %v591, 0
    %v720 = vsel %vm664, %v592, 0
    %v723 = vsel %vm664, %v593, 0
    %v726 = vsel %vm664, %v594, 0
    %v729 = vsel %vm664, %v595, 0
    %v732 = vsel %vm664, %v596, 0
    %v735 = vsel %vm664, %v597, 0
    %v738 = vsel %vm664, %v598, 0
    %v741 = vsel %vm664, %v599, 0
    %v744 = vsel %vm664, %v600, 0
    %v747 = vsel %vm664, %v601, 0
    %v750 = vsel %vm664, %v602, 0
    %v753 = vsel %vm664, %v603, 0
    %v756 = vsel %vm664, %v604, 0
    %v759 = vsel %vm664, %v605, 0
    %v762 = vsel %vm664, %v606, 0
    %v765 = vsel %vm664, %v607, 0
    %v768 = vsel %vm664, %v608, 0
    %v771 = vsel %vm664, %v609, 0
    %v774 = vsel %vm664, %v610, 0
    %v777 = vsel %vm664, %v611, 0
    %v780 = vsel %vm664, %v612, 0
    %v783 = vsel %vm664, %v613, 0
    %v786 = vsel %vm664, %v614, 0
    %v789 = vsel %vm664, %v615, 0
    %v792 = vsel %vm664, %v616, 0
    %v795 = vsel %vm664, %v617, 0
    %v798 = vsel %vm664, %v618, 0
    %v801 = vsel %vm664, %v619, 0
    %v804 = vsel %vm664, %v620, 0
    %v807 = vsel %vm664, %v621, 0
    %v810 = vsel %vm664, %v622, 0
    %v813 = vsel %vm664, %v623, 0
    %v816 = vsel %vm664, %v624, 0
    %v819 = vsel %vm664, %v625, 0
    %v822 = vsel %vm664, %v626, 0
    %v825 = vsel %vm664, %v627, 0
    %v828 = vsel %vm664, %v628, 0
    %v831 = vsel %vm664, %v629, 0
    %v834 = vsel %vm664, %v630, 0
    %v837 = vsel %vm664, %v631, 0
    %v840 = vsel %vm664, %v632, 0
    %v843 = vsel %vm664, %v633, 0
    %v846 = vsel %vm664, %v634, 0
    %v849 = vsel %vm664, %v635, 0
    %v852 = vsel %vm664, %v636, 0
    %v855 = vsel %vm664, %v637, 0
    %v858 = vsel %vm664, %v638, 0
    %v861 = vsel %vm664, %v639, 0
    %v864 = vsel %vm664, %v640, 0
    %v867 = vsel %vm664, %v641, 0
    %v870 = vsel %vm664, %v642, 0
    %v873 = vsel %vm664, %v643, 0
    %v876 = vsel %vm664, %v644, 0
    %v879 = vsel %vm664, %v645, 0
    %v882 = vsel %vm664, %v646, 0
    %v885 = vsel %vm664, %v647, 0
    %v888 = vsel %vm664, %v648, 0
    %v891 = vsel %vm664, %v649, 0
    %v894 = vsel %vm664, %v650, 0
    %v897 = vsel %vm664, %v651, 0
    %v900 = vsel %vm664, %v652, 0
    %v903 = vsel %vm664, %v653, 0
    %v906 = vsel %vm664, %v654, 0
    %v909 = vsel %vm664, %v655, 0
    %v912 = vsel %vm664, %v656, 0
    %v915 = vsel %vm664, %v657, 0
    %v918 = vsel %vm664, %v658, 0
    %vm920 = vcmask 1043456
    %vm921 = vcmask 1044480
    %v922 = vsel %vm920, 4294967295, 65535
    %v923 = vsel %vm921, %v922, 0
    %v925 = vand.u32 %v663, %v923
    %927 = vmatprep.subr.bf16.mxu0 0
    %928 = vmatpush1.bf16.msra.mxu0 0
    %929 = vmatprep.subr.bf16.mxu0 0
    %930 = vmatpush1.bf16.msra.mxu0 0
    %931 = vmatprep.subr.bf16.mxu0 0
    %932 = vmatpush1.bf16.msra.mxu0 0
    %933 = vmatprep.subr.bf16.mxu0 0
    %934 = vmatpush1.bf16.msra.mxu0 0
    %935 = vmatprep.subr.bf16.mxu0 0
    %936 = vmatpush1.bf16.msra.mxu0 0
    %937 = vmatprep.subr.bf16.mxu0 0
    %938 = vmatpush1.bf16.msra.mxu0 0
    %939 = vmatprep.subr.bf16.mxu0 0
    %940 = vmatpush1.bf16.msra.mxu0 0
    %941 = vmatprep.subr.bf16.mxu0 0
    %942 = vmatpush1.bf16.msra.mxu0 %v925
    %943 = vmatprep.subr.bf16.mxu0 0
    %944 = vmatpush2.bf16.msra.mxu0 0
    %945 = vmatprep.subr.bf16.mxu0 0
    %946 = vmatpush2.bf16.msra.mxu0 0
    %947 = vmatprep.subr.bf16.mxu0 0
    %948 = vmatpush2.bf16.msra.mxu0 0
    %949 = vmatprep.subr.bf16.mxu0 0
    %950 = vmatpush2.bf16.msra.mxu0 0
    %951 = vmatprep.subr.bf16.mxu0 0
    %952 = vmatpush2.bf16.msra.mxu0 0
    %953 = vmatprep.subr.bf16.mxu0 0
    %954 = vmatpush2.bf16.msra.mxu0 0
    %955 = vmatprep.subr.bf16.mxu0 0
    %956 = vmatpush2.bf16.msra.mxu0 0
    %957 = vmatprep.subr.bf16.mxu0 0
    %958 = vmatpush2.bf16.msra.mxu0 0
    %959 = vmatprep.mubr.bf16.mxu0 0
    %960 = vmatmul.mubr.bf16.gmra.mxu0 %v666
    %v961 = vpop.f32.mrf.mxu0
    %v962 = vadd.f32 %v234, %v961
    %v963 = vpop.f32.mrf.mxu0
    %v964 = vpop.f32.mrf.mxu0
    %v965 = vadd.f32 %v234, %v964
    %v966 = vpop.f32.mrf.mxu0
    %967 = vmatprep.mubr.bf16.mxu0 0
    %968 = vmatmul.mubr.bf16.gmra.mxu0 %v669
    %v969 = vpop.f32.mrf.mxu0
    %v970 = vadd.f32 %v234, %v969
    %v971 = vpop.f32.mrf.mxu0
    %v972 = vpop.f32.mrf.mxu0
    %v973 = vadd.f32 %v234, %v972
    %v974 = vpop.f32.mrf.mxu0
    %975 = vmatprep.mubr.bf16.mxu0 0
    %976 = vmatmul.mubr.bf16.gmra.mxu0 %v672
    %v977 = vpop.f32.mrf.mxu0
    %v978 = vadd.f32 %v234, %v977
    %v979 = vpop.f32.mrf.mxu0
    %v980 = vpop.f32.mrf.mxu0
    %v981 = vadd.f32 %v234, %v980
    %v982 = vpop.f32.mrf.mxu0
    %983 = vmatprep.mubr.bf16.mxu0 0
    %984 = vmatmul.mubr.bf16.gmra.mxu0 %v675
    %v985 = vpop.f32.mrf.mxu0
    %v986 = vadd.f32 %v234, %v985
    %v987 = vpop.f32.mrf.mxu0
    %v988 = vpop.f32.mrf.mxu0
    %v989 = vadd.f32 %v234, %v988
    %v990 = vpop.f32.mrf.mxu0
    %991 = vmatprep.mubr.bf16.mxu0 0
    %992 = vmatmul.mubr.bf16.gmra.mxu0 %v678
    %v993 = vpop.f32.mrf.mxu0
    %v994 = vadd.f32 %v234, %v993
    %v995 = vpop.f32.mrf.mxu0
    %v996 = vpop.f32.mrf.mxu0
    %v997 = vadd.f32 %v234, %v996
    %v998 = vpop.f32.mrf.mxu0
    %999 = vmatprep.mubr.bf16.mxu0 0
    %1000 = vmatmul.mubr.bf16.gmra.mxu0 %v681
    %v1001 = vpop.f32.mrf.mxu0
    %v1002 = vadd.f32 %v234, %v1001
    %v1003 = vpop.f32.mrf.mxu0
    %v1004 = vpop.f32.mrf.mxu0
    %v1005 = vadd.f32 %v234, %v1004
    %v1006 = vpop.f32.mrf.mxu0
    %1007 = vmatprep.mubr.bf16.mxu0 0
    %1008 = vmatmul.mubr.bf16.gmra.mxu0 %v684
    %v1009 = vpop.f32.mrf.mxu0
    %v1010 = vadd.f32 %v234, %v1009
    %v1011 = vpop.f32.mrf.mxu0
    %v1012 = vpop.f32.mrf.mxu0
    %v1013 = vadd.f32 %v234, %v1012
    %v1014 = vpop.f32.mrf.mxu0
    %1015 = vmatprep.mubr.bf16.mxu0 0
    %1016 = vmatmul.mubr.bf16.gmra.mxu0 %v687
    %v1017 = vpop.f32.mrf.mxu0
    %v1018 = vadd.f32 %v234, %v1017
    %v1019 = vpop.f32.mrf.mxu0
    %v1020 = vpop.f32.mrf.mxu0
    %v1021 = vadd.f32 %v234, %v1020
    %v1022 = vpop.f32.mrf.mxu0
    %1023 = vmatprep.mubr.bf16.mxu0 0
    %1024 = vmatmul.mubr.bf16.gmra.mxu0 %v690
    %v1025 = vpop.f32.mrf.mxu0
    %v1026 = vadd.f32 %v234, %v1025
    %v1027 = vpop.f32.mrf.mxu0
    %v1028 = vpop.f32.mrf.mxu0
    %v1029 = vadd.f32 %v234, %v1028
    %v1030 = vpop.f32.mrf.mxu0
    %1031 = vmatprep.mubr.bf16.mxu0 0
    %1032 = vmatmul.mubr.bf16.gmra.mxu0 %v693
    %v1033 = vpop.f32.mrf.mxu0
    %v1034 = vadd.f32 %v234, %v1033
    %v1035 = vpop.f32.mrf.mxu0
    %v1036 = vpop.f32.mrf.mxu0
    %v1037 = vadd.f32 %v234, %v1036
    %v1038 = vpop.f32.mrf.mxu0
    %1039 = vmatprep.mubr.bf16.mxu0 0
    %1040 = vmatmul.mubr.bf16.gmra.mxu0 %v696
    %v1041 = vpop.f32.mrf.mxu0
    %v1042 = vadd.f32 %v234, %v1041
    %v1043 = vpop.f32.mrf.mxu0
    %v1044 = vpop.f32.mrf.mxu0
    %v1045 = vadd.f32 %v234, %v1044
    %v1046 = vpop.f32.mrf.mxu0
    %1047 = vmatprep.mubr.bf16.mxu0 0
    %1048 = vmatmul.mubr.bf16.gmra.mxu0 %v699
    %v1049 = vpop.f32.mrf.mxu0
    %v1050 = vadd.f32 %v234, %v1049
    %v1051 = vpop.f32.mrf.mxu0
    %v1052 = vpop.f32.mrf.mxu0
    %v1053 = vadd.f32 %v234, %v1052
    %v1054 = vpop.f32.mrf.mxu0
    %1055 = vmatprep.mubr.bf16.mxu0 0
    %1056 = vmatmul.mubr.bf16.gmra.mxu0 %v702
    %v1057 = vpop.f32.mrf.mxu0
    %v1058 = vadd.f32 %v234, %v1057
    %v1059 = vpop.f32.mrf.mxu0
    %v1060 = vpop.f32.mrf.mxu0
    %v1061 = vadd.f32 %v234, %v1060
    %v1062 = vpop.f32.mrf.mxu0
    %1063 = vmatprep.mubr.bf16.mxu0 0
    %1064 = vmatmul.mubr.bf16.gmra.mxu0 %v705
    %v1065 = vpop.f32.mrf.mxu0
    %v1066 = vadd.f32 %v234, %v1065
    %v1067 = vpop.f32.mrf.mxu0
    %v1068 = vpop.f32.mrf.mxu0
    %v1069 = vadd.f32 %v234, %v1068
    %v1070 = vpop.f32.mrf.mxu0
    %1071 = vmatprep.mubr.bf16.mxu0 0
    %1072 = vmatmul.mubr.bf16.gmra.mxu0 %v708
    %v1073 = vpop.f32.mrf.mxu0
    %v1074 = vadd.f32 %v234, %v1073
    %v1075 = vpop.f32.mrf.mxu0
    %v1076 = vpop.f32.mrf.mxu0
    %v1077 = vadd.f32 %v234, %v1076
    %v1078 = vpop.f32.mrf.mxu0
    %1079 = vmatprep.mubr.bf16.mxu0 0
    %1080 = vmatmul.mubr.bf16.gmra.mxu0 %v711
    %v1081 = vpop.f32.mrf.mxu0
    %v1082 = vadd.f32 %v234, %v1081
    %v1083 = vpop.f32.mrf.mxu0
    %v1084 = vpop.f32.mrf.mxu0
    %v1085 = vadd.f32 %v234, %v1084
    %v1086 = vpop.f32.mrf.mxu0
    %1087 = vmatprep.mubr.bf16.mxu0 0
    %1088 = vmatmul.mubr.bf16.gmra.mxu0 %v714
    %v1089 = vpop.f32.mrf.mxu0
    %v1090 = vadd.f32 %v234, %v1089
    %v1091 = vpop.f32.mrf.mxu0
    %v1092 = vpop.f32.mrf.mxu0
    %v1093 = vadd.f32 %v234, %v1092
    %v1094 = vpop.f32.mrf.mxu0
    %1095 = vmatprep.mubr.bf16.mxu0 0
    %1096 = vmatmul.mubr.bf16.gmra.mxu0 %v717
    %v1097 = vpop.f32.mrf.mxu0
    %v1098 = vadd.f32 %v234, %v1097
    %v1099 = vpop.f32.mrf.mxu0
    %v1100 = vpop.f32.mrf.mxu0
    %v1101 = vadd.f32 %v234, %v1100
    %v1102 = vpop.f32.mrf.mxu0
    %1103 = vmatprep.mubr.bf16.mxu0 0
    %1104 = vmatmul.mubr.bf16.gmra.mxu0 %v720
    %v1105 = vpop.f32.mrf.mxu0
    %v1106 = vadd.f32 %v234, %v1105
    %v1107 = vpop.f32.mrf.mxu0
    %v1108 = vpop.f32.mrf.mxu0
    %v1109 = vadd.f32 %v234, %v1108
    %v1110 = vpop.f32.mrf.mxu0
    %1111 = vmatprep.mubr.bf16.mxu0 0
    %1112 = vmatmul.mubr.bf16.gmra.mxu0 %v723
    %v1113 = vpop.f32.mrf.mxu0
    %v1114 = vadd.f32 %v234, %v1113
    %v1115 = vpop.f32.mrf.mxu0
    %v1116 = vpop.f32.mrf.mxu0
    %v1117 = vadd.f32 %v234, %v1116
    %v1118 = vpop.f32.mrf.mxu0
    %1119 = vmatprep.mubr.bf16.mxu0 0
    %1120 = vmatmul.mubr.bf16.gmra.mxu0 %v726
    %v1121 = vpop.f32.mrf.mxu0
    %v1122 = vadd.f32 %v234, %v1121
    %v1123 = vpop.f32.mrf.mxu0
    %v1124 = vpop.f32.mrf.mxu0
    %v1125 = vadd.f32 %v234, %v1124
    %v1126 = vpop.f32.mrf.mxu0
    %1127 = vmatprep.mubr.bf16.mxu0 0
    %1128 = vmatmul.mubr.bf16.gmra.mxu0 %v729
    %v1129 = vpop.f32.mrf.mxu0
    %v1130 = vadd.f32 %v234, %v1129
    %v1131 = vpop.f32.mrf.mxu0
    %v1132 = vpop.f32.mrf.mxu0
    %v1133 = vadd.f32 %v234, %v1132
    %v1134 = vpop.f32.mrf.mxu0
    %1135 = vmatprep.mubr.bf16.mxu0 0
    %1136 = vmatmul.mubr.bf16.gmra.mxu0 %v732
    %v1137 = vpop.f32.mrf.mxu0
    %v1138 = vadd.f32 %v234, %v1137
    %v1139 = vpop.f32.mrf.mxu0
    %v1140 = vpop.f32.mrf.mxu0
    %v1141 = vadd.f32 %v234, %v1140
    %v1142 = vpop.f32.mrf.mxu0
    %1143 = vmatprep.mubr.bf16.mxu0 0
    %1144 = vmatmul.mubr.bf16.gmra.mxu0 %v735
    %v1145 = vpop.f32.mrf.mxu0
    %v1146 = vadd.f32 %v234, %v1145
    %v1147 = vpop.f32.mrf.mxu0
    %v1148 = vpop.f32.mrf.mxu0
    %v1149 = vadd.f32 %v234, %v1148
    %v1150 = vpop.f32.mrf.mxu0
    %1151 = vmatprep.mubr.bf16.mxu0 0
    %1152 = vmatmul.mubr.bf16.gmra.mxu0 %v738
    %v1153 = vpop.f32.mrf.mxu0
    %v1154 = vadd.f32 %v234, %v1153
    %v1155 = vpop.f32.mrf.mxu0
    %v1156 = vpop.f32.mrf.mxu0
    %v1157 = vadd.f32 %v234, %v1156
    %v1158 = vpop.f32.mrf.mxu0
    %1159 = vmatprep.mubr.bf16.mxu0 0
    %1160 = vmatmul.mubr.bf16.gmra.mxu0 %v741
    %v1161 = vpop.f32.mrf.mxu0
    %v1162 = vadd.f32 %v234, %v1161
    %v1163 = vpop.f32.mrf.mxu0
    %v1164 = vpop.f32.mrf.mxu0
    %v1165 = vadd.f32 %v234, %v1164
    %v1166 = vpop.f32.mrf.mxu0
    %1167 = vmatprep.mubr.bf16.mxu0 0
    %1168 = vmatmul.mubr.bf16.gmra.mxu0 %v744
    %v1169 = vpop.f32.mrf.mxu0
    %v1170 = vadd.f32 %v234, %v1169
    %v1171 = vpop.f32.mrf.mxu0
    %v1172 = vpop.f32.mrf.mxu0
    %v1173 = vadd.f32 %v234, %v1172
    %v1174 = vpop.f32.mrf.mxu0
    %1175 = vmatprep.mubr.bf16.mxu0 0
    %1176 = vmatmul.mubr.bf16.gmra.mxu0 %v747
    %v1177 = vpop.f32.mrf.mxu0
    %v1178 = vadd.f32 %v234, %v1177
    %v1179 = vpop.f32.mrf.mxu0
    %v1180 = vpop.f32.mrf.mxu0
    %v1181 = vadd.f32 %v234, %v1180
    %v1182 = vpop.f32.mrf.mxu0
    %1183 = vmatprep.mubr.bf16.mxu0 0
    %1184 = vmatmul.mubr.bf16.gmra.mxu0 %v750
    %v1185 = vpop.f32.mrf.mxu0
    %v1186 = vadd.f32 %v234, %v1185
    %v1187 = vpop.f32.mrf.mxu0
    %v1188 = vpop.f32.mrf.mxu0
    %v1189 = vadd.f32 %v234, %v1188
    %v1190 = vpop.f32.mrf.mxu0
    %1191 = vmatprep.mubr.bf16.mxu0 0
    %1192 = vmatmul.mubr.bf16.gmra.mxu0 %v753
    %v1193 = vpop.f32.mrf.mxu0
    %v1194 = vadd.f32 %v234, %v1193
    %v1195 = vpop.f32.mrf.mxu0
    %v1196 = vpop.f32.mrf.mxu0
    %v1197 = vadd.f32 %v234, %v1196
    %v1198 = vpop.f32.mrf.mxu0
    %1199 = vmatprep.mubr.bf16.mxu0 0
    %1200 = vmatmul.mubr.bf16.gmra.mxu0 %v756
    %v1201 = vpop.f32.mrf.mxu0
    %v1202 = vadd.f32 %v234, %v1201
    %v1203 = vpop.f32.mrf.mxu0
    %v1204 = vpop.f32.mrf.mxu0
    %v1205 = vadd.f32 %v234, %v1204
    %v1206 = vpop.f32.mrf.mxu0
    %1207 = vmatprep.mubr.bf16.mxu0 0
    %1208 = vmatmul.mubr.bf16.gmra.mxu0 %v759
    %v1209 = vpop.f32.mrf.mxu0
    %v1210 = vadd.f32 %v234, %v1209
    %v1211 = vpop.f32.mrf.mxu0
    %v1212 = vpop.f32.mrf.mxu0
    %v1213 = vadd.f32 %v234, %v1212
    %v1214 = vpop.f32.mrf.mxu0
    %1215 = vmatprep.mubr.bf16.mxu0 0
    %1216 = vmatmul.mubr.bf16.gmra.mxu0 %v762
    %v1217 = vpop.f32.mrf.mxu0
    %v1218 = vadd.f32 %v234, %v1217
    %v1219 = vpop.f32.mrf.mxu0
    %v1220 = vpop.f32.mrf.mxu0
    %v1221 = vadd.f32 %v234, %v1220
    %v1222 = vpop.f32.mrf.mxu0
    %1223 = vmatprep.mubr.bf16.mxu0 0
    %1224 = vmatmul.mubr.bf16.gmra.mxu0 %v765
    %v1225 = vpop.f32.mrf.mxu0
    %v1226 = vadd.f32 %v234, %v1225
    %v1227 = vpop.f32.mrf.mxu0
    %v1228 = vpop.f32.mrf.mxu0
    %v1229 = vadd.f32 %v234, %v1228
    %v1230 = vpop.f32.mrf.mxu0
    %1231 = vmatprep.mubr.bf16.mxu0 0
    %1232 = vmatmul.mubr.bf16.gmra.mxu0 %v768
    %v1233 = vpop.f32.mrf.mxu0
    %v1234 = vadd.f32 %v234, %v1233
    %v1235 = vpop.f32.mrf.mxu0
    %v1236 = vpop.f32.mrf.mxu0
    %v1237 = vadd.f32 %v234, %v1236
    %v1238 = vpop.f32.mrf.mxu0
    %1239 = vmatprep.mubr.bf16.mxu0 0
    %1240 = vmatmul.mubr.bf16.gmra.mxu0 %v771
    %v1241 = vpop.f32.mrf.mxu0
    %v1242 = vadd.f32 %v234, %v1241
    %v1243 = vpop.f32.mrf.mxu0
    %v1244 = vpop.f32.mrf.mxu0
    %v1245 = vadd.f32 %v234, %v1244
    %v1246 = vpop.f32.mrf.mxu0
    %1247 = vmatprep.mubr.bf16.mxu0 0
    %1248 = vmatmul.mubr.bf16.gmra.mxu0 %v774
    %v1249 = vpop.f32.mrf.mxu0
    %v1250 = vadd.f32 %v234, %v1249
    %v1251 = vpop.f32.mrf.mxu0
    %v1252 = vpop.f32.mrf.mxu0
    %v1253 = vadd.f32 %v234, %v1252
    %v1254 = vpop.f32.mrf.mxu0
    %1255 = vmatprep.mubr.bf16.mxu0 0
    %1256 = vmatmul.mubr.bf16.gmra.mxu0 %v777
    %v1257 = vpop.f32.mrf.mxu0
    %v1258 = vadd.f32 %v234, %v1257
    %v1259 = vpop.f32.mrf.mxu0
    %v1260 = vpop.f32.mrf.mxu0
    %v1261 = vadd.f32 %v234, %v1260
    %v1262 = vpop.f32.mrf.mxu0
    %1263 = vmatprep.mubr.bf16.mxu0 0
    %1264 = vmatmul.mubr.bf16.gmra.mxu0 %v780
    %v1265 = vpop.f32.mrf.mxu0
    %v1266 = vadd.f32 %v234, %v1265
    %v1267 = vpop.f32.mrf.mxu0
    %v1268 = vpop.f32.mrf.mxu0
    %v1269 = vadd.f32 %v234, %v1268
    %v1270 = vpop.f32.mrf.mxu0
    %1271 = vmatprep.mubr.bf16.mxu0 0
    %1272 = vmatmul.mubr.bf16.gmra.mxu0 %v783
    %v1273 = vpop.f32.mrf.mxu0
    %v1274 = vadd.f32 %v234, %v1273
    %v1275 = vpop.f32.mrf.mxu0
    %v1276 = vpop.f32.mrf.mxu0
    %v1277 = vadd.f32 %v234, %v1276
    %v1278 = vpop.f32.mrf.mxu0
    %1279 = vmatprep.mubr.bf16.mxu0 0
    %1280 = vmatmul.mubr.bf16.gmra.mxu0 %v786
    %v1281 = vpop.f32.mrf.mxu0
    %v1282 = vadd.f32 %v234, %v1281
    %v1283 = vpop.f32.mrf.mxu0
    %v1284 = vpop.f32.mrf.mxu0
    %v1285 = vadd.f32 %v234, %v1284
    %v1286 = vpop.f32.mrf.mxu0
    %1287 = vmatprep.mubr.bf16.mxu0 0
    %1288 = vmatmul.mubr.bf16.gmra.mxu0 %v789
    %v1289 = vpop.f32.mrf.mxu0
    %v1290 = vadd.f32 %v234, %v1289
    %v1291 = vpop.f32.mrf.mxu0
    %v1292 = vpop.f32.mrf.mxu0
    %v1293 = vadd.f32 %v234, %v1292
    %v1294 = vpop.f32.mrf.mxu0
    %1295 = vmatprep.mubr.bf16.mxu0 0
    %1296 = vmatmul.mubr.bf16.gmra.mxu0 %v792
    %v1297 = vpop.f32.mrf.mxu0
    %v1298 = vadd.f32 %v234, %v1297
    %v1299 = vpop.f32.mrf.mxu0
    %v1300 = vpop.f32.mrf.mxu0
    %v1301 = vadd.f32 %v234, %v1300
    %v1302 = vpop.f32.mrf.mxu0
    %1303 = vmatprep.mubr.bf16.mxu0 0
    %1304 = vmatmul.mubr.bf16.gmra.mxu0 %v795
    %v1305 = vpop.f32.mrf.mxu0
    %v1306 = vadd.f32 %v234, %v1305
    %v1307 = vpop.f32.mrf.mxu0
    %v1308 = vpop.f32.mrf.mxu0
    %v1309 = vadd.f32 %v234, %v1308
    %v1310 = vpop.f32.mrf.mxu0
    %1311 = vmatprep.mubr.bf16.mxu0 0
    %1312 = vmatmul.mubr.bf16.gmra.mxu0 %v798
    %v1313 = vpop.f32.mrf.mxu0
    %v1314 = vadd.f32 %v234, %v1313
    %v1315 = vpop.f32.mrf.mxu0
    %v1316 = vpop.f32.mrf.mxu0
    %v1317 = vadd.f32 %v234, %v1316
    %v1318 = vpop.f32.mrf.mxu0
    %1319 = vmatprep.mubr.bf16.mxu0 0
    %1320 = vmatmul.mubr.bf16.gmra.mxu0 %v801
    %v1321 = vpop.f32.mrf.mxu0
    %v1322 = vadd.f32 %v234, %v1321
    %v1323 = vpop.f32.mrf.mxu0
    %v1324 = vpop.f32.mrf.mxu0
    %v1325 = vadd.f32 %v234, %v1324
    %v1326 = vpop.f32.mrf.mxu0
    %1327 = vmatprep.mubr.bf16.mxu0 0
    %1328 = vmatmul.mubr.bf16.gmra.mxu0 %v804
    %v1329 = vpop.f32.mrf.mxu0
    %v1330 = vadd.f32 %v234, %v1329
    %v1331 = vpop.f32.mrf.mxu0
    %v1332 = vpop.f32.mrf.mxu0
    %v1333 = vadd.f32 %v234, %v1332
    %v1334 = vpop.f32.mrf.mxu0
    %1335 = vmatprep.mubr.bf16.mxu0 0
    %1336 = vmatmul.mubr.bf16.gmra.mxu0 %v807
    %v1337 = vpop.f32.mrf.mxu0
    %v1338 = vadd.f32 %v234, %v1337
    %v1339 = vpop.f32.mrf.mxu0
    %v1340 = vpop.f32.mrf.mxu0
    %v1341 = vadd.f32 %v234, %v1340
    %v1342 = vpop.f32.mrf.mxu0
    %1343 = vmatprep.mubr.bf16.mxu0 0
    %1344 = vmatmul.mubr.bf16.gmra.mxu0 %v810
    %v1345 = vpop.f32.mrf.mxu0
    %v1346 = vadd.f32 %v234, %v1345
    %v1347 = vpop.f32.mrf.mxu0
    %v1348 = vpop.f32.mrf.mxu0
    %v1349 = vadd.f32 %v234, %v1348
    %v1350 = vpop.f32.mrf.mxu0
    %1351 = vmatprep.mubr.bf16.mxu0 0
    %1352 = vmatmul.mubr.bf16.gmra.mxu0 %v813
    %v1353 = vpop.f32.mrf.mxu0
    %v1354 = vadd.f32 %v234, %v1353
    %v1355 = vpop.f32.mrf.mxu0
    %v1356 = vpop.f32.mrf.mxu0
    %v1357 = vadd.f32 %v234, %v1356
    %v1358 = vpop.f32.mrf.mxu0
    %1359 = vmatprep.mubr.bf16.mxu0 0
    %1360 = vmatmul.mubr.bf16.gmra.mxu0 %v816
    %v1361 = vpop.f32.mrf.mxu0
    %v1362 = vadd.f32 %v234, %v1361
    %v1363 = vpop.f32.mrf.mxu0
    %v1364 = vpop.f32.mrf.mxu0
    %v1365 = vadd.f32 %v234, %v1364
    %v1366 = vpop.f32.mrf.mxu0
    %1367 = vmatprep.mubr.bf16.mxu0 0
    %1368 = vmatmul.mubr.bf16.gmra.mxu0 %v819
    %v1369 = vpop.f32.mrf.mxu0
    %v1370 = vadd.f32 %v234, %v1369
    %v1371 = vpop.f32.mrf.mxu0
    %v1372 = vpop.f32.mrf.mxu0
    %v1373 = vadd.f32 %v234, %v1372
    %v1374 = vpop.f32.mrf.mxu0
    %1375 = vmatprep.mubr.bf16.mxu0 0
    %1376 = vmatmul.mubr.bf16.gmra.mxu0 %v822
    %v1377 = vpop.f32.mrf.mxu0
    %v1378 = vadd.f32 %v234, %v1377
    %v1379 = vpop.f32.mrf.mxu0
    %v1380 = vpop.f32.mrf.mxu0
    %v1381 = vadd.f32 %v234, %v1380
    %v1382 = vpop.f32.mrf.mxu0
    %1383 = vmatprep.mubr.bf16.mxu0 0
    %1384 = vmatmul.mubr.bf16.gmra.mxu0 %v825
    %v1385 = vpop.f32.mrf.mxu0
    %v1386 = vadd.f32 %v234, %v1385
    %v1387 = vpop.f32.mrf.mxu0
    %v1388 = vpop.f32.mrf.mxu0
    %v1389 = vadd.f32 %v234, %v1388
    %v1390 = vpop.f32.mrf.mxu0
    %1391 = vmatprep.mubr.bf16.mxu0 0
    %1392 = vmatmul.mubr.bf16.gmra.mxu0 %v828
    %v1393 = vpop.f32.mrf.mxu0
    %v1394 = vadd.f32 %v234, %v1393
    %v1395 = vpop.f32.mrf.mxu0
    %v1396 = vpop.f32.mrf.mxu0
    %v1397 = vadd.f32 %v234, %v1396
    %v1398 = vpop.f32.mrf.mxu0
    %1399 = vmatprep.mubr.bf16.mxu0 0
    %1400 = vmatmul.mubr.bf16.gmra.mxu0 %v831
    %v1401 = vpop.f32.mrf.mxu0
    %v1402 = vadd.f32 %v234, %v1401
    %v1403 = vpop.f32.mrf.mxu0
    %v1404 = vpop.f32.mrf.mxu0
    %v1405 = vadd.f32 %v234, %v1404
    %v1406 = vpop.f32.mrf.mxu0
    %1407 = vmatprep.mubr.bf16.mxu0 0
    %1408 = vmatmul.mubr.bf16.gmra.mxu0 %v834
    %v1409 = vpop.f32.mrf.mxu0
    %v1410 = vadd.f32 %v234, %v1409
    %v1411 = vpop.f32.mrf.mxu0
    %v1412 = vpop.f32.mrf.mxu0
    %v1413 = vadd.f32 %v234, %v1412
    %v1414 = vpop.f32.mrf.mxu0
    %1415 = vmatprep.mubr.bf16.mxu0 0
    %1416 = vmatmul.mubr.bf16.gmra.mxu0 %v837
    %v1417 = vpop.f32.mrf.mxu0
    %v1418 = vadd.f32 %v234, %v1417
    %v1419 = vpop.f32.mrf.mxu0
    %v1420 = vpop.f32.mrf.mxu0
    %v1421 = vadd.f32 %v234, %v1420
    %v1422 = vpop.f32.mrf.mxu0
    %1423 = vmatprep.mubr.bf16.mxu0 0
    %1424 = vmatmul.mubr.bf16.gmra.mxu0 %v840
    %v1425 = vpop.f32.mrf.mxu0
    %v1426 = vadd.f32 %v234, %v1425
    %v1427 = vpop.f32.mrf.mxu0
    %v1428 = vpop.f32.mrf.mxu0
    %v1429 = vadd.f32 %v234, %v1428
    %v1430 = vpop.f32.mrf.mxu0
    %1431 = vmatprep.mubr.bf16.mxu0 0
    %1432 = vmatmul.mubr.bf16.gmra.mxu0 %v843
    %v1433 = vpop.f32.mrf.mxu0
    %v1434 = vadd.f32 %v234, %v1433
    %v1435 = vpop.f32.mrf.mxu0
    %v1436 = vpop.f32.mrf.mxu0
    %v1437 = vadd.f32 %v234, %v1436
    %v1438 = vpop.f32.mrf.mxu0
    %1439 = vmatprep.mubr.bf16.mxu0 0
    %1440 = vmatmul.mubr.bf16.gmra.mxu0 %v846
    %v1441 = vpop.f32.mrf.mxu0
    %v1442 = vadd.f32 %v234, %v1441
    %v1443 = vpop.f32.mrf.mxu0
    %v1444 = vpop.f32.mrf.mxu0
    %v1445 = vadd.f32 %v234, %v1444
    %v1446 = vpop.f32.mrf.mxu0
    %1447 = vmatprep.mubr.bf16.mxu0 0
    %1448 = vmatmul.mubr.bf16.gmra.mxu0 %v849
    %v1449 = vpop.f32.mrf.mxu0
    %v1450 = vadd.f32 %v234, %v1449
    %v1451 = vpop.f32.mrf.mxu0
    %v1452 = vpop.f32.mrf.mxu0
    %v1453 = vadd.f32 %v234, %v1452
    %v1454 = vpop.f32.mrf.mxu0
    %1455 = vmatprep.mubr.bf16.mxu0 0
    %1456 = vmatmul.mubr.bf16.gmra.mxu0 %v852
    %v1457 = vpop.f32.mrf.mxu0
    %v1458 = vadd.f32 %v234, %v1457
    %v1459 = vpop.f32.mrf.mxu0
    %v1460 = vpop.f32.mrf.mxu0
    %v1461 = vadd.f32 %v234, %v1460
    %v1462 = vpop.f32.mrf.mxu0
    %1463 = vmatprep.mubr.bf16.mxu0 0
    %1464 = vmatmul.mubr.bf16.gmra.mxu0 %v855
    %v1465 = vpop.f32.mrf.mxu0
    %v1466 = vadd.f32 %v234, %v1465
    %v1467 = vpop.f32.mrf.mxu0
    %v1468 = vpop.f32.mrf.mxu0
    %v1469 = vadd.f32 %v234, %v1468
    %v1470 = vpop.f32.mrf.mxu0
    %1471 = vmatprep.mubr.bf16.mxu0 0
    %1472 = vmatmul.mubr.bf16.gmra.mxu0 %v858
    %v1473 = vpop.f32.mrf.mxu0
    %v1474 = vadd.f32 %v234, %v1473
    %v1475 = vpop.f32.mrf.mxu0
    %v1476 = vpop.f32.mrf.mxu0
    %v1477 = vadd.f32 %v234, %v1476
    %v1478 = vpop.f32.mrf.mxu0
    %1479 = vmatprep.mubr.bf16.mxu0 0
    %1480 = vmatmul.mubr.bf16.gmra.mxu0 %v861
    %v1481 = vpop.f32.mrf.mxu0
    %v1482 = vadd.f32 %v234, %v1481
    %v1483 = vpop.f32.mrf.mxu0
    %v1484 = vpop.f32.mrf.mxu0
    %v1485 = vadd.f32 %v234, %v1484
    %v1486 = vpop.f32.mrf.mxu0
    %1487 = vmatprep.mubr.bf16.mxu0 0
    %1488 = vmatmul.mubr.bf16.gmra.mxu0 %v864
    %v1489 = vpop.f32.mrf.mxu0
    %v1490 = vadd.f32 %v234, %v1489
    %v1491 = vpop.f32.mrf.mxu0
    %v1492 = vpop.f32.mrf.mxu0
    %v1493 = vadd.f32 %v234, %v1492
    %v1494 = vpop.f32.mrf.mxu0
    %1495 = vmatprep.mubr.bf16.mxu0 0
    %1496 = vmatmul.mubr.bf16.gmra.mxu0 %v867
    %v1497 = vpop.f32.mrf.mxu0
    %v1498 = vadd.f32 %v234, %v1497
    %v1499 = vpop.f32.mrf.mxu0
    %v1500 = vpop.f32.mrf.mxu0
    %v1501 = vadd.f32 %v234, %v1500
    %v1502 = vpop.f32.mrf.mxu0
    %1503 = vmatprep.mubr.bf16.mxu0 0
    %1504 = vmatmul.mubr.bf16.gmra.mxu0 %v870
    %v1505 = vpop.f32.mrf.mxu0
    %v1506 = vadd.f32 %v234, %v1505
    %v1507 = vpop.f32.mrf.mxu0
    %v1508 = vpop.f32.mrf.mxu0
    %v1509 = vadd.f32 %v234, %v1508
    %v1510 = vpop.f32.mrf.mxu0
    %1511 = vmatprep.mubr.bf16.mxu0 0
    %1512 = vmatmul.mubr.bf16.gmra.mxu0 %v873
    %v1513 = vpop.f32.mrf.mxu0
    %v1514 = vadd.f32 %v234, %v1513
    %v1515 = vpop.f32.mrf.mxu0
    %v1516 = vpop.f32.mrf.mxu0
    %v1517 = vadd.f32 %v234, %v1516
    %v1518 = vpop.f32.mrf.mxu0
    %1519 = vmatprep.mubr.bf16.mxu0 0
    %1520 = vmatmul.mubr.bf16.gmra.mxu0 %v876
    %v1521 = vpop.f32.mrf.mxu0
    %v1522 = vadd.f32 %v234, %v1521
    %v1523 = vpop.f32.mrf.mxu0
    %v1524 = vpop.f32.mrf.mxu0
    %v1525 = vadd.f32 %v234, %v1524
    %v1526 = vpop.f32.mrf.mxu0
    %1527 = vmatprep.mubr.bf16.mxu0 0
    %1528 = vmatmul.mubr.bf16.gmra.mxu0 %v879
    %v1529 = vpop.f32.mrf.mxu0
    %v1530 = vadd.f32 %v234, %v1529
    %v1531 = vpop.f32.mrf.mxu0
    %v1532 = vpop.f32.mrf.mxu0
    %v1533 = vadd.f32 %v234, %v1532
    %v1534 = vpop.f32.mrf.mxu0
    %1535 = vmatprep.mubr.bf16.mxu0 0
    %1536 = vmatmul.mubr.bf16.gmra.mxu0 %v882
    %v1537 = vpop.f32.mrf.mxu0
    %v1538 = vadd.f32 %v234, %v1537
    %v1539 = vpop.f32.mrf.mxu0
    %v1540 = vpop.f32.mrf.mxu0
    %v1541 = vadd.f32 %v234, %v1540
    %v1542 = vpop.f32.mrf.mxu0
    %1543 = vmatprep.mubr.bf16.mxu0 0
    %1544 = vmatmul.mubr.bf16.gmra.mxu0 %v885
    %v1545 = vpop.f32.mrf.mxu0
    %v1546 = vadd.f32 %v234, %v1545
    %v1547 = vpop.f32.mrf.mxu0
    %v1548 = vpop.f32.mrf.mxu0
    %v1549 = vadd.f32 %v234, %v1548
    %v1550 = vpop.f32.mrf.mxu0
    %1551 = vmatprep.mubr.bf16.mxu0 0
    %1552 = vmatmul.mubr.bf16.gmra.mxu0 %v888
    %v1553 = vpop.f32.mrf.mxu0
    %v1554 = vadd.f32 %v234, %v1553
    %v1555 = vpop.f32.mrf.mxu0
    %v1556 = vpop.f32.mrf.mxu0
    %v1557 = vadd.f32 %v234, %v1556
    %v1558 = vpop.f32.mrf.mxu0
    %1559 = vmatprep.mubr.bf16.mxu0 0
    %1560 = vmatmul.mubr.bf16.gmra.mxu0 %v891
    %v1561 = vpop.f32.mrf.mxu0
    %v1562 = vadd.f32 %v234, %v1561
    %v1563 = vpop.f32.mrf.mxu0
    %v1564 = vpop.f32.mrf.mxu0
    %v1565 = vadd.f32 %v234, %v1564
    %v1566 = vpop.f32.mrf.mxu0
    %1567 = vmatprep.mubr.bf16.mxu0 0
    %1568 = vmatmul.mubr.bf16.gmra.mxu0 %v894
    %v1569 = vpop.f32.mrf.mxu0
    %v1570 = vadd.f32 %v234, %v1569
    %v1571 = vpop.f32.mrf.mxu0
    %v1572 = vpop.f32.mrf.mxu0
    %v1573 = vadd.f32 %v234, %v1572
    %v1574 = vpop.f32.mrf.mxu0
    %1575 = vmatprep.mubr.bf16.mxu0 0
    %1576 = vmatmul.mubr.bf16.gmra.mxu0 %v897
    %v1577 = vpop.f32.mrf.mxu0
    %v1578 = vadd.f32 %v234, %v1577
    %v1579 = vpop.f32.mrf.mxu0
    %v1580 = vpop.f32.mrf.mxu0
    %v1581 = vadd.f32 %v234, %v1580
    %v1582 = vpop.f32.mrf.mxu0
    %1583 = vmatprep.mubr.bf16.mxu0 0
    %1584 = vmatmul.mubr.bf16.gmra.mxu0 %v900
    %v1585 = vpop.f32.mrf.mxu0
    %v1586 = vadd.f32 %v234, %v1585
    %v1587 = vpop.f32.mrf.mxu0
    %v1588 = vpop.f32.mrf.mxu0
    %v1589 = vadd.f32 %v234, %v1588
    %v1590 = vpop.f32.mrf.mxu0
    %1591 = vmatprep.mubr.bf16.mxu0 0
    %1592 = vmatmul.mubr.bf16.gmra.mxu0 %v903
    %v1593 = vpop.f32.mrf.mxu0
    %v1594 = vadd.f32 %v234, %v1593
    %v1595 = vpop.f32.mrf.mxu0
    %v1596 = vpop.f32.mrf.mxu0
    %v1597 = vadd.f32 %v234, %v1596
    %v1598 = vpop.f32.mrf.mxu0
    %1599 = vmatprep.mubr.bf16.mxu0 0
    %1600 = vmatmul.mubr.bf16.gmra.mxu0 %v906
    %v1601 = vpop.f32.mrf.mxu0
    %v1602 = vadd.f32 %v234, %v1601
    %v1603 = vpop.f32.mrf.mxu0
    %v1604 = vpop.f32.mrf.mxu0
    %v1605 = vadd.f32 %v234, %v1604
    %v1606 = vpop.f32.mrf.mxu0
    %1607 = vmatprep.mubr.bf16.mxu0 0
    %1608 = vmatmul.mubr.bf16.gmra.mxu0 %v909
    %v1609 = vpop.f32.mrf.mxu0
    %v1610 = vadd.f32 %v234, %v1609
    %v1611 = vpop.f32.mrf.mxu0
    %v1612 = vpop.f32.mrf.mxu0
    %v1613 = vadd.f32 %v234, %v1612
    %v1614 = vpop.f32.mrf.mxu0
    %1615 = vmatprep.mubr.bf16.mxu0 0
    %1616 = vmatmul.mubr.bf16.gmra.mxu0 %v912
    %v1617 = vpop.f32.mrf.mxu0
    %v1618 = vadd.f32 %v234, %v1617
    %v1619 = vpop.f32.mrf.mxu0
    %v1620 = vpop.f32.mrf.mxu0
    %v1621 = vadd.f32 %v234, %v1620
    %v1622 = vpop.f32.mrf.mxu0
    %1623 = vmatprep.mubr.bf16.mxu0 0
    %1624 = vmatmul.mubr.bf16.gmra.mxu0 %v915
    %v1625 = vpop.f32.mrf.mxu0
    %v1626 = vadd.f32 %v234, %v1625
    %v1627 = vpop.f32.mrf.mxu0
    %v1628 = vpop.f32.mrf.mxu0
    %v1629 = vadd.f32 %v234, %v1628
    %v1630 = vpop.f32.mrf.mxu0
    %1631 = vmatprep.mubr.bf16.mxu0 0
    %1632 = vmatmul.mubr.bf16.gmra.mxu0 %v918
    %v1633 = vpop.f32.mrf.mxu0
    %v1634 = vadd.f32 %v234, %v1633
    %v1635 = vpop.f32.mrf.mxu0
    %v1636 = vpop.f32.mrf.mxu0
    %v1637 = vpop.f32.mrf.mxu0
    %1638 = vdwg.mxu0
    %v1639 = vmax.f32 %v962, 0.0
    %v1640 = vmax.f32 %v965, 0.0
    %v1641 = vmax.f32 %v970, 0.0
    %v1642 = vmax.f32 %v973, 0.0
    %v1643 = vmax.f32 %v978, 0.0
    %v1644 = vmax.f32 %v981, 0.0
    %v1645 = vmax.f32 %v986, 0.0
    %v1646 = vmax.f32 %v989, 0.0
    %v1647 = vmax.f32 %v994, 0.0
    %v1648 = vmax.f32 %v997, 0.0
    %v1649 = vmax.f32 %v1002, 0.0
    %v1650 = vmax.f32 %v1005, 0.0
    %v1651 = vmax.f32 %v1010, 0.0
    %v1652 = vmax.f32 %v1013, 0.0
    %v1653 = vmax.f32 %v1018, 0.0
    %v1654 = vmax.f32 %v1021, 0.0
    %v1655 = vmax.f32 %v1026, 0.0
    %v1656 = vmax.f32 %v1029, 0.0
    %v1657 = vmax.f32 %v1034, 0.0
    %v1658 = vmax.f32 %v1037, 0.0
    %v1659 = vmax.f32 %v1042, 0.0
    %v1660 = vmax.f32 %v1045, 0.0
    %v1661 = vmax.f32 %v1050, 0.0
    %v1662 = vmax.f32 %v1053, 0.0
    %v1663 = vmax.f32 %v1058, 0.0
    %v1664 = vmax.f32 %v1061, 0.0
    %v1665 = vmax.f32 %v1066, 0.0
    %v1666 = vmax.f32 %v1069, 0.0
    %v1667 = vmax.f32 %v1074, 0.0
    %v1668 = vmax.f32 %v1077, 0.0
    %v1669 = vmax.f32 %v1082, 0.0
    %v1670 = vmax.f32 %v1085, 0.0
    %v1671 = vmax.f32 %v1090, 0.0
    %v1672 = vmax.f32 %v1093, 0.0
    %v1673 = vmax.f32 %v1098, 0.0
    %v1674 = vmax.f32 %v1101, 0.0
    %v1675 = vmax.f32 %v1106, 0.0
    %v1676 = vmax.f32 %v1109, 0.0
    %v1677 = vmax.f32 %v1114, 0.0
    %v1678 = vmax.f32 %v1117, 0.0
    %v1679 = vmax.f32 %v1122, 0.0
    %v1680 = vmax.f32 %v1125, 0.0
    %v1681 = vmax.f32 %v1130, 0.0
    %v1682 = vmax.f32 %v1133, 0.0
    %v1683 = vmax.f32 %v1138, 0.0
    %v1684 = vmax.f32 %v1141, 0.0
    %v1685 = vmax.f32 %v1146, 0.0
    %v1686 = vmax.f32 %v1149, 0.0
    %v1687 = vmax.f32 %v1154, 0.0
    %v1688 = vmax.f32 %v1157, 0.0
    %v1689 = vmax.f32 %v1162, 0.0
    %v1690 = vmax.f32 %v1165, 0.0
    %v1691 = vmax.f32 %v1170, 0.0
    %v1692 = vmax.f32 %v1173, 0.0
    %v1693 = vmax.f32 %v1178, 0.0
    %v1694 = vmax.f32 %v1181, 0.0
    %v1695 = vmax.f32 %v1186, 0.0
    %v1696 = vmax.f32 %v1189, 0.0
    %v1697 = vmax.f32 %v1194, 0.0
    %v1698 = vmax.f32 %v1197, 0.0
    %v1699 = vmax.f32 %v1202, 0.0
    %v1700 = vmax.f32 %v1205, 0.0
    %v1701 = vmax.f32 %v1210, 0.0
    %v1702 = vmax.f32 %v1213, 0.0
    %v1703 = vmax.f32 %v1218, 0.0
    %v1704 = vmax.f32 %v1221, 0.0
    %v1705 = vmax.f32 %v1226, 0.0
    %v1706 = vmax.f32 %v1229, 0.0
    %v1707 = vmax.f32 %v1234, 0.0
    %v1708 = vmax.f32 %v1237, 0.0
    %v1709 = vmax.f32 %v1242, 0.0
    %v1710 = vmax.f32 %v1245, 0.0
    %v1711 = vmax.f32 %v1250, 0.0
    %v1712 = vmax.f32 %v1253, 0.0
    %v1713 = vmax.f32 %v1258, 0.0
    %v1714 = vmax.f32 %v1261, 0.0
    %v1715 = vmax.f32 %v1266, 0.0
    %v1716 = vmax.f32 %v1269, 0.0
    %v1717 = vmax.f32 %v1274, 0.0
    %v1718 = vmax.f32 %v1277, 0.0
    %v1719 = vmax.f32 %v1282, 0.0
    %v1720 = vmax.f32 %v1285, 0.0
    %v1721 = vmax.f32 %v1290, 0.0
    %v1722 = vmax.f32 %v1293, 0.0
    %v1723 = vmax.f32 %v1298, 0.0
    %v1724 = vmax.f32 %v1301, 0.0
    %v1725 = vmax.f32 %v1306, 0.0
    %v1726 = vmax.f32 %v1309, 0.0
    %v1727 = vmax.f32 %v1314, 0.0
    %v1728 = vmax.f32 %v1317, 0.0
    %v1729 = vmax.f32 %v1322, 0.0
    %v1730 = vmax.f32 %v1325, 0.0
    %v1731 = vmax.f32 %v1330, 0.0
    %v1732 = vmax.f32 %v1333, 0.0
    %v1733 = vmax.f32 %v1338, 0.0
    %v1734 = vmax.f32 %v1341, 0.0
    %v1735 = vmax.f32 %v1346, 0.0
    %v1736 = vmax.f32 %v1349, 0.0
    %v1737 = vmax.f32 %v1354, 0.0
    %v1738 = vmax.f32 %v1357, 0.0
    %v1739 = vmax.f32 %v1362, 0.0
    %v1740 = vmax.f32 %v1365, 0.0
    %v1741 = vmax.f32 %v1370, 0.0
    %v1742 = vmax.f32 %v1373, 0.0
    %v1743 = vmax.f32 %v1378, 0.0
    %v1744 = vmax.f32 %v1381, 0.0
    %v1745 = vmax.f32 %v1386, 0.0
    %v1746 = vmax.f32 %v1389, 0.0
    %v1747 = vmax.f32 %v1394, 0.0
    %v1748 = vmax.f32 %v1397, 0.0
    %v1749 = vmax.f32 %v1402, 0.0
    %v1750 = vmax.f32 %v1405, 0.0
    %v1751 = vmax.f32 %v1410, 0.0
    %v1752 = vmax.f32 %v1413, 0.0
    %v1753 = vmax.f32 %v1418, 0.0
    %v1754 = vmax.f32 %v1421, 0.0
    %v1755 = vmax.f32 %v1426, 0.0
    %v1756 = vmax.f32 %v1429, 0.0
    %v1757 = vmax.f32 %v1434, 0.0
    %v1758 = vmax.f32 %v1437, 0.0
    %v1759 = vmax.f32 %v1442, 0.0
    %v1760 = vmax.f32 %v1445, 0.0
    %v1761 = vmax.f32 %v1450, 0.0
    %v1762 = vmax.f32 %v1453, 0.0
    %v1763 = vmax.f32 %v1458, 0.0
    %v1764 = vmax.f32 %v1461, 0.0
    %v1765 = vmax.f32 %v1466, 0.0
    %v1766 = vmax.f32 %v1469, 0.0
    %v1767 = vmax.f32 %v1474, 0.0
    %v1768 = vmax.f32 %v1477, 0.0
    %v1769 = vmax.f32 %v1482, 0.0
    %v1770 = vmax.f32 %v1485, 0.0
    %v1771 = vmax.f32 %v1490, 0.0
    %v1772 = vmax.f32 %v1493, 0.0
    %v1773 = vmax.f32 %v1498, 0.0
    %v1774 = vmax.f32 %v1501, 0.0
    %v1775 = vmax.f32 %v1506, 0.0
    %v1776 = vmax.f32 %v1509, 0.0
    %v1777 = vmax.f32 %v1514, 0.0
    %v1778 = vmax.f32 %v1517, 0.0
    %v1779 = vmax.f32 %v1522, 0.0
    %v1780 = vmax.f32 %v1525, 0.0
    %v1781 = vmax.f32 %v1530, 0.0
    %v1782 = vmax.f32 %v1533, 0.0
    %v1783 = vmax.f32 %v1538, 0.0
    %v1784 = vmax.f32 %v1541, 0.0
    %v1785 = vmax.f32 %v1546, 0.0
    %v1786 = vmax.f32 %v1549, 0.0
    %v1787 = vmax.f32 %v1554, 0.0
    %v1788 = vmax.f32 %v1557, 0.0
    %v1789 = vmax.f32 %v1562, 0.0
    %v1790 = vmax.f32 %v1565, 0.0
    %v1791 = vmax.f32 %v1570, 0.0
    %v1792 = vmax.f32 %v1573, 0.0
    %v1793 = vmax.f32 %v1578, 0.0
    %v1794 = vmax.f32 %v1581, 0.0
    %v1795 = vmax.f32 %v1586, 0.0
    %v1796 = vmax.f32 %v1589, 0.0
    %v1797 = vmax.f32 %v1594, 0.0
    %v1798 = vmax.f32 %v1597, 0.0
    %v1799 = vmax.f32 %v1602, 0.0
    %v1800 = vmax.f32 %v1605, 0.0
    %v1801 = vmax.f32 %v1610, 0.0
    %v1802 = vmax.f32 %v1613, 0.0
    %v1803 = vmax.f32 %v1618, 0.0
    %v1804 = vmax.f32 %v1621, 0.0
    %v1805 = vmax.f32 %v1626, 0.0
    %v1806 = vmax.f32 %v1629, 0.0
    %v1807 = vmax.f32 %v1634, 0.0
    %vm1808 = vcmask 261120
    %1809 = vst.msk [vmem:[#allocation2] sm:$0xff] %vm1808, %v1639
    %1810 = vst.msk [vmem:[#allocation2 + $0x8] sm:$0xff] %vm1808, %v1640
    %1811 = vst.msk [vmem:[#allocation2 + $0x10] sm:$0xff] %vm1808, %v1641
    %1812 = vst.msk [vmem:[#allocation2 + $0x18] sm:$0xff] %vm1808, %v1642
    %1813 = vst.msk [vmem:[#allocation2 + $0x20] sm:$0xff] %vm1808, %v1643
    %1814 = vst.msk [vmem:[#allocation2 + $0x28] sm:$0xff] %vm1808, %v1644
    %1815 = vst.msk [vmem:[#allocation2 + $0x30] sm:$0xff] %vm1808, %v1645
    %1816 = vst.msk [vmem:[#allocation2 + $0x38] sm:$0xff] %vm1808, %v1646
    %1817 = vst.msk [vmem:[#allocation2 + $0x40] sm:$0xff] %vm1808, %v1647
    %1818 = vst.msk [vmem:[#allocation2 + $0x48] sm:$0xff] %vm1808, %v1648
    %1819 = vst.msk [vmem:[#allocation2 + $0x50] sm:$0xff] %vm1808, %v1649
    %1820 = vst.msk [vmem:[#allocation2 + $0x58] sm:$0xff] %vm1808, %v1650
    %1821 = vst.msk [vmem:[#allocation2 + $0x60] sm:$0xff] %vm1808, %v1651
    %1822 = vst.msk [vmem:[#allocation2 + $0x68] sm:$0xff] %vm1808, %v1652
    %1823 = vst.msk [vmem:[#allocation2 + $0x70] sm:$0xff] %vm1808, %v1653
    %1824 = vst.msk [vmem:[#allocation2 + $0x78] sm:$0xff] %vm1808, %v1654
    %1825 = vst.msk [vmem:[#allocation2 + $0x80] sm:$0xff] %vm1808, %v1655
    %1826 = vst.msk [vmem:[#allocation2 + $0x88] sm:$0xff] %vm1808, %v1656
    %1827 = vst.msk [vmem:[#allocation2 + $0x90] sm:$0xff] %vm1808, %v1657
    %1828 = vst.msk [vmem:[#allocation2 + $0x98] sm:$0xff] %vm1808, %v1658
    %1829 = vst.msk [vmem:[#allocation2 + $0xa0] sm:$0xff] %vm1808, %v1659
    %1830 = vst.msk [vmem:[#allocation2 + $0xa8] sm:$0xff] %vm1808, %v1660
    %1831 = vst.msk [vmem:[#allocation2 + $0xb0] sm:$0xff] %vm1808, %v1661
    %1832 = vst.msk [vmem:[#allocation2 + $0xb8] sm:$0xff] %vm1808, %v1662
    %1833 = vst.msk [vmem:[#allocation2 + $0xc0] sm:$0xff] %vm1808, %v1663
    %1834 = vst.msk [vmem:[#allocation2 + $0xc8] sm:$0xff] %vm1808, %v1664
    %1835 = vst.msk [vmem:[#allocation2 + $0xd0] sm:$0xff] %vm1808, %v1665
    %1836 = vst.msk [vmem:[#allocation2 + $0xd8] sm:$0xff] %vm1808, %v1666
    %1837 = vst.msk [vmem:[#allocation2 + $0xe0] sm:$0xff] %vm1808, %v1667
    %1838 = vst.msk [vmem:[#allocation2 + $0xe8] sm:$0xff] %vm1808, %v1668
    %1839 = vst.msk [vmem:[#allocation2 + $0xf0] sm:$0xff] %vm1808, %v1669
    %1840 = vst.msk [vmem:[#allocation2 + $0xf8] sm:$0xff] %vm1808, %v1670
    %1841 = vst.msk [vmem:[#allocation2 + $0x100] sm:$0xff] %vm1808, %v1671
    %1842 = vst.msk [vmem:[#allocation2 + $0x108] sm:$0xff] %vm1808, %v1672
    %1843 = vst.msk [vmem:[#allocation2 + $0x110] sm:$0xff] %vm1808, %v1673
    %1844 = vst.msk [vmem:[#allocation2 + $0x118] sm:$0xff] %vm1808, %v1674
    %1845 = vst.msk [vmem:[#allocation2 + $0x120] sm:$0xff] %vm1808, %v1675
    %1846 = vst.msk [vmem:[#allocation2 + $0x128] sm:$0xff] %vm1808, %v1676
    %1847 = vst.msk [vmem:[#allocation2 + $0x130] sm:$0xff] %vm1808, %v1677
    %1848 = vst.msk [vmem:[#allocation2 + $0x138] sm:$0xff] %vm1808, %v1678
    %1849 = vst.msk [vmem:[#allocation2 + $0x140] sm:$0xff] %vm1808, %v1679
    %1850 = vst.msk [vmem:[#allocation2 + $0x148] sm:$0xff] %vm1808, %v1680
    %1851 = vst.msk [vmem:[#allocation2 + $0x150] sm:$0xff] %vm1808, %v1681
    %1852 = vst.msk [vmem:[#allocation2 + $0x158] sm:$0xff] %vm1808, %v1682
    %1853 = vst.msk [vmem:[#allocation2 + $0x160] sm:$0xff] %vm1808, %v1683
    %1854 = vst.msk [vmem:[#allocation2 + $0x168] sm:$0xff] %vm1808, %v1684
    %1855 = vst.msk [vmem:[#allocation2 + $0x170] sm:$0xff] %vm1808, %v1685
    %1856 = vst.msk [vmem:[#allocation2 + $0x178] sm:$0xff] %vm1808, %v1686
    %1857 = vst.msk [vmem:[#allocation2 + $0x180] sm:$0xff] %vm1808, %v1687
    %1858 = vst.msk [vmem:[#allocation2 + $0x188] sm:$0xff] %vm1808, %v1688
    %1859 = vst.msk [vmem:[#allocation2 + $0x190] sm:$0xff] %vm1808, %v1689
    %1860 = vst.msk [vmem:[#allocation2 + $0x198] sm:$0xff] %vm1808, %v1690
    %1861 = vst.msk [vmem:[#allocation2 + $0x1a0] sm:$0xff] %vm1808, %v1691
    %1862 = vst.msk [vmem:[#allocation2 + $0x1a8] sm:$0xff] %vm1808, %v1692
    %1863 = vst.msk [vmem:[#allocation2 + $0x1b0] sm:$0xff] %vm1808, %v1693
    %1864 = vst.msk [vmem:[#allocation2 + $0x1b8] sm:$0xff] %vm1808, %v1694
    %1865 = vst.msk [vmem:[#allocation2 + $0x1c0] sm:$0xff] %vm1808, %v1695
    %1866 = vst.msk [vmem:[#allocation2 + $0x1c8] sm:$0xff] %vm1808, %v1696
    %1867 = vst.msk [vmem:[#allocation2 + $0x1d0] sm:$0xff] %vm1808, %v1697
    %1868 = vst.msk [vmem:[#allocation2 + $0x1d8] sm:$0xff] %vm1808, %v1698
    %1869 = vst.msk [vmem:[#allocation2 + $0x1e0] sm:$0xff] %vm1808, %v1699
    %1870 = vst.msk [vmem:[#allocation2 + $0x1e8] sm:$0xff] %vm1808, %v1700
    %1871 = vst.msk [vmem:[#allocation2 + $0x1f0] sm:$0xff] %vm1808, %v1701
    %1872 = vst.msk [vmem:[#allocation2 + $0x1f8] sm:$0xff] %vm1808, %v1702
    %1873 = vst.msk [vmem:[#allocation2 + $0x200] sm:$0xff] %vm1808, %v1703
    %1874 = vst.msk [vmem:[#allocation2 + $0x208] sm:$0xff] %vm1808, %v1704
    %1875 = vst.msk [vmem:[#allocation2 + $0x210] sm:$0xff] %vm1808, %v1705
    %1876 = vst.msk [vmem:[#allocation2 + $0x218] sm:$0xff] %vm1808, %v1706
    %1877 = vst.msk [vmem:[#allocation2 + $0x220] sm:$0xff] %vm1808, %v1707
    %1878 = vst.msk [vmem:[#allocation2 + $0x228] sm:$0xff] %vm1808, %v1708
    %1879 = vst.msk [vmem:[#allocation2 + $0x230] sm:$0xff] %vm1808, %v1709
    %1880 = vst.msk [vmem:[#allocation2 + $0x238] sm:$0xff] %vm1808, %v1710
    %1881 = vst.msk [vmem:[#allocation2 + $0x240] sm:$0xff] %vm1808, %v1711
    %1882 = vst.msk [vmem:[#allocation2 + $0x248] sm:$0xff] %vm1808, %v1712
    %1883 = vst.msk [vmem:[#allocation2 + $0x250] sm:$0xff] %vm1808, %v1713
    %1884 = vst.msk [vmem:[#allocation2 + $0x258] sm:$0xff] %vm1808, %v1714
    %1885 = vst.msk [vmem:[#allocation2 + $0x260] sm:$0xff] %vm1808, %v1715
    %1886 = vst.msk [vmem:[#allocation2 + $0x268] sm:$0xff] %vm1808, %v1716
    %1887 = vst.msk [vmem:[#allocation2 + $0x270] sm:$0xff] %vm1808, %v1717
    %1888 = vst.msk [vmem:[#allocation2 + $0x278] sm:$0xff] %vm1808, %v1718
    %1889 = vst.msk [vmem:[#allocation2 + $0x280] sm:$0xff] %vm1808, %v1719
    %1890 = vst.msk [vmem:[#allocation2 + $0x288] sm:$0xff] %vm1808, %v1720
    %1891 = vst.msk [vmem:[#allocation2 + $0x290] sm:$0xff] %vm1808, %v1721
    %1892 = vst.msk [vmem:[#allocation2 + $0x298] sm:$0xff] %vm1808, %v1722
    %1893 = vst.msk [vmem:[#allocation2 + $0x2a0] sm:$0xff] %vm1808, %v1723
    %1894 = vst.msk [vmem:[#allocation2 + $0x2a8] sm:$0xff] %vm1808, %v1724
    %1895 = vst.msk [vmem:[#allocation2 + $0x2b0] sm:$0xff] %vm1808, %v1725
    %1896 = vst.msk [vmem:[#allocation2 + $0x2b8] sm:$0xff] %vm1808, %v1726
    %1897 = vst.msk [vmem:[#allocation2 + $0x2c0] sm:$0xff] %vm1808, %v1727
    %1898 = vst.msk [vmem:[#allocation2 + $0x2c8] sm:$0xff] %vm1808, %v1728
    %1899 = vst.msk [vmem:[#allocation2 + $0x2d0] sm:$0xff] %vm1808, %v1729
    %1900 = vst.msk [vmem:[#allocation2 + $0x2d8] sm:$0xff] %vm1808, %v1730
    %1901 = vst.msk [vmem:[#allocation2 + $0x2e0] sm:$0xff] %vm1808, %v1731
    %1902 = vst.msk [vmem:[#allocation2 + $0x2e8] sm:$0xff] %vm1808, %v1732
    %1903 = vst.msk [vmem:[#allocation2 + $0x2f0] sm:$0xff] %vm1808, %v1733
    %1904 = vst.msk [vmem:[#allocation2 + $0x2f8] sm:$0xff] %vm1808, %v1734
    %1905 = vst.msk [vmem:[#allocation2 + $0x300] sm:$0xff] %vm1808, %v1735
    %1906 = vst.msk [vmem:[#allocation2 + $0x308] sm:$0xff] %vm1808, %v1736
    %1907 = vst.msk [vmem:[#allocation2 + $0x310] sm:$0xff] %vm1808, %v1737
    %1908 = vst.msk [vmem:[#allocation2 + $0x318] sm:$0xff] %vm1808, %v1738
    %1909 = vst.msk [vmem:[#allocation2 + $0x320] sm:$0xff] %vm1808, %v1739
    %1910 = vst.msk [vmem:[#allocation2 + $0x328] sm:$0xff] %vm1808, %v1740
    %1911 = vst.msk [vmem:[#allocation2 + $0x330] sm:$0xff] %vm1808, %v1741
    %1912 = vst.msk [vmem:[#allocation2 + $0x338] sm:$0xff] %vm1808, %v1742
    %1913 = vst.msk [vmem:[#allocation2 + $0x340] sm:$0xff] %vm1808, %v1743
    %1914 = vst.msk [vmem:[#allocation2 + $0x348] sm:$0xff] %vm1808, %v1744
    %1915 = vst.msk [vmem:[#allocation2 + $0x350] sm:$0xff] %vm1808, %v1745
    %1916 = vst.msk [vmem:[#allocation2 + $0x358] sm:$0xff] %vm1808, %v1746
    %1917 = vst.msk [vmem:[#allocation2 + $0x360] sm:$0xff] %vm1808, %v1747
    %1918 = vst.msk [vmem:[#allocation2 + $0x368] sm:$0xff] %vm1808, %v1748
    %1919 = vst.msk [vmem:[#allocation2 + $0x370] sm:$0xff] %vm1808, %v1749
    %1920 = vst.msk [vmem:[#allocation2 + $0x378] sm:$0xff] %vm1808, %v1750
    %1921 = vst.msk [vmem:[#allocation2 + $0x380] sm:$0xff] %vm1808, %v1751
    %1922 = vst.msk [vmem:[#allocation2 + $0x388] sm:$0xff] %vm1808, %v1752
    %1923 = vst.msk [vmem:[#allocation2 + $0x390] sm:$0xff] %vm1808, %v1753
    %1924 = vst.msk [vmem:[#allocation2 + $0x398] sm:$0xff] %vm1808, %v1754
    %1925 = vst.msk [vmem:[#allocation2 + $0x3a0] sm:$0xff] %vm1808, %v1755
    %1926 = vst.msk [vmem:[#allocation2 + $0x3a8] sm:$0xff] %vm1808, %v1756
    %1927 = vst.msk [vmem:[#allocation2 + $0x3b0] sm:$0xff] %vm1808, %v1757
    %1928 = vst.msk [vmem:[#allocation2 + $0x3b8] sm:$0xff] %vm1808, %v1758
    %1929 = vst.msk [vmem:[#allocation2 + $0x3c0] sm:$0xff] %vm1808, %v1759
    %1930 = vst.msk [vmem:[#allocation2 + $0x3c8] sm:$0xff] %vm1808, %v1760
    %1931 = vst.msk [vmem:[#allocation2 + $0x3d0] sm:$0xff] %vm1808, %v1761
    %1932 = vst.msk [vmem:[#allocation2 + $0x3d8] sm:$0xff] %vm1808, %v1762
    %1933 = vst.msk [vmem:[#allocation2 + $0x3e0] sm:$0xff] %vm1808, %v1763
    %1934 = vst.msk [vmem:[#allocation2 + $0x3e8] sm:$0xff] %vm1808, %v1764
    %1935 = vst.msk [vmem:[#allocation2 + $0x3f0] sm:$0xff] %vm1808, %v1765
    %1936 = vst.msk [vmem:[#allocation2 + $0x3f8] sm:$0xff] %vm1808, %v1766
    %1937 = vst.msk [vmem:[#allocation2 + $0x400] sm:$0xff] %vm1808, %v1767
    %1938 = vst.msk [vmem:[#allocation2 + $0x408] sm:$0xff] %vm1808, %v1768
    %1939 = vst.msk [vmem:[#allocation2 + $0x410] sm:$0xff] %vm1808, %v1769
    %1940 = vst.msk [vmem:[#allocation2 + $0x418] sm:$0xff] %vm1808, %v1770
    %1941 = vst.msk [vmem:[#allocation2 + $0x420] sm:$0xff] %vm1808, %v1771
    %1942 = vst.msk [vmem:[#allocation2 + $0x428] sm:$0xff] %vm1808, %v1772
    %1943 = vst.msk [vmem:[#allocation2 + $0x430] sm:$0xff] %vm1808, %v1773
    %1944 = vst.msk [vmem:[#allocation2 + $0x438] sm:$0xff] %vm1808, %v1774
    %1945 = vst.msk [vmem:[#allocation2 + $0x440] sm:$0xff] %vm1808, %v1775
    %1946 = vst.msk [vmem:[#allocation2 + $0x448] sm:$0xff] %vm1808, %v1776
    %1947 = vst.msk [vmem:[#allocation2 + $0x450] sm:$0xff] %vm1808, %v1777
    %1948 = vst.msk [vmem:[#allocation2 + $0x458] sm:$0xff] %vm1808, %v1778
    %1949 = vst.msk [vmem:[#allocation2 + $0x460] sm:$0xff] %vm1808, %v1779
    %1950 = vst.msk [vmem:[#allocation2 + $0x468] sm:$0xff] %vm1808, %v1780
    %1951 = vst.msk [vmem:[#allocation2 + $0x470] sm:$0xff] %vm1808, %v1781
    %1952 = vst.msk [vmem:[#allocation2 + $0x478] sm:$0xff] %vm1808, %v1782
    %1953 = vst.msk [vmem:[#allocation2 + $0x480] sm:$0xff] %vm1808, %v1783
    %1954 = vst.msk [vmem:[#allocation2 + $0x488] sm:$0xff] %vm1808, %v1784
    %1955 = vst.msk [vmem:[#allocation2 + $0x490] sm:$0xff] %vm1808, %v1785
    %1956 = vst.msk [vmem:[#allocation2 + $0x498] sm:$0xff] %vm1808, %v1786
    %1957 = vst.msk [vmem:[#allocation2 + $0x4a0] sm:$0xff] %vm1808, %v1787
    %1958 = vst.msk [vmem:[#allocation2 + $0x4a8] sm:$0xff] %vm1808, %v1788
    %1959 = vst.msk [vmem:[#allocation2 + $0x4b0] sm:$0xff] %vm1808, %v1789
    %1960 = vst.msk [vmem:[#allocation2 + $0x4b8] sm:$0xff] %vm1808, %v1790
    %1961 = vst.msk [vmem:[#allocation2 + $0x4c0] sm:$0xff] %vm1808, %v1791
    %1962 = vst.msk [vmem:[#allocation2 + $0x4c8] sm:$0xff] %vm1808, %v1792
    %1963 = vst.msk [vmem:[#allocation2 + $0x4d0] sm:$0xff] %vm1808, %v1793
    %1964 = vst.msk [vmem:[#allocation2 + $0x4d8] sm:$0xff] %vm1808, %v1794
    %1965 = vst.msk [vmem:[#allocation2 + $0x4e0] sm:$0xff] %vm1808, %v1795
    %1966 = vst.msk [vmem:[#allocation2 + $0x4e8] sm:$0xff] %vm1808, %v1796
    %1967 = vst.msk [vmem:[#allocation2 + $0x4f0] sm:$0xff] %vm1808, %v1797
    %1968 = vst.msk [vmem:[#allocation2 + $0x4f8] sm:$0xff] %vm1808, %v1798
    %1969 = vst.msk [vmem:[#allocation2 + $0x500] sm:$0xff] %vm1808, %v1799
    %1970 = vst.msk [vmem:[#allocation2 + $0x508] sm:$0xff] %vm1808, %v1800
    %1971 = vst.msk [vmem:[#allocation2 + $0x510] sm:$0xff] %vm1808, %v1801
    %1972 = vst.msk [vmem:[#allocation2 + $0x518] sm:$0xff] %vm1808, %v1802
    %1973 = vst.msk [vmem:[#allocation2 + $0x520] sm:$0xff] %vm1808, %v1803
    %1974 = vst.msk [vmem:[#allocation2 + $0x528] sm:$0xff] %vm1808, %v1804
    %1975 = vst.msk [vmem:[#allocation2 + $0x530] sm:$0xff] %vm1808, %v1805
    %1976 = vst.msk [vmem:[#allocation2 + $0x538] sm:$0xff] %vm1808, %v1806
    %1977 = vst.msk [vmem:[#allocation2 + $0x540] sm:$0xff] %vm1808, %v1807
    %1978 = vst.msk [vmem:[#allocation2 + $0x548] sm:$0xff] %vm1808, 0.0
    %1979 = vst.msk [vmem:[#allocation2 + $0x550] sm:$0xff] %vm1808, 0.0
    %1980 = vst.msk [vmem:[#allocation2 + $0x558] sm:$0xff] %vm1808, 0.0
    %1981 = vst.msk [vmem:[#allocation2 + $0x560] sm:$0xff] %vm1808, 0.0
    %1982 = vst.msk [vmem:[#allocation2 + $0x568] sm:$0xff] %vm1808, 0.0
    %1983 = vst.msk [vmem:[#allocation2 + $0x570] sm:$0xff] %vm1808, 0.0
    %1984 = vst.msk [vmem:[#allocation2 + $0x578] sm:$0xff] %vm1808, 0.0
    %v1985 = vpack.c.bf16 %v1640, %v1639
    %v1986 = vpack.c.bf16 %v1642, %v1641
    %v1987 = vpack.c.bf16 %v1644, %v1643
    %v1988 = vpack.c.bf16 %v1646, %v1645
    %v1989 = vpack.c.bf16 %v1648, %v1647
    %v1990 = vpack.c.bf16 %v1650, %v1649
    %v1991 = vpack.c.bf16 %v1652, %v1651
    %v1992 = vpack.c.bf16 %v1654, %v1653
    %v1993 = vpack.c.bf16 %v1656, %v1655
    %v1994 = vpack.c.bf16 %v1658, %v1657
    %v1995 = vpack.c.bf16 %v1660, %v1659
    %v1996 = vpack.c.bf16 %v1662, %v1661
    %v1997 = vpack.c.bf16 %v1664, %v1663
    %v1998 = vpack.c.bf16 %v1666, %v1665
    %v1999 = vpack.c.bf16 %v1668, %v1667
    %v2000 = vpack.c.bf16 %v1670, %v1669
    %v2001 = vpack.c.bf16 %v1672, %v1671
    %v2002 = vpack.c.bf16 %v1674, %v1673
    %v2003 = vpack.c.bf16 %v1676, %v1675
    %v2004 = vpack.c.bf16 %v1678, %v1677
    %v2005 = vpack.c.bf16 %v1680, %v1679
    %v2006 = vpack.c.bf16 %v1682, %v1681
    %v2007 = vpack.c.bf16 %v1684, %v1683
    %v2008 = vpack.c.bf16 %v1686, %v1685
    %v2009 = vpack.c.bf16 %v1688, %v1687
    %v2010 = vpack.c.bf16 %v1690, %v1689
    %v2011 = vpack.c.bf16 %v1692, %v1691
    %v2012 = vpack.c.bf16 %v1694, %v1693
    %v2013 = vpack.c.bf16 %v1696, %v1695
    %v2014 = vpack.c.bf16 %v1698, %v1697
    %v2015 = vpack.c.bf16 %v1700, %v1699
    %v2016 = vpack.c.bf16 %v1702, %v1701
    %v2017 = vpack.c.bf16 %v1704, %v1703
    %v2018 = vpack.c.bf16 %v1706, %v1705
    %v2019 = vpack.c.bf16 %v1708, %v1707
    %v2020 = vpack.c.bf16 %v1710, %v1709
    %v2021 = vpack.c.bf16 %v1712, %v1711
    %v2022 = vpack.c.bf16 %v1714, %v1713
    %v2023 = vpack.c.bf16 %v1716, %v1715
    %v2024 = vpack.c.bf16 %v1718, %v1717
    %v2025 = vpack.c.bf16 %v1720, %v1719
    %v2026 = vpack.c.bf16 %v1722, %v1721
    %v2027 = vpack.c.bf16 %v1724, %v1723
    %v2028 = vpack.c.bf16 %v1726, %v1725
    %v2029 = vpack.c.bf16 %v1728, %v1727
    %v2030 = vpack.c.bf16 %v1730, %v1729
    %v2031 = vpack.c.bf16 %v1732, %v1731
    %v2032 = vpack.c.bf16 %v1734, %v1733
    %v2033 = vpack.c.bf16 %v1736, %v1735
    %v2034 = vpack.c.bf16 %v1738, %v1737
    %v2035 = vpack.c.bf16 %v1740, %v1739
    %v2036 = vpack.c.bf16 %v1742, %v1741
    %v2037 = vpack.c.bf16 %v1744, %v1743
    %v2038 = vpack.c.bf16 %v1746, %v1745
    %v2039 = vpack.c.bf16 %v1748, %v1747
    %v2040 = vpack.c.bf16 %v1750, %v1749
    %v2041 = vpack.c.bf16 %v1752, %v1751
    %v2042 = vpack.c.bf16 %v1754, %v1753
    %v2043 = vpack.c.bf16 %v1756, %v1755
    %v2044 = vpack.c.bf16 %v1758, %v1757
    %v2045 = vpack.c.bf16 %v1760, %v1759
    %v2046 = vpack.c.bf16 %v1762, %v1761
    %v2047 = vpack.c.bf16 %v1764, %v1763
    %v2048 = vpack.c.bf16 %v1766, %v1765
    %v2049 = vpack.c.bf16 %v1768, %v1767
    %v2050 = vpack.c.bf16 %v1770, %v1769
    %v2051 = vpack.c.bf16 %v1772, %v1771
    %v2052 = vpack.c.bf16 %v1774, %v1773
    %v2053 = vpack.c.bf16 %v1776, %v1775
    %v2054 = vpack.c.bf16 %v1778, %v1777
    %v2055 = vpack.c.bf16 %v1780, %v1779
    %v2056 = vpack.c.bf16 %v1782, %v1781
    %v2057 = vpack.c.bf16 %v1784, %v1783
    %v2058 = vpack.c.bf16 %v1786, %v1785
    %v2059 = vpack.c.bf16 %v1788, %v1787
    %v2060 = vpack.c.bf16 %v1790, %v1789
    %v2061 = vpack.c.bf16 %v1792, %v1791
    %v2062 = vpack.c.bf16 %v1794, %v1793
    %v2063 = vpack.c.bf16 %v1796, %v1795
    %v2064 = vpack.c.bf16 %v1798, %v1797
    %v2065 = vpack.c.bf16 %v1800, %v1799
    %v2066 = vpack.c.bf16 %v1802, %v1801
    %v2067 = vpack.c.bf16 %v1804, %v1803
    %v2068 = vpack.c.bf16 %v1806, %v1805
    %v2069 = vpack.c.bf16 %v1807, %v1807
    %v2070 = vld [vmem:[#allocation2 + $0x1] sm:$0xff]
    %v2071 = vld [vmem:[#allocation2 + $0x9] sm:$0xff]
    %v2072 = vld [vmem:[#allocation2 + $0x11] sm:$0xff]
    %v2073 = vld [vmem:[#allocation2 + $0x19] sm:$0xff]
    %v2074 = vld [vmem:[#allocation2 + $0x21] sm:$0xff]
    %v2075 = vld [vmem:[#allocation2 + $0x29] sm:$0xff]
    %v2076 = vld [vmem:[#allocation2 + $0x31] sm:$0xff]
    %v2077 = vld [vmem:[#allocation2 + $0x39] sm:$0xff]
    %v2078 = vld [vmem:[#allocation2 + $0x41] sm:$0xff]
    %v2079 = vld [vmem:[#allocation2 + $0x49] sm:$0xff]
    %v2080 = vld [vmem:[#allocation2 + $0x51] sm:$0xff]
    %v2081 = vld [vmem:[#allocation2 + $0x59] sm:$0xff]
    %v2082 = vld [vmem:[#allocation2 + $0x61] sm:$0xff]
    %v2083 = vld [vmem:[#allocation2 + $0x69] sm:$0xff]
    %v2084 = vld [vmem:[#allocation2 + $0x71] sm:$0xff]
    %v2085 = vld [vmem:[#allocation2 + $0x79] sm:$0xff]
    %v2086 = vld [vmem:[#allocation2 + $0x81] sm:$0xff]
    %v2087 = vld [vmem:[#allocation2 + $0x89] sm:$0xff]
    %v2088 = vld [vmem:[#allocation2 + $0x91] sm:$0xff]
    %v2089 = vld [vmem:[#allocation2 + $0x99] sm:$0xff]
    %v2090 = vld [vmem:[#allocation2 + $0xa1] sm:$0xff]
    %v2091 = vld [vmem:[#allocation2 + $0xa9] sm:$0xff]
    %v2092 = vld [vmem:[#allocation2 + $0xb1] sm:$0xff]
    %v2093 = vld [vmem:[#allocation2 + $0xb9] sm:$0xff]
    %v2094 = vld [vmem:[#allocation2 + $0xc1] sm:$0xff]
    %v2095 = vld [vmem:[#allocation2 + $0xc9] sm:$0xff]
    %v2096 = vld [vmem:[#allocation2 + $0xd1] sm:$0xff]
    %v2097 = vld [vmem:[#allocation2 + $0xd9] sm:$0xff]
    %v2098 = vld [vmem:[#allocation2 + $0xe1] sm:$0xff]
    %v2099 = vld [vmem:[#allocation2 + $0xe9] sm:$0xff]
    %v2100 = vld [vmem:[#allocation2 + $0xf1] sm:$0xff]
    %v2101 = vld [vmem:[#allocation2 + $0xf9] sm:$0xff]
    %v2102 = vld [vmem:[#allocation2 + $0x101] sm:$0xff]
    %v2103 = vld [vmem:[#allocation2 + $0x109] sm:$0xff]
    %v2104 = vld [vmem:[#allocation2 + $0x111] sm:$0xff]
    %v2105 = vld [vmem:[#allocation2 + $0x119] sm:$0xff]
    %v2106 = vld [vmem:[#allocation2 + $0x121] sm:$0xff]
    %v2107 = vld [vmem:[#allocation2 + $0x129] sm:$0xff]
    %v2108 = vld [vmem:[#allocation2 + $0x131] sm:$0xff]
    %v2109 = vld [vmem:[#allocation2 + $0x139] sm:$0xff]
    %v2110 = vld [vmem:[#allocation2 + $0x141] sm:$0xff]
    %v2111 = vld [vmem:[#allocation2 + $0x149] sm:$0xff]
    %v2112 = vld [vmem:[#allocation2 + $0x151] sm:$0xff]
    %v2113 = vld [vmem:[#allocation2 + $0x159] sm:$0xff]
    %v2114 = vld [vmem:[#allocation2 + $0x161] sm:$0xff]
    %v2115 = vld [vmem:[#allocation2 + $0x169] sm:$0xff]
    %v2116 = vld [vmem:[#allocation2 + $0x171] sm:$0xff]
    %v2117 = vld [vmem:[#allocation2 + $0x179] sm:$0xff]
    %v2118 = vld [vmem:[#allocation2 + $0x181] sm:$0xff]
    %v2119 = vld [vmem:[#allocation2 + $0x189] sm:$0xff]
    %v2120 = vld [vmem:[#allocation2 + $0x191] sm:$0xff]
    %v2121 = vld [vmem:[#allocation2 + $0x199] sm:$0xff]
    %v2122 = vld [vmem:[#allocation2 + $0x1a1] sm:$0xff]
    %v2123 = vld [vmem:[#allocation2 + $0x1a9] sm:$0xff]
    %v2124 = vld [vmem:[#allocation2 + $0x1b1] sm:$0xff]
    %v2125 = vld [vmem:[#allocation2 + $0x1b9] sm:$0xff]
    %v2126 = vld [vmem:[#allocation2 + $0x1c1] sm:$0xff]
    %v2127 = vld [vmem:[#allocation2 + $0x1c9] sm:$0xff]
    %v2128 = vld [vmem:[#allocation2 + $0x1d1] sm:$0xff]
    %v2129 = vld [vmem:[#allocation2 + $0x1d9] sm:$0xff]
    %v2130 = vld [vmem:[#allocation2 + $0x1e1] sm:$0xff]
    %v2131 = vld [vmem:[#allocation2 + $0x1e9] sm:$0xff]
    %v2132 = vld [vmem:[#allocation2 + $0x1f1] sm:$0xff]
    %v2133 = vld [vmem:[#allocation2 + $0x1f9] sm:$0xff]
    %v2134 = vld [vmem:[#allocation2 + $0x201] sm:$0xff]
    %v2135 = vld [vmem:[#allocation2 + $0x209] sm:$0xff]
    %v2136 = vld [vmem:[#allocation2 + $0x211] sm:$0xff]
    %v2137 = vld [vmem:[#allocation2 + $0x219] sm:$0xff]
    %v2138 = vld [vmem:[#allocation2 + $0x221] sm:$0xff]
    %v2139 = vld [vmem:[#allocation2 + $0x229] sm:$0xff]
    %v2140 = vld [vmem:[#allocation2 + $0x231] sm:$0xff]
    %v2141 = vld [vmem:[#allocation2 + $0x239] sm:$0xff]
    %v2142 = vld [vmem:[#allocation2 + $0x241] sm:$0xff]
    %v2143 = vld [vmem:[#allocation2 + $0x249] sm:$0xff]
    %v2144 = vld [vmem:[#allocation2 + $0x251] sm:$0xff]
    %v2145 = vld [vmem:[#allocation2 + $0x259] sm:$0xff]
    %v2146 = vld [vmem:[#allocation2 + $0x261] sm:$0xff]
    %v2147 = vld [vmem:[#allocation2 + $0x269] sm:$0xff]
    %v2148 = vld [vmem:[#allocation2 + $0x271] sm:$0xff]
    %v2149 = vld [vmem:[#allocation2 + $0x279] sm:$0xff]
    %v2150 = vld [vmem:[#allocation2 + $0x281] sm:$0xff]
    %v2151 = vld [vmem:[#allocation2 + $0x289] sm:$0xff]
    %v2152 = vld [vmem:[#allocation2 + $0x291] sm:$0xff]
    %v2153 = vld [vmem:[#allocation2 + $0x299] sm:$0xff]
    %v2154 = vld [vmem:[#allocation2 + $0x2a1] sm:$0xff]
    %v2155 = vld [vmem:[#allocation2 + $0x2a9] sm:$0xff]
    %v2156 = vld [vmem:[#allocation2 + $0x2b1] sm:$0xff]
    %v2157 = vld [vmem:[#allocation2 + $0x2b9] sm:$0xff]
    %v2158 = vld [vmem:[#allocation2 + $0x2c1] sm:$0xff]
    %v2159 = vld [vmem:[#allocation2 + $0x2c9] sm:$0xff]
    %v2160 = vld [vmem:[#allocation2 + $0x2d1] sm:$0xff]
    %v2161 = vld [vmem:[#allocation2 + $0x2d9] sm:$0xff]
    %v2162 = vld [vmem:[#allocation2 + $0x2e1] sm:$0xff]
    %v2163 = vld [vmem:[#allocation2 + $0x2e9] sm:$0xff]
    %v2164 = vld [vmem:[#allocation2 + $0x2f1] sm:$0xff]
    %v2165 = vld [vmem:[#allocation2 + $0x2f9] sm:$0xff]
    %v2166 = vld [vmem:[#allocation2 + $0x301] sm:$0xff]
    %v2167 = vld [vmem:[#allocation2 + $0x309] sm:$0xff]
    %v2168 = vld [vmem:[#allocation2 + $0x311] sm:$0xff]
    %v2169 = vld [vmem:[#allocation2 + $0x319] sm:$0xff]
    %v2170 = vld [vmem:[#allocation2 + $0x321] sm:$0xff]
    %v2171 = vld [vmem:[#allocation2 + $0x329] sm:$0xff]
    %v2172 = vld [vmem:[#allocation2 + $0x331] sm:$0xff]
    %v2173 = vld [vmem:[#allocation2 + $0x339] sm:$0xff]
    %v2174 = vld [vmem:[#allocation2 + $0x341] sm:$0xff]
    %v2175 = vld [vmem:[#allocation2 + $0x349] sm:$0xff]
    %v2176 = vld [vmem:[#allocation2 + $0x351] sm:$0xff]
    %v2177 = vld [vmem:[#allocation2 + $0x359] sm:$0xff]
    %v2178 = vld [vmem:[#allocation2 + $0x361] sm:$0xff]
    %v2179 = vld [vmem:[#allocation2 + $0x369] sm:$0xff]
    %v2180 = vld [vmem:[#allocation2 + $0x371] sm:$0xff]
    %v2181 = vld [vmem:[#allocation2 + $0x379] sm:$0xff]
    %v2182 = vld [vmem:[#allocation2 + $0x381] sm:$0xff]
    %v2183 = vld [vmem:[#allocation2 + $0x389] sm:$0xff]
    %v2184 = vld [vmem:[#allocation2 + $0x391] sm:$0xff]
    %v2185 = vld [vmem:[#allocation2 + $0x399] sm:$0xff]
    %v2186 = vld [vmem:[#allocation2 + $0x3a1] sm:$0xff]
    %v2187 = vld [vmem:[#allocation2 + $0x3a9] sm:$0xff]
    %v2188 = vld [vmem:[#allocation2 + $0x3b1] sm:$0xff]
    %v2189 = vld [vmem:[#allocation2 + $0x3b9] sm:$0xff]
    %v2190 = vld [vmem:[#allocation2 + $0x3c1] sm:$0xff]
    %v2191 = vld [vmem:[#allocation2 + $0x3c9] sm:$0xff]
    %v2192 = vld [vmem:[#allocation2 + $0x3d1] sm:$0xff]
    %v2193 = vld [vmem:[#allocation2 + $0x3d9] sm:$0xff]
    %v2194 = vld [vmem:[#allocation2 + $0x3e1] sm:$0xff]
    %v2195 = vld [vmem:[#allocation2 + $0x3e9] sm:$0xff]
    %v2196 = vld [vmem:[#allocation2 + $0x3f1] sm:$0xff]
    %v2197 = vld [vmem:[#allocation2 + $0x3f9] sm:$0xff]
    %v2198 = vld [vmem:[#allocation2 + $0x401] sm:$0xff]
    %v2199 = vld [vmem:[#allocation2 + $0x409] sm:$0xff]
    %v2200 = vld [vmem:[#allocation2 + $0x411] sm:$0xff]
    %v2201 = vld [vmem:[#allocation2 + $0x419] sm:$0xff]
    %v2202 = vld [vmem:[#allocation2 + $0x421] sm:$0xff]
    %v2203 = vld [vmem:[#allocation2 + $0x429] sm:$0xff]
    %v2204 = vld [vmem:[#allocation2 + $0x431] sm:$0xff]
    %v2205 = vld [vmem:[#allocation2 + $0x439] sm:$0xff]
    %v2206 = vld [vmem:[#allocation2 + $0x441] sm:$0xff]
    %v2207 = vld [vmem:[#allocation2 + $0x449] sm:$0xff]
    %v2208 = vld [vmem:[#allocation2 + $0x451] sm:$0xff]
    %v2209 = vld [vmem:[#allocation2 + $0x459] sm:$0xff]
    %v2210 = vld [vmem:[#allocation2 + $0x461] sm:$0xff]
    %v2211 = vld [vmem:[#allocation2 + $0x469] sm:$0xff]
    %v2212 = vld [vmem:[#allocation2 + $0x471] sm:$0xff]
    %v2213 = vld [vmem:[#allocation2 + $0x479] sm:$0xff]
    %v2214 = vld [vmem:[#allocation2 + $0x481] sm:$0xff]
    %v2215 = vld [vmem:[#allocation2 + $0x489] sm:$0xff]
    %v2216 = vld [vmem:[#allocation2 + $0x491] sm:$0xff]
    %v2217 = vld [vmem:[#allocation2 + $0x499] sm:$0xff]
    %v2218 = vld [vmem:[#allocation2 + $0x4a1] sm:$0xff]
    %v2219 = vld [vmem:[#allocation2 + $0x4a9] sm:$0xff]
    %v2220 = vld [vmem:[#allocation2 + $0x4b1] sm:$0xff]
    %v2221 = vld [vmem:[#allocation2 + $0x4b9] sm:$0xff]
    %v2222 = vld [vmem:[#allocation2 + $0x4c1] sm:$0xff]
    %v2223 = vld [vmem:[#allocation2 + $0x4c9] sm:$0xff]
    %v2224 = vld [vmem:[#allocation2 + $0x4d1] sm:$0xff]
    %v2225 = vld [vmem:[#allocation2 + $0x4d9] sm:$0xff]
    %v2226 = vld [vmem:[#allocation2 + $0x4e1] sm:$0xff]
    %v2227 = vld [vmem:[#allocation2 + $0x4e9] sm:$0xff]
    %v2228 = vld [vmem:[#allocation2 + $0x4f1] sm:$0xff]
    %v2229 = vld [vmem:[#allocation2 + $0x4f9] sm:$0xff]
    %v2230 = vld [vmem:[#allocation2 + $0x501] sm:$0xff]
    %v2231 = vld [vmem:[#allocation2 + $0x509] sm:$0xff]
    %v2232 = vld [vmem:[#allocation2 + $0x511] sm:$0xff]
    %v2233 = vld [vmem:[#allocation2 + $0x519] sm:$0xff]
    %v2234 = vld [vmem:[#allocation2 + $0x521] sm:$0xff]
    %v2235 = vld [vmem:[#allocation2 + $0x529] sm:$0xff]
    %v2236 = vld [vmem:[#allocation2 + $0x531] sm:$0xff]
    %v2237 = vld [vmem:[#allocation2 + $0x539] sm:$0xff]
    %v2238 = vld [vmem:[#allocation2 + $0x541] sm:$0xff]
    %v2239 = vpack.c.bf16 %v2071, %v2070
    %v2240 = vpack.c.bf16 %v2073, %v2072
    %v2241 = vpack.c.bf16 %v2075, %v2074
    %v2242 = vpack.c.bf16 %v2077, %v2076
    %v2243 = vpack.c.bf16 %v2079, %v2078
    %v2244 = vpack.c.bf16 %v2081, %v2080
    %v2245 = vpack.c.bf16 %v2083, %v2082
    %v2246 = vpack.c.bf16 %v2085, %v2084
    %v2247 = vpack.c.bf16 %v2087, %v2086
    %v2248 = vpack.c.bf16 %v2089, %v2088
    %v2249 = vpack.c.bf16 %v2091, %v2090
    %v2250 = vpack.c.bf16 %v2093, %v2092
    %v2251 = vpack.c.bf16 %v2095, %v2094
    %v2252 = vpack.c.bf16 %v2097, %v2096
    %v2253 = vpack.c.bf16 %v2099, %v2098
    %v2254 = vpack.c.bf16 %v2101, %v2100
    %v2255 = vpack.c.bf16 %v2103, %v2102
    %v2256 = vpack.c.bf16 %v2105, %v2104
    %v2257 = vpack.c.bf16 %v2107, %v2106
    %v2258 = vpack.c.bf16 %v2109, %v2108
    %v2259 = vpack.c.bf16 %v2111, %v2110
    %v2260 = vpack.c.bf16 %v2113, %v2112
    %v2261 = vpack.c.bf16 %v2115, %v2114
    %v2262 = vpack.c.bf16 %v2117, %v2116
    %v2263 = vpack.c.bf16 %v2119, %v2118
    %v2264 = vpack.c.bf16 %v2121, %v2120
    %v2265 = vpack.c.bf16 %v2123, %v2122
    %v2266 = vpack.c.bf16 %v2125, %v2124
    %v2267 = vpack.c.bf16 %v2127, %v2126
    %v2268 = vpack.c.bf16 %v2129, %v2128
    %v2269 = vpack.c.bf16 %v2131, %v2130
    %v2270 = vpack.c.bf16 %v2133, %v2132
    %v2271 = vpack.c.bf16 %v2135, %v2134
    %v2272 = vpack.c.bf16 %v2137, %v2136
    %v2273 = vpack.c.bf16 %v2139, %v2138
    %v2274 = vpack.c.bf16 %v2141, %v2140
    %v2275 = vpack.c.bf16 %v2143, %v2142
    %v2276 = vpack.c.bf16 %v2145, %v2144
    %v2277 = vpack.c.bf16 %v2147, %v2146
    %v2278 = vpack.c.bf16 %v2149, %v2148
    %v2279 = vpack.c.bf16 %v2151, %v2150
    %v2280 = vpack.c.bf16 %v2153, %v2152
    %v2281 = vpack.c.bf16 %v2155, %v2154
    %v2282 = vpack.c.bf16 %v2157, %v2156
    %v2283 = vpack.c.bf16 %v2159, %v2158
    %v2284 = vpack.c.bf16 %v2161, %v2160
    %v2285 = vpack.c.bf16 %v2163, %v2162
    %v2286 = vpack.c.bf16 %v2165, %v2164
    %v2287 = vpack.c.bf16 %v2167, %v2166
    %v2288 = vpack.c.bf16 %v2169, %v2168
    %v2289 = vpack.c.bf16 %v2171, %v2170
    %v2290 = vpack.c.bf16 %v2173, %v2172
    %v2291 = vpack.c.bf16 %v2175, %v2174
    %v2292 = vpack.c.bf16 %v2177, %v2176
    %v2293 = vpack.c.bf16 %v2179, %v2178
    %v2294 = vpack.c.bf16 %v2181, %v2180
    %v2295 = vpack.c.bf16 %v2183, %v2182
    %v2296 = vpack.c.bf16 %v2185, %v2184
    %v2297 = vpack.c.bf16 %v2187, %v2186
    %v2298 = vpack.c.bf16 %v2189, %v2188
    %v2299 = vpack.c.bf16 %v2191, %v2190
    %v2300 = vpack.c.bf16 %v2193, %v2192
    %v2301 = vpack.c.bf16 %v2195, %v2194
    %v2302 = vpack.c.bf16 %v2197, %v2196
    %v2303 = vpack.c.bf16 %v2199, %v2198
    %v2304 = vpack.c.bf16 %v2201, %v2200
    %v2305 = vpack.c.bf16 %v2203, %v2202
    %v2306 = vpack.c.bf16 %v2205, %v2204
    %v2307 = vpack.c.bf16 %v2207, %v2206
    %v2308 = vpack.c.bf16 %v2209, %v2208
    %v2309 = vpack.c.bf16 %v2211, %v2210
    %v2310 = vpack.c.bf16 %v2213, %v2212
    %v2311 = vpack.c.bf16 %v2215, %v2214
    %v2312 = vpack.c.bf16 %v2217, %v2216
    %v2313 = vpack.c.bf16 %v2219, %v2218
    %v2314 = vpack.c.bf16 %v2221, %v2220
    %v2315 = vpack.c.bf16 %v2223, %v2222
    %v2316 = vpack.c.bf16 %v2225, %v2224
    %v2317 = vpack.c.bf16 %v2227, %v2226
    %v2318 = vpack.c.bf16 %v2229, %v2228
    %v2319 = vpack.c.bf16 %v2231, %v2230
    %v2320 = vpack.c.bf16 %v2233, %v2232
    %v2321 = vpack.c.bf16 %v2235, %v2234
    %v2322 = vpack.c.bf16 %v2237, %v2236
    %v2323 = vpack.c.bf16 %v2238, %v2238
    %v2324 = vld [vmem:[#allocation2 + $0x2] sm:$0xff]
    %v2325 = vld [vmem:[#allocation2 + $0xa] sm:$0xff]
    %v2326 = vld [vmem:[#allocation2 + $0x12] sm:$0xff]
    %v2327 = vld [vmem:[#allocation2 + $0x1a] sm:$0xff]
    %v2328 = vld [vmem:[#allocation2 + $0x22] sm:$0xff]
    %v2329 = vld [vmem:[#allocation2 + $0x2a] sm:$0xff]
    %v2330 = vld [vmem:[#allocation2 + $0x32] sm:$0xff]
    %v2331 = vld [vmem:[#allocation2 + $0x3a] sm:$0xff]
    %v2332 = vld [vmem:[#allocation2 + $0x42] sm:$0xff]
    %v2333 = vld [vmem:[#allocation2 + $0x4a] sm:$0xff]
    %v2334 = vld [vmem:[#allocation2 + $0x52] sm:$0xff]
    %v2335 = vld [vmem:[#allocation2 + $0x5a] sm:$0xff]
    %v2336 = vld [vmem:[#allocation2 + $0x62] sm:$0xff]
    %v2337 = vld [vmem:[#allocation2 + $0x6a] sm:$0xff]
    %v2338 = vld [vmem:[#allocation2 + $0x72] sm:$0xff]
    %v2339 = vld [vmem:[#allocation2 + $0x7a] sm:$0xff]
    %v2340 = vld [vmem:[#allocation2 + $0x82] sm:$0xff]
    %v2341 = vld [vmem:[#allocation2 + $0x8a] sm:$0xff]
    %v2342 = vld [vmem:[#allocation2 + $0x92] sm:$0xff]
    %v2343 = vld [vmem:[#allocation2 + $0x9a] sm:$0xff]
    %v2344 = vld [vmem:[#allocation2 + $0xa2] sm:$0xff]
    %v2345 = vld [vmem:[#allocation2 + $0xaa] sm:$0xff]
    %v2346 = vld [vmem:[#allocation2 + $0xb2] sm:$0xff]
    %v2347 = vld [vmem:[#allocation2 + $0xba] sm:$0xff]
    %v2348 = vld [vmem:[#allocation2 + $0xc2] sm:$0xff]
    %v2349 = vld [vmem:[#allocation2 + $0xca] sm:$0xff]
    %v2350 = vld [vmem:[#allocation2 + $0xd2] sm:$0xff]
    %v2351 = vld [vmem:[#allocation2 + $0xda] sm:$0xff]
    %v2352 = vld [vmem:[#allocation2 + $0xe2] sm:$0xff]
    %v2353 = vld [vmem:[#allocation2 + $0xea] sm:$0xff]
    %v2354 = vld [vmem:[#allocation2 + $0xf2] sm:$0xff]
    %v2355 = vld [vmem:[#allocation2 + $0xfa] sm:$0xff]
    %v2356 = vld [vmem:[#allocation2 + $0x102] sm:$0xff]
    %v2357 = vld [vmem:[#allocation2 + $0x10a] sm:$0xff]
    %v2358 = vld [vmem:[#allocation2 + $0x112] sm:$0xff]
    %v2359 = vld [vmem:[#allocation2 + $0x11a] sm:$0xff]
    %v2360 = vld [vmem:[#allocation2 + $0x122] sm:$0xff]
    %v2361 = vld [vmem:[#allocation2 + $0x12a] sm:$0xff]
    %v2362 = vld [vmem:[#allocation2 + $0x132] sm:$0xff]
    %v2363 = vld [vmem:[#allocation2 + $0x13a] sm:$0xff]
    %v2364 = vld [vmem:[#allocation2 + $0x142] sm:$0xff]
    %v2365 = vld [vmem:[#allocation2 + $0x14a] sm:$0xff]
    %v2366 = vld [vmem:[#allocation2 + $0x152] sm:$0xff]
    %v2367 = vld [vmem:[#allocation2 + $0x15a] sm:$0xff]
    %v2368 = vld [vmem:[#allocation2 + $0x162] sm:$0xff]
    %v2369 = vld [vmem:[#allocation2 + $0x16a] sm:$0xff]
    %v2370 = vld [vmem:[#allocation2 + $0x172] sm:$0xff]
    %v2371 = vld [vmem:[#allocation2 + $0x17a] sm:$0xff]
    %v2372 = vld [vmem:[#allocation2 + $0x182] sm:$0xff]
    %v2373 = vld [vmem:[#allocation2 + $0x18a] sm:$0xff]
    %v2374 = vld [vmem:[#allocation2 + $0x192] sm:$0xff]
    %v2375 = vld [vmem:[#allocation2 + $0x19a] sm:$0xff]
    %v2376 = vld [vmem:[#allocation2 + $0x1a2] sm:$0xff]
    %v2377 = vld [vmem:[#allocation2 + $0x1aa] sm:$0xff]
    %v2378 = vld [vmem:[#allocation2 + $0x1b2] sm:$0xff]
    %v2379 = vld [vmem:[#allocation2 + $0x1ba] sm:$0xff]
    %v2380 = vld [vmem:[#allocation2 + $0x1c2] sm:$0xff]
    %v2381 = vld [vmem:[#allocation2 + $0x1ca] sm:$0xff]
    %v2382 = vld [vmem:[#allocation2 + $0x1d2] sm:$0xff]
    %v2383 = vld [vmem:[#allocation2 + $0x1da] sm:$0xff]
    %v2384 = vld [vmem:[#allocation2 + $0x1e2] sm:$0xff]
    %v2385 = vld [vmem:[#allocation2 + $0x1ea] sm:$0xff]
    %v2386 = vld [vmem:[#allocation2 + $0x1f2] sm:$0xff]
    %v2387 = vld [vmem:[#allocation2 + $0x1fa] sm:$0xff]
    %v2388 = vld [vmem:[#allocation2 + $0x202] sm:$0xff]
    %v2389 = vld [vmem:[#allocation2 + $0x20a] sm:$0xff]
    %v2390 = vld [vmem:[#allocation2 + $0x212] sm:$0xff]
    %v2391 = vld [vmem:[#allocation2 + $0x21a] sm:$0xff]
    %v2392 = vld [vmem:[#allocation2 + $0x222] sm:$0xff]
    %v2393 = vld [vmem:[#allocation2 + $0x22a] sm:$0xff]
    %v2394 = vld [vmem:[#allocation2 + $0x232] sm:$0xff]
    %v2395 = vld [vmem:[#allocation2 + $0x23a] sm:$0xff]
    %v2396 = vld [vmem:[#allocation2 + $0x242] sm:$0xff]
    %v2397 = vld [vmem:[#allocation2 + $0x24a] sm:$0xff]
    %v2398 = vld [vmem:[#allocation2 + $0x252] sm:$0xff]
    %v2399 = vld [vmem:[#allocation2 + $0x25a] sm:$0xff]
    %v2400 = vld [vmem:[#allocation2 + $0x262] sm:$0xff]
    %v2401 = vld [vmem:[#allocation2 + $0x26a] sm:$0xff]
    %v2402 = vld [vmem:[#allocation2 + $0x272] sm:$0xff]
    %v2403 = vld [vmem:[#allocation2 + $0x27a] sm:$0xff]
    %v2404 = vld [vmem:[#allocation2 + $0x282] sm:$0xff]
    %v2405 = vld [vmem:[#allocation2 + $0x28a] sm:$0xff]
    %v2406 = vld [vmem:[#allocation2 + $0x292] sm:$0xff]
    %v2407 = vld [vmem:[#allocation2 + $0x29a] sm:$0xff]
    %v2408 = vld [vmem:[#allocation2 + $0x2a2] sm:$0xff]
    %v2409 = vld [vmem:[#allocation2 + $0x2aa] sm:$0xff]
    %v2410 = vld [vmem:[#allocation2 + $0x2b2] sm:$0xff]
    %v2411 = vld [vmem:[#allocation2 + $0x2ba] sm:$0xff]
    %v2412 = vld [vmem:[#allocation2 + $0x2c2] sm:$0xff]
    %v2413 = vld [vmem:[#allocation2 + $0x2ca] sm:$0xff]
    %v2414 = vld [vmem:[#allocation2 + $0x2d2] sm:$0xff]
    %v2415 = vld [vmem:[#allocation2 + $0x2da] sm:$0xff]
    %v2416 = vld [vmem:[#allocation2 + $0x2e2] sm:$0xff]
    %v2417 = vld [vmem:[#allocation2 + $0x2ea] sm:$0xff]
    %v2418 = vld [vmem:[#allocation2 + $0x2f2] sm:$0xff]
    %v2419 = vld [vmem:[#allocation2 + $0x2fa] sm:$0xff]
    %v2420 = vld [vmem:[#allocation2 + $0x302] sm:$0xff]
    %v2421 = vld [vmem:[#allocation2 + $0x30a] sm:$0xff]
    %v2422 = vld [vmem:[#allocation2 + $0x312] sm:$0xff]
    %v2423 = vld [vmem:[#allocation2 + $0x31a] sm:$0xff]
    %v2424 = vld [vmem:[#allocation2 + $0x322] sm:$0xff]
    %v2425 = vld [vmem:[#allocation2 + $0x32a] sm:$0xff]
    %v2426 = vld [vmem:[#allocation2 + $0x332] sm:$0xff]
    %v2427 = vld [vmem:[#allocation2 + $0x33a] sm:$0xff]
    %v2428 = vld [vmem:[#allocation2 + $0x342] sm:$0xff]
    %v2429 = vld [vmem:[#allocation2 + $0x34a] sm:$0xff]
    %v2430 = vld [vmem:[#allocation2 + $0x352] sm:$0xff]
    %v2431 = vld [vmem:[#allocation2 + $0x35a] sm:$0xff]
    %v2432 = vld [vmem:[#allocation2 + $0x362] sm:$0xff]
    %v2433 = vld [vmem:[#allocation2 + $0x36a] sm:$0xff]
    %v2434 = vld [vmem:[#allocation2 + $0x372] sm:$0xff]
    %v2435 = vld [vmem:[#allocation2 + $0x37a] sm:$0xff]
    %v2436 = vld [vmem:[#allocation2 + $0x382] sm:$0xff]
    %v2437 = vld [vmem:[#allocation2 + $0x38a] sm:$0xff]
    %v2438 = vld [vmem:[#allocation2 + $0x392] sm:$0xff]
    %v2439 = vld [vmem:[#allocation2 + $0x39a] sm:$0xff]
    %v2440 = vld [vmem:[#allocation2 + $0x3a2] sm:$0xff]
    %v2441 = vld [vmem:[#allocation2 + $0x3aa] sm:$0xff]
    %v2442 = vld [vmem:[#allocation2 + $0x3b2] sm:$0xff]
    %v2443 = vld [vmem:[#allocation2 + $0x3ba] sm:$0xff]
    %v2444 = vld [vmem:[#allocation2 + $0x3c2] sm:$0xff]
    %v2445 = vld [vmem:[#allocation2 + $0x3ca] sm:$0xff]
    %v2446 = vld [vmem:[#allocation2 + $0x3d2] sm:$0xff]
    %v2447 = vld [vmem:[#allocation2 + $0x3da] sm:$0xff]
    %v2448 = vld [vmem:[#allocation2 + $0x3e2] sm:$0xff]
    %v2449 = vld [vmem:[#allocation2 + $0x3ea] sm:$0xff]
    %v2450 = vld [vmem:[#allocation2 + $0x3f2] sm:$0xff]
    %v2451 = vld [vmem:[#allocation2 + $0x3fa] sm:$0xff]
    %v2452 = vld [vmem:[#allocation2 + $0x402] sm:$0xff]
    %v2453 = vld [vmem:[#allocation2 + $0x40a] sm:$0xff]
    %v2454 = vld [vmem:[#allocation2 + $0x412] sm:$0xff]
    %v2455 = vld [vmem:[#allocation2 + $0x41a] sm:$0xff]
    %v2456 = vld [vmem:[#allocation2 + $0x422] sm:$0xff]
    %v2457 = vld [vmem:[#allocation2 + $0x42a] sm:$0xff]
    %v2458 = vld [vmem:[#allocation2 + $0x432] sm:$0xff]
    %v2459 = vld [vmem:[#allocation2 + $0x43a] sm:$0xff]
    %v2460 = vld [vmem:[#allocation2 + $0x442] sm:$0xff]
    %v2461 = vld [vmem:[#allocation2 + $0x44a] sm:$0xff]
    %v2462 = vld [vmem:[#allocation2 + $0x452] sm:$0xff]
    %v2463 = vld [vmem:[#allocation2 + $0x45a] sm:$0xff]
    %v2464 = vld [vmem:[#allocation2 + $0x462] sm:$0xff]
    %v2465 = vld [vmem:[#allocation2 + $0x46a] sm:$0xff]
    %v2466 = vld [vmem:[#allocation2 + $0x472] sm:$0xff]
    %v2467 = vld [vmem:[#allocation2 + $0x47a] sm:$0xff]
    %v2468 = vld [vmem:[#allocation2 + $0x482] sm:$0xff]
    %v2469 = vld [vmem:[#allocation2 + $0x48a] sm:$0xff]
    %v2470 = vld [vmem:[#allocation2 + $0x492] sm:$0xff]
    %v2471 = vld [vmem:[#allocation2 + $0x49a] sm:$0xff]
    %v2472 = vld [vmem:[#allocation2 + $0x4a2] sm:$0xff]
    %v2473 = vld [vmem:[#allocation2 + $0x4aa] sm:$0xff]
    %v2474 = vld [vmem:[#allocation2 + $0x4b2] sm:$0xff]
    %v2475 = vld [vmem:[#allocation2 + $0x4ba] sm:$0xff]
    %v2476 = vld [vmem:[#allocation2 + $0x4c2] sm:$0xff]
    %v2477 = vld [vmem:[#allocation2 + $0x4ca] sm:$0xff]
    %v2478 = vld [vmem:[#allocation2 + $0x4d2] sm:$0xff]
    %v2479 = vld [vmem:[#allocation2 + $0x4da] sm:$0xff]
    %v2480 = vld [vmem:[#allocation2 + $0x4e2] sm:$0xff]
    %v2481 = vld [vmem:[#allocation2 + $0x4ea] sm:$0xff]
    %v2482 = vld [vmem:[#allocation2 + $0x4f2] sm:$0xff]
    %v2483 = vld [vmem:[#allocation2 + $0x4fa] sm:$0xff]
    %v2484 = vld [vmem:[#allocation2 + $0x502] sm:$0xff]
    %v2485 = vld [vmem:[#allocation2 + $0x50a] sm:$0xff]
    %v2486 = vld [vmem:[#allocation2 + $0x512] sm:$0xff]
    %v2487 = vld [vmem:[#allocation2 + $0x51a] sm:$0xff]
    %v2488 = vld [vmem:[#allocation2 + $0x522] sm:$0xff]
    %v2489 = vld [vmem:[#allocation2 + $0x52a] sm:$0xff]
    %v2490 = vld [vmem:[#allocation2 + $0x532] sm:$0xff]
    %v2491 = vld [vmem:[#allocation2 + $0x53a] sm:$0xff]
    %v2492 = vld [vmem:[#allocation2 + $0x542] sm:$0xff]
    %v2493 = vpack.c.bf16 %v2325, %v2324
    %v2494 = vpack.c.bf16 %v2327, %v2326
    %v2495 = vpack.c.bf16 %v2329, %v2328
    %v2496 = vpack.c.bf16 %v2331, %v2330
    %v2497 = vpack.c.bf16 %v2333, %v2332
    %v2498 = vpack.c.bf16 %v2335, %v2334
    %v2499 = vpack.c.bf16 %v2337, %v2336
    %v2500 = vpack.c.bf16 %v2339, %v2338
    %v2501 = vpack.c.bf16 %v2341, %v2340
    %v2502 = vpack.c.bf16 %v2343, %v2342
    %v2503 = vpack.c.bf16 %v2345, %v2344
    %v2504 = vpack.c.bf16 %v2347, %v2346
    %v2505 = vpack.c.bf16 %v2349, %v2348
    %v2506 = vpack.c.bf16 %v2351, %v2350
    %v2507 = vpack.c.bf16 %v2353, %v2352
    %v2508 = vpack.c.bf16 %v2355, %v2354
    %v2509 = vpack.c.bf16 %v2357, %v2356
    %v2510 = vpack.c.bf16 %v2359, %v2358
    %v2511 = vpack.c.bf16 %v2361, %v2360
    %v2512 = vpack.c.bf16 %v2363, %v2362
    %v2513 = vpack.c.bf16 %v2365, %v2364
    %v2514 = vpack.c.bf16 %v2367, %v2366
    %v2515 = vpack.c.bf16 %v2369, %v2368
    %v2516 = vpack.c.bf16 %v2371, %v2370
    %v2517 = vpack.c.bf16 %v2373, %v2372
    %v2518 = vpack.c.bf16 %v2375, %v2374
    %v2519 = vpack.c.bf16 %v2377, %v2376
    %v2520 = vpack.c.bf16 %v2379, %v2378
    %v2521 = vpack.c.bf16 %v2381, %v2380
    %v2522 = vpack.c.bf16 %v2383, %v2382
    %v2523 = vpack.c.bf16 %v2385, %v2384
    %v2524 = vpack.c.bf16 %v2387, %v2386
    %v2525 = vpack.c.bf16 %v2389, %v2388
    %v2526 = vpack.c.bf16 %v2391, %v2390
    %v2527 = vpack.c.bf16 %v2393, %v2392
    %v2528 = vpack.c.bf16 %v2395, %v2394
    %v2529 = vpack.c.bf16 %v2397, %v2396
    %v2530 = vpack.c.bf16 %v2399, %v2398
    %v2531 = vpack.c.bf16 %v2401, %v2400
    %v2532 = vpack.c.bf16 %v2403, %v2402
    %v2533 = vpack.c.bf16 %v2405, %v2404
    %v2534 = vpack.c.bf16 %v2407, %v2406
    %v2535 = vpack.c.bf16 %v2409, %v2408
    %v2536 = vpack.c.bf16 %v2411, %v2410
    %v2537 = vpack.c.bf16 %v2413, %v2412
    %v2538 = vpack.c.bf16 %v2415, %v2414
    %v2539 = vpack.c.bf16 %v2417, %v2416
    %v2540 = vpack.c.bf16 %v2419, %v2418
    %v2541 = vpack.c.bf16 %v2421, %v2420
    %v2542 = vpack.c.bf16 %v2423, %v2422
    %v2543 = vpack.c.bf16 %v2425, %v2424
    %v2544 = vpack.c.bf16 %v2427, %v2426
    %v2545 = vpack.c.bf16 %v2429, %v2428
    %v2546 = vpack.c.bf16 %v2431, %v2430
    %v2547 = vpack.c.bf16 %v2433, %v2432
    %v2548 = vpack.c.bf16 %v2435, %v2434
    %v2549 = vpack.c.bf16 %v2437, %v2436
    %v2550 = vpack.c.bf16 %v2439, %v2438
    %v2551 = vpack.c.bf16 %v2441, %v2440
    %v2552 = vpack.c.bf16 %v2443, %v2442
    %v2553 = vpack.c.bf16 %v2445, %v2444
    %v2554 = vpack.c.bf16 %v2447, %v2446
    %v2555 = vpack.c.bf16 %v2449, %v2448
    %v2556 = vpack.c.bf16 %v2451, %v2450
    %v2557 = vpack.c.bf16 %v2453, %v2452
    %v2558 = vpack.c.bf16 %v2455, %v2454
    %v2559 = vpack.c.bf16 %v2457, %v2456
    %v2560 = vpack.c.bf16 %v2459, %v2458
    %v2561 = vpack.c.bf16 %v2461, %v2460
    %v2562 = vpack.c.bf16 %v2463, %v2462
    %v2563 = vpack.c.bf16 %v2465, %v2464
    %v2564 = vpack.c.bf16 %v2467, %v2466
    %v2565 = vpack.c.bf16 %v2469, %v2468
    %v2566 = vpack.c.bf16 %v2471, %v2470
    %v2567 = vpack.c.bf16 %v2473, %v2472
    %v2568 = vpack.c.bf16 %v2475, %v2474
    %v2569 = vpack.c.bf16 %v2477, %v2476
    %v2570 = vpack.c.bf16 %v2479, %v2478
    %v2571 = vpack.c.bf16 %v2481, %v2480
    %v2572 = vpack.c.bf16 %v2483, %v2482
    %v2573 = vpack.c.bf16 %v2485, %v2484
    %v2574 = vpack.c.bf16 %v2487, %v2486
    %v2575 = vpack.c.bf16 %v2489, %v2488
    %v2576 = vpack.c.bf16 %v2491, %v2490
    %v2577 = vpack.c.bf16 %v2492, %v2492
    %v2578 = vld [vmem:[#allocation2 + $0x54a] sm:$0xff]
    %v2579 = vld [vmem:[#allocation2 + $0x552] sm:$0xff]
    %v2580 = vld [vmem:[#allocation2 + $0x55a] sm:$0xff]
    %v2581 = vpack.c.bf16 %v2328, %v2327
    %v2582 = vpack.c.bf16 %v2330, %v2329
    %v2583 = vpack.c.bf16 %v2332, %v2331
    %v2584 = vpack.c.bf16 %v2334, %v2333
    %v2585 = vpack.c.bf16 %v2336, %v2335
    %v2586 = vpack.c.bf16 %v2338, %v2337
    %v2587 = vpack.c.bf16 %v2340, %v2339
    %v2588 = vpack.c.bf16 %v2342, %v2341
    %v2589 = vpack.c.bf16 %v2344, %v2343
    %v2590 = vpack.c.bf16 %v2346, %v2345
    %v2591 = vpack.c.bf16 %v2348, %v2347
    %v2592 = vpack.c.bf16 %v2350, %v2349
    %v2593 = vpack.c.bf16 %v2352, %v2351
    %v2594 = vpack.c.bf16 %v2354, %v2353
    %v2595 = vpack.c.bf16 %v2356, %v2355
    %v2596 = vpack.c.bf16 %v2358, %v2357
    %v2597 = vpack.c.bf16 %v2360, %v2359
    %v2598 = vpack.c.bf16 %v2362, %v2361
    %v2599 = vpack.c.bf16 %v2364, %v2363
    %v2600 = vpack.c.bf16 %v2366, %v2365
    %v2601 = vpack.c.bf16 %v2368, %v2367
    %v2602 = vpack.c.bf16 %v2370, %v2369
    %v2603 = vpack.c.bf16 %v2372, %v2371
    %v2604 = vpack.c.bf16 %v2374, %v2373
    %v2605 = vpack.c.bf16 %v2376, %v2375
    %v2606 = vpack.c.bf16 %v2378, %v2377
    %v2607 = vpack.c.bf16 %v2380, %v2379
    %v2608 = vpack.c.bf16 %v2382, %v2381
    %v2609 = vpack.c.bf16 %v2384, %v2383
    %v2610 = vpack.c.bf16 %v2386, %v2385
    %v2611 = vpack.c.bf16 %v2388, %v2387
    %v2612 = vpack.c.bf16 %v2390, %v2389
    %v2613 = vpack.c.bf16 %v2392, %v2391
    %v2614 = vpack.c.bf16 %v2394, %v2393
    %v2615 = vpack.c.bf16 %v2396, %v2395
    %v2616 = vpack.c.bf16 %v2398, %v2397
    %v2617 = vpack.c.bf16 %v2400, %v2399
    %v2618 = vpack.c.bf16 %v2402, %v2401
    %v2619 = vpack.c.bf16 %v2404, %v2403
    %v2620 = vpack.c.bf16 %v2406, %v2405
    %v2621 = vpack.c.bf16 %v2408, %v2407
    %v2622 = vpack.c.bf16 %v2410, %v2409
    %v2623 = vpack.c.bf16 %v2412, %v2411
    %v2624 = vpack.c.bf16 %v2414, %v2413
    %v2625 = vpack.c.bf16 %v2416, %v2415
    %v2626 = vpack.c.bf16 %v2418, %v2417
    %v2627 = vpack.c.bf16 %v2420, %v2419
    %v2628 = vpack.c.bf16 %v2422, %v2421
    %v2629 = vpack.c.bf16 %v2424, %v2423
    %v2630 = vpack.c.bf16 %v2426, %v2425
    %v2631 = vpack.c.bf16 %v2428, %v2427
    %v2632 = vpack.c.bf16 %v2430, %v2429
    %v2633 = vpack.c.bf16 %v2432, %v2431
    %v2634 = vpack.c.bf16 %v2434, %v2433
    %v2635 = vpack.c.bf16 %v2436, %v2435
    %v2636 = vpack.c.bf16 %v2438, %v2437
    %v2637 = vpack.c.bf16 %v2440, %v2439
    %v2638 = vpack.c.bf16 %v2442, %v2441
    %v2639 = vpack.c.bf16 %v2444, %v2443
    %v2640 = vpack.c.bf16 %v2446, %v2445
    %v2641 = vpack.c.bf16 %v2448, %v2447
    %v2642 = vpack.c.bf16 %v2450, %v2449
    %v2643 = vpack.c.bf16 %v2452, %v2451
    %v2644 = vpack.c.bf16 %v2454, %v2453
    %v2645 = vpack.c.bf16 %v2456, %v2455
    %v2646 = vpack.c.bf16 %v2458, %v2457
    %v2647 = vpack.c.bf16 %v2460, %v2459
    %v2648 = vpack.c.bf16 %v2462, %v2461
    %v2649 = vpack.c.bf16 %v2464, %v2463
    %v2650 = vpack.c.bf16 %v2466, %v2465
    %v2651 = vpack.c.bf16 %v2468, %v2467
    %v2652 = vpack.c.bf16 %v2470, %v2469
    %v2653 = vpack.c.bf16 %v2472, %v2471
    %v2654 = vpack.c.bf16 %v2474, %v2473
    %v2655 = vpack.c.bf16 %v2476, %v2475
    %v2656 = vpack.c.bf16 %v2478, %v2477
    %v2657 = vpack.c.bf16 %v2480, %v2479
    %v2658 = vpack.c.bf16 %v2482, %v2481
    %v2659 = vpack.c.bf16 %v2484, %v2483
    %v2660 = vpack.c.bf16 %v2486, %v2485
    %v2661 = vpack.c.bf16 %v2488, %v2487
    %v2662 = vpack.c.bf16 %v2490, %v2489
    %v2663 = vpack.c.bf16 %v2492, %v2491
    %v2664 = vpack.c.bf16 %v2579, %v2578
    %v2665 = vpack.c.bf16 %v2580, %v2580
    %v2666 = vld [vmem:[#allocation2 + $0x1b] sm:$0xff]
    %v2667 = vld [vmem:[#allocation2 + $0x23] sm:$0xff]
    %v2668 = vld [vmem:[#allocation2 + $0x2b] sm:$0xff]
    %v2669 = vld [vmem:[#allocation2 + $0x33] sm:$0xff]
    %v2670 = vld [vmem:[#allocation2 + $0x3b] sm:$0xff]
    %v2671 = vld [vmem:[#allocation2 + $0x43] sm:$0xff]
    %v2672 = vld [vmem:[#allocation2 + $0x4b] sm:$0xff]
    %v2673 = vld [vmem:[#allocation2 + $0x53] sm:$0xff]
    %v2674 = vld [vmem:[#allocation2 + $0x5b] sm:$0xff]
    %v2675 = vld [vmem:[#allocation2 + $0x63] sm:$0xff]
    %v2676 = vld [vmem:[#allocation2 + $0x6b] sm:$0xff]
    %v2677 = vld [vmem:[#allocation2 + $0x73] sm:$0xff]
    %v2678 = vld [vmem:[#allocation2 + $0x7b] sm:$0xff]
    %v2679 = vld [vmem:[#allocation2 + $0x83] sm:$0xff]
    %v2680 = vld [vmem:[#allocation2 + $0x8b] sm:$0xff]
    %v2681 = vld [vmem:[#allocation2 + $0x93] sm:$0xff]
    %v2682 = vld [vmem:[#allocation2 + $0x9b] sm:$0xff]
    %v2683 = vld [vmem:[#allocation2 + $0xa3] sm:$0xff]
    %v2684 = vld [vmem:[#allocation2 + $0xab] sm:$0xff]
    %v2685 = vld [vmem:[#allocation2 + $0xb3] sm:$0xff]
    %v2686 = vld [vmem:[#allocation2 + $0xbb] sm:$0xff]
    %v2687 = vld [vmem:[#allocation2 + $0xc3] sm:$0xff]
    %v2688 = vld [vmem:[#allocation2 + $0xcb] sm:$0xff]
    %v2689 = vld [vmem:[#allocation2 + $0xd3] sm:$0xff]
    %v2690 = vld [vmem:[#allocation2 + $0xdb] sm:$0xff]
    %v2691 = vld [vmem:[#allocation2 + $0xe3] sm:$0xff]
    %v2692 = vld [vmem:[#allocation2 + $0xeb] sm:$0xff]
    %v2693 = vld [vmem:[#allocation2 + $0xf3] sm:$0xff]
    %v2694 = vld [vmem:[#allocation2 + $0xfb] sm:$0xff]
    %v2695 = vld [vmem:[#allocation2 + $0x103] sm:$0xff]
    %v2696 = vld [vmem:[#allocation2 + $0x10b] sm:$0xff]
    %v2697 = vld [vmem:[#allocation2 + $0x113] sm:$0xff]
    %v2698 = vld [vmem:[#allocation2 + $0x11b] sm:$0xff]
    %v2699 = vld [vmem:[#allocation2 + $0x123] sm:$0xff]
    %v2700 = vld [vmem:[#allocation2 + $0x12b] sm:$0xff]
    %v2701 = vld [vmem:[#allocation2 + $0x133] sm:$0xff]
    %v2702 = vld [vmem:[#allocation2 + $0x13b] sm:$0xff]
    %v2703 = vld [vmem:[#allocation2 + $0x143] sm:$0xff]
    %v2704 = vld [vmem:[#allocation2 + $0x14b] sm:$0xff]
    %v2705 = vld [vmem:[#allocation2 + $0x153] sm:$0xff]
    %v2706 = vld [vmem:[#allocation2 + $0x15b] sm:$0xff]
    %v2707 = vld [vmem:[#allocation2 + $0x163] sm:$0xff]
    %v2708 = vld [vmem:[#allocation2 + $0x16b] sm:$0xff]
    %v2709 = vld [vmem:[#allocation2 + $0x173] sm:$0xff]
    %v2710 = vld [vmem:[#allocation2 + $0x17b] sm:$0xff]
    %v2711 = vld [vmem:[#allocation2 + $0x183] sm:$0xff]
    %v2712 = vld [vmem:[#allocation2 + $0x18b] sm:$0xff]
    %v2713 = vld [vmem:[#allocation2 + $0x193] sm:$0xff]
    %v2714 = vld [vmem:[#allocation2 + $0x19b] sm:$0xff]
    %v2715 = vld [vmem:[#allocation2 + $0x1a3] sm:$0xff]
    %v2716 = vld [vmem:[#allocation2 + $0x1ab] sm:$0xff]
    %v2717 = vld [vmem:[#allocation2 + $0x1b3] sm:$0xff]
    %v2718 = vld [vmem:[#allocation2 + $0x1bb] sm:$0xff]
    %v2719 = vld [vmem:[#allocation2 + $0x1c3] sm:$0xff]
    %v2720 = vld [vmem:[#allocation2 + $0x1cb] sm:$0xff]
    %v2721 = vld [vmem:[#allocation2 + $0x1d3] sm:$0xff]
    %v2722 = vld [vmem:[#allocation2 + $0x1db] sm:$0xff]
    %v2723 = vld [vmem:[#allocation2 + $0x1e3] sm:$0xff]
    %v2724 = vld [vmem:[#allocation2 + $0x1eb] sm:$0xff]
    %v2725 = vld [vmem:[#allocation2 + $0x1f3] sm:$0xff]
    %v2726 = vld [vmem:[#allocation2 + $0x1fb] sm:$0xff]
    %v2727 = vld [vmem:[#allocation2 + $0x203] sm:$0xff]
    %v2728 = vld [vmem:[#allocation2 + $0x20b] sm:$0xff]
    %v2729 = vld [vmem:[#allocation2 + $0x213] sm:$0xff]
    %v2730 = vld [vmem:[#allocation2 + $0x21b] sm:$0xff]
    %v2731 = vld [vmem:[#allocation2 + $0x223] sm:$0xff]
    %v2732 = vld [vmem:[#allocation2 + $0x22b] sm:$0xff]
    %v2733 = vld [vmem:[#allocation2 + $0x233] sm:$0xff]
    %v2734 = vld [vmem:[#allocation2 + $0x23b] sm:$0xff]
    %v2735 = vld [vmem:[#allocation2 + $0x243] sm:$0xff]
    %v2736 = vld [vmem:[#allocation2 + $0x24b] sm:$0xff]
    %v2737 = vld [vmem:[#allocation2 + $0x253] sm:$0xff]
    %v2738 = vld [vmem:[#allocation2 + $0x25b] sm:$0xff]
    %v2739 = vld [vmem:[#allocation2 + $0x263] sm:$0xff]
    %v2740 = vld [vmem:[#allocation2 + $0x26b] sm:$0xff]
    %v2741 = vld [vmem:[#allocation2 + $0x273] sm:$0xff]
    %v2742 = vld [vmem:[#allocation2 + $0x27b] sm:$0xff]
    %v2743 = vld [vmem:[#allocation2 + $0x283] sm:$0xff]
    %v2744 = vld [vmem:[#allocation2 + $0x28b] sm:$0xff]
    %v2745 = vld [vmem:[#allocation2 + $0x293] sm:$0xff]
    %v2746 = vld [vmem:[#allocation2 + $0x29b] sm:$0xff]
    %v2747 = vld [vmem:[#allocation2 + $0x2a3] sm:$0xff]
    %v2748 = vld [vmem:[#allocation2 + $0x2ab] sm:$0xff]
    %v2749 = vld [vmem:[#allocation2 + $0x2b3] sm:$0xff]
    %v2750 = vld [vmem:[#allocation2 + $0x2bb] sm:$0xff]
    %v2751 = vld [vmem:[#allocation2 + $0x2c3] sm:$0xff]
    %v2752 = vld [vmem:[#allocation2 + $0x2cb] sm:$0xff]
    %v2753 = vld [vmem:[#allocation2 + $0x2d3] sm:$0xff]
    %v2754 = vld [vmem:[#allocation2 + $0x2db] sm:$0xff]
    %v2755 = vld [vmem:[#allocation2 + $0x2e3] sm:$0xff]
    %v2756 = vld [vmem:[#allocation2 + $0x2eb] sm:$0xff]
    %v2757 = vld [vmem:[#allocation2 + $0x2f3] sm:$0xff]
    %v2758 = vld [vmem:[#allocation2 + $0x2fb] sm:$0xff]
    %v2759 = vld [vmem:[#allocation2 + $0x303] sm:$0xff]
    %v2760 = vld [vmem:[#allocation2 + $0x30b] sm:$0xff]
    %v2761 = vld [vmem:[#allocation2 + $0x313] sm:$0xff]
    %v2762 = vld [vmem:[#allocation2 + $0x31b] sm:$0xff]
    %v2763 = vld [vmem:[#allocation2 + $0x323] sm:$0xff]
    %v2764 = vld [vmem:[#allocation2 + $0x32b] sm:$0xff]
    %v2765 = vld [vmem:[#allocation2 + $0x333] sm:$0xff]
    %v2766 = vld [vmem:[#allocation2 + $0x33b] sm:$0xff]
    %v2767 = vld [vmem:[#allocation2 + $0x343] sm:$0xff]
    %v2768 = vld [vmem:[#allocation2 + $0x34b] sm:$0xff]
    %v2769 = vld [vmem:[#allocation2 + $0x353] sm:$0xff]
    %v2770 = vld [vmem:[#allocation2 + $0x35b] sm:$0xff]
    %v2771 = vld [vmem:[#allocation2 + $0x363] sm:$0xff]
    %v2772 = vld [vmem:[#allocation2 + $0x36b] sm:$0xff]
    %v2773 = vld [vmem:[#allocation2 + $0x373] sm:$0xff]
    %v2774 = vld [vmem:[#allocation2 + $0x37b] sm:$0xff]
    %v2775 = vld [vmem:[#allocation2 + $0x383] sm:$0xff]
    %v2776 = vld [vmem:[#allocation2 + $0x38b] sm:$0xff]
    %v2777 = vld [vmem:[#allocation2 + $0x393] sm:$0xff]
    %v2778 = vld [vmem:[#allocation2 + $0x39b] sm:$0xff]
    %v2779 = vld [vmem:[#allocation2 + $0x3a3] sm:$0xff]
    %v2780 = vld [vmem:[#allocation2 + $0x3ab] sm:$0xff]
    %v2781 = vld [vmem:[#allocation2 + $0x3b3] sm:$0xff]
    %v2782 = vld [vmem:[#allocation2 + $0x3bb] sm:$0xff]
    %v2783 = vld [vmem:[#allocation2 + $0x3c3] sm:$0xff]
    %v2784 = vld [vmem:[#allocation2 + $0x3cb] sm:$0xff]
    %v2785 = vld [vmem:[#allocation2 + $0x3d3] sm:$0xff]
    %v2786 = vld [vmem:[#allocation2 + $0x3db] sm:$0xff]
    %v2787 = vld [vmem:[#allocation2 + $0x3e3] sm:$0xff]
    %v2788 = vld [vmem:[#allocation2 + $0x3eb] sm:$0xff]
    %v2789 = vld [vmem:[#allocation2 + $0x3f3] sm:$0xff]
    %v2790 = vld [vmem:[#allocation2 + $0x3fb] sm:$0xff]
    %v2791 = vld [vmem:[#allocation2 + $0x403] sm:$0xff]
    %v2792 = vld [vmem:[#allocation2 + $0x40b] sm:$0xff]
    %v2793 = vld [vmem:[#allocation2 + $0x413] sm:$0xff]
    %v2794 = vld [vmem:[#allocation2 + $0x41b] sm:$0xff]
    %v2795 = vld [vmem:[#allocation2 + $0x423] sm:$0xff]
    %v2796 = vld [vmem:[#allocation2 + $0x42b] sm:$0xff]
    %v2797 = vld [vmem:[#allocation2 + $0x433] sm:$0xff]
    %v2798 = vld [vmem:[#allocation2 + $0x43b] sm:$0xff]
    %v2799 = vld [vmem:[#allocation2 + $0x443] sm:$0xff]
    %v2800 = vld [vmem:[#allocation2 + $0x44b] sm:$0xff]
    %v2801 = vld [vmem:[#allocation2 + $0x453] sm:$0xff]
    %v2802 = vld [vmem:[#allocation2 + $0x45b] sm:$0xff]
    %v2803 = vld [vmem:[#allocation2 + $0x463] sm:$0xff]
    %v2804 = vld [vmem:[#allocation2 + $0x46b] sm:$0xff]
    %v2805 = vld [vmem:[#allocation2 + $0x473] sm:$0xff]
    %v2806 = vld [vmem:[#allocation2 + $0x47b] sm:$0xff]
    %v2807 = vld [vmem:[#allocation2 + $0x483] sm:$0xff]
    %v2808 = vld [vmem:[#allocation2 + $0x48b] sm:$0xff]
    %v2809 = vld [vmem:[#allocation2 + $0x493] sm:$0xff]
    %v2810 = vld [vmem:[#allocation2 + $0x49b] sm:$0xff]
    %v2811 = vld [vmem:[#allocation2 + $0x4a3] sm:$0xff]
    %v2812 = vld [vmem:[#allocation2 + $0x4ab] sm:$0xff]
    %v2813 = vld [vmem:[#allocation2 + $0x4b3] sm:$0xff]
    %v2814 = vld [vmem:[#allocation2 + $0x4bb] sm:$0xff]
    %v2815 = vld [vmem:[#allocation2 + $0x4c3] sm:$0xff]
    %v2816 = vld [vmem:[#allocation2 + $0x4cb] sm:$0xff]
    %v2817 = vld [vmem:[#allocation2 + $0x4d3] sm:$0xff]
    %v2818 = vld [vmem:[#allocation2 + $0x4db] sm:$0xff]
    %v2819 = vld [vmem:[#allocation2 + $0x4e3] sm:$0xff]
    %v2820 = vld [vmem:[#allocation2 + $0x4eb] sm:$0xff]
    %v2821 = vld [vmem:[#allocation2 + $0x4f3] sm:$0xff]
    %v2822 = vld [vmem:[#allocation2 + $0x4fb] sm:$0xff]
    %v2823 = vld [vmem:[#allocation2 + $0x503] sm:$0xff]
    %v2824 = vld [vmem:[#allocation2 + $0x50b] sm:$0xff]
    %v2825 = vld [vmem:[#allocation2 + $0x513] sm:$0xff]
    %v2826 = vld [vmem:[#allocation2 + $0x51b] sm:$0xff]
    %v2827 = vld [vmem:[#allocation2 + $0x523] sm:$0xff]
    %v2828 = vld [vmem:[#allocation2 + $0x52b] sm:$0xff]
    %v2829 = vld [vmem:[#allocation2 + $0x533] sm:$0xff]
    %v2830 = vld [vmem:[#allocation2 + $0x53b] sm:$0xff]
    %v2831 = vld [vmem:[#allocation2 + $0x543] sm:$0xff]
    %v2832 = vld [vmem:[#allocation2 + $0x54b] sm:$0xff]
    %v2833 = vld [vmem:[#allocation2 + $0x553] sm:$0xff]
    %v2834 = vld [vmem:[#allocation2 + $0x55b] sm:$0xff]
    %v2835 = vpack.c.bf16 %v2667, %v2666
    %v2836 = vpack.c.bf16 %v2669, %v2668
    %v2837 = vpack.c.bf16 %v2671, %v2670
    %v2838 = vpack.c.bf16 %v2673, %v2672
    %v2839 = vpack.c.bf16 %v2675, %v2674
    %v2840 = vpack.c.bf16 %v2677, %v2676
    %v2841 = vpack.c.bf16 %v2679, %v2678
    %v2842 = vpack.c.bf16 %v2681, %v2680
    %v2843 = vpack.c.bf16 %v2683, %v2682
    %v2844 = vpack.c.bf16 %v2685, %v2684
    %v2845 = vpack.c.bf16 %v2687, %v2686
    %v2846 = vpack.c.bf16 %v2689, %v2688
    %v2847 = vpack.c.bf16 %v2691, %v2690
    %v2848 = vpack.c.bf16 %v2693, %v2692
    %v2849 = vpack.c.bf16 %v2695, %v2694
    %v2850 = vpack.c.bf16 %v2697, %v2696
    %v2851 = vpack.c.bf16 %v2699, %v2698
    %v2852 = vpack.c.bf16 %v2701, %v2700
    %v2853 = vpack.c.bf16 %v2703, %v2702
    %v2854 = vpack.c.bf16 %v2705, %v2704
    %v2855 = vpack.c.bf16 %v2707, %v2706
    %v2856 = vpack.c.bf16 %v2709, %v2708
    %v2857 = vpack.c.bf16 %v2711, %v2710
    %v2858 = vpack.c.bf16 %v2713, %v2712
    %v2859 = vpack.c.bf16 %v2715, %v2714
    %v2860 = vpack.c.bf16 %v2717, %v2716
    %v2861 = vpack.c.bf16 %v2719, %v2718
    %v2862 = vpack.c.bf16 %v2721, %v2720
    %v2863 = vpack.c.bf16 %v2723, %v2722
    %v2864 = vpack.c.bf16 %v2725, %v2724
    %v2865 = vpack.c.bf16 %v2727, %v2726
    %v2866 = vpack.c.bf16 %v2729, %v2728
    %v2867 = vpack.c.bf16 %v2731, %v2730
    %v2868 = vpack.c.bf16 %v2733, %v2732
    %v2869 = vpack.c.bf16 %v2735, %v2734
    %v2870 = vpack.c.bf16 %v2737, %v2736
    %v2871 = vpack.c.bf16 %v2739, %v2738
    %v2872 = vpack.c.bf16 %v2741, %v2740
    %v2873 = vpack.c.bf16 %v2743, %v2742
    %v2874 = vpack.c.bf16 %v2745, %v2744
    %v2875 = vpack.c.bf16 %v2747, %v2746
    %v2876 = vpack.c.bf16 %v2749, %v2748
    %v2877 = vpack.c.bf16 %v2751, %v2750
    %v2878 = vpack.c.bf16 %v2753, %v2752
    %v2879 = vpack.c.bf16 %v2755, %v2754
    %v2880 = vpack.c.bf16 %v2757, %v2756
    %v2881 = vpack.c.bf16 %v2759, %v2758
    %v2882 = vpack.c.bf16 %v2761, %v2760
    %v2883 = vpack.c.bf16 %v2763, %v2762
    %v2884 = vpack.c.bf16 %v2765, %v2764
    %v2885 = vpack.c.bf16 %v2767, %v2766
    %v2886 = vpack.c.bf16 %v2769, %v2768
    %v2887 = vpack.c.bf16 %v2771, %v2770
    %v2888 = vpack.c.bf16 %v2773, %v2772
    %v2889 = vpack.c.bf16 %v2775, %v2774
    %v2890 = vpack.c.bf16 %v2777, %v2776
    %v2891 = vpack.c.bf16 %v2779, %v2778
    %v2892 = vpack.c.bf16 %v2781, %v2780
    %v2893 = vpack.c.bf16 %v2783, %v2782
    %v2894 = vpack.c.bf16 %v2785, %v2784
    %v2895 = vpack.c.bf16 %v2787, %v2786
    %v2896 = vpack.c.bf16 %v2789, %v2788
    %v2897 = vpack.c.bf16 %v2791, %v2790
    %v2898 = vpack.c.bf16 %v2793, %v2792
    %v2899 = vpack.c.bf16 %v2795, %v2794
    %v2900 = vpack.c.bf16 %v2797, %v2796
    %v2901 = vpack.c.bf16 %v2799, %v2798
    %v2902 = vpack.c.bf16 %v2801, %v2800
    %v2903 = vpack.c.bf16 %v2803, %v2802
    %v2904 = vpack.c.bf16 %v2805, %v2804
    %v2905 = vpack.c.bf16 %v2807, %v2806
    %v2906 = vpack.c.bf16 %v2809, %v2808
    %v2907 = vpack.c.bf16 %v2811, %v2810
    %v2908 = vpack.c.bf16 %v2813, %v2812
    %v2909 = vpack.c.bf16 %v2815, %v2814
    %v2910 = vpack.c.bf16 %v2817, %v2816
    %v2911 = vpack.c.bf16 %v2819, %v2818
    %v2912 = vpack.c.bf16 %v2821, %v2820
    %v2913 = vpack.c.bf16 %v2823, %v2822
    %v2914 = vpack.c.bf16 %v2825, %v2824
    %v2915 = vpack.c.bf16 %v2827, %v2826
    %v2916 = vpack.c.bf16 %v2829, %v2828
    %v2917 = vpack.c.bf16 %v2831, %v2830
    %v2918 = vpack.c.bf16 %v2833, %v2832
    %v2919 = vpack.c.bf16 %v2834, %v2834
    %v2920 = vld [vmem:[#allocation2 + $0x1c] sm:$0xff]
    %v2921 = vld [vmem:[#allocation2 + $0x24] sm:$0xff]
    %v2922 = vld [vmem:[#allocation2 + $0x2c] sm:$0xff]
    %v2923 = vld [vmem:[#allocation2 + $0x34] sm:$0xff]
    %v2924 = vld [vmem:[#allocation2 + $0x3c] sm:$0xff]
    %v2925 = vld [vmem:[#allocation2 + $0x44] sm:$0xff]
    %v2926 = vld [vmem:[#allocation2 + $0x4c] sm:$0xff]
    %v2927 = vld [vmem:[#allocation2 + $0x54] sm:$0xff]
    %v2928 = vld [vmem:[#allocation2 + $0x5c] sm:$0xff]
    %v2929 = vld [vmem:[#allocation2 + $0x64] sm:$0xff]
    %v2930 = vld [vmem:[#allocation2 + $0x6c] sm:$0xff]
    %v2931 = vld [vmem:[#allocation2 + $0x74] sm:$0xff]
    %v2932 = vld [vmem:[#allocation2 + $0x7c] sm:$0xff]
    %v2933 = vld [vmem:[#allocation2 + $0x84] sm:$0xff]
    %v2934 = vld [vmem:[#allocation2 + $0x8c] sm:$0xff]
    %v2935 = vld [vmem:[#allocation2 + $0x94] sm:$0xff]
    %v2936 = vld [vmem:[#allocation2 + $0x9c] sm:$0xff]
    %v2937 = vld [vmem:[#allocation2 + $0xa4] sm:$0xff]
    %v2938 = vld [vmem:[#allocation2 + $0xac] sm:$0xff]
    %v2939 = vld [vmem:[#allocation2 + $0xb4] sm:$0xff]
    %v2940 = vld [vmem:[#allocation2 + $0xbc] sm:$0xff]
    %v2941 = vld [vmem:[#allocation2 + $0xc4] sm:$0xff]
    %v2942 = vld [vmem:[#allocation2 + $0xcc] sm:$0xff]
    %v2943 = vld [vmem:[#allocation2 + $0xd4] sm:$0xff]
    %v2944 = vld [vmem:[#allocation2 + $0xdc] sm:$0xff]
    %v2945 = vld [vmem:[#allocation2 + $0xe4] sm:$0xff]
    %v2946 = vld [vmem:[#allocation2 + $0xec] sm:$0xff]
    %v2947 = vld [vmem:[#allocation2 + $0xf4] sm:$0xff]
    %v2948 = vld [vmem:[#allocation2 + $0xfc] sm:$0xff]
    %v2949 = vld [vmem:[#allocation2 + $0x104] sm:$0xff]
    %v2950 = vld [vmem:[#allocation2 + $0x10c] sm:$0xff]
    %v2951 = vld [vmem:[#allocation2 + $0x114] sm:$0xff]
    %v2952 = vld [vmem:[#allocation2 + $0x11c] sm:$0xff]
    %v2953 = vld [vmem:[#allocation2 + $0x124] sm:$0xff]
    %v2954 = vld [vmem:[#allocation2 + $0x12c] sm:$0xff]
    %v2955 = vld [vmem:[#allocation2 + $0x134] sm:$0xff]
    %v2956 = vld [vmem:[#allocation2 + $0x13c] sm:$0xff]
    %v2957 = vld [vmem:[#allocation2 + $0x144] sm:$0xff]
    %v2958 = vld [vmem:[#allocation2 + $0x14c] sm:$0xff]
    %v2959 = vld [vmem:[#allocation2 + $0x154] sm:$0xff]
    %v2960 = vld [vmem:[#allocation2 + $0x15c] sm:$0xff]
    %v2961 = vld [vmem:[#allocation2 + $0x164] sm:$0xff]
    %v2962 = vld [vmem:[#allocation2 + $0x16c] sm:$0xff]
    %v2963 = vld [vmem:[#allocation2 + $0x174] sm:$0xff]
    %v2964 = vld [vmem:[#allocation2 + $0x17c] sm:$0xff]
    %v2965 = vld [vmem:[#allocation2 + $0x184] sm:$0xff]
    %v2966 = vld [vmem:[#allocation2 + $0x18c] sm:$0xff]
    %v2967 = vld [vmem:[#allocation2 + $0x194] sm:$0xff]
    %v2968 = vld [vmem:[#allocation2 + $0x19c] sm:$0xff]
    %v2969 = vld [vmem:[#allocation2 + $0x1a4] sm:$0xff]
    %v2970 = vld [vmem:[#allocation2 + $0x1ac] sm:$0xff]
    %v2971 = vld [vmem:[#allocation2 + $0x1b4] sm:$0xff]
    %v2972 = vld [vmem:[#allocation2 + $0x1bc] sm:$0xff]
    %v2973 = vld [vmem:[#allocation2 + $0x1c4] sm:$0xff]
    %v2974 = vld [vmem:[#allocation2 + $0x1cc] sm:$0xff]
    %v2975 = vld [vmem:[#allocation2 + $0x1d4] sm:$0xff]
    %v2976 = vld [vmem:[#allocation2 + $0x1dc] sm:$0xff]
    %v2977 = vld [vmem:[#allocation2 + $0x1e4] sm:$0xff]
    %v2978 = vld [vmem:[#allocation2 + $0x1ec] sm:$0xff]
    %v2979 = vld [vmem:[#allocation2 + $0x1f4] sm:$0xff]
    %v2980 = vld [vmem:[#allocation2 + $0x1fc] sm:$0xff]
    %v2981 = vld [vmem:[#allocation2 + $0x204] sm:$0xff]
    %v2982 = vld [vmem:[#allocation2 + $0x20c] sm:$0xff]
    %v2983 = vld [vmem:[#allocation2 + $0x214] sm:$0xff]
    %v2984 = vld [vmem:[#allocation2 + $0x21c] sm:$0xff]
    %v2985 = vld [vmem:[#allocation2 + $0x224] sm:$0xff]
    %v2986 = vld [vmem:[#allocation2 + $0x22c] sm:$0xff]
    %v2987 = vld [vmem:[#allocation2 + $0x234] sm:$0xff]
    %v2988 = vld [vmem:[#allocation2 + $0x23c] sm:$0xff]
    %v2989 = vld [vmem:[#allocation2 + $0x244] sm:$0xff]
    %v2990 = vld [vmem:[#allocation2 + $0x24c] sm:$0xff]
    %v2991 = vld [vmem:[#allocation2 + $0x254] sm:$0xff]
    %v2992 = vld [vmem:[#allocation2 + $0x25c] sm:$0xff]
    %v2993 = vld [vmem:[#allocation2 + $0x264] sm:$0xff]
    %v2994 = vld [vmem:[#allocation2 + $0x26c] sm:$0xff]
    %v2995 = vld [vmem:[#allocation2 + $0x274] sm:$0xff]
    %v2996 = vld [vmem:[#allocation2 + $0x27c] sm:$0xff]
    %v2997 = vld [vmem:[#allocation2 + $0x284] sm:$0xff]
    %v2998 = vld [vmem:[#allocation2 + $0x28c] sm:$0xff]
    %v2999 = vld [vmem:[#allocation2 + $0x294] sm:$0xff]
    %v3000 = vld [vmem:[#allocation2 + $0x29c] sm:$0xff]
    %v3001 = vld [vmem:[#allocation2 + $0x2a4] sm:$0xff]
    %v3002 = vld [vmem:[#allocation2 + $0x2ac] sm:$0xff]
    %v3003 = vld [vmem:[#allocation2 + $0x2b4] sm:$0xff]
    %v3004 = vld [vmem:[#allocation2 + $0x2bc] sm:$0xff]
    %v3005 = vld [vmem:[#allocation2 + $0x2c4] sm:$0xff]
    %v3006 = vld [vmem:[#allocation2 + $0x2cc] sm:$0xff]
    %v3007 = vld [vmem:[#allocation2 + $0x2d4] sm:$0xff]
    %v3008 = vld [vmem:[#allocation2 + $0x2dc] sm:$0xff]
    %v3009 = vld [vmem:[#allocation2 + $0x2e4] sm:$0xff]
    %v3010 = vld [vmem:[#allocation2 + $0x2ec] sm:$0xff]
    %v3011 = vld [vmem:[#allocation2 + $0x2f4] sm:$0xff]
    %v3012 = vld [vmem:[#allocation2 + $0x2fc] sm:$0xff]
    %v3013 = vld [vmem:[#allocation2 + $0x304] sm:$0xff]
    %v3014 = vld [vmem:[#allocation2 + $0x30c] sm:$0xff]
    %v3015 = vld [vmem:[#allocation2 + $0x314] sm:$0xff]
    %v3016 = vld [vmem:[#allocation2 + $0x31c] sm:$0xff]
    %v3017 = vld [vmem:[#allocation2 + $0x324] sm:$0xff]
    %v3018 = vld [vmem:[#allocation2 + $0x32c] sm:$0xff]
    %v3019 = vld [vmem:[#allocation2 + $0x334] sm:$0xff]
    %v3020 = vld [vmem:[#allocation2 + $0x33c] sm:$0xff]
    %v3021 = vld [vmem:[#allocation2 + $0x344] sm:$0xff]
    %v3022 = vld [vmem:[#allocation2 + $0x34c] sm:$0xff]
    %v3023 = vld [vmem:[#allocation2 + $0x354] sm:$0xff]
    %v3024 = vld [vmem:[#allocation2 + $0x35c] sm:$0xff]
    %v3025 = vld [vmem:[#allocation2 + $0x364] sm:$0xff]
    %v3026 = vld [vmem:[#allocation2 + $0x36c] sm:$0xff]
    %v3027 = vld [vmem:[#allocation2 + $0x374] sm:$0xff]
    %v3028 = vld [vmem:[#allocation2 + $0x37c] sm:$0xff]
    %v3029 = vld [vmem:[#allocation2 + $0x384] sm:$0xff]
    %v3030 = vld [vmem:[#allocation2 + $0x38c] sm:$0xff]
    %v3031 = vld [vmem:[#allocation2 + $0x394] sm:$0xff]
    %v3032 = vld [vmem:[#allocation2 + $0x39c] sm:$0xff]
    %v3033 = vld [vmem:[#allocation2 + $0x3a4] sm:$0xff]
    %v3034 = vld [vmem:[#allocation2 + $0x3ac] sm:$0xff]
    %v3035 = vld [vmem:[#allocation2 + $0x3b4] sm:$0xff]
    %v3036 = vld [vmem:[#allocation2 + $0x3bc] sm:$0xff]
    %v3037 = vld [vmem:[#allocation2 + $0x3c4] sm:$0xff]
    %v3038 = vld [vmem:[#allocation2 + $0x3cc] sm:$0xff]
    %v3039 = vld [vmem:[#allocation2 + $0x3d4] sm:$0xff]
    %v3040 = vld [vmem:[#allocation2 + $0x3dc] sm:$0xff]
    %v3041 = vld [vmem:[#allocation2 + $0x3e4] sm:$0xff]
    %v3042 = vld [vmem:[#allocation2 + $0x3ec] sm:$0xff]
    %v3043 = vld [vmem:[#allocation2 + $0x3f4] sm:$0xff]
    %v3044 = vld [vmem:[#allocation2 + $0x3fc] sm:$0xff]
    %v3045 = vld [vmem:[#allocation2 + $0x404] sm:$0xff]
    %v3046 = vld [vmem:[#allocation2 + $0x40c] sm:$0xff]
    %v3047 = vld [vmem:[#allocation2 + $0x414] sm:$0xff]
    %v3048 = vld [vmem:[#allocation2 + $0x41c] sm:$0xff]
    %v3049 = vld [vmem:[#allocation2 + $0x424] sm:$0xff]
    %v3050 = vld [vmem:[#allocation2 + $0x42c] sm:$0xff]
    %v3051 = vld [vmem:[#allocation2 + $0x434] sm:$0xff]
    %v3052 = vld [vmem:[#allocation2 + $0x43c] sm:$0xff]
    %v3053 = vld [vmem:[#allocation2 + $0x444] sm:$0xff]
    %v3054 = vld [vmem:[#allocation2 + $0x44c] sm:$0xff]
    %v3055 = vld [vmem:[#allocation2 + $0x454] sm:$0xff]
    %v3056 = vld [vmem:[#allocation2 + $0x45c] sm:$0xff]
    %v3057 = vld [vmem:[#allocation2 + $0x464] sm:$0xff]
    %v3058 = vld [vmem:[#allocation2 + $0x46c] sm:$0xff]
    %v3059 = vld [vmem:[#allocation2 + $0x474] sm:$0xff]
    %v3060 = vld [vmem:[#allocation2 + $0x47c] sm:$0xff]
    %v3061 = vld [vmem:[#allocation2 + $0x484] sm:$0xff]
    %v3062 = vld [vmem:[#allocation2 + $0x48c] sm:$0xff]
    %v3063 = vld [vmem:[#allocation2 + $0x494] sm:$0xff]
    %v3064 = vld [vmem:[#allocation2 + $0x49c] sm:$0xff]
    %v3065 = vld [vmem:[#allocation2 + $0x4a4] sm:$0xff]
    %v3066 = vld [vmem:[#allocation2 + $0x4ac] sm:$0xff]
    %v3067 = vld [vmem:[#allocation2 + $0x4b4] sm:$0xff]
    %v3068 = vld [vmem:[#allocation2 + $0x4bc] sm:$0xff]
    %v3069 = vld [vmem:[#allocation2 + $0x4c4] sm:$0xff]
    %v3070 = vld [vmem:[#allocation2 + $0x4cc] sm:$0xff]
    %v3071 = vld [vmem:[#allocation2 + $0x4d4] sm:$0xff]
    %v3072 = vld [vmem:[#allocation2 + $0x4dc] sm:$0xff]
    %v3073 = vld [vmem:[#allocation2 + $0x4e4] sm:$0xff]
    %v3074 = vld [vmem:[#allocation2 + $0x4ec] sm:$0xff]
    %v3075 = vld [vmem:[#allocation2 + $0x4f4] sm:$0xff]
    %v3076 = vld [vmem:[#allocation2 + $0x4fc] sm:$0xff]
    %v3077 = vld [vmem:[#allocation2 + $0x504] sm:$0xff]
    %v3078 = vld [vmem:[#allocation2 + $0x50c] sm:$0xff]
    %v3079 = vld [vmem:[#allocation2 + $0x514] sm:$0xff]
    %v3080 = vld [vmem:[#allocation2 + $0x51c] sm:$0xff]
    %v3081 = vld [vmem:[#allocation2 + $0x524] sm:$0xff]
    %v3082 = vld [vmem:[#allocation2 + $0x52c] sm:$0xff]
    %v3083 = vld [vmem:[#allocation2 + $0x534] sm:$0xff]
    %v3084 = vld [vmem:[#allocation2 + $0x53c] sm:$0xff]
    %v3085 = vld [vmem:[#allocation2 + $0x544] sm:$0xff]
    %v3086 = vld [vmem:[#allocation2 + $0x54c] sm:$0xff]
    %v3087 = vld [vmem:[#allocation2 + $0x554] sm:$0xff]
    %v3088 = vld [vmem:[#allocation2 + $0x55c] sm:$0xff]
    %v3089 = vpack.c.bf16 %v2921, %v2920
    %v3090 = vpack.c.bf16 %v2923, %v2922
    %v3091 = vpack.c.bf16 %v2925, %v2924
    %v3092 = vpack.c.bf16 %v2927, %v2926
    %v3093 = vpack.c.bf16 %v2929, %v2928
    %v3094 = vpack.c.bf16 %v2931, %v2930
    %v3095 = vpack.c.bf16 %v2933, %v2932
    %v3096 = vpack.c.bf16 %v2935, %v2934
    %v3097 = vpack.c.bf16 %v2937, %v2936
    %v3098 = vpack.c.bf16 %v2939, %v2938
    %v3099 = vpack.c.bf16 %v2941, %v2940
    %v3100 = vpack.c.bf16 %v2943, %v2942
    %v3101 = vpack.c.bf16 %v2945, %v2944
    %v3102 = vpack.c.bf16 %v2947, %v2946
    %v3103 = vpack.c.bf16 %v2949, %v2948
    %v3104 = vpack.c.bf16 %v2951, %v2950
    %v3105 = vpack.c.bf16 %v2953, %v2952
    %v3106 = vpack.c.bf16 %v2955, %v2954
    %v3107 = vpack.c.bf16 %v2957, %v2956
    %v3108 = vpack.c.bf16 %v2959, %v2958
    %v3109 = vpack.c.bf16 %v2961, %v2960
    %v3110 = vpack.c.bf16 %v2963, %v2962
    %v3111 = vpack.c.bf16 %v2965, %v2964
    %v3112 = vpack.c.bf16 %v2967, %v2966
    %v3113 = vpack.c.bf16 %v2969, %v2968
    %v3114 = vpack.c.bf16 %v2971, %v2970
    %v3115 = vpack.c.bf16 %v2973, %v2972
    %v3116 = vpack.c.bf16 %v2975, %v2974
    %v3117 = vpack.c.bf16 %v2977, %v2976
    %v3118 = vpack.c.bf16 %v2979, %v2978
    %v3119 = vpack.c.bf16 %v2981, %v2980
    %v3120 = vpack.c.bf16 %v2983, %v2982
    %v3121 = vpack.c.bf16 %v2985, %v2984
    %v3122 = vpack.c.bf16 %v2987, %v2986
    %v3123 = vpack.c.bf16 %v2989, %v2988
    %v3124 = vpack.c.bf16 %v2991, %v2990
    %v3125 = vpack.c.bf16 %v2993, %v2992
    %v3126 = vpack.c.bf16 %v2995, %v2994
    %v3127 = vpack.c.bf16 %v2997, %v2996
    %v3128 = vpack.c.bf16 %v2999, %v2998
    %v3129 = vpack.c.bf16 %v3001, %v3000
    %v3130 = vpack.c.bf16 %v3003, %v3002
    %v3131 = vpack.c.bf16 %v3005, %v3004
    %v3132 = vpack.c.bf16 %v3007, %v3006
    %v3133 = vpack.c.bf16 %v3009, %v3008
    %v3134 = vpack.c.bf16 %v3011, %v3010
    %v3135 = vpack.c.bf16 %v3013, %v3012
    %v3136 = vpack.c.bf16 %v3015, %v3014
    %v3137 = vpack.c.bf16 %v3017, %v3016
    %v3138 = vpack.c.bf16 %v3019, %v3018
    %v3139 = vpack.c.bf16 %v3021, %v3020
    %v3140 = vpack.c.bf16 %v3023, %v3022
    %v3141 = vpack.c.bf16 %v3025, %v3024
    %v3142 = vpack.c.bf16 %v3027, %v3026
    %v3143 = vpack.c.bf16 %v3029, %v3028
    %v3144 = vpack.c.bf16 %v3031, %v3030
    %v3145 = vpack.c.bf16 %v3033, %v3032
    %v3146 = vpack.c.bf16 %v3035, %v3034
    %v3147 = vpack.c.bf16 %v3037, %v3036
    %v3148 = vpack.c.bf16 %v3039, %v3038
    %v3149 = vpack.c.bf16 %v3041, %v3040
    %v3150 = vpack.c.bf16 %v3043, %v3042
    %v3151 = vpack.c.bf16 %v3045, %v3044
    %v3152 = vpack.c.bf16 %v3047, %v3046
    %v3153 = vpack.c.bf16 %v3049, %v3048
    %v3154 = vpack.c.bf16 %v3051, %v3050
    %v3155 = vpack.c.bf16 %v3053, %v3052
    %v3156 = vpack.c.bf16 %v3055, %v3054
    %v3157 = vpack.c.bf16 %v3057, %v3056
    %v3158 = vpack.c.bf16 %v3059, %v3058
    %v3159 = vpack.c.bf16 %v3061, %v3060
    %v3160 = vpack.c.bf16 %v3063, %v3062
    %v3161 = vpack.c.bf16 %v3065, %v3064
    %v3162 = vpack.c.bf16 %v3067, %v3066
    %v3163 = vpack.c.bf16 %v3069, %v3068
    %v3164 = vpack.c.bf16 %v3071, %v3070
    %v3165 = vpack.c.bf16 %v3073, %v3072
    %v3166 = vpack.c.bf16 %v3075, %v3074
    %v3167 = vpack.c.bf16 %v3077, %v3076
    %v3168 = vpack.c.bf16 %v3079, %v3078
    %v3169 = vpack.c.bf16 %v3081, %v3080
    %v3170 = vpack.c.bf16 %v3083, %v3082
    %v3171 = vpack.c.bf16 %v3085, %v3084
    %v3172 = vpack.c.bf16 %v3087, %v3086
    %v3173 = vpack.c.bf16 %v3088, %v3088
    %v3174 = vld [vmem:[#allocation2 + $0x564] sm:$0xff]
    %v3175 = vld [vmem:[#allocation2 + $0x56c] sm:$0xff]
    %v3176 = vld [vmem:[#allocation2 + $0x574] sm:$0xff]
    %v3177 = vpack.c.bf16 %v2924, %v2923
    %v3178 = vpack.c.bf16 %v2926, %v2925
    %v3179 = vpack.c.bf16 %v2928, %v2927
    %v3180 = vpack.c.bf16 %v2930, %v2929
    %v3181 = vpack.c.bf16 %v2932, %v2931
    %v3182 = vpack.c.bf16 %v2934, %v2933
    %v3183 = vpack.c.bf16 %v2936, %v2935
    %v3184 = vpack.c.bf16 %v2938, %v2937
    %v3185 = vpack.c.bf16 %v2940, %v2939
    %v3186 = vpack.c.bf16 %v2942, %v2941
    %v3187 = vpack.c.bf16 %v2944, %v2943
    %v3188 = vpack.c.bf16 %v2946, %v2945
    %v3189 = vpack.c.bf16 %v2948, %v2947
    %v3190 = vpack.c.bf16 %v2950, %v2949
    %v3191 = vpack.c.bf16 %v2952, %v2951
    %v3192 = vpack.c.bf16 %v2954, %v2953
    %v3193 = vpack.c.bf16 %v2956, %v2955
    %v3194 = vpack.c.bf16 %v2958, %v2957
    %v3195 = vpack.c.bf16 %v2960, %v2959
    %v3196 = vpack.c.bf16 %v2962, %v2961
    %v3197 = vpack.c.bf16 %v2964, %v2963
    %v3198 = vpack.c.bf16 %v2966, %v2965
    %v3199 = vpack.c.bf16 %v2968, %v2967
    %v3200 = vpack.c.bf16 %v2970, %v2969
    %v3201 = vpack.c.bf16 %v2972, %v2971
    %v3202 = vpack.c.bf16 %v2974, %v2973
    %v3203 = vpack.c.bf16 %v2976, %v2975
    %v3204 = vpack.c.bf16 %v2978, %v2977
    %v3205 = vpack.c.bf16 %v2980, %v2979
    %v3206 = vpack.c.bf16 %v2982, %v2981
    %v3207 = vpack.c.bf16 %v2984, %v2983
    %v3208 = vpack.c.bf16 %v2986, %v2985
    %v3209 = vpack.c.bf16 %v2988, %v2987
    %v3210 = vpack.c.bf16 %v2990, %v2989
    %v3211 = vpack.c.bf16 %v2992, %v2991
    %v3212 = vpack.c.bf16 %v2994, %v2993
    %v3213 = vpack.c.bf16 %v2996, %v2995
    %v3214 = vpack.c.bf16 %v2998, %v2997
    %v3215 = vpack.c.bf16 %v3000, %v2999
    %v3216 = vpack.c.bf16 %v3002, %v3001
    %v3217 = vpack.c.bf16 %v3004, %v3003
    %v3218 = vpack.c.bf16 %v3006, %v3005
    %v3219 = vpack.c.bf16 %v3008, %v3007
    %v3220 = vpack.c.bf16 %v3010, %v3009
    %v3221 = vpack.c.bf16 %v3012, %v3011
    %v3222 = vpack.c.bf16 %v3014, %v3013
    %v3223 = vpack.c.bf16 %v3016, %v3015
    %v3224 = vpack.c.bf16 %v3018, %v3017
    %v3225 = vpack.c.bf16 %v3020, %v3019
    %v3226 = vpack.c.bf16 %v3022, %v3021
    %v3227 = vpack.c.bf16 %v3024, %v3023
    %v3228 = vpack.c.bf16 %v3026, %v3025
    %v3229 = vpack.c.bf16 %v3028, %v3027
    %v3230 = vpack.c.bf16 %v3030, %v3029
    %v3231 = vpack.c.bf16 %v3032, %v3031
    %v3232 = vpack.c.bf16 %v3034, %v3033
    %v3233 = vpack.c.bf16 %v3036, %v3035
    %v3234 = vpack.c.bf16 %v3038, %v3037
    %v3235 = vpack.c.bf16 %v3040, %v3039
    %v3236 = vpack.c.bf16 %v3042, %v3041
    %v3237 = vpack.c.bf16 %v3044, %v3043
    %v3238 = vpack.c.bf16 %v3046, %v3045
    %v3239 = vpack.c.bf16 %v3048, %v3047
    %v3240 = vpack.c.bf16 %v3050, %v3049
    %v3241 = vpack.c.bf16 %v3052, %v3051
    %v3242 = vpack.c.bf16 %v3054, %v3053
    %v3243 = vpack.c.bf16 %v3056, %v3055
    %v3244 = vpack.c.bf16 %v3058, %v3057
    %v3245 = vpack.c.bf16 %v3060, %v3059
    %v3246 = vpack.c.bf16 %v3062, %v3061
    %v3247 = vpack.c.bf16 %v3064, %v3063
    %v3248 = vpack.c.bf16 %v3066, %v3065
    %v3249 = vpack.c.bf16 %v3068, %v3067
    %v3250 = vpack.c.bf16 %v3070, %v3069
    %v3251 = vpack.c.bf16 %v3072, %v3071
    %v3252 = vpack.c.bf16 %v3074, %v3073
    %v3253 = vpack.c.bf16 %v3076, %v3075
    %v3254 = vpack.c.bf16 %v3078, %v3077
    %v3255 = vpack.c.bf16 %v3080, %v3079
    %v3256 = vpack.c.bf16 %v3082, %v3081
    %v3257 = vpack.c.bf16 %v3084, %v3083
    %v3258 = vpack.c.bf16 %v3086, %v3085
    %v3259 = vpack.c.bf16 %v3088, %v3087
    %v3260 = vpack.c.bf16 %v3175, %v3174
    %v3261 = vpack.c.bf16 %v3176, %v3176
    %v3262 = vld [vmem:[#allocation2 + $0x35] sm:$0xff]
    %v3263 = vld [vmem:[#allocation2 + $0x3d] sm:$0xff]
    %v3264 = vld [vmem:[#allocation2 + $0x45] sm:$0xff]
    %v3265 = vld [vmem:[#allocation2 + $0x4d] sm:$0xff]
    %v3266 = vld [vmem:[#allocation2 + $0x55] sm:$0xff]
    %v3267 = vld [vmem:[#allocation2 + $0x5d] sm:$0xff]
    %v3268 = vld [vmem:[#allocation2 + $0x65] sm:$0xff]
    %v3269 = vld [vmem:[#allocation2 + $0x6d] sm:$0xff]
    %v3270 = vld [vmem:[#allocation2 + $0x75] sm:$0xff]
    %v3271 = vld [vmem:[#allocation2 + $0x7d] sm:$0xff]
    %v3272 = vld [vmem:[#allocation2 + $0x85] sm:$0xff]
    %v3273 = vld [vmem:[#allocation2 + $0x8d] sm:$0xff]
    %v3274 = vld [vmem:[#allocation2 + $0x95] sm:$0xff]
    %v3275 = vld [vmem:[#allocation2 + $0x9d] sm:$0xff]
    %v3276 = vld [vmem:[#allocation2 + $0xa5] sm:$0xff]
    %v3277 = vld [vmem:[#allocation2 + $0xad] sm:$0xff]
    %v3278 = vld [vmem:[#allocation2 + $0xb5] sm:$0xff]
    %v3279 = vld [vmem:[#allocation2 + $0xbd] sm:$0xff]
    %v3280 = vld [vmem:[#allocation2 + $0xc5] sm:$0xff]
    %v3281 = vld [vmem:[#allocation2 + $0xcd] sm:$0xff]
    %v3282 = vld [vmem:[#allocation2 + $0xd5] sm:$0xff]
    %v3283 = vld [vmem:[#allocation2 + $0xdd] sm:$0xff]
    %v3284 = vld [vmem:[#allocation2 + $0xe5] sm:$0xff]
    %v3285 = vld [vmem:[#allocation2 + $0xed] sm:$0xff]
    %v3286 = vld [vmem:[#allocation2 + $0xf5] sm:$0xff]
    %v3287 = vld [vmem:[#allocation2 + $0xfd] sm:$0xff]
    %v3288 = vld [vmem:[#allocation2 + $0x105] sm:$0xff]
    %v3289 = vld [vmem:[#allocation2 + $0x10d] sm:$0xff]
    %v3290 = vld [vmem:[#allocation2 + $0x115] sm:$0xff]
    %v3291 = vld [vmem:[#allocation2 + $0x11d] sm:$0xff]
    %v3292 = vld [vmem:[#allocation2 + $0x125] sm:$0xff]
    %v3293 = vld [vmem:[#allocation2 + $0x12d] sm:$0xff]
    %v3294 = vld [vmem:[#allocation2 + $0x135] sm:$0xff]
    %v3295 = vld [vmem:[#allocation2 + $0x13d] sm:$0xff]
    %v3296 = vld [vmem:[#allocation2 + $0x145] sm:$0xff]
    %v3297 = vld [vmem:[#allocation2 + $0x14d] sm:$0xff]
    %v3298 = vld [vmem:[#allocation2 + $0x155] sm:$0xff]
    %v3299 = vld [vmem:[#allocation2 + $0x15d] sm:$0xff]
    %v3300 = vld [vmem:[#allocation2 + $0x165] sm:$0xff]
    %v3301 = vld [vmem:[#allocation2 + $0x16d] sm:$0xff]
    %v3302 = vld [vmem:[#allocation2 + $0x175] sm:$0xff]
    %v3303 = vld [vmem:[#allocation2 + $0x17d] sm:$0xff]
    %v3304 = vld [vmem:[#allocation2 + $0x185] sm:$0xff]
    %v3305 = vld [vmem:[#allocation2 + $0x18d] sm:$0xff]
    %v3306 = vld [vmem:[#allocation2 + $0x195] sm:$0xff]
    %v3307 = vld [vmem:[#allocation2 + $0x19d] sm:$0xff]
    %v3308 = vld [vmem:[#allocation2 + $0x1a5] sm:$0xff]
    %v3309 = vld [vmem:[#allocation2 + $0x1ad] sm:$0xff]
    %v3310 = vld [vmem:[#allocation2 + $0x1b5] sm:$0xff]
    %v3311 = vld [vmem:[#allocation2 + $0x1bd] sm:$0xff]
    %v3312 = vld [vmem:[#allocation2 + $0x1c5] sm:$0xff]
    %v3313 = vld [vmem:[#allocation2 + $0x1cd] sm:$0xff]
    %v3314 = vld [vmem:[#allocation2 + $0x1d5] sm:$0xff]
    %v3315 = vld [vmem:[#allocation2 + $0x1dd] sm:$0xff]
    %v3316 = vld [vmem:[#allocation2 + $0x1e5] sm:$0xff]
    %v3317 = vld [vmem:[#allocation2 + $0x1ed] sm:$0xff]
    %v3318 = vld [vmem:[#allocation2 + $0x1f5] sm:$0xff]
    %v3319 = vld [vmem:[#allocation2 + $0x1fd] sm:$0xff]
    %v3320 = vld [vmem:[#allocation2 + $0x205] sm:$0xff]
    %v3321 = vld [vmem:[#allocation2 + $0x20d] sm:$0xff]
    %v3322 = vld [vmem:[#allocation2 + $0x215] sm:$0xff]
    %v3323 = vld [vmem:[#allocation2 + $0x21d] sm:$0xff]
    %v3324 = vld [vmem:[#allocation2 + $0x225] sm:$0xff]
    %v3325 = vld [vmem:[#allocation2 + $0x22d] sm:$0xff]
    %v3326 = vld [vmem:[#allocation2 + $0x235] sm:$0xff]
    %v3327 = vld [vmem:[#allocation2 + $0x23d] sm:$0xff]
    %v3328 = vld [vmem:[#allocation2 + $0x245] sm:$0xff]
    %v3329 = vld [vmem:[#allocation2 + $0x24d] sm:$0xff]
    %v3330 = vld [vmem:[#allocation2 + $0x255] sm:$0xff]
    %v3331 = vld [vmem:[#allocation2 + $0x25d] sm:$0xff]
    %v3332 = vld [vmem:[#allocation2 + $0x265] sm:$0xff]
    %v3333 = vld [vmem:[#allocation2 + $0x26d] sm:$0xff]
    %v3334 = vld [vmem:[#allocation2 + $0x275] sm:$0xff]
    %v3335 = vld [vmem:[#allocation2 + $0x27d] sm:$0xff]
    %v3336 = vld [vmem:[#allocation2 + $0x285] sm:$0xff]
    %v3337 = vld [vmem:[#allocation2 + $0x28d] sm:$0xff]
    %v3338 = vld [vmem:[#allocation2 + $0x295] sm:$0xff]
    %v3339 = vld [vmem:[#allocation2 + $0x29d] sm:$0xff]
    %v3340 = vld [vmem:[#allocation2 + $0x2a5] sm:$0xff]
    %v3341 = vld [vmem:[#allocation2 + $0x2ad] sm:$0xff]
    %v3342 = vld [vmem:[#allocation2 + $0x2b5] sm:$0xff]
    %v3343 = vld [vmem:[#allocation2 + $0x2bd] sm:$0xff]
    %v3344 = vld [vmem:[#allocation2 + $0x2c5] sm:$0xff]
    %v3345 = vld [vmem:[#allocation2 + $0x2cd] sm:$0xff]
    %v3346 = vld [vmem:[#allocation2 + $0x2d5] sm:$0xff]
    %v3347 = vld [vmem:[#allocation2 + $0x2dd] sm:$0xff]
    %v3348 = vld [vmem:[#allocation2 + $0x2e5] sm:$0xff]
    %v3349 = vld [vmem:[#allocation2 + $0x2ed] sm:$0xff]
    %v3350 = vld [vmem:[#allocation2 + $0x2f5] sm:$0xff]
    %v3351 = vld [vmem:[#allocation2 + $0x2fd] sm:$0xff]
    %v3352 = vld [vmem:[#allocation2 + $0x305] sm:$0xff]
    %v3353 = vld [vmem:[#allocation2 + $0x30d] sm:$0xff]
    %v3354 = vld [vmem:[#allocation2 + $0x315] sm:$0xff]
    %v3355 = vld [vmem:[#allocation2 + $0x31d] sm:$0xff]
    %v3356 = vld [vmem:[#allocation2 + $0x325] sm:$0xff]
    %v3357 = vld [vmem:[#allocation2 + $0x32d] sm:$0xff]
    %v3358 = vld [vmem:[#allocation2 + $0x335] sm:$0xff]
    %v3359 = vld [vmem:[#allocation2 + $0x33d] sm:$0xff]
    %v3360 = vld [vmem:[#allocation2 + $0x345] sm:$0xff]
    %v3361 = vld [vmem:[#allocation2 + $0x34d] sm:$0xff]
    %v3362 = vld [vmem:[#allocation2 + $0x355] sm:$0xff]
    %v3363 = vld [vmem:[#allocation2 + $0x35d] sm:$0xff]
    %v3364 = vld [vmem:[#allocation2 + $0x365] sm:$0xff]
    %v3365 = vld [vmem:[#allocation2 + $0x36d] sm:$0xff]
    %v3366 = vld [vmem:[#allocation2 + $0x375] sm:$0xff]
    %v3367 = vld [vmem:[#allocation2 + $0x37d] sm:$0xff]
    %v3368 = vld [vmem:[#allocation2 + $0x385] sm:$0xff]
    %v3369 = vld [vmem:[#allocation2 + $0x38d] sm:$0xff]
    %v3370 = vld [vmem:[#allocation2 + $0x395] sm:$0xff]
    %v3371 = vld [vmem:[#allocation2 + $0x39d] sm:$0xff]
    %v3372 = vld [vmem:[#allocation2 + $0x3a5] sm:$0xff]
    %v3373 = vld [vmem:[#allocation2 + $0x3ad] sm:$0xff]
    %v3374 = vld [vmem:[#allocation2 + $0x3b5] sm:$0xff]
    %v3375 = vld [vmem:[#allocation2 + $0x3bd] sm:$0xff]
    %v3376 = vld [vmem:[#allocation2 + $0x3c5] sm:$0xff]
    %v3377 = vld [vmem:[#allocation2 + $0x3cd] sm:$0xff]
    %v3378 = vld [vmem:[#allocation2 + $0x3d5] sm:$0xff]
    %v3379 = vld [vmem:[#allocation2 + $0x3dd] sm:$0xff]
    %v3380 = vld [vmem:[#allocation2 + $0x3e5] sm:$0xff]
    %v3381 = vld [vmem:[#allocation2 + $0x3ed] sm:$0xff]
    %v3382 = vld [vmem:[#allocation2 + $0x3f5] sm:$0xff]
    %v3383 = vld [vmem:[#allocation2 + $0x3fd] sm:$0xff]
    %v3384 = vld [vmem:[#allocation2 + $0x405] sm:$0xff]
    %v3385 = vld [vmem:[#allocation2 + $0x40d] sm:$0xff]
    %v3386 = vld [vmem:[#allocation2 + $0x415] sm:$0xff]
    %v3387 = vld [vmem:[#allocation2 + $0x41d] sm:$0xff]
    %v3388 = vld [vmem:[#allocation2 + $0x425] sm:$0xff]
    %v3389 = vld [vmem:[#allocation2 + $0x42d] sm:$0xff]
    %v3390 = vld [vmem:[#allocation2 + $0x435] sm:$0xff]
    %v3391 = vld [vmem:[#allocation2 + $0x43d] sm:$0xff]
    %v3392 = vld [vmem:[#allocation2 + $0x445] sm:$0xff]
    %v3393 = vld [vmem:[#allocation2 + $0x44d] sm:$0xff]
    %v3394 = vld [vmem:[#allocation2 + $0x455] sm:$0xff]
    %v3395 = vld [vmem:[#allocation2 + $0x45d] sm:$0xff]
    %v3396 = vld [vmem:[#allocation2 + $0x465] sm:$0xff]
    %v3397 = vld [vmem:[#allocation2 + $0x46d] sm:$0xff]
    %v3398 = vld [vmem:[#allocation2 + $0x475] sm:$0xff]
    %v3399 = vld [vmem:[#allocation2 + $0x47d] sm:$0xff]
    %v3400 = vld [vmem:[#allocation2 + $0x485] sm:$0xff]
    %v3401 = vld [vmem:[#allocation2 + $0x48d] sm:$0xff]
    %v3402 = vld [vmem:[#allocation2 + $0x495] sm:$0xff]
    %v3403 = vld [vmem:[#allocation2 + $0x49d] sm:$0xff]
    %v3404 = vld [vmem:[#allocation2 + $0x4a5] sm:$0xff]
    %v3405 = vld [vmem:[#allocation2 + $0x4ad] sm:$0xff]
    %v3406 = vld [vmem:[#allocation2 + $0x4b5] sm:$0xff]
    %v3407 = vld [vmem:[#allocation2 + $0x4bd] sm:$0xff]
    %v3408 = vld [vmem:[#allocation2 + $0x4c5] sm:$0xff]
    %v3409 = vld [vmem:[#allocation2 + $0x4cd] sm:$0xff]
    %v3410 = vld [vmem:[#allocation2 + $0x4d5] sm:$0xff]
    %v3411 = vld [vmem:[#allocation2 + $0x4dd] sm:$0xff]
    %v3412 = vld [vmem:[#allocation2 + $0x4e5] sm:$0xff]
    %v3413 = vld [vmem:[#allocation2 + $0x4ed] sm:$0xff]
    %v3414 = vld [vmem:[#allocation2 + $0x4f5] sm:$0xff]
    %v3415 = vld [vmem:[#allocation2 + $0x4fd] sm:$0xff]
    %v3416 = vld [vmem:[#allocation2 + $0x505] sm:$0xff]
    %v3417 = vld [vmem:[#allocation2 + $0x50d] sm:$0xff]
    %v3418 = vld [vmem:[#allocation2 + $0x515] sm:$0xff]
    %v3419 = vld [vmem:[#allocation2 + $0x51d] sm:$0xff]
    %v3420 = vld [vmem:[#allocation2 + $0x525] sm:$0xff]
    %v3421 = vld [vmem:[#allocation2 + $0x52d] sm:$0xff]
    %v3422 = vld [vmem:[#allocation2 + $0x535] sm:$0xff]
    %v3423 = vld [vmem:[#allocation2 + $0x53d] sm:$0xff]
    %v3424 = vld [vmem:[#allocation2 + $0x545] sm:$0xff]
    %v3425 = vld [vmem:[#allocation2 + $0x54d] sm:$0xff]
    %v3426 = vld [vmem:[#allocation2 + $0x555] sm:$0xff]
    %v3427 = vld [vmem:[#allocation2 + $0x55d] sm:$0xff]
    %v3428 = vld [vmem:[#allocation2 + $0x565] sm:$0xff]
    %v3429 = vld [vmem:[#allocation2 + $0x56d] sm:$0xff]
    %v3430 = vld [vmem:[#allocation2 + $0x575] sm:$0xff]
    %v3431 = vpack.c.bf16 %v3263, %v3262
    %v3432 = vpack.c.bf16 %v3265, %v3264
    %v3433 = vpack.c.bf16 %v3267, %v3266
    %v3434 = vpack.c.bf16 %v3269, %v3268
    %v3435 = vpack.c.bf16 %v3271, %v3270
    %v3436 = vpack.c.bf16 %v3273, %v3272
    %v3437 = vpack.c.bf16 %v3275, %v3274
    %v3438 = vpack.c.bf16 %v3277, %v3276
    %v3439 = vpack.c.bf16 %v3279, %v3278
    %v3440 = vpack.c.bf16 %v3281, %v3280
    %v3441 = vpack.c.bf16 %v3283, %v3282
    %v3442 = vpack.c.bf16 %v3285, %v3284
    %v3443 = vpack.c.bf16 %v3287, %v3286
    %v3444 = vpack.c.bf16 %v3289, %v3288
    %v3445 = vpack.c.bf16 %v3291, %v3290
    %v3446 = vpack.c.bf16 %v3293, %v3292
    %v3447 = vpack.c.bf16 %v3295, %v3294
    %v3448 = vpack.c.bf16 %v3297, %v3296
    %v3449 = vpack.c.bf16 %v3299, %v3298
    %v3450 = vpack.c.bf16 %v3301, %v3300
    %v3451 = vpack.c.bf16 %v3303, %v3302
    %v3452 = vpack.c.bf16 %v3305, %v3304
    %v3453 = vpack.c.bf16 %v3307, %v3306
    %v3454 = vpack.c.bf16 %v3309, %v3308
    %v3455 = vpack.c.bf16 %v3311, %v3310
    %v3456 = vpack.c.bf16 %v3313, %v3312
    %v3457 = vpack.c.bf16 %v3315, %v3314
    %v3458 = vpack.c.bf16 %v3317, %v3316
    %v3459 = vpack.c.bf16 %v3319, %v3318
    %v3460 = vpack.c.bf16 %v3321, %v3320
    %v3461 = vpack.c.bf16 %v3323, %v3322
    %v3462 = vpack.c.bf16 %v3325, %v3324
    %v3463 = vpack.c.bf16 %v3327, %v3326
    %v3464 = vpack.c.bf16 %v3329, %v3328
    %v3465 = vpack.c.bf16 %v3331, %v3330
    %v3466 = vpack.c.bf16 %v3333, %v3332
    %v3467 = vpack.c.bf16 %v3335, %v3334
    %v3468 = vpack.c.bf16 %v3337, %v3336
    %v3469 = vpack.c.bf16 %v3339, %v3338
    %v3470 = vpack.c.bf16 %v3341, %v3340
    %v3471 = vpack.c.bf16 %v3343, %v3342
    %v3472 = vpack.c.bf16 %v3345, %v3344
    %v3473 = vpack.c.bf16 %v3347, %v3346
    %v3474 = vpack.c.bf16 %v3349, %v3348
    %v3475 = vpack.c.bf16 %v3351, %v3350
    %v3476 = vpack.c.bf16 %v3353, %v3352
    %v3477 = vpack.c.bf16 %v3355, %v3354
    %v3478 = vpack.c.bf16 %v3357, %v3356
    %v3479 = vpack.c.bf16 %v3359, %v3358
    %v3480 = vpack.c.bf16 %v3361, %v3360
    %v3481 = vpack.c.bf16 %v3363, %v3362
    %v3482 = vpack.c.bf16 %v3365, %v3364
    %v3483 = vpack.c.bf16 %v3367, %v3366
    %v3484 = vpack.c.bf16 %v3369, %v3368
    %v3485 = vpack.c.bf16 %v3371, %v3370
    %v3486 = vpack.c.bf16 %v3373, %v3372
    %v3487 = vpack.c.bf16 %v3375, %v3374
    %v3488 = vpack.c.bf16 %v3377, %v3376
    %v3489 = vpack.c.bf16 %v3379, %v3378
    %v3490 = vpack.c.bf16 %v3381, %v3380
    %v3491 = vpack.c.bf16 %v3383, %v3382
    %v3492 = vpack.c.bf16 %v3385, %v3384
    %v3493 = vpack.c.bf16 %v3387, %v3386
    %v3494 = vpack.c.bf16 %v3389, %v3388
    %v3495 = vpack.c.bf16 %v3391, %v3390
    %v3496 = vpack.c.bf16 %v3393, %v3392
    %v3497 = vpack.c.bf16 %v3395, %v3394
    %v3498 = vpack.c.bf16 %v3397, %v3396
    %v3499 = vpack.c.bf16 %v3399, %v3398
    %v3500 = vpack.c.bf16 %v3401, %v3400
    %v3501 = vpack.c.bf16 %v3403, %v3402
    %v3502 = vpack.c.bf16 %v3405, %v3404
    %v3503 = vpack.c.bf16 %v3407, %v3406
    %v3504 = vpack.c.bf16 %v3409, %v3408
    %v3505 = vpack.c.bf16 %v3411, %v3410
    %v3506 = vpack.c.bf16 %v3413, %v3412
    %v3507 = vpack.c.bf16 %v3415, %v3414
    %v3508 = vpack.c.bf16 %v3417, %v3416
    %v3509 = vpack.c.bf16 %v3419, %v3418
    %v3510 = vpack.c.bf16 %v3421, %v3420
    %v3511 = vpack.c.bf16 %v3423, %v3422
    %v3512 = vpack.c.bf16 %v3425, %v3424
    %v3513 = vpack.c.bf16 %v3427, %v3426
    %v3514 = vpack.c.bf16 %v3429, %v3428
    %v3515 = vpack.c.bf16 %v3430, %v3430
    %v3516 = vld [vmem:[#allocation2 + $0x36] sm:$0xff]
    %v3517 = vld [vmem:[#allocation2 + $0x3e] sm:$0xff]
    %v3518 = vld [vmem:[#allocation2 + $0x46] sm:$0xff]
    %v3519 = vld [vmem:[#allocation2 + $0x4e] sm:$0xff]
    %v3520 = vld [vmem:[#allocation2 + $0x56] sm:$0xff]
    %v3521 = vld [vmem:[#allocation2 + $0x5e] sm:$0xff]
    %v3522 = vld [vmem:[#allocation2 + $0x66] sm:$0xff]
    %v3523 = vld [vmem:[#allocation2 + $0x6e] sm:$0xff]
    %v3524 = vld [vmem:[#allocation2 + $0x76] sm:$0xff]
    %v3525 = vld [vmem:[#allocation2 + $0x7e] sm:$0xff]
    %v3526 = vld [vmem:[#allocation2 + $0x86] sm:$0xff]
    %v3527 = vld [vmem:[#allocation2 + $0x8e] sm:$0xff]
    %v3528 = vld [vmem:[#allocation2 + $0x96] sm:$0xff]
    %v3529 = vld [vmem:[#allocation2 + $0x9e] sm:$0xff]
    %v3530 = vld [vmem:[#allocation2 + $0xa6] sm:$0xff]
    %v3531 = vld [vmem:[#allocation2 + $0xae] sm:$0xff]
    %v3532 = vld [vmem:[#allocation2 + $0xb6] sm:$0xff]
    %v3533 = vld [vmem:[#allocation2 + $0xbe] sm:$0xff]
    %v3534 = vld [vmem:[#allocation2 + $0xc6] sm:$0xff]
    %v3535 = vld [vmem:[#allocation2 + $0xce] sm:$0xff]
    %v3536 = vld [vmem:[#allocation2 + $0xd6] sm:$0xff]
    %v3537 = vld [vmem:[#allocation2 + $0xde] sm:$0xff]
    %v3538 = vld [vmem:[#allocation2 + $0xe6] sm:$0xff]
    %v3539 = vld [vmem:[#allocation2 + $0xee] sm:$0xff]
    %v3540 = vld [vmem:[#allocation2 + $0xf6] sm:$0xff]
    %v3541 = vld [vmem:[#allocation2 + $0xfe] sm:$0xff]
    %v3542 = vld [vmem:[#allocation2 + $0x106] sm:$0xff]
    %v3543 = vld [vmem:[#allocation2 + $0x10e] sm:$0xff]
    %v3544 = vld [vmem:[#allocation2 + $0x116] sm:$0xff]
    %v3545 = vld [vmem:[#allocation2 + $0x11e] sm:$0xff]
    %v3546 = vld [vmem:[#allocation2 + $0x126] sm:$0xff]
    %v3547 = vld [vmem:[#allocation2 + $0x12e] sm:$0xff]
    %v3548 = vld [vmem:[#allocation2 + $0x136] sm:$0xff]
    %v3549 = vld [vmem:[#allocation2 + $0x13e] sm:$0xff]
    %v3550 = vld [vmem:[#allocation2 + $0x146] sm:$0xff]
    %v3551 = vld [vmem:[#allocation2 + $0x14e] sm:$0xff]
    %v3552 = vld [vmem:[#allocation2 + $0x156] sm:$0xff]
    %v3553 = vld [vmem:[#allocation2 + $0x15e] sm:$0xff]
    %v3554 = vld [vmem:[#allocation2 + $0x166] sm:$0xff]
    %v3555 = vld [vmem:[#allocation2 + $0x16e] sm:$0xff]
    %v3556 = vld [vmem:[#allocation2 + $0x176] sm:$0xff]
    %v3557 = vld [vmem:[#allocation2 + $0x17e] sm:$0xff]
    %v3558 = vld [vmem:[#allocation2 + $0x186] sm:$0xff]
    %v3559 = vld [vmem:[#allocation2 + $0x18e] sm:$0xff]
    %v3560 = vld [vmem:[#allocation2 + $0x196] sm:$0xff]
    %v3561 = vld [vmem:[#allocation2 + $0x19e] sm:$0xff]
    %v3562 = vld [vmem:[#allocation2 + $0x1a6] sm:$0xff]
    %v3563 = vld [vmem:[#allocation2 + $0x1ae] sm:$0xff]
    %v3564 = vld [vmem:[#allocation2 + $0x1b6] sm:$0xff]
    %v3565 = vld [vmem:[#allocation2 + $0x1be] sm:$0xff]
    %v3566 = vld [vmem:[#allocation2 + $0x1c6] sm:$0xff]
    %v3567 = vld [vmem:[#allocation2 + $0x1ce] sm:$0xff]
    %v3568 = vld [vmem:[#allocation2 + $0x1d6] sm:$0xff]
    %v3569 = vld [vmem:[#allocation2 + $0x1de] sm:$0xff]
    %v3570 = vld [vmem:[#allocation2 + $0x1e6] sm:$0xff]
    %v3571 = vld [vmem:[#allocation2 + $0x1ee] sm:$0xff]
    %v3572 = vld [vmem:[#allocation2 + $0x1f6] sm:$0xff]
    %v3573 = vld [vmem:[#allocation2 + $0x1fe] sm:$0xff]
    %v3574 = vld [vmem:[#allocation2 + $0x206] sm:$0xff]
    %v3575 = vld [vmem:[#allocation2 + $0x20e] sm:$0xff]
    %v3576 = vld [vmem:[#allocation2 + $0x216] sm:$0xff]
    %v3577 = vld [vmem:[#allocation2 + $0x21e] sm:$0xff]
    %v3578 = vld [vmem:[#allocation2 + $0x226] sm:$0xff]
    %v3579 = vld [vmem:[#allocation2 + $0x22e] sm:$0xff]
    %v3580 = vld [vmem:[#allocation2 + $0x236] sm:$0xff]
    %v3581 = vld [vmem:[#allocation2 + $0x23e] sm:$0xff]
    %v3582 = vld [vmem:[#allocation2 + $0x246] sm:$0xff]
    %v3583 = vld [vmem:[#allocation2 + $0x24e] sm:$0xff]
    %v3584 = vld [vmem:[#allocation2 + $0x256] sm:$0xff]
    %v3585 = vld [vmem:[#allocation2 + $0x25e] sm:$0xff]
    %v3586 = vld [vmem:[#allocation2 + $0x266] sm:$0xff]
    %v3587 = vld [vmem:[#allocation2 + $0x26e] sm:$0xff]
    %v3588 = vld [vmem:[#allocation2 + $0x276] sm:$0xff]
    %v3589 = vld [vmem:[#allocation2 + $0x27e] sm:$0xff]
    %v3590 = vld [vmem:[#allocation2 + $0x286] sm:$0xff]
    %v3591 = vld [vmem:[#allocation2 + $0x28e] sm:$0xff]
    %v3592 = vld [vmem:[#allocation2 + $0x296] sm:$0xff]
    %v3593 = vld [vmem:[#allocation2 + $0x29e] sm:$0xff]
    %v3594 = vld [vmem:[#allocation2 + $0x2a6] sm:$0xff]
    %v3595 = vld [vmem:[#allocation2 + $0x2ae] sm:$0xff]
    %v3596 = vld [vmem:[#allocation2 + $0x2b6] sm:$0xff]
    %v3597 = vld [vmem:[#allocation2 + $0x2be] sm:$0xff]
    %v3598 = vld [vmem:[#allocation2 + $0x2c6] sm:$0xff]
    %v3599 = vld [vmem:[#allocation2 + $0x2ce] sm:$0xff]
    %v3600 = vld [vmem:[#allocation2 + $0x2d6] sm:$0xff]
    %v3601 = vld [vmem:[#allocation2 + $0x2de] sm:$0xff]
    %v3602 = vld [vmem:[#allocation2 + $0x2e6] sm:$0xff]
    %v3603 = vld [vmem:[#allocation2 + $0x2ee] sm:$0xff]
    %v3604 = vld [vmem:[#allocation2 + $0x2f6] sm:$0xff]
    %v3605 = vld [vmem:[#allocation2 + $0x2fe] sm:$0xff]
    %v3606 = vld [vmem:[#allocation2 + $0x306] sm:$0xff]
    %v3607 = vld [vmem:[#allocation2 + $0x30e] sm:$0xff]
    %v3608 = vld [vmem:[#allocation2 + $0x316] sm:$0xff]
    %v3609 = vld [vmem:[#allocation2 + $0x31e] sm:$0xff]
    %v3610 = vld [vmem:[#allocation2 + $0x326] sm:$0xff]
    %v3611 = vld [vmem:[#allocation2 + $0x32e] sm:$0xff]
    %v3612 = vld [vmem:[#allocation2 + $0x336] sm:$0xff]
    %v3613 = vld [vmem:[#allocation2 + $0x33e] sm:$0xff]
    %v3614 = vld [vmem:[#allocation2 + $0x346] sm:$0xff]
    %v3615 = vld [vmem:[#allocation2 + $0x34e] sm:$0xff]
    %v3616 = vld [vmem:[#allocation2 + $0x356] sm:$0xff]
    %v3617 = vld [vmem:[#allocation2 + $0x35e] sm:$0xff]
    %v3618 = vld [vmem:[#allocation2 + $0x366] sm:$0xff]
    %v3619 = vld [vmem:[#allocation2 + $0x36e] sm:$0xff]
    %v3620 = vld [vmem:[#allocation2 + $0x376] sm:$0xff]
    %v3621 = vld [vmem:[#allocation2 + $0x37e] sm:$0xff]
    %v3622 = vld [vmem:[#allocation2 + $0x386] sm:$0xff]
    %v3623 = vld [vmem:[#allocation2 + $0x38e] sm:$0xff]
    %v3624 = vld [vmem:[#allocation2 + $0x396] sm:$0xff]
    %v3625 = vld [vmem:[#allocation2 + $0x39e] sm:$0xff]
    %v3626 = vld [vmem:[#allocation2 + $0x3a6] sm:$0xff]
    %v3627 = vld [vmem:[#allocation2 + $0x3ae] sm:$0xff]
    %v3628 = vld [vmem:[#allocation2 + $0x3b6] sm:$0xff]
    %v3629 = vld [vmem:[#allocation2 + $0x3be] sm:$0xff]
    %v3630 = vld [vmem:[#allocation2 + $0x3c6] sm:$0xff]
    %v3631 = vld [vmem:[#allocation2 + $0x3ce] sm:$0xff]
    %v3632 = vld [vmem:[#allocation2 + $0x3d6] sm:$0xff]
    %v3633 = vld [vmem:[#allocation2 + $0x3de] sm:$0xff]
    %v3634 = vld [vmem:[#allocation2 + $0x3e6] sm:$0xff]
    %v3635 = vld [vmem:[#allocation2 + $0x3ee] sm:$0xff]
    %v3636 = vld [vmem:[#allocation2 + $0x3f6] sm:$0xff]
    %v3637 = vld [vmem:[#allocation2 + $0x3fe] sm:$0xff]
    %v3638 = vld [vmem:[#allocation2 + $0x406] sm:$0xff]
    %v3639 = vld [vmem:[#allocation2 + $0x40e] sm:$0xff]
    %v3640 = vld [vmem:[#allocation2 + $0x416] sm:$0xff]
    %v3641 = vld [vmem:[#allocation2 + $0x41e] sm:$0xff]
    %v3642 = vld [vmem:[#allocation2 + $0x426] sm:$0xff]
    %v3643 = vld [vmem:[#allocation2 + $0x42e] sm:$0xff]
    %v3644 = vld [vmem:[#allocation2 + $0x436] sm:$0xff]
    %v3645 = vld [vmem:[#allocation2 + $0x43e] sm:$0xff]
    %v3646 = vld [vmem:[#allocation2 + $0x446] sm:$0xff]
    %v3647 = vld [vmem:[#allocation2 + $0x44e] sm:$0xff]
    %v3648 = vld [vmem:[#allocation2 + $0x456] sm:$0xff]
    %v3649 = vld [vmem:[#allocation2 + $0x45e] sm:$0xff]
    %v3650 = vld [vmem:[#allocation2 + $0x466] sm:$0xff]
    %v3651 = vld [vmem:[#allocation2 + $0x46e] sm:$0xff]
    %v3652 = vld [vmem:[#allocation2 + $0x476] sm:$0xff]
    %v3653 = vld [vmem:[#allocation2 + $0x47e] sm:$0xff]
    %v3654 = vld [vmem:[#allocation2 + $0x486] sm:$0xff]
    %v3655 = vld [vmem:[#allocation2 + $0x48e] sm:$0xff]
    %v3656 = vld [vmem:[#allocation2 + $0x496] sm:$0xff]
    %v3657 = vld [vmem:[#allocation2 + $0x49e] sm:$0xff]
    %v3658 = vld [vmem:[#allocation2 + $0x4a6] sm:$0xff]
    %v3659 = vld [vmem:[#allocation2 + $0x4ae] sm:$0xff]
    %v3660 = vld [vmem:[#allocation2 + $0x4b6] sm:$0xff]
    %v3661 = vld [vmem:[#allocation2 + $0x4be] sm:$0xff]
    %v3662 = vld [vmem:[#allocation2 + $0x4c6] sm:$0xff]
    %v3663 = vld [vmem:[#allocation2 + $0x4ce] sm:$0xff]
    %v3664 = vld [vmem:[#allocation2 + $0x4d6] sm:$0xff]
    %v3665 = vld [vmem:[#allocation2 + $0x4de] sm:$0xff]
    %v3666 = vld [vmem:[#allocation2 + $0x4e6] sm:$0xff]
    %v3667 = vld [vmem:[#allocation2 + $0x4ee] sm:$0xff]
    %v3668 = vld [vmem:[#allocation2 + $0x4f6] sm:$0xff]
    %v3669 = vld [vmem:[#allocation2 + $0x4fe] sm:$0xff]
    %v3670 = vld [vmem:[#allocation2 + $0x506] sm:$0xff]
    %v3671 = vld [vmem:[#allocation2 + $0x50e] sm:$0xff]
    %v3672 = vld [vmem:[#allocation2 + $0x516] sm:$0xff]
    %v3673 = vld [vmem:[#allocation2 + $0x51e] sm:$0xff]
    %v3674 = vld [vmem:[#allocation2 + $0x526] sm:$0xff]
    %v3675 = vld [vmem:[#allocation2 + $0x52e] sm:$0xff]
    %v3676 = vld [vmem:[#allocation2 + $0x536] sm:$0xff]
    %v3677 = vld [vmem:[#allocation2 + $0x53e] sm:$0xff]
    %v3678 = vld [vmem:[#allocation2 + $0x546] sm:$0xff]
    %v3679 = vld [vmem:[#allocation2 + $0x54e] sm:$0xff]
    %v3680 = vld [vmem:[#allocation2 + $0x556] sm:$0xff]
    %v3681 = vld [vmem:[#allocation2 + $0x55e] sm:$0xff]
    %v3682 = vld [vmem:[#allocation2 + $0x566] sm:$0xff]
    %v3683 = vld [vmem:[#allocation2 + $0x56e] sm:$0xff]
    %v3684 = vld [vmem:[#allocation2 + $0x576] sm:$0xff]
    %v3685 = vpack.c.bf16 %v3517, %v3516
    %v3686 = vpack.c.bf16 %v3519, %v3518
    %v3687 = vpack.c.bf16 %v3521, %v3520
    %v3688 = vpack.c.bf16 %v3523, %v3522
    %v3689 = vpack.c.bf16 %v3525, %v3524
    %v3690 = vpack.c.bf16 %v3527, %v3526
    %v3691 = vpack.c.bf16 %v3529, %v3528
    %v3692 = vpack.c.bf16 %v3531, %v3530
    %v3693 = vpack.c.bf16 %v3533, %v3532
    %v3694 = vpack.c.bf16 %v3535, %v3534
    %v3695 = vpack.c.bf16 %v3537, %v3536
    %v3696 = vpack.c.bf16 %v3539, %v3538
    %v3697 = vpack.c.bf16 %v3541, %v3540
    %v3698 = vpack.c.bf16 %v3543, %v3542
    %v3699 = vpack.c.bf16 %v3545, %v3544
    %v3700 = vpack.c.bf16 %v3547, %v3546
    %v3701 = vpack.c.bf16 %v3549, %v3548
    %v3702 = vpack.c.bf16 %v3551, %v3550
    %v3703 = vpack.c.bf16 %v3553, %v3552
    %v3704 = vpack.c.bf16 %v3555, %v3554
    %v3705 = vpack.c.bf16 %v3557, %v3556
    %v3706 = vpack.c.bf16 %v3559, %v3558
    %v3707 = vpack.c.bf16 %v3561, %v3560
    %v3708 = vpack.c.bf16 %v3563, %v3562
    %v3709 = vpack.c.bf16 %v3565, %v3564
    %v3710 = vpack.c.bf16 %v3567, %v3566
    %v3711 = vpack.c.bf16 %v3569, %v3568
    %v3712 = vpack.c.bf16 %v3571, %v3570
    %v3713 = vpack.c.bf16 %v3573, %v3572
    %v3714 = vpack.c.bf16 %v3575, %v3574
    %v3715 = vpack.c.bf16 %v3577, %v3576
    %v3716 = vpack.c.bf16 %v3579, %v3578
    %v3717 = vpack.c.bf16 %v3581, %v3580
    %v3718 = vpack.c.bf16 %v3583, %v3582
    %v3719 = vpack.c.bf16 %v3585, %v3584
    %v3720 = vpack.c.bf16 %v3587, %v3586
    %v3721 = vpack.c.bf16 %v3589, %v3588
    %v3722 = vpack.c.bf16 %v3591, %v3590
    %v3723 = vpack.c.bf16 %v3593, %v3592
    %v3724 = vpack.c.bf16 %v3595, %v3594
    %v3725 = vpack.c.bf16 %v3597, %v3596
    %v3726 = vpack.c.bf16 %v3599, %v3598
    %v3727 = vpack.c.bf16 %v3601, %v3600
    %v3728 = vpack.c.bf16 %v3603, %v3602
    %v3729 = vpack.c.bf16 %v3605, %v3604
    %v3730 = vpack.c.bf16 %v3607, %v3606
    %v3731 = vpack.c.bf16 %v3609, %v3608
    %v3732 = vpack.c.bf16 %v3611, %v3610
    %v3733 = vpack.c.bf16 %v3613, %v3612
    %v3734 = vpack.c.bf16 %v3615, %v3614
    %v3735 = vpack.c.bf16 %v3617, %v3616
    %v3736 = vpack.c.bf16 %v3619, %v3618
    %v3737 = vpack.c.bf16 %v3621, %v3620
    %v3738 = vpack.c.bf16 %v3623, %v3622
    %v3739 = vpack.c.bf16 %v3625, %v3624
    %v3740 = vpack.c.bf16 %v3627, %v3626
    %v3741 = vpack.c.bf16 %v3629, %v3628
    %v3742 = vpack.c.bf16 %v3631, %v3630
    %v3743 = vpack.c.bf16 %v3633, %v3632
    %v3744 = vpack.c.bf16 %v3635, %v3634
    %v3745 = vpack.c.bf16 %v3637, %v3636
    %v3746 = vpack.c.bf16 %v3639, %v3638
    %v3747 = vpack.c.bf16 %v3641, %v3640
    %v3748 = vpack.c.bf16 %v3643, %v3642
    %v3749 = vpack.c.bf16 %v3645, %v3644
    %v3750 = vpack.c.bf16 %v3647, %v3646
    %v3751 = vpack.c.bf16 %v3649, %v3648
    %v3752 = vpack.c.bf16 %v3651, %v3650
    %v3753 = vpack.c.bf16 %v3653, %v3652
    %v3754 = vpack.c.bf16 %v3655, %v3654
    %v3755 = vpack.c.bf16 %v3657, %v3656
    %v3756 = vpack.c.bf16 %v3659, %v3658
    %v3757 = vpack.c.bf16 %v3661, %v3660
    %v3758 = vpack.c.bf16 %v3663, %v3662
    %v3759 = vpack.c.bf16 %v3665, %v3664
    %v3760 = vpack.c.bf16 %v3667, %v3666
    %v3761 = vpack.c.bf16 %v3669, %v3668
    %v3762 = vpack.c.bf16 %v3671, %v3670
    %v3763 = vpack.c.bf16 %v3673, %v3672
    %v3764 = vpack.c.bf16 %v3675, %v3674
    %v3765 = vpack.c.bf16 %v3677, %v3676
    %v3766 = vpack.c.bf16 %v3679, %v3678
    %v3767 = vpack.c.bf16 %v3681, %v3680
    %v3768 = vpack.c.bf16 %v3683, %v3682
    %v3769 = vpack.c.bf16 %v3684, %v3684
    %3855 = vrot.lane.b32.xlu0 %v2239, 32
    %v3856 = vpop.permute.xlu0 %3855
    %3857 = vrot.lane.b32.xlu0 %v2240, 32
    %v3858 = vpop.permute.xlu0 %3857
    %3859 = vrot.lane.b32.xlu0 %v2241, 32
    %v3860 = vpop.permute.xlu0 %3859
    %3861 = vrot.lane.b32.xlu0 %v2242, 32
    %v3862 = vpop.permute.xlu0 %3861
    %3863 = vrot.lane.b32.xlu0 %v2243, 32
    %v3864 = vpop.permute.xlu0 %3863
    %3865 = vrot.lane.b32.xlu0 %v2244, 32
    %v3866 = vpop.permute.xlu0 %3865
    %3867 = vrot.lane.b32.xlu0 %v2245, 32
    %v3868 = vpop.permute.xlu0 %3867
    %3869 = vrot.lane.b32.xlu0 %v2246, 32
    %v3870 = vpop.permute.xlu0 %3869
    %3871 = vrot.lane.b32.xlu0 %v2247, 32
    %v3872 = vpop.permute.xlu0 %3871
    %3873 = vrot.lane.b32.xlu0 %v2248, 32
    %v3874 = vpop.permute.xlu0 %3873
    %3875 = vrot.lane.b32.xlu0 %v2249, 32
    %v3876 = vpop.permute.xlu0 %3875
    %3877 = vrot.lane.b32.xlu0 %v2250, 32
    %v3878 = vpop.permute.xlu0 %3877
    %3879 = vrot.lane.b32.xlu0 %v2251, 32
    %v3880 = vpop.permute.xlu0 %3879
    %3881 = vrot.lane.b32.xlu0 %v2252, 32
    %v3882 = vpop.permute.xlu0 %3881
    %3883 = vrot.lane.b32.xlu0 %v2253, 32
    %v3884 = vpop.permute.xlu0 %3883
    %3885 = vrot.lane.b32.xlu0 %v2254, 32
    %v3886 = vpop.permute.xlu0 %3885
    %3887 = vrot.lane.b32.xlu0 %v2255, 32
    %v3888 = vpop.permute.xlu0 %3887
    %3889 = vrot.lane.b32.xlu0 %v2256, 32
    %v3890 = vpop.permute.xlu0 %3889
    %3891 = vrot.lane.b32.xlu0 %v2257, 32
    %v3892 = vpop.permute.xlu0 %3891
    %3893 = vrot.lane.b32.xlu0 %v2258, 32
    %v3894 = vpop.permute.xlu0 %3893
    %3895 = vrot.lane.b32.xlu0 %v2259, 32
    %v3896 = vpop.permute.xlu0 %3895
    %3897 = vrot.lane.b32.xlu0 %v2260, 32
    %v3898 = vpop.permute.xlu0 %3897
    %3899 = vrot.lane.b32.xlu0 %v2261, 32
    %v3900 = vpop.permute.xlu0 %3899
    %3901 = vrot.lane.b32.xlu0 %v2262, 32
    %v3902 = vpop.permute.xlu0 %3901
    %3903 = vrot.lane.b32.xlu0 %v2263, 32
    %v3904 = vpop.permute.xlu0 %3903
    %3905 = vrot.lane.b32.xlu0 %v2264, 32
    %v3906 = vpop.permute.xlu0 %3905
    %3907 = vrot.lane.b32.xlu0 %v2265, 32
    %v3908 = vpop.permute.xlu0 %3907
    %3909 = vrot.lane.b32.xlu0 %v2266, 32
    %v3910 = vpop.permute.xlu0 %3909
    %3911 = vrot.lane.b32.xlu0 %v2267, 32
    %v3912 = vpop.permute.xlu0 %3911
    %3913 = vrot.lane.b32.xlu0 %v2268, 32
    %v3914 = vpop.permute.xlu0 %3913
    %3915 = vrot.lane.b32.xlu0 %v2269, 32
    %v3916 = vpop.permute.xlu0 %3915
    %3917 = vrot.lane.b32.xlu0 %v2270, 32
    %v3918 = vpop.permute.xlu0 %3917
    %3919 = vrot.lane.b32.xlu0 %v2271, 32
    %v3920 = vpop.permute.xlu0 %3919
    %3921 = vrot.lane.b32.xlu0 %v2272, 32
    %v3922 = vpop.permute.xlu0 %3921
    %3923 = vrot.lane.b32.xlu0 %v2273, 32
    %v3924 = vpop.permute.xlu0 %3923
    %3925 = vrot.lane.b32.xlu0 %v2274, 32
    %v3926 = vpop.permute.xlu0 %3925
    %3927 = vrot.lane.b32.xlu0 %v2275, 32
    %v3928 = vpop.permute.xlu0 %3927
    %3929 = vrot.lane.b32.xlu0 %v2276, 32
    %v3930 = vpop.permute.xlu0 %3929
    %3931 = vrot.lane.b32.xlu0 %v2277, 32
    %v3932 = vpop.permute.xlu0 %3931
    %3933 = vrot.lane.b32.xlu0 %v2278, 32
    %v3934 = vpop.permute.xlu0 %3933
    %3935 = vrot.lane.b32.xlu0 %v2279, 32
    %v3936 = vpop.permute.xlu0 %3935
    %3937 = vrot.lane.b32.xlu0 %v2280, 32
    %v3938 = vpop.permute.xlu0 %3937
    %3939 = vrot.lane.b32.xlu0 %v2281, 32
    %v3940 = vpop.permute.xlu0 %3939
    %3941 = vrot.lane.b32.xlu0 %v2282, 32
    %v3942 = vpop.permute.xlu0 %3941
    %3943 = vrot.lane.b32.xlu0 %v2283, 32
    %v3944 = vpop.permute.xlu0 %3943
    %3945 = vrot.lane.b32.xlu0 %v2284, 32
    %v3946 = vpop.permute.xlu0 %3945
    %3947 = vrot.lane.b32.xlu0 %v2285, 32
    %v3948 = vpop.permute.xlu0 %3947
    %3949 = vrot.lane.b32.xlu0 %v2286, 32
    %v3950 = vpop.permute.xlu0 %3949
    %3951 = vrot.lane.b32.xlu0 %v2287, 32
    %v3952 = vpop.permute.xlu0 %3951
    %3953 = vrot.lane.b32.xlu0 %v2288, 32
    %v3954 = vpop.permute.xlu0 %3953
    %3955 = vrot.lane.b32.xlu0 %v2289, 32
    %v3956 = vpop.permute.xlu0 %3955
    %3957 = vrot.lane.b32.xlu0 %v2290, 32
    %v3958 = vpop.permute.xlu0 %3957
    %3959 = vrot.lane.b32.xlu0 %v2291, 32
    %v3960 = vpop.permute.xlu0 %3959
    %3961 = vrot.lane.b32.xlu0 %v2292, 32
    %v3962 = vpop.permute.xlu0 %3961
    %3963 = vrot.lane.b32.xlu0 %v2293, 32
    %v3964 = vpop.permute.xlu0 %3963
    %3965 = vrot.lane.b32.xlu0 %v2294, 32
    %v3966 = vpop.permute.xlu0 %3965
    %3967 = vrot.lane.b32.xlu0 %v2295, 32
    %v3968 = vpop.permute.xlu0 %3967
    %3969 = vrot.lane.b32.xlu0 %v2296, 32
    %v3970 = vpop.permute.xlu0 %3969
    %3971 = vrot.lane.b32.xlu0 %v2297, 32
    %v3972 = vpop.permute.xlu0 %3971
    %3973 = vrot.lane.b32.xlu0 %v2298, 32
    %v3974 = vpop.permute.xlu0 %3973
    %3975 = vrot.lane.b32.xlu0 %v2299, 32
    %v3976 = vpop.permute.xlu0 %3975
    %3977 = vrot.lane.b32.xlu0 %v2300, 32
    %v3978 = vpop.permute.xlu0 %3977
    %3979 = vrot.lane.b32.xlu0 %v2301, 32
    %v3980 = vpop.permute.xlu0 %3979
    %3981 = vrot.lane.b32.xlu0 %v2302, 32
    %v3982 = vpop.permute.xlu0 %3981
    %3983 = vrot.lane.b32.xlu0 %v2303, 32
    %v3984 = vpop.permute.xlu0 %3983
    %3985 = vrot.lane.b32.xlu0 %v2304, 32
    %v3986 = vpop.permute.xlu0 %3985
    %3987 = vrot.lane.b32.xlu0 %v2305, 32
    %v3988 = vpop.permute.xlu0 %3987
    %3989 = vrot.lane.b32.xlu0 %v2306, 32
    %v3990 = vpop.permute.xlu0 %3989
    %3991 = vrot.lane.b32.xlu0 %v2307, 32
    %v3992 = vpop.permute.xlu0 %3991
    %3993 = vrot.lane.b32.xlu0 %v2308, 32
    %v3994 = vpop.permute.xlu0 %3993
    %3995 = vrot.lane.b32.xlu0 %v2309, 32
    %v3996 = vpop.permute.xlu0 %3995
    %3997 = vrot.lane.b32.xlu0 %v2310, 32
    %v3998 = vpop.permute.xlu0 %3997
    %3999 = vrot.lane.b32.xlu0 %v2311, 32
    %v4000 = vpop.permute.xlu0 %3999
    %4001 = vrot.lane.b32.xlu0 %v2312, 32
    %v4002 = vpop.permute.xlu0 %4001
    %4003 = vrot.lane.b32.xlu0 %v2313, 32
    %v4004 = vpop.permute.xlu0 %4003
    %4005 = vrot.lane.b32.xlu0 %v2314, 32
    %v4006 = vpop.permute.xlu0 %4005
    %4007 = vrot.lane.b32.xlu0 %v2315, 32
    %v4008 = vpop.permute.xlu0 %4007
    %4009 = vrot.lane.b32.xlu0 %v2316, 32
    %v4010 = vpop.permute.xlu0 %4009
    %4011 = vrot.lane.b32.xlu0 %v2317, 32
    %v4012 = vpop.permute.xlu0 %4011
    %4013 = vrot.lane.b32.xlu0 %v2318, 32
    %v4014 = vpop.permute.xlu0 %4013
    %4015 = vrot.lane.b32.xlu0 %v2319, 32
    %v4016 = vpop.permute.xlu0 %4015
    %4017 = vrot.lane.b32.xlu0 %v2320, 32
    %v4018 = vpop.permute.xlu0 %4017
    %4019 = vrot.lane.b32.xlu0 %v2321, 32
    %v4020 = vpop.permute.xlu0 %4019
    %4021 = vrot.lane.b32.xlu0 %v2322, 32
    %v4022 = vpop.permute.xlu0 %4021
    %4023 = vrot.lane.b32.xlu0 %v2323, 32
    %v4024 = vpop.permute.xlu0 %4023
    %4110 = vrot.lane.b32.xlu0 %v2493, 64
    %v4111 = vpop.permute.xlu0 %4110
    %4112 = vrot.lane.b32.xlu0 %v2494, 64
    %v4113 = vpop.permute.xlu0 %4112
    %4114 = vrot.lane.b32.xlu0 %v2495, 64
    %v4115 = vpop.permute.xlu0 %4114
    %4116 = vrot.lane.b32.xlu0 %v2496, 64
    %v4117 = vpop.permute.xlu0 %4116
    %4118 = vrot.lane.b32.xlu0 %v2497, 64
    %v4119 = vpop.permute.xlu0 %4118
    %4120 = vrot.lane.b32.xlu0 %v2498, 64
    %v4121 = vpop.permute.xlu0 %4120
    %4122 = vrot.lane.b32.xlu0 %v2499, 64
    %v4123 = vpop.permute.xlu0 %4122
    %4124 = vrot.lane.b32.xlu0 %v2500, 64
    %v4125 = vpop.permute.xlu0 %4124
    %4126 = vrot.lane.b32.xlu0 %v2501, 64
    %v4127 = vpop.permute.xlu0 %4126
    %4128 = vrot.lane.b32.xlu0 %v2502, 64
    %v4129 = vpop.permute.xlu0 %4128
    %4130 = vrot.lane.b32.xlu0 %v2503, 64
    %v4131 = vpop.permute.xlu0 %4130
    %4132 = vrot.lane.b32.xlu0 %v2504, 64
    %v4133 = vpop.permute.xlu0 %4132
    %4134 = vrot.lane.b32.xlu0 %v2505, 64
    %v4135 = vpop.permute.xlu0 %4134
    %4136 = vrot.lane.b32.xlu0 %v2506, 64
    %v4137 = vpop.permute.xlu0 %4136
    %4138 = vrot.lane.b32.xlu0 %v2507, 64
    %v4139 = vpop.permute.xlu0 %4138
    %4140 = vrot.lane.b32.xlu0 %v2508, 64
    %v4141 = vpop.permute.xlu0 %4140
    %4142 = vrot.lane.b32.xlu0 %v2509, 64
    %v4143 = vpop.permute.xlu0 %4142
    %4144 = vrot.lane.b32.xlu0 %v2510, 64
    %v4145 = vpop.permute.xlu0 %4144
    %4146 = vrot.lane.b32.xlu0 %v2511, 64
    %v4147 = vpop.permute.xlu0 %4146
    %4148 = vrot.lane.b32.xlu0 %v2512, 64
    %v4149 = vpop.permute.xlu0 %4148
    %4150 = vrot.lane.b32.xlu0 %v2513, 64
    %v4151 = vpop.permute.xlu0 %4150
    %4152 = vrot.lane.b32.xlu0 %v2514, 64
    %v4153 = vpop.permute.xlu0 %4152
    %4154 = vrot.lane.b32.xlu0 %v2515, 64
    %v4155 = vpop.permute.xlu0 %4154
    %4156 = vrot.lane.b32.xlu0 %v2516, 64
    %v4157 = vpop.permute.xlu0 %4156
    %4158 = vrot.lane.b32.xlu0 %v2517, 64
    %v4159 = vpop.permute.xlu0 %4158
    %4160 = vrot.lane.b32.xlu0 %v2518, 64
    %v4161 = vpop.permute.xlu0 %4160
    %4162 = vrot.lane.b32.xlu0 %v2519, 64
    %v4163 = vpop.permute.xlu0 %4162
    %4164 = vrot.lane.b32.xlu0 %v2520, 64
    %v4165 = vpop.permute.xlu0 %4164
    %4166 = vrot.lane.b32.xlu0 %v2521, 64
    %v4167 = vpop.permute.xlu0 %4166
    %4168 = vrot.lane.b32.xlu0 %v2522, 64
    %v4169 = vpop.permute.xlu0 %4168
    %4170 = vrot.lane.b32.xlu0 %v2523, 64
    %v4171 = vpop.permute.xlu0 %4170
    %4172 = vrot.lane.b32.xlu0 %v2524, 64
    %v4173 = vpop.permute.xlu0 %4172
    %4174 = vrot.lane.b32.xlu0 %v2525, 64
    %v4175 = vpop.permute.xlu0 %4174
    %4176 = vrot.lane.b32.xlu0 %v2526, 64
    %v4177 = vpop.permute.xlu0 %4176
    %4178 = vrot.lane.b32.xlu0 %v2527, 64
    %v4179 = vpop.permute.xlu0 %4178
    %4180 = vrot.lane.b32.xlu0 %v2528, 64
    %v4181 = vpop.permute.xlu0 %4180
    %4182 = vrot.lane.b32.xlu0 %v2529, 64
    %v4183 = vpop.permute.xlu0 %4182
    %4184 = vrot.lane.b32.xlu0 %v2530, 64
    %v4185 = vpop.permute.xlu0 %4184
    %4186 = vrot.lane.b32.xlu0 %v2531, 64
    %v4187 = vpop.permute.xlu0 %4186
    %4188 = vrot.lane.b32.xlu0 %v2532, 64
    %v4189 = vpop.permute.xlu0 %4188
    %4190 = vrot.lane.b32.xlu0 %v2533, 64
    %v4191 = vpop.permute.xlu0 %4190
    %4192 = vrot.lane.b32.xlu0 %v2534, 64
    %v4193 = vpop.permute.xlu0 %4192
    %4194 = vrot.lane.b32.xlu0 %v2535, 64
    %v4195 = vpop.permute.xlu0 %4194
    %4196 = vrot.lane.b32.xlu0 %v2536, 64
    %v4197 = vpop.permute.xlu0 %4196
    %4198 = vrot.lane.b32.xlu0 %v2537, 64
    %v4199 = vpop.permute.xlu0 %4198
    %4200 = vrot.lane.b32.xlu0 %v2538, 64
    %v4201 = vpop.permute.xlu0 %4200
    %4202 = vrot.lane.b32.xlu0 %v2539, 64
    %v4203 = vpop.permute.xlu0 %4202
    %4204 = vrot.lane.b32.xlu0 %v2540, 64
    %v4205 = vpop.permute.xlu0 %4204
    %4206 = vrot.lane.b32.xlu0 %v2541, 64
    %v4207 = vpop.permute.xlu0 %4206
    %4208 = vrot.lane.b32.xlu0 %v2542, 64
    %v4209 = vpop.permute.xlu0 %4208
    %4210 = vrot.lane.b32.xlu0 %v2543, 64
    %v4211 = vpop.permute.xlu0 %4210
    %4212 = vrot.lane.b32.xlu0 %v2544, 64
    %v4213 = vpop.permute.xlu0 %4212
    %4214 = vrot.lane.b32.xlu0 %v2545, 64
    %v4215 = vpop.permute.xlu0 %4214
    %4216 = vrot.lane.b32.xlu0 %v2546, 64
    %v4217 = vpop.permute.xlu0 %4216
    %4218 = vrot.lane.b32.xlu0 %v2547, 64
    %v4219 = vpop.permute.xlu0 %4218
    %4220 = vrot.lane.b32.xlu0 %v2548, 64
    %v4221 = vpop.permute.xlu0 %4220
    %4222 = vrot.lane.b32.xlu0 %v2549, 64
    %v4223 = vpop.permute.xlu0 %4222
    %4224 = vrot.lane.b32.xlu0 %v2550, 64
    %v4225 = vpop.permute.xlu0 %4224
    %4226 = vrot.lane.b32.xlu0 %v2551, 64
    %v4227 = vpop.permute.xlu0 %4226
    %4228 = vrot.lane.b32.xlu0 %v2552, 64
    %v4229 = vpop.permute.xlu0 %4228
    %4230 = vrot.lane.b32.xlu0 %v2553, 64
    %v4231 = vpop.permute.xlu0 %4230
    %4232 = vrot.lane.b32.xlu0 %v2554, 64
    %v4233 = vpop.permute.xlu0 %4232
    %4234 = vrot.lane.b32.xlu0 %v2555, 64
    %v4235 = vpop.permute.xlu0 %4234
    %4236 = vrot.lane.b32.xlu0 %v2556, 64
    %v4237 = vpop.permute.xlu0 %4236
    %4238 = vrot.lane.b32.xlu0 %v2557, 64
    %v4239 = vpop.permute.xlu0 %4238
    %4240 = vrot.lane.b32.xlu0 %v2558, 64
    %v4241 = vpop.permute.xlu0 %4240
    %4242 = vrot.lane.b32.xlu0 %v2559, 64
    %v4243 = vpop.permute.xlu0 %4242
    %4244 = vrot.lane.b32.xlu0 %v2560, 64
    %v4245 = vpop.permute.xlu0 %4244
    %4246 = vrot.lane.b32.xlu0 %v2561, 64
    %v4247 = vpop.permute.xlu0 %4246
    %4248 = vrot.lane.b32.xlu0 %v2562, 64
    %v4249 = vpop.permute.xlu0 %4248
    %4250 = vrot.lane.b32.xlu0 %v2563, 64
    %v4251 = vpop.permute.xlu0 %4250
    %4252 = vrot.lane.b32.xlu0 %v2564, 64
    %v4253 = vpop.permute.xlu0 %4252
    %4254 = vrot.lane.b32.xlu0 %v2565, 64
    %v4255 = vpop.permute.xlu0 %4254
    %4256 = vrot.lane.b32.xlu0 %v2566, 64
    %v4257 = vpop.permute.xlu0 %4256
    %4258 = vrot.lane.b32.xlu0 %v2567, 64
    %v4259 = vpop.permute.xlu0 %4258
    %4260 = vrot.lane.b32.xlu0 %v2568, 64
    %v4261 = vpop.permute.xlu0 %4260
    %4262 = vrot.lane.b32.xlu0 %v2569, 64
    %v4263 = vpop.permute.xlu0 %4262
    %4264 = vrot.lane.b32.xlu0 %v2570, 64
    %v4265 = vpop.permute.xlu0 %4264
    %4266 = vrot.lane.b32.xlu0 %v2571, 64
    %v4267 = vpop.permute.xlu0 %4266
    %4268 = vrot.lane.b32.xlu0 %v2572, 64
    %v4269 = vpop.permute.xlu0 %4268
    %4270 = vrot.lane.b32.xlu0 %v2573, 64
    %v4271 = vpop.permute.xlu0 %4270
    %4272 = vrot.lane.b32.xlu0 %v2574, 64
    %v4273 = vpop.permute.xlu0 %4272
    %4274 = vrot.lane.b32.xlu0 %v2575, 64
    %v4275 = vpop.permute.xlu0 %4274
    %4276 = vrot.lane.b32.xlu0 %v2576, 64
    %v4277 = vpop.permute.xlu0 %4276
    %4278 = vrot.lane.b32.xlu0 %v2577, 64
    %v4279 = vpop.permute.xlu0 %4278
    %4365 = vrot.lane.b32.xlu0 %v2581, 96
    %v4366 = vpop.permute.xlu0 %4365
    %4367 = vrot.lane.b32.xlu0 %v2582, 96
    %v4368 = vpop.permute.xlu0 %4367
    %4369 = vrot.lane.b32.xlu0 %v2583, 96
    %v4370 = vpop.permute.xlu0 %4369
    %4371 = vrot.lane.b32.xlu0 %v2584, 96
    %v4372 = vpop.permute.xlu0 %4371
    %4373 = vrot.lane.b32.xlu0 %v2585, 96
    %v4374 = vpop.permute.xlu0 %4373
    %4375 = vrot.lane.b32.xlu0 %v2586, 96
    %v4376 = vpop.permute.xlu0 %4375
    %4377 = vrot.lane.b32.xlu0 %v2587, 96
    %v4378 = vpop.permute.xlu0 %4377
    %4379 = vrot.lane.b32.xlu0 %v2588, 96
    %v4380 = vpop.permute.xlu0 %4379
    %4381 = vrot.lane.b32.xlu0 %v2589, 96
    %v4382 = vpop.permute.xlu0 %4381
    %4383 = vrot.lane.b32.xlu0 %v2590, 96
    %v4384 = vpop.permute.xlu0 %4383
    %4385 = vrot.lane.b32.xlu0 %v2591, 96
    %v4386 = vpop.permute.xlu0 %4385
    %4387 = vrot.lane.b32.xlu0 %v2592, 96
    %v4388 = vpop.permute.xlu0 %4387
    %4389 = vrot.lane.b32.xlu0 %v2593, 96
    %v4390 = vpop.permute.xlu0 %4389
    %4391 = vrot.lane.b32.xlu0 %v2594, 96
    %v4392 = vpop.permute.xlu0 %4391
    %4393 = vrot.lane.b32.xlu0 %v2595, 96
    %v4394 = vpop.permute.xlu0 %4393
    %4395 = vrot.lane.b32.xlu0 %v2596, 96
    %v4396 = vpop.permute.xlu0 %4395
    %4397 = vrot.lane.b32.xlu0 %v2597, 96
    %v4398 = vpop.permute.xlu0 %4397
    %4399 = vrot.lane.b32.xlu0 %v2598, 96
    %v4400 = vpop.permute.xlu0 %4399
    %4401 = vrot.lane.b32.xlu0 %v2599, 96
    %v4402 = vpop.permute.xlu0 %4401
    %4403 = vrot.lane.b32.xlu0 %v2600, 96
    %v4404 = vpop.permute.xlu0 %4403
    %4405 = vrot.lane.b32.xlu0 %v2601, 96
    %v4406 = vpop.permute.xlu0 %4405
    %4407 = vrot.lane.b32.xlu0 %v2602, 96
    %v4408 = vpop.permute.xlu0 %4407
    %4409 = vrot.lane.b32.xlu0 %v2603, 96
    %v4410 = vpop.permute.xlu0 %4409
    %4411 = vrot.lane.b32.xlu0 %v2604, 96
    %v4412 = vpop.permute.xlu0 %4411
    %4413 = vrot.lane.b32.xlu0 %v2605, 96
    %v4414 = vpop.permute.xlu0 %4413
    %4415 = vrot.lane.b32.xlu0 %v2606, 96
    %v4416 = vpop.permute.xlu0 %4415
    %4417 = vrot.lane.b32.xlu0 %v2607, 96
    %v4418 = vpop.permute.xlu0 %4417
    %4419 = vrot.lane.b32.xlu0 %v2608, 96
    %v4420 = vpop.permute.xlu0 %4419
    %4421 = vrot.lane.b32.xlu0 %v2609, 96
    %v4422 = vpop.permute.xlu0 %4421
    %4423 = vrot.lane.b32.xlu0 %v2610, 96
    %v4424 = vpop.permute.xlu0 %4423
    %4425 = vrot.lane.b32.xlu0 %v2611, 96
    %v4426 = vpop.permute.xlu0 %4425
    %4427 = vrot.lane.b32.xlu0 %v2612, 96
    %v4428 = vpop.permute.xlu0 %4427
    %4429 = vrot.lane.b32.xlu0 %v2613, 96
    %v4430 = vpop.permute.xlu0 %4429
    %4431 = vrot.lane.b32.xlu0 %v2614, 96
    %v4432 = vpop.permute.xlu0 %4431
    %4433 = vrot.lane.b32.xlu0 %v2615, 96
    %v4434 = vpop.permute.xlu0 %4433
    %4435 = vrot.lane.b32.xlu0 %v2616, 96
    %v4436 = vpop.permute.xlu0 %4435
    %4437 = vrot.lane.b32.xlu0 %v2617, 96
    %v4438 = vpop.permute.xlu0 %4437
    %4439 = vrot.lane.b32.xlu0 %v2618, 96
    %v4440 = vpop.permute.xlu0 %4439
    %4441 = vrot.lane.b32.xlu0 %v2619, 96
    %v4442 = vpop.permute.xlu0 %4441
    %4443 = vrot.lane.b32.xlu0 %v2620, 96
    %v4444 = vpop.permute.xlu0 %4443
    %4445 = vrot.lane.b32.xlu0 %v2621, 96
    %v4446 = vpop.permute.xlu0 %4445
    %4447 = vrot.lane.b32.xlu0 %v2622, 96
    %v4448 = vpop.permute.xlu0 %4447
    %4449 = vrot.lane.b32.xlu0 %v2623, 96
    %v4450 = vpop.permute.xlu0 %4449
    %4451 = vrot.lane.b32.xlu0 %v2624, 96
    %v4452 = vpop.permute.xlu0 %4451
    %4453 = vrot.lane.b32.xlu0 %v2625, 96
    %v4454 = vpop.permute.xlu0 %4453
    %4455 = vrot.lane.b32.xlu0 %v2626, 96
    %v4456 = vpop.permute.xlu0 %4455
    %4457 = vrot.lane.b32.xlu0 %v2627, 96
    %v4458 = vpop.permute.xlu0 %4457
    %4459 = vrot.lane.b32.xlu0 %v2628, 96
    %v4460 = vpop.permute.xlu0 %4459
    %4461 = vrot.lane.b32.xlu0 %v2629, 96
    %v4462 = vpop.permute.xlu0 %4461
    %4463 = vrot.lane.b32.xlu0 %v2630, 96
    %v4464 = vpop.permute.xlu0 %4463
    %4465 = vrot.lane.b32.xlu0 %v2631, 96
    %v4466 = vpop.permute.xlu0 %4465
    %4467 = vrot.lane.b32.xlu0 %v2632, 96
    %v4468 = vpop.permute.xlu0 %4467
    %4469 = vrot.lane.b32.xlu0 %v2633, 96
    %v4470 = vpop.permute.xlu0 %4469
    %4471 = vrot.lane.b32.xlu0 %v2634, 96
    %v4472 = vpop.permute.xlu0 %4471
    %4473 = vrot.lane.b32.xlu0 %v2635, 96
    %v4474 = vpop.permute.xlu0 %4473
    %4475 = vrot.lane.b32.xlu0 %v2636, 96
    %v4476 = vpop.permute.xlu0 %4475
    %4477 = vrot.lane.b32.xlu0 %v2637, 96
    %v4478 = vpop.permute.xlu0 %4477
    %4479 = vrot.lane.b32.xlu0 %v2638, 96
    %v4480 = vpop.permute.xlu0 %4479
    %4481 = vrot.lane.b32.xlu0 %v2639, 96
    %v4482 = vpop.permute.xlu0 %4481
    %4483 = vrot.lane.b32.xlu0 %v2640, 96
    %v4484 = vpop.permute.xlu0 %4483
    %4485 = vrot.lane.b32.xlu0 %v2641, 96
    %v4486 = vpop.permute.xlu0 %4485
    %4487 = vrot.lane.b32.xlu0 %v2642, 96
    %v4488 = vpop.permute.xlu0 %4487
    %4489 = vrot.lane.b32.xlu0 %v2643, 96
    %v4490 = vpop.permute.xlu0 %4489
    %4491 = vrot.lane.b32.xlu0 %v2644, 96
    %v4492 = vpop.permute.xlu0 %4491
    %4493 = vrot.lane.b32.xlu0 %v2645, 96
    %v4494 = vpop.permute.xlu0 %4493
    %4495 = vrot.lane.b32.xlu0 %v2646, 96
    %v4496 = vpop.permute.xlu0 %4495
    %4497 = vrot.lane.b32.xlu0 %v2647, 96
    %v4498 = vpop.permute.xlu0 %4497
    %4499 = vrot.lane.b32.xlu0 %v2648, 96
    %v4500 = vpop.permute.xlu0 %4499
    %4501 = vrot.lane.b32.xlu0 %v2649, 96
    %v4502 = vpop.permute.xlu0 %4501
    %4503 = vrot.lane.b32.xlu0 %v2650, 96
    %v4504 = vpop.permute.xlu0 %4503
    %4505 = vrot.lane.b32.xlu0 %v2651, 96
    %v4506 = vpop.permute.xlu0 %4505
    %4507 = vrot.lane.b32.xlu0 %v2652, 96
    %v4508 = vpop.permute.xlu0 %4507
    %4509 = vrot.lane.b32.xlu0 %v2653, 96
    %v4510 = vpop.permute.xlu0 %4509
    %4511 = vrot.lane.b32.xlu0 %v2654, 96
    %v4512 = vpop.permute.xlu0 %4511
    %4513 = vrot.lane.b32.xlu0 %v2655, 96
    %v4514 = vpop.permute.xlu0 %4513
    %4515 = vrot.lane.b32.xlu0 %v2656, 96
    %v4516 = vpop.permute.xlu0 %4515
    %4517 = vrot.lane.b32.xlu0 %v2657, 96
    %v4518 = vpop.permute.xlu0 %4517
    %4519 = vrot.lane.b32.xlu0 %v2658, 96
    %v4520 = vpop.permute.xlu0 %4519
    %4521 = vrot.lane.b32.xlu0 %v2659, 96
    %v4522 = vpop.permute.xlu0 %4521
    %4523 = vrot.lane.b32.xlu0 %v2660, 96
    %v4524 = vpop.permute.xlu0 %4523
    %4525 = vrot.lane.b32.xlu0 %v2661, 96
    %v4526 = vpop.permute.xlu0 %4525
    %4527 = vrot.lane.b32.xlu0 %v2662, 96
    %v4528 = vpop.permute.xlu0 %4527
    %4529 = vrot.lane.b32.xlu0 %v2663, 96
    %v4530 = vpop.permute.xlu0 %4529
    %4531 = vrot.lane.b32.xlu0 %v2664, 96
    %v4532 = vpop.permute.xlu0 %4531
    %4533 = vrot.lane.b32.xlu0 %v2665, 96
    %v4534 = vpop.permute.xlu0 %4533
    %4620 = vrot.lane.b32.xlu0 %v3089, 32
    %v4621 = vpop.permute.xlu0 %4620
    %4622 = vrot.lane.b32.xlu0 %v3090, 32
    %v4623 = vpop.permute.xlu0 %4622
    %4624 = vrot.lane.b32.xlu0 %v3091, 32
    %v4625 = vpop.permute.xlu0 %4624
    %4626 = vrot.lane.b32.xlu0 %v3092, 32
    %v4627 = vpop.permute.xlu0 %4626
    %4628 = vrot.lane.b32.xlu0 %v3093, 32
    %v4629 = vpop.permute.xlu0 %4628
    %4630 = vrot.lane.b32.xlu0 %v3094, 32
    %v4631 = vpop.permute.xlu0 %4630
    %4632 = vrot.lane.b32.xlu0 %v3095, 32
    %v4633 = vpop.permute.xlu0 %4632
    %4634 = vrot.lane.b32.xlu0 %v3096, 32
    %v4635 = vpop.permute.xlu0 %4634
    %4636 = vrot.lane.b32.xlu0 %v3097, 32
    %v4637 = vpop.permute.xlu0 %4636
    %4638 = vrot.lane.b32.xlu0 %v3098, 32
    %v4639 = vpop.permute.xlu0 %4638
    %4640 = vrot.lane.b32.xlu0 %v3099, 32
    %v4641 = vpop.permute.xlu0 %4640
    %4642 = vrot.lane.b32.xlu0 %v3100, 32
    %v4643 = vpop.permute.xlu0 %4642
    %4644 = vrot.lane.b32.xlu0 %v3101, 32
    %v4645 = vpop.permute.xlu0 %4644
    %4646 = vrot.lane.b32.xlu0 %v3102, 32
    %v4647 = vpop.permute.xlu0 %4646
    %4648 = vrot.lane.b32.xlu0 %v3103, 32
    %v4649 = vpop.permute.xlu0 %4648
    %4650 = vrot.lane.b32.xlu0 %v3104, 32
    %v4651 = vpop.permute.xlu0 %4650
    %4652 = vrot.lane.b32.xlu0 %v3105, 32
    %v4653 = vpop.permute.xlu0 %4652
    %4654 = vrot.lane.b32.xlu0 %v3106, 32
    %v4655 = vpop.permute.xlu0 %4654
    %4656 = vrot.lane.b32.xlu0 %v3107, 32
    %v4657 = vpop.permute.xlu0 %4656
    %4658 = vrot.lane.b32.xlu0 %v3108, 32
    %v4659 = vpop.permute.xlu0 %4658
    %4660 = vrot.lane.b32.xlu0 %v3109, 32
    %v4661 = vpop.permute.xlu0 %4660
    %4662 = vrot.lane.b32.xlu0 %v3110, 32
    %v4663 = vpop.permute.xlu0 %4662
    %4664 = vrot.lane.b32.xlu0 %v3111, 32
    %v4665 = vpop.permute.xlu0 %4664
    %4666 = vrot.lane.b32.xlu0 %v3112, 32
    %v4667 = vpop.permute.xlu0 %4666
    %4668 = vrot.lane.b32.xlu0 %v3113, 32
    %v4669 = vpop.permute.xlu0 %4668
    %4670 = vrot.lane.b32.xlu0 %v3114, 32
    %v4671 = vpop.permute.xlu0 %4670
    %4672 = vrot.lane.b32.xlu0 %v3115, 32
    %v4673 = vpop.permute.xlu0 %4672
    %4674 = vrot.lane.b32.xlu0 %v3116, 32
    %v4675 = vpop.permute.xlu0 %4674
    %4676 = vrot.lane.b32.xlu0 %v3117, 32
    %v4677 = vpop.permute.xlu0 %4676
    %4678 = vrot.lane.b32.xlu0 %v3118, 32
    %v4679 = vpop.permute.xlu0 %4678
    %4680 = vrot.lane.b32.xlu0 %v3119, 32
    %v4681 = vpop.permute.xlu0 %4680
    %4682 = vrot.lane.b32.xlu0 %v3120, 32
    %v4683 = vpop.permute.xlu0 %4682
    %4684 = vrot.lane.b32.xlu0 %v3121, 32
    %v4685 = vpop.permute.xlu0 %4684
    %4686 = vrot.lane.b32.xlu0 %v3122, 32
    %v4687 = vpop.permute.xlu0 %4686
    %4688 = vrot.lane.b32.xlu0 %v3123, 32
    %v4689 = vpop.permute.xlu0 %4688
    %4690 = vrot.lane.b32.xlu0 %v3124, 32
    %v4691 = vpop.permute.xlu0 %4690
    %4692 = vrot.lane.b32.xlu0 %v3125, 32
    %v4693 = vpop.permute.xlu0 %4692
    %4694 = vrot.lane.b32.xlu0 %v3126, 32
    %v4695 = vpop.permute.xlu0 %4694
    %4696 = vrot.lane.b32.xlu0 %v3127, 32
    %v4697 = vpop.permute.xlu0 %4696
    %4698 = vrot.lane.b32.xlu0 %v3128, 32
    %v4699 = vpop.permute.xlu0 %4698
    %4700 = vrot.lane.b32.xlu0 %v3129, 32
    %v4701 = vpop.permute.xlu0 %4700
    %4702 = vrot.lane.b32.xlu0 %v3130, 32
    %v4703 = vpop.permute.xlu0 %4702
    %4704 = vrot.lane.b32.xlu0 %v3131, 32
    %v4705 = vpop.permute.xlu0 %4704
    %4706 = vrot.lane.b32.xlu0 %v3132, 32
    %v4707 = vpop.permute.xlu0 %4706
    %4708 = vrot.lane.b32.xlu0 %v3133, 32
    %v4709 = vpop.permute.xlu0 %4708
    %4710 = vrot.lane.b32.xlu0 %v3134, 32
    %v4711 = vpop.permute.xlu0 %4710
    %4712 = vrot.lane.b32.xlu0 %v3135, 32
    %v4713 = vpop.permute.xlu0 %4712
    %4714 = vrot.lane.b32.xlu0 %v3136, 32
    %v4715 = vpop.permute.xlu0 %4714
    %4716 = vrot.lane.b32.xlu0 %v3137, 32
    %v4717 = vpop.permute.xlu0 %4716
    %4718 = vrot.lane.b32.xlu0 %v3138, 32
    %v4719 = vpop.permute.xlu0 %4718
    %4720 = vrot.lane.b32.xlu0 %v3139, 32
    %v4721 = vpop.permute.xlu0 %4720
    %4722 = vrot.lane.b32.xlu0 %v3140, 32
    %v4723 = vpop.permute.xlu0 %4722
    %4724 = vrot.lane.b32.xlu0 %v3141, 32
    %v4725 = vpop.permute.xlu0 %4724
    %4726 = vrot.lane.b32.xlu0 %v3142, 32
    %v4727 = vpop.permute.xlu0 %4726
    %4728 = vrot.lane.b32.xlu0 %v3143, 32
    %v4729 = vpop.permute.xlu0 %4728
    %4730 = vrot.lane.b32.xlu0 %v3144, 32
    %v4731 = vpop.permute.xlu0 %4730
    %4732 = vrot.lane.b32.xlu0 %v3145, 32
    %v4733 = vpop.permute.xlu0 %4732
    %4734 = vrot.lane.b32.xlu0 %v3146, 32
    %v4735 = vpop.permute.xlu0 %4734
    %4736 = vrot.lane.b32.xlu0 %v3147, 32
    %v4737 = vpop.permute.xlu0 %4736
    %4738 = vrot.lane.b32.xlu0 %v3148, 32
    %v4739 = vpop.permute.xlu0 %4738
    %4740 = vrot.lane.b32.xlu0 %v3149, 32
    %v4741 = vpop.permute.xlu0 %4740
    %4742 = vrot.lane.b32.xlu0 %v3150, 32
    %v4743 = vpop.permute.xlu0 %4742
    %4744 = vrot.lane.b32.xlu0 %v3151, 32
    %v4745 = vpop.permute.xlu0 %4744
    %4746 = vrot.lane.b32.xlu0 %v3152, 32
    %v4747 = vpop.permute.xlu0 %4746
    %4748 = vrot.lane.b32.xlu0 %v3153, 32
    %v4749 = vpop.permute.xlu0 %4748
    %4750 = vrot.lane.b32.xlu0 %v3154, 32
    %v4751 = vpop.permute.xlu0 %4750
    %4752 = vrot.lane.b32.xlu0 %v3155, 32
    %v4753 = vpop.permute.xlu0 %4752
    %4754 = vrot.lane.b32.xlu0 %v3156, 32
    %v4755 = vpop.permute.xlu0 %4754
    %4756 = vrot.lane.b32.xlu0 %v3157, 32
    %v4757 = vpop.permute.xlu0 %4756
    %4758 = vrot.lane.b32.xlu0 %v3158, 32
    %v4759 = vpop.permute.xlu0 %4758
    %4760 = vrot.lane.b32.xlu0 %v3159, 32
    %v4761 = vpop.permute.xlu0 %4760
    %4762 = vrot.lane.b32.xlu0 %v3160, 32
    %v4763 = vpop.permute.xlu0 %4762
    %4764 = vrot.lane.b32.xlu0 %v3161, 32
    %v4765 = vpop.permute.xlu0 %4764
    %4766 = vrot.lane.b32.xlu0 %v3162, 32
    %v4767 = vpop.permute.xlu0 %4766
    %4768 = vrot.lane.b32.xlu0 %v3163, 32
    %v4769 = vpop.permute.xlu0 %4768
    %4770 = vrot.lane.b32.xlu0 %v3164, 32
    %v4771 = vpop.permute.xlu0 %4770
    %4772 = vrot.lane.b32.xlu0 %v3165, 32
    %v4773 = vpop.permute.xlu0 %4772
    %4774 = vrot.lane.b32.xlu0 %v3166, 32
    %v4775 = vpop.permute.xlu0 %4774
    %4776 = vrot.lane.b32.xlu0 %v3167, 32
    %v4777 = vpop.permute.xlu0 %4776
    %4778 = vrot.lane.b32.xlu0 %v3168, 32
    %v4779 = vpop.permute.xlu0 %4778
    %4780 = vrot.lane.b32.xlu0 %v3169, 32
    %v4781 = vpop.permute.xlu0 %4780
    %4782 = vrot.lane.b32.xlu0 %v3170, 32
    %v4783 = vpop.permute.xlu0 %4782
    %4784 = vrot.lane.b32.xlu0 %v3171, 32
    %v4785 = vpop.permute.xlu0 %4784
    %4786 = vrot.lane.b32.xlu0 %v3172, 32
    %v4787 = vpop.permute.xlu0 %4786
    %4788 = vrot.lane.b32.xlu0 %v3173, 32
    %v4789 = vpop.permute.xlu0 %4788
    %4875 = vrot.lane.b32.xlu0 %v3177, 64
    %v4876 = vpop.permute.xlu0 %4875
    %4877 = vrot.lane.b32.xlu0 %v3178, 64
    %v4878 = vpop.permute.xlu0 %4877
    %4879 = vrot.lane.b32.xlu0 %v3179, 64
    %v4880 = vpop.permute.xlu0 %4879
    %4881 = vrot.lane.b32.xlu0 %v3180, 64
    %v4882 = vpop.permute.xlu0 %4881
    %4883 = vrot.lane.b32.xlu0 %v3181, 64
    %v4884 = vpop.permute.xlu0 %4883
    %4885 = vrot.lane.b32.xlu0 %v3182, 64
    %v4886 = vpop.permute.xlu0 %4885
    %4887 = vrot.lane.b32.xlu0 %v3183, 64
    %v4888 = vpop.permute.xlu0 %4887
    %4889 = vrot.lane.b32.xlu0 %v3184, 64
    %v4890 = vpop.permute.xlu0 %4889
    %4891 = vrot.lane.b32.xlu0 %v3185, 64
    %v4892 = vpop.permute.xlu0 %4891
    %4893 = vrot.lane.b32.xlu0 %v3186, 64
    %v4894 = vpop.permute.xlu0 %4893
    %4895 = vrot.lane.b32.xlu0 %v3187, 64
    %v4896 = vpop.permute.xlu0 %4895
    %4897 = vrot.lane.b32.xlu0 %v3188, 64
    %v4898 = vpop.permute.xlu0 %4897
    %4899 = vrot.lane.b32.xlu0 %v3189, 64
    %v4900 = vpop.permute.xlu0 %4899
    %4901 = vrot.lane.b32.xlu0 %v3190, 64
    %v4902 = vpop.permute.xlu0 %4901
    %4903 = vrot.lane.b32.xlu0 %v3191, 64
    %v4904 = vpop.permute.xlu0 %4903
    %4905 = vrot.lane.b32.xlu0 %v3192, 64
    %v4906 = vpop.permute.xlu0 %4905
    %4907 = vrot.lane.b32.xlu0 %v3193, 64
    %v4908 = vpop.permute.xlu0 %4907
    %4909 = vrot.lane.b32.xlu0 %v3194, 64
    %v4910 = vpop.permute.xlu0 %4909
    %4911 = vrot.lane.b32.xlu0 %v3195, 64
    %v4912 = vpop.permute.xlu0 %4911
    %4913 = vrot.lane.b32.xlu0 %v3196, 64
    %v4914 = vpop.permute.xlu0 %4913
    %4915 = vrot.lane.b32.xlu0 %v3197, 64
    %v4916 = vpop.permute.xlu0 %4915
    %4917 = vrot.lane.b32.xlu0 %v3198, 64
    %v4918 = vpop.permute.xlu0 %4917
    %4919 = vrot.lane.b32.xlu0 %v3199, 64
    %v4920 = vpop.permute.xlu0 %4919
    %4921 = vrot.lane.b32.xlu0 %v3200, 64
    %v4922 = vpop.permute.xlu0 %4921
    %4923 = vrot.lane.b32.xlu0 %v3201, 64
    %v4924 = vpop.permute.xlu0 %4923
    %4925 = vrot.lane.b32.xlu0 %v3202, 64
    %v4926 = vpop.permute.xlu0 %4925
    %4927 = vrot.lane.b32.xlu0 %v3203, 64
    %v4928 = vpop.permute.xlu0 %4927
    %4929 = vrot.lane.b32.xlu0 %v3204, 64
    %v4930 = vpop.permute.xlu0 %4929
    %4931 = vrot.lane.b32.xlu0 %v3205, 64
    %v4932 = vpop.permute.xlu0 %4931
    %4933 = vrot.lane.b32.xlu0 %v3206, 64
    %v4934 = vpop.permute.xlu0 %4933
    %4935 = vrot.lane.b32.xlu0 %v3207, 64
    %v4936 = vpop.permute.xlu0 %4935
    %4937 = vrot.lane.b32.xlu0 %v3208, 64
    %v4938 = vpop.permute.xlu0 %4937
    %4939 = vrot.lane.b32.xlu0 %v3209, 64
    %v4940 = vpop.permute.xlu0 %4939
    %4941 = vrot.lane.b32.xlu0 %v3210, 64
    %v4942 = vpop.permute.xlu0 %4941
    %4943 = vrot.lane.b32.xlu0 %v3211, 64
    %v4944 = vpop.permute.xlu0 %4943
    %4945 = vrot.lane.b32.xlu0 %v3212, 64
    %v4946 = vpop.permute.xlu0 %4945
    %4947 = vrot.lane.b32.xlu0 %v3213, 64
    %v4948 = vpop.permute.xlu0 %4947
    %4949 = vrot.lane.b32.xlu0 %v3214, 64
    %v4950 = vpop.permute.xlu0 %4949
    %4951 = vrot.lane.b32.xlu0 %v3215, 64
    %v4952 = vpop.permute.xlu0 %4951
    %4953 = vrot.lane.b32.xlu0 %v3216, 64
    %v4954 = vpop.permute.xlu0 %4953
    %4955 = vrot.lane.b32.xlu0 %v3217, 64
    %v4956 = vpop.permute.xlu0 %4955
    %4957 = vrot.lane.b32.xlu0 %v3218, 64
    %v4958 = vpop.permute.xlu0 %4957
    %4959 = vrot.lane.b32.xlu0 %v3219, 64
    %v4960 = vpop.permute.xlu0 %4959
    %4961 = vrot.lane.b32.xlu0 %v3220, 64
    %v4962 = vpop.permute.xlu0 %4961
    %4963 = vrot.lane.b32.xlu0 %v3221, 64
    %v4964 = vpop.permute.xlu0 %4963
    %4965 = vrot.lane.b32.xlu0 %v3222, 64
    %v4966 = vpop.permute.xlu0 %4965
    %4967 = vrot.lane.b32.xlu0 %v3223, 64
    %v4968 = vpop.permute.xlu0 %4967
    %4969 = vrot.lane.b32.xlu0 %v3224, 64
    %v4970 = vpop.permute.xlu0 %4969
    %4971 = vrot.lane.b32.xlu0 %v3225, 64
    %v4972 = vpop.permute.xlu0 %4971
    %4973 = vrot.lane.b32.xlu0 %v3226, 64
    %v4974 = vpop.permute.xlu0 %4973
    %4975 = vrot.lane.b32.xlu0 %v3227, 64
    %v4976 = vpop.permute.xlu0 %4975
    %4977 = vrot.lane.b32.xlu0 %v3228, 64
    %v4978 = vpop.permute.xlu0 %4977
    %4979 = vrot.lane.b32.xlu0 %v3229, 64
    %v4980 = vpop.permute.xlu0 %4979
    %4981 = vrot.lane.b32.xlu0 %v3230, 64
    %v4982 = vpop.permute.xlu0 %4981
    %4983 = vrot.lane.b32.xlu0 %v3231, 64
    %v4984 = vpop.permute.xlu0 %4983
    %4985 = vrot.lane.b32.xlu0 %v3232, 64
    %v4986 = vpop.permute.xlu0 %4985
    %4987 = vrot.lane.b32.xlu0 %v3233, 64
    %v4988 = vpop.permute.xlu0 %4987
    %4989 = vrot.lane.b32.xlu0 %v3234, 64
    %v4990 = vpop.permute.xlu0 %4989
    %4991 = vrot.lane.b32.xlu0 %v3235, 64
    %v4992 = vpop.permute.xlu0 %4991
    %4993 = vrot.lane.b32.xlu0 %v3236, 64
    %v4994 = vpop.permute.xlu0 %4993
    %4995 = vrot.lane.b32.xlu0 %v3237, 64
    %v4996 = vpop.permute.xlu0 %4995
    %4997 = vrot.lane.b32.xlu0 %v3238, 64
    %v4998 = vpop.permute.xlu0 %4997
    %4999 = vrot.lane.b32.xlu0 %v3239, 64
    %v5000 = vpop.permute.xlu0 %4999
    %5001 = vrot.lane.b32.xlu0 %v3240, 64
    %v5002 = vpop.permute.xlu0 %5001
    %5003 = vrot.lane.b32.xlu0 %v3241, 64
    %v5004 = vpop.permute.xlu0 %5003
    %5005 = vrot.lane.b32.xlu0 %v3242, 64
    %v5006 = vpop.permute.xlu0 %5005
    %5007 = vrot.lane.b32.xlu0 %v3243, 64
    %v5008 = vpop.permute.xlu0 %5007
    %5009 = vrot.lane.b32.xlu0 %v3244, 64
    %v5010 = vpop.permute.xlu0 %5009
    %5011 = vrot.lane.b32.xlu0 %v3245, 64
    %v5012 = vpop.permute.xlu0 %5011
    %5013 = vrot.lane.b32.xlu0 %v3246, 64
    %v5014 = vpop.permute.xlu0 %5013
    %5015 = vrot.lane.b32.xlu0 %v3247, 64
    %v5016 = vpop.permute.xlu0 %5015
    %5017 = vrot.lane.b32.xlu0 %v3248, 64
    %v5018 = vpop.permute.xlu0 %5017
    %5019 = vrot.lane.b32.xlu0 %v3249, 64
    %v5020 = vpop.permute.xlu0 %5019
    %5021 = vrot.lane.b32.xlu0 %v3250, 64
    %v5022 = vpop.permute.xlu0 %5021
    %5023 = vrot.lane.b32.xlu0 %v3251, 64
    %v5024 = vpop.permute.xlu0 %5023
    %5025 = vrot.lane.b32.xlu0 %v3252, 64
    %v5026 = vpop.permute.xlu0 %5025
    %5027 = vrot.lane.b32.xlu0 %v3253, 64
    %v5028 = vpop.permute.xlu0 %5027
    %5029 = vrot.lane.b32.xlu0 %v3254, 64
    %v5030 = vpop.permute.xlu0 %5029
    %5031 = vrot.lane.b32.xlu0 %v3255, 64
    %v5032 = vpop.permute.xlu0 %5031
    %5033 = vrot.lane.b32.xlu0 %v3256, 64
    %v5034 = vpop.permute.xlu0 %5033
    %5035 = vrot.lane.b32.xlu0 %v3257, 64
    %v5036 = vpop.permute.xlu0 %5035
    %5037 = vrot.lane.b32.xlu0 %v3258, 64
    %v5038 = vpop.permute.xlu0 %5037
    %5039 = vrot.lane.b32.xlu0 %v3259, 64
    %v5040 = vpop.permute.xlu0 %5039
    %5041 = vrot.lane.b32.xlu0 %v3260, 64
    %v5042 = vpop.permute.xlu0 %5041
    %5043 = vrot.lane.b32.xlu0 %v3261, 64
    %v5044 = vpop.permute.xlu0 %5043
    %5130 = vrot.lane.b32.xlu0 %v3431, 96
    %v5131 = vpop.permute.xlu0 %5130
    %5132 = vrot.lane.b32.xlu0 %v3432, 96
    %v5133 = vpop.permute.xlu0 %5132
    %5134 = vrot.lane.b32.xlu0 %v3433, 96
    %v5135 = vpop.permute.xlu0 %5134
    %5136 = vrot.lane.b32.xlu0 %v3434, 96
    %v5137 = vpop.permute.xlu0 %5136
    %5138 = vrot.lane.b32.xlu0 %v3435, 96
    %v5139 = vpop.permute.xlu0 %5138
    %5140 = vrot.lane.b32.xlu0 %v3436, 96
    %v5141 = vpop.permute.xlu0 %5140
    %5142 = vrot.lane.b32.xlu0 %v3437, 96
    %v5143 = vpop.permute.xlu0 %5142
    %5144 = vrot.lane.b32.xlu0 %v3438, 96
    %v5145 = vpop.permute.xlu0 %5144
    %5146 = vrot.lane.b32.xlu0 %v3439, 96
    %v5147 = vpop.permute.xlu0 %5146
    %5148 = vrot.lane.b32.xlu0 %v3440, 96
    %v5149 = vpop.permute.xlu0 %5148
    %5150 = vrot.lane.b32.xlu0 %v3441, 96
    %v5151 = vpop.permute.xlu0 %5150
    %5152 = vrot.lane.b32.xlu0 %v3442, 96
    %v5153 = vpop.permute.xlu0 %5152
    %5154 = vrot.lane.b32.xlu0 %v3443, 96
    %v5155 = vpop.permute.xlu0 %5154
    %5156 = vrot.lane.b32.xlu0 %v3444, 96
    %v5157 = vpop.permute.xlu0 %5156
    %5158 = vrot.lane.b32.xlu0 %v3445, 96
    %v5159 = vpop.permute.xlu0 %5158
    %5160 = vrot.lane.b32.xlu0 %v3446, 96
    %v5161 = vpop.permute.xlu0 %5160
    %5162 = vrot.lane.b32.xlu0 %v3447, 96
    %v5163 = vpop.permute.xlu0 %5162
    %5164 = vrot.lane.b32.xlu0 %v3448, 96
    %v5165 = vpop.permute.xlu0 %5164
    %5166 = vrot.lane.b32.xlu0 %v3449, 96
    %v5167 = vpop.permute.xlu0 %5166
    %5168 = vrot.lane.b32.xlu0 %v3450, 96
    %v5169 = vpop.permute.xlu0 %5168
    %5170 = vrot.lane.b32.xlu0 %v3451, 96
    %v5171 = vpop.permute.xlu0 %5170
    %5172 = vrot.lane.b32.xlu0 %v3452, 96
    %v5173 = vpop.permute.xlu0 %5172
    %5174 = vrot.lane.b32.xlu0 %v3453, 96
    %v5175 = vpop.permute.xlu0 %5174
    %5176 = vrot.lane.b32.xlu0 %v3454, 96
    %v5177 = vpop.permute.xlu0 %5176
    %5178 = vrot.lane.b32.xlu0 %v3455, 96
    %v5179 = vpop.permute.xlu0 %5178
    %5180 = vrot.lane.b32.xlu0 %v3456, 96
    %v5181 = vpop.permute.xlu0 %5180
    %5182 = vrot.lane.b32.xlu0 %v3457, 96
    %v5183 = vpop.permute.xlu0 %5182
    %5184 = vrot.lane.b32.xlu0 %v3458, 96
    %v5185 = vpop.permute.xlu0 %5184
    %5186 = vrot.lane.b32.xlu0 %v3459, 96
    %v5187 = vpop.permute.xlu0 %5186
    %5188 = vrot.lane.b32.xlu0 %v3460, 96
    %v5189 = vpop.permute.xlu0 %5188
    %5190 = vrot.lane.b32.xlu0 %v3461, 96
    %v5191 = vpop.permute.xlu0 %5190
    %5192 = vrot.lane.b32.xlu0 %v3462, 96
    %v5193 = vpop.permute.xlu0 %5192
    %5194 = vrot.lane.b32.xlu0 %v3463, 96
    %v5195 = vpop.permute.xlu0 %5194
    %5196 = vrot.lane.b32.xlu0 %v3464, 96
    %v5197 = vpop.permute.xlu0 %5196
    %5198 = vrot.lane.b32.xlu0 %v3465, 96
    %v5199 = vpop.permute.xlu0 %5198
    %5200 = vrot.lane.b32.xlu0 %v3466, 96
    %v5201 = vpop.permute.xlu0 %5200
    %5202 = vrot.lane.b32.xlu0 %v3467, 96
    %v5203 = vpop.permute.xlu0 %5202
    %5204 = vrot.lane.b32.xlu0 %v3468, 96
    %v5205 = vpop.permute.xlu0 %5204
    %5206 = vrot.lane.b32.xlu0 %v3469, 96
    %v5207 = vpop.permute.xlu0 %5206
    %5208 = vrot.lane.b32.xlu0 %v3470, 96
    %v5209 = vpop.permute.xlu0 %5208
    %5210 = vrot.lane.b32.xlu0 %v3471, 96
    %v5211 = vpop.permute.xlu0 %5210
    %5212 = vrot.lane.b32.xlu0 %v3472, 96
    %v5213 = vpop.permute.xlu0 %5212
    %5214 = vrot.lane.b32.xlu0 %v3473, 96
    %v5215 = vpop.permute.xlu0 %5214
    %5216 = vrot.lane.b32.xlu0 %v3474, 96
    %v5217 = vpop.permute.xlu0 %5216
    %5218 = vrot.lane.b32.xlu0 %v3475, 96
    %v5219 = vpop.permute.xlu0 %5218
    %5220 = vrot.lane.b32.xlu0 %v3476, 96
    %v5221 = vpop.permute.xlu0 %5220
    %5222 = vrot.lane.b32.xlu0 %v3477, 96
    %v5223 = vpop.permute.xlu0 %5222
    %5224 = vrot.lane.b32.xlu0 %v3478, 96
    %v5225 = vpop.permute.xlu0 %5224
    %5226 = vrot.lane.b32.xlu0 %v3479, 96
    %v5227 = vpop.permute.xlu0 %5226
    %5228 = vrot.lane.b32.xlu0 %v3480, 96
    %v5229 = vpop.permute.xlu0 %5228
    %5230 = vrot.lane.b32.xlu0 %v3481, 96
    %v5231 = vpop.permute.xlu0 %5230
    %5232 = vrot.lane.b32.xlu0 %v3482, 96
    %v5233 = vpop.permute.xlu0 %5232
    %5234 = vrot.lane.b32.xlu0 %v3483, 96
    %v5235 = vpop.permute.xlu0 %5234
    %5236 = vrot.lane.b32.xlu0 %v3484, 96
    %v5237 = vpop.permute.xlu0 %5236
    %5238 = vrot.lane.b32.xlu0 %v3485, 96
    %v5239 = vpop.permute.xlu0 %5238
    %5240 = vrot.lane.b32.xlu0 %v3486, 96
    %v5241 = vpop.permute.xlu0 %5240
    %5242 = vrot.lane.b32.xlu0 %v3487, 96
    %v5243 = vpop.permute.xlu0 %5242
    %5244 = vrot.lane.b32.xlu0 %v3488, 96
    %v5245 = vpop.permute.xlu0 %5244
    %5246 = vrot.lane.b32.xlu0 %v3489, 96
    %v5247 = vpop.permute.xlu0 %5246
    %5248 = vrot.lane.b32.xlu0 %v3490, 96
    %v5249 = vpop.permute.xlu0 %5248
    %5250 = vrot.lane.b32.xlu0 %v3491, 96
    %v5251 = vpop.permute.xlu0 %5250
    %5252 = vrot.lane.b32.xlu0 %v3492, 96
    %v5253 = vpop.permute.xlu0 %5252
    %5254 = vrot.lane.b32.xlu0 %v3493, 96
    %v5255 = vpop.permute.xlu0 %5254
    %5256 = vrot.lane.b32.xlu0 %v3494, 96
    %v5257 = vpop.permute.xlu0 %5256
    %5258 = vrot.lane.b32.xlu0 %v3495, 96
    %v5259 = vpop.permute.xlu0 %5258
    %5260 = vrot.lane.b32.xlu0 %v3496, 96
    %v5261 = vpop.permute.xlu0 %5260
    %5262 = vrot.lane.b32.xlu0 %v3497, 96
    %v5263 = vpop.permute.xlu0 %5262
    %5264 = vrot.lane.b32.xlu0 %v3498, 96
    %v5265 = vpop.permute.xlu0 %5264
    %5266 = vrot.lane.b32.xlu0 %v3499, 96
    %v5267 = vpop.permute.xlu0 %5266
    %5268 = vrot.lane.b32.xlu0 %v3500, 96
    %v5269 = vpop.permute.xlu0 %5268
    %5270 = vrot.lane.b32.xlu0 %v3501, 96
    %v5271 = vpop.permute.xlu0 %5270
    %5272 = vrot.lane.b32.xlu0 %v3502, 96
    %v5273 = vpop.permute.xlu0 %5272
    %5274 = vrot.lane.b32.xlu0 %v3503, 96
    %v5275 = vpop.permute.xlu0 %5274
    %5276 = vrot.lane.b32.xlu0 %v3504, 96
    %v5277 = vpop.permute.xlu0 %5276
    %5278 = vrot.lane.b32.xlu0 %v3505, 96
    %v5279 = vpop.permute.xlu0 %5278
    %5280 = vrot.lane.b32.xlu0 %v3506, 96
    %v5281 = vpop.permute.xlu0 %5280
    %5282 = vrot.lane.b32.xlu0 %v3507, 96
    %v5283 = vpop.permute.xlu0 %5282
    %5284 = vrot.lane.b32.xlu0 %v3508, 96
    %v5285 = vpop.permute.xlu0 %5284
    %5286 = vrot.lane.b32.xlu0 %v3509, 96
    %v5287 = vpop.permute.xlu0 %5286
    %5288 = vrot.lane.b32.xlu0 %v3510, 96
    %v5289 = vpop.permute.xlu0 %5288
    %5290 = vrot.lane.b32.xlu0 %v3511, 96
    %v5291 = vpop.permute.xlu0 %5290
    %5292 = vrot.lane.b32.xlu0 %v3512, 96
    %v5293 = vpop.permute.xlu0 %5292
    %5294 = vrot.lane.b32.xlu0 %v3513, 96
    %v5295 = vpop.permute.xlu0 %5294
    %5296 = vrot.lane.b32.xlu0 %v3514, 96
    %v5297 = vpop.permute.xlu0 %5296
    %5298 = vrot.lane.b32.xlu0 %v3515, 96
    %v5299 = vpop.permute.xlu0 %5298
    %v5302 = vsel %vm1808, %v1985, %v3856
    %v5305 = vsel %vm1808, %v1986, %v3858
    %v5308 = vsel %vm1808, %v1987, %v3860
    %v5311 = vsel %vm1808, %v1988, %v3862
    %v5314 = vsel %vm1808, %v1989, %v3864
    %v5317 = vsel %vm1808, %v1990, %v3866
    %v5320 = vsel %vm1808, %v1991, %v3868
    %v5323 = vsel %vm1808, %v1992, %v3870
    %v5326 = vsel %vm1808, %v1993, %v3872
    %v5329 = vsel %vm1808, %v1994, %v3874
    %v5332 = vsel %vm1808, %v1995, %v3876
    %v5335 = vsel %vm1808, %v1996, %v3878
    %v5338 = vsel %vm1808, %v1997, %v3880
    %v5341 = vsel %vm1808, %v1998, %v3882
    %v5344 = vsel %vm1808, %v1999, %v3884
    %v5347 = vsel %vm1808, %v2000, %v3886
    %v5350 = vsel %vm1808, %v2001, %v3888
    %v5353 = vsel %vm1808, %v2002, %v3890
    %v5356 = vsel %vm1808, %v2003, %v3892
    %v5359 = vsel %vm1808, %v2004, %v3894
    %v5362 = vsel %vm1808, %v2005, %v3896
    %v5365 = vsel %vm1808, %v2006, %v3898
    %v5368 = vsel %vm1808, %v2007, %v3900
    %v5371 = vsel %vm1808, %v2008, %v3902
    %v5374 = vsel %vm1808, %v2009, %v3904
    %v5377 = vsel %vm1808, %v2010, %v3906
    %v5380 = vsel %vm1808, %v2011, %v3908
    %v5383 = vsel %vm1808, %v2012, %v3910
    %v5386 = vsel %vm1808, %v2013, %v3912
    %v5389 = vsel %vm1808, %v2014, %v3914
    %v5392 = vsel %vm1808, %v2015, %v3916
    %v5395 = vsel %vm1808, %v2016, %v3918
    %v5398 = vsel %vm1808, %v2017, %v3920
    %v5401 = vsel %vm1808, %v2018, %v3922
    %v5404 = vsel %vm1808, %v2019, %v3924
    %v5407 = vsel %vm1808, %v2020, %v3926
    %v5410 = vsel %vm1808, %v2021, %v3928
    %v5413 = vsel %vm1808, %v2022, %v3930
    %v5416 = vsel %vm1808, %v2023, %v3932
    %v5419 = vsel %vm1808, %v2024, %v3934
    %v5422 = vsel %vm1808, %v2025, %v3936
    %v5425 = vsel %vm1808, %v2026, %v3938
    %v5428 = vsel %vm1808, %v2027, %v3940
    %v5431 = vsel %vm1808, %v2028, %v3942
    %v5434 = vsel %vm1808, %v2029, %v3944
    %v5437 = vsel %vm1808, %v2030, %v3946
    %v5440 = vsel %vm1808, %v2031, %v3948
    %v5443 = vsel %vm1808, %v2032, %v3950
    %v5446 = vsel %vm1808, %v2033, %v3952
    %v5449 = vsel %vm1808, %v2034, %v3954
    %v5452 = vsel %vm1808, %v2035, %v3956
    %v5455 = vsel %vm1808, %v2036, %v3958
    %v5458 = vsel %vm1808, %v2037, %v3960
    %v5461 = vsel %vm1808, %v2038, %v3962
    %v5464 = vsel %vm1808, %v2039, %v3964
    %v5467 = vsel %vm1808, %v2040, %v3966
    %v5470 = vsel %vm1808, %v2041, %v3968
    %v5473 = vsel %vm1808, %v2042, %v3970
    %v5476 = vsel %vm1808, %v2043, %v3972
    %v5479 = vsel %vm1808, %v2044, %v3974
    %v5482 = vsel %vm1808, %v2045, %v3976
    %v5485 = vsel %vm1808, %v2046, %v3978
    %v5488 = vsel %vm1808, %v2047, %v3980
    %v5491 = vsel %vm1808, %v2048, %v3982
    %v5494 = vsel %vm1808, %v2049, %v3984
    %v5497 = vsel %vm1808, %v2050, %v3986
    %v5500 = vsel %vm1808, %v2051, %v3988
    %v5503 = vsel %vm1808, %v2052, %v3990
    %v5506 = vsel %vm1808, %v2053, %v3992
    %v5509 = vsel %vm1808, %v2054, %v3994
    %v5512 = vsel %vm1808, %v2055, %v3996
    %v5515 = vsel %vm1808, %v2056, %v3998
    %v5518 = vsel %vm1808, %v2057, %v4000
    %v5521 = vsel %vm1808, %v2058, %v4002
    %v5524 = vsel %vm1808, %v2059, %v4004
    %v5527 = vsel %vm1808, %v2060, %v4006
    %v5530 = vsel %vm1808, %v2061, %v4008
    %v5533 = vsel %vm1808, %v2062, %v4010
    %v5536 = vsel %vm1808, %v2063, %v4012
    %v5539 = vsel %vm1808, %v2064, %v4014
    %v5542 = vsel %vm1808, %v2065, %v4016
    %v5545 = vsel %vm1808, %v2066, %v4018
    %v5548 = vsel %vm1808, %v2067, %v4020
    %v5551 = vsel %vm1808, %v2068, %v4022
    %v5554 = vsel %vm1808, %v2069, %v4024
    %vm5555 = vcmask 523264
    %v5557 = vsel %vm5555, %v5302, %v4111
    %v5559 = vsel %vm5555, %v5305, %v4113
    %v5561 = vsel %vm5555, %v5308, %v4115
    %v5563 = vsel %vm5555, %v5311, %v4117
    %v5565 = vsel %vm5555, %v5314, %v4119
    %v5567 = vsel %vm5555, %v5317, %v4121
    %v5569 = vsel %vm5555, %v5320, %v4123
    %v5571 = vsel %vm5555, %v5323, %v4125
    %v5573 = vsel %vm5555, %v5326, %v4127
    %v5575 = vsel %vm5555, %v5329, %v4129
    %v5577 = vsel %vm5555, %v5332, %v4131
    %v5579 = vsel %vm5555, %v5335, %v4133
    %v5581 = vsel %vm5555, %v5338, %v4135
    %v5583 = vsel %vm5555, %v5341, %v4137
    %v5585 = vsel %vm5555, %v5344, %v4139
    %v5587 = vsel %vm5555, %v5347, %v4141
    %v5589 = vsel %vm5555, %v5350, %v4143
    %v5591 = vsel %vm5555, %v5353, %v4145
    %v5593 = vsel %vm5555, %v5356, %v4147
    %v5595 = vsel %vm5555, %v5359, %v4149
    %v5597 = vsel %vm5555, %v5362, %v4151
    %v5599 = vsel %vm5555, %v5365, %v4153
    %v5601 = vsel %vm5555, %v5368, %v4155
    %v5603 = vsel %vm5555, %v5371, %v4157
    %v5605 = vsel %vm5555, %v5374, %v4159
    %v5607 = vsel %vm5555, %v5377, %v4161
    %v5609 = vsel %vm5555, %v5380, %v4163
    %v5611 = vsel %vm5555, %v5383, %v4165
    %v5613 = vsel %vm5555, %v5386, %v4167
    %v5615 = vsel %vm5555, %v5389, %v4169
    %v5617 = vsel %vm5555, %v5392, %v4171
    %v5619 = vsel %vm5555, %v5395, %v4173
    %v5621 = vsel %vm5555, %v5398, %v4175
    %v5623 = vsel %vm5555, %v5401, %v4177
    %v5625 = vsel %vm5555, %v5404, %v4179
    %v5627 = vsel %vm5555, %v5407, %v4181
    %v5629 = vsel %vm5555, %v5410, %v4183
    %v5631 = vsel %vm5555, %v5413, %v4185
    %v5633 = vsel %vm5555, %v5416, %v4187
    %v5635 = vsel %vm5555, %v5419, %v4189
    %v5637 = vsel %vm5555, %v5422, %v4191
    %v5639 = vsel %vm5555, %v5425, %v4193
    %v5641 = vsel %vm5555, %v5428, %v4195
    %v5643 = vsel %vm5555, %v5431, %v4197
    %v5645 = vsel %vm5555, %v5434, %v4199
    %v5647 = vsel %vm5555, %v5437, %v4201
    %v5649 = vsel %vm5555, %v5440, %v4203
    %v5651 = vsel %vm5555, %v5443, %v4205
    %v5653 = vsel %vm5555, %v5446, %v4207
    %v5655 = vsel %vm5555, %v5449, %v4209
    %v5657 = vsel %vm5555, %v5452, %v4211
    %v5659 = vsel %vm5555, %v5455, %v4213
    %v5661 = vsel %vm5555, %v5458, %v4215
    %v5663 = vsel %vm5555, %v5461, %v4217
    %v5665 = vsel %vm5555, %v5464, %v4219
    %v5667 = vsel %vm5555, %v5467, %v4221
    %v5669 = vsel %vm5555, %v5470, %v4223
    %v5671 = vsel %vm5555, %v5473, %v4225
    %v5673 = vsel %vm5555, %v5476, %v4227
    %v5675 = vsel %vm5555, %v5479, %v4229
    %v5677 = vsel %vm5555, %v5482, %v4231
    %v5679 = vsel %vm5555, %v5485, %v4233
    %v5681 = vsel %vm5555, %v5488, %v4235
    %v5683 = vsel %vm5555, %v5491, %v4237
    %v5685 = vsel %vm5555, %v5494, %v4239
    %v5687 = vsel %vm5555, %v5497, %v4241
    %v5689 = vsel %vm5555, %v5500, %v4243
    %v5691 = vsel %vm5555, %v5503, %v4245
    %v5693 = vsel %vm5555, %v5506, %v4247
    %v5695 = vsel %vm5555, %v5509, %v4249
    %v5697 = vsel %vm5555, %v5512, %v4251
    %v5699 = vsel %vm5555, %v5515, %v4253
    %v5701 = vsel %vm5555, %v5518, %v4255
    %v5703 = vsel %vm5555, %v5521, %v4257
    %v5705 = vsel %vm5555, %v5524, %v4259
    %v5707 = vsel %vm5555, %v5527, %v4261
    %v5709 = vsel %vm5555, %v5530, %v4263
    %v5711 = vsel %vm5555, %v5533, %v4265
    %v5713 = vsel %vm5555, %v5536, %v4267
    %v5715 = vsel %vm5555, %v5539, %v4269
    %v5717 = vsel %vm5555, %v5542, %v4271
    %v5719 = vsel %vm5555, %v5545, %v4273
    %v5721 = vsel %vm5555, %v5548, %v4275
    %v5723 = vsel %vm5555, %v5551, %v4277
    %v5725 = vsel %vm5555, %v5554, %v4279
    %vm5726 = vcmask 785408
    %v5728 = vsel %vm5726, %v5557, %v4366
    %v5731 = vsel %vm5726, %v5559, %v4368
    %v5734 = vsel %vm5726, %v5561, %v4370
    %v5737 = vsel %vm5726, %v5563, %v4372
    %v5740 = vsel %vm5726, %v5565, %v4374
    %v5743 = vsel %vm5726, %v5567, %v4376
    %v5746 = vsel %vm5726, %v5569, %v4378
    %v5749 = vsel %vm5726, %v5571, %v4380
    %v5752 = vsel %vm5726, %v5573, %v4382
    %v5755 = vsel %vm5726, %v5575, %v4384
    %v5758 = vsel %vm5726, %v5577, %v4386
    %v5761 = vsel %vm5726, %v5579, %v4388
    %v5764 = vsel %vm5726, %v5581, %v4390
    %v5767 = vsel %vm5726, %v5583, %v4392
    %v5770 = vsel %vm5726, %v5585, %v4394
    %v5773 = vsel %vm5726, %v5587, %v4396
    %v5776 = vsel %vm5726, %v5589, %v4398
    %v5779 = vsel %vm5726, %v5591, %v4400
    %v5782 = vsel %vm5726, %v5593, %v4402
    %v5785 = vsel %vm5726, %v5595, %v4404
    %v5788 = vsel %vm5726, %v5597, %v4406
    %v5791 = vsel %vm5726, %v5599, %v4408
    %v5794 = vsel %vm5726, %v5601, %v4410
    %v5797 = vsel %vm5726, %v5603, %v4412
    %v5800 = vsel %vm5726, %v5605, %v4414
    %v5803 = vsel %vm5726, %v5607, %v4416
    %v5806 = vsel %vm5726, %v5609, %v4418
    %v5809 = vsel %vm5726, %v5611, %v4420
    %v5812 = vsel %vm5726, %v5613, %v4422
    %v5815 = vsel %vm5726, %v5615, %v4424
    %v5818 = vsel %vm5726, %v5617, %v4426
    %v5821 = vsel %vm5726, %v5619, %v4428
    %v5824 = vsel %vm5726, %v5621, %v4430
    %v5827 = vsel %vm5726, %v5623, %v4432
    %v5830 = vsel %vm5726, %v5625, %v4434
    %v5833 = vsel %vm5726, %v5627, %v4436
    %v5836 = vsel %vm5726, %v5629, %v4438
    %v5839 = vsel %vm5726, %v5631, %v4440
    %v5842 = vsel %vm5726, %v5633, %v4442
    %v5845 = vsel %vm5726, %v5635, %v4444
    %v5848 = vsel %vm5726, %v5637, %v4446
    %v5851 = vsel %vm5726, %v5639, %v4448
    %v5854 = vsel %vm5726, %v5641, %v4450
    %v5857 = vsel %vm5726, %v5643, %v4452
    %v5860 = vsel %vm5726, %v5645, %v4454
    %v5863 = vsel %vm5726, %v5647, %v4456
    %v5866 = vsel %vm5726, %v5649, %v4458
    %v5869 = vsel %vm5726, %v5651, %v4460
    %v5872 = vsel %vm5726, %v5653, %v4462
    %v5875 = vsel %vm5726, %v5655, %v4464
    %v5878 = vsel %vm5726, %v5657, %v4466
    %v5881 = vsel %vm5726, %v5659, %v4468
    %v5884 = vsel %vm5726, %v5661, %v4470
    %v5887 = vsel %vm5726, %v5663, %v4472
    %v5890 = vsel %vm5726, %v5665, %v4474
    %v5893 = vsel %vm5726, %v5667, %v4476
    %v5896 = vsel %vm5726, %v5669, %v4478
    %v5899 = vsel %vm5726, %v5671, %v4480
    %v5902 = vsel %vm5726, %v5673, %v4482
    %v5905 = vsel %vm5726, %v5675, %v4484
    %v5908 = vsel %vm5726, %v5677, %v4486
    %v5911 = vsel %vm5726, %v5679, %v4488
    %v5914 = vsel %vm5726, %v5681, %v4490
    %v5917 = vsel %vm5726, %v5683, %v4492
    %v5920 = vsel %vm5726, %v5685, %v4494
    %v5923 = vsel %vm5726, %v5687, %v4496
    %v5926 = vsel %vm5726, %v5689, %v4498
    %v5929 = vsel %vm5726, %v5691, %v4500
    %v5932 = vsel %vm5726, %v5693, %v4502
    %v5935 = vsel %vm5726, %v5695, %v4504
    %v5938 = vsel %vm5726, %v5697, %v4506
    %v5941 = vsel %vm5726, %v5699, %v4508
    %v5944 = vsel %vm5726, %v5701, %v4510
    %v5947 = vsel %vm5726, %v5703, %v4512
    %v5950 = vsel %vm5726, %v5705, %v4514
    %v5953 = vsel %vm5726, %v5707, %v4516
    %v5956 = vsel %vm5726, %v5709, %v4518
    %v5959 = vsel %vm5726, %v5711, %v4520
    %v5962 = vsel %vm5726, %v5713, %v4522
    %v5965 = vsel %vm5726, %v5715, %v4524
    %v5968 = vsel %vm5726, %v5717, %v4526
    %v5971 = vsel %vm5726, %v5719, %v4528
    %v5974 = vsel %vm5726, %v5721, %v4530
    %v5977 = vsel %vm5726, %v5723, %v4532
    %v5980 = vsel %vm5726, %v5725, %v4534
    %v5984 = vsel %vm1808, %v2835, %v4621
    %v5987 = vsel %vm1808, %v2836, %v4623
    %v5990 = vsel %vm1808, %v2837, %v4625
    %v5993 = vsel %vm1808, %v2838, %v4627
    %v5996 = vsel %vm1808, %v2839, %v4629
    %v5999 = vsel %vm1808, %v2840, %v4631
    %v6002 = vsel %vm1808, %v2841, %v4633
    %v6005 = vsel %vm1808, %v2842, %v4635
    %v6008 = vsel %vm1808, %v2843, %v4637
    %v6011 = vsel %vm1808, %v2844, %v4639
    %v6014 = vsel %vm1808, %v2845, %v4641
    %v6017 = vsel %vm1808, %v2846, %v4643
    %v6020 = vsel %vm1808, %v2847, %v4645
    %v6023 = vsel %vm1808, %v2848, %v4647
    %v6026 = vsel %vm1808, %v2849, %v4649
    %v6029 = vsel %vm1808, %v2850, %v4651
    %v6032 = vsel %vm1808, %v2851, %v4653
    %v6035 = vsel %vm1808, %v2852, %v4655
    %v6038 = vsel %vm1808, %v2853, %v4657
    %v6041 = vsel %vm1808, %v2854, %v4659
    %v6044 = vsel %vm1808, %v2855, %v4661
    %v6047 = vsel %vm1808, %v2856, %v4663
    %v6050 = vsel %vm1808, %v2857, %v4665
    %v6053 = vsel %vm1808, %v2858, %v4667
    %v6056 = vsel %vm1808, %v2859, %v4669
    %v6059 = vsel %vm1808, %v2860, %v4671
    %v6062 = vsel %vm1808, %v2861, %v4673
    %v6065 = vsel %vm1808, %v2862, %v4675
    %v6068 = vsel %vm1808, %v2863, %v4677
    %v6071 = vsel %vm1808, %v2864, %v4679
    %v6074 = vsel %vm1808, %v2865, %v4681
    %v6077 = vsel %vm1808, %v2866, %v4683
    %v6080 = vsel %vm1808, %v2867, %v4685
    %v6083 = vsel %vm1808, %v2868, %v4687
    %v6086 = vsel %vm1808, %v2869, %v4689
    %v6089 = vsel %vm1808, %v2870, %v4691
    %v6092 = vsel %vm1808, %v2871, %v4693
    %v6095 = vsel %vm1808, %v2872, %v4695
    %v6098 = vsel %vm1808, %v2873, %v4697
    %v6101 = vsel %vm1808, %v2874, %v4699
    %v6104 = vsel %vm1808, %v2875, %v4701
    %v6107 = vsel %vm1808, %v2876, %v4703
    %v6110 = vsel %vm1808, %v2877, %v4705
    %v6113 = vsel %vm1808, %v2878, %v4707
    %v6116 = vsel %vm1808, %v2879, %v4709
    %v6119 = vsel %vm1808, %v2880, %v4711
    %v6122 = vsel %vm1808, %v2881, %v4713
    %v6125 = vsel %vm1808, %v2882, %v4715
    %v6128 = vsel %vm1808, %v2883, %v4717
    %v6131 = vsel %vm1808, %v2884, %v4719
    %v6134 = vsel %vm1808, %v2885, %v4721
    %v6137 = vsel %vm1808, %v2886, %v4723
    %v6140 = vsel %vm1808, %v2887, %v4725
    %v6143 = vsel %vm1808, %v2888, %v4727
    %v6146 = vsel %vm1808, %v2889, %v4729
    %v6149 = vsel %vm1808, %v2890, %v4731
    %v6152 = vsel %vm1808, %v2891, %v4733
    %v6155 = vsel %vm1808, %v2892, %v4735
    %v6158 = vsel %vm1808, %v2893, %v4737
    %v6161 = vsel %vm1808, %v2894, %v4739
    %v6164 = vsel %vm1808, %v2895, %v4741
    %v6167 = vsel %vm1808, %v2896, %v4743
    %v6170 = vsel %vm1808, %v2897, %v4745
    %v6173 = vsel %vm1808, %v2898, %v4747
    %v6176 = vsel %vm1808, %v2899, %v4749
    %v6179 = vsel %vm1808, %v2900, %v4751
    %v6182 = vsel %vm1808, %v2901, %v4753
    %v6185 = vsel %vm1808, %v2902, %v4755
    %v6188 = vsel %vm1808, %v2903, %v4757
    %v6191 = vsel %vm1808, %v2904, %v4759
    %v6194 = vsel %vm1808, %v2905, %v4761
    %v6197 = vsel %vm1808, %v2906, %v4763
    %v6200 = vsel %vm1808, %v2907, %v4765
    %v6203 = vsel %vm1808, %v2908, %v4767
    %v6206 = vsel %vm1808, %v2909, %v4769
    %v6209 = vsel %vm1808, %v2910, %v4771
    %v6212 = vsel %vm1808, %v2911, %v4773
    %v6215 = vsel %vm1808, %v2912, %v4775
    %v6218 = vsel %vm1808, %v2913, %v4777
    %v6221 = vsel %vm1808, %v2914, %v4779
    %v6224 = vsel %vm1808, %v2915, %v4781
    %v6227 = vsel %vm1808, %v2916, %v4783
    %v6230 = vsel %vm1808, %v2917, %v4785
    %v6233 = vsel %vm1808, %v2918, %v4787
    %v6236 = vsel %vm1808, %v2919, %v4789
    %v6238 = vsel %vm5555, %v5984, %v4876
    %v6240 = vsel %vm5555, %v5987, %v4878
    %v6242 = vsel %vm5555, %v5990, %v4880
    %v6244 = vsel %vm5555, %v5993, %v4882
    %v6246 = vsel %vm5555, %v5996, %v4884
    %v6248 = vsel %vm5555, %v5999, %v4886
    %v6250 = vsel %vm5555, %v6002, %v4888
    %v6252 = vsel %vm5555, %v6005, %v4890
    %v6254 = vsel %vm5555, %v6008, %v4892
    %v6256 = vsel %vm5555, %v6011, %v4894
    %v6258 = vsel %vm5555, %v6014, %v4896
    %v6260 = vsel %vm5555, %v6017, %v4898
    %v6262 = vsel %vm5555, %v6020, %v4900
    %v6264 = vsel %vm5555, %v6023, %v4902
    %v6266 = vsel %vm5555, %v6026, %v4904
    %v6268 = vsel %vm5555, %v6029, %v4906
    %v6270 = vsel %vm5555, %v6032, %v4908
    %v6272 = vsel %vm5555, %v6035, %v4910
    %v6274 = vsel %vm5555, %v6038, %v4912
    %v6276 = vsel %vm5555, %v6041, %v4914
    %v6278 = vsel %vm5555, %v6044, %v4916
    %v6280 = vsel %vm5555, %v6047, %v4918
    %v6282 = vsel %vm5555, %v6050, %v4920
    %v6284 = vsel %vm5555, %v6053, %v4922
    %v6286 = vsel %vm5555, %v6056, %v4924
    %v6288 = vsel %vm5555, %v6059, %v4926
    %v6290 = vsel %vm5555, %v6062, %v4928
    %v6292 = vsel %vm5555, %v6065, %v4930
    %v6294 = vsel %vm5555, %v6068, %v4932
    %v6296 = vsel %vm5555, %v6071, %v4934
    %v6298 = vsel %vm5555, %v6074, %v4936
    %v6300 = vsel %vm5555, %v6077, %v4938
    %v6302 = vsel %vm5555, %v6080, %v4940
    %v6304 = vsel %vm5555, %v6083, %v4942
    %v6306 = vsel %vm5555, %v6086, %v4944
    %v6308 = vsel %vm5555, %v6089, %v4946
    %v6310 = vsel %vm5555, %v6092, %v4948
    %v6312 = vsel %vm5555, %v6095, %v4950
    %v6314 = vsel %vm5555, %v6098, %v4952
    %v6316 = vsel %vm5555, %v6101, %v4954
    %v6318 = vsel %vm5555, %v6104, %v4956
    %v6320 = vsel %vm5555, %v6107, %v4958
    %v6322 = vsel %vm5555, %v6110, %v4960
    %v6324 = vsel %vm5555, %v6113, %v4962
    %v6326 = vsel %vm5555, %v6116, %v4964
    %v6328 = vsel %vm5555, %v6119, %v4966
    %v6330 = vsel %vm5555, %v6122, %v4968
    %v6332 = vsel %vm5555, %v6125, %v4970
    %v6334 = vsel %vm5555, %v6128, %v4972
    %v6336 = vsel %vm5555, %v6131, %v4974
    %v6338 = vsel %vm5555, %v6134, %v4976
    %v6340 = vsel %vm5555, %v6137, %v4978
    %v6342 = vsel %vm5555, %v6140, %v4980
    %v6344 = vsel %vm5555, %v6143, %v4982
    %v6346 = vsel %vm5555, %v6146, %v4984
    %v6348 = vsel %vm5555, %v6149, %v4986
    %v6350 = vsel %vm5555, %v6152, %v4988
    %v6352 = vsel %vm5555, %v6155, %v4990
    %v6354 = vsel %vm5555, %v6158, %v4992
    %v6356 = vsel %vm5555, %v6161, %v4994
    %v6358 = vsel %vm5555, %v6164, %v4996
    %v6360 = vsel %vm5555, %v6167, %v4998
    %v6362 = vsel %vm5555, %v6170, %v5000
    %v6364 = vsel %vm5555, %v6173, %v5002
    %v6366 = vsel %vm5555, %v6176, %v5004
    %v6368 = vsel %vm5555, %v6179, %v5006
    %v6370 = vsel %vm5555, %v6182, %v5008
    %v6372 = vsel %vm5555, %v6185, %v5010
    %v6374 = vsel %vm5555, %v6188, %v5012
    %v6376 = vsel %vm5555, %v6191, %v5014
    %v6378 = vsel %vm5555, %v6194, %v5016
    %v6380 = vsel %vm5555, %v6197, %v5018
    %v6382 = vsel %vm5555, %v6200, %v5020
    %v6384 = vsel %vm5555, %v6203, %v5022
    %v6386 = vsel %vm5555, %v6206, %v5024
    %v6388 = vsel %vm5555, %v6209, %v5026
    %v6390 = vsel %vm5555, %v6212, %v5028
    %v6392 = vsel %vm5555, %v6215, %v5030
    %v6394 = vsel %vm5555, %v6218, %v5032
    %v6396 = vsel %vm5555, %v6221, %v5034
    %v6398 = vsel %vm5555, %v6224, %v5036
    %v6400 = vsel %vm5555, %v6227, %v5038
    %v6402 = vsel %vm5555, %v6230, %v5040
    %v6404 = vsel %vm5555, %v6233, %v5042
    %v6406 = vsel %vm5555, %v6236, %v5044
    %v6408 = vsel %vm5726, %v6238, %v5131
    %v6411 = vsel %vm5726, %v6240, %v5133
    %v6414 = vsel %vm5726, %v6242, %v5135
    %v6417 = vsel %vm5726, %v6244, %v5137
    %v6420 = vsel %vm5726, %v6246, %v5139
    %v6423 = vsel %vm5726, %v6248, %v5141
    %v6426 = vsel %vm5726, %v6250, %v5143
    %v6429 = vsel %vm5726, %v6252, %v5145
    %v6432 = vsel %vm5726, %v6254, %v5147
    %v6435 = vsel %vm5726, %v6256, %v5149
    %v6438 = vsel %vm5726, %v6258, %v5151
    %v6441 = vsel %vm5726, %v6260, %v5153
    %v6444 = vsel %vm5726, %v6262, %v5155
    %v6447 = vsel %vm5726, %v6264, %v5157
    %v6450 = vsel %vm5726, %v6266, %v5159
    %v6453 = vsel %vm5726, %v6268, %v5161
    %v6456 = vsel %vm5726, %v6270, %v5163
    %v6459 = vsel %vm5726, %v6272, %v5165
    %v6462 = vsel %vm5726, %v6274, %v5167
    %v6465 = vsel %vm5726, %v6276, %v5169
    %v6468 = vsel %vm5726, %v6278, %v5171
    %v6471 = vsel %vm5726, %v6280, %v5173
    %v6474 = vsel %vm5726, %v6282, %v5175
    %v6477 = vsel %vm5726, %v6284, %v5177
    %v6480 = vsel %vm5726, %v6286, %v5179
    %v6483 = vsel %vm5726, %v6288, %v5181
    %v6486 = vsel %vm5726, %v6290, %v5183
    %v6489 = vsel %vm5726, %v6292, %v5185
    %v6492 = vsel %vm5726, %v6294, %v5187
    %v6495 = vsel %vm5726, %v6296, %v5189
    %v6498 = vsel %vm5726, %v6298, %v5191
    %v6501 = vsel %vm5726, %v6300, %v5193
    %v6504 = vsel %vm5726, %v6302, %v5195
    %v6507 = vsel %vm5726, %v6304, %v5197
    %v6510 = vsel %vm5726, %v6306, %v5199
    %v6513 = vsel %vm5726, %v6308, %v5201
    %v6516 = vsel %vm5726, %v6310, %v5203
    %v6519 = vsel %vm5726, %v6312, %v5205
    %v6522 = vsel %vm5726, %v6314, %v5207
    %v6525 = vsel %vm5726, %v6316, %v5209
    %v6528 = vsel %vm5726, %v6318, %v5211
    %v6531 = vsel %vm5726, %v6320, %v5213
    %v6534 = vsel %vm5726, %v6322, %v5215
    %v6537 = vsel %vm5726, %v6324, %v5217
    %v6540 = vsel %vm5726, %v6326, %v5219
    %v6543 = vsel %vm5726, %v6328, %v5221
    %v6546 = vsel %vm5726, %v6330, %v5223
    %v6549 = vsel %vm5726, %v6332, %v5225
    %v6552 = vsel %vm5726, %v6334, %v5227
    %v6555 = vsel %vm5726, %v6336, %v5229
    %v6558 = vsel %vm5726, %v6338, %v5231
    %v6561 = vsel %vm5726, %v6340, %v5233
    %v6564 = vsel %vm5726, %v6342, %v5235
    %v6567 = vsel %vm5726, %v6344, %v5237
    %v6570 = vsel %vm5726, %v6346, %v5239
    %v6573 = vsel %vm5726, %v6348, %v5241
    %v6576 = vsel %vm5726, %v6350, %v5243
    %v6579 = vsel %vm5726, %v6352, %v5245
    %v6582 = vsel %vm5726, %v6354, %v5247
    %v6585 = vsel %vm5726, %v6356, %v5249
    %v6588 = vsel %vm5726, %v6358, %v5251
    %v6591 = vsel %vm5726, %v6360, %v5253
    %v6594 = vsel %vm5726, %v6362, %v5255
    %v6597 = vsel %vm5726, %v6364, %v5257
    %v6600 = vsel %vm5726, %v6366, %v5259
    %v6603 = vsel %vm5726, %v6368, %v5261
    %v6606 = vsel %vm5726, %v6370, %v5263
    %v6609 = vsel %vm5726, %v6372, %v5265
    %v6612 = vsel %vm5726, %v6374, %v5267
    %v6615 = vsel %vm5726, %v6376, %v5269
    %v6618 = vsel %vm5726, %v6378, %v5271
    %v6621 = vsel %vm5726, %v6380, %v5273
    %v6624 = vsel %vm5726, %v6382, %v5275
    %v6627 = vsel %vm5726, %v6384, %v5277
    %v6630 = vsel %vm5726, %v6386, %v5279
    %v6633 = vsel %vm5726, %v6388, %v5281
    %v6636 = vsel %vm5726, %v6390, %v5283
    %v6639 = vsel %vm5726, %v6392, %v5285
    %v6642 = vsel %vm5726, %v6394, %v5287
    %v6645 = vsel %vm5726, %v6396, %v5289
    %v6648 = vsel %vm5726, %v6398, %v5291
    %v6651 = vsel %vm5726, %v6400, %v5293
    %v6654 = vsel %vm5726, %v6402, %v5295
    %v6657 = vsel %vm5726, %v6404, %v5297
    %v6660 = vsel %vm5726, %v6406, %v5299
    %v6662 = vld [vmem:[%s3] sm:$0xf]
    %v6663 = vld [vmem:[%s3 + $0x4] sm:$0xf]
    %v6664 = vld [vmem:[%s3 + $0x8] sm:$0xf]
    %v6665 = vld [vmem:[%s3 + $0xc] sm:$0xf]
    %v6666 = vld [vmem:[%s3 + $0x10] sm:$0xf]
    %v6667 = vld [vmem:[%s3 + $0x14] sm:$0xf]
    %v6668 = vld [vmem:[%s3 + $0x18] sm:$0xf]
    %v6669 = vld [vmem:[%s3 + $0x1c] sm:$0xf]
    %v6670 = vld [vmem:[%s3 + $0x20] sm:$0xf]
    %v6671 = vld [vmem:[%s3 + $0x24] sm:$0xf]
    %v6672 = vld [vmem:[%s3 + $0x28] sm:$0xf]
    %v6673 = vld [vmem:[%s3 + $0x2c] sm:$0xf]
    %v6674 = vld [vmem:[%s3 + $0x30] sm:$0xf]
    %v6675 = vld [vmem:[%s3 + $0x34] sm:$0xf]
    %v6676 = vld [vmem:[%s3 + $0x38] sm:$0xf]
    %v6677 = vld [vmem:[%s3 + $0x3c] sm:$0xf]
    %v6678 = vld [vmem:[%s3 + $0x40] sm:$0xf]
    %v6679 = vld [vmem:[%s3 + $0x44] sm:$0xf]
    %v6680 = vld [vmem:[%s3 + $0x48] sm:$0xf]
    %v6681 = vld [vmem:[%s3 + $0x4c] sm:$0xf]
    %v6682 = vld [vmem:[%s3 + $0x50] sm:$0xf]
    %v6683 = vld [vmem:[%s3 + $0x54] sm:$0xf]
    %v6684 = vld [vmem:[%s3 + $0x58] sm:$0xf]
    %v6685 = vld [vmem:[%s3 + $0x5c] sm:$0xf]
    %v6686 = vld [vmem:[%s3 + $0x60] sm:$0xf]
    %v6687 = vld [vmem:[%s3 + $0x64] sm:$0xf]
    %v6688 = vld [vmem:[%s3 + $0x68] sm:$0xf]
    %v6689 = vld [vmem:[%s3 + $0x6c] sm:$0xf]
    %v6690 = vld [vmem:[%s3 + $0x70] sm:$0xf]
    %v6691 = vld [vmem:[%s3 + $0x74] sm:$0xf]
    %v6692 = vld [vmem:[%s3 + $0x78] sm:$0xf]
    %v6693 = vld [vmem:[%s3 + $0x7c] sm:$0xf]
    %v6694 = vld [vmem:[%s3 + $0x80] sm:$0xf]
    %v6695 = vld [vmem:[%s3 + $0x84] sm:$0xf]
    %v6696 = vld [vmem:[%s3 + $0x88] sm:$0xf]
    %v6697 = vld [vmem:[%s3 + $0x8c] sm:$0xf]
    %v6698 = vld [vmem:[#allocation9] sm:$0x1]
    %v6700 = vlaneseq
    %v6701 = vshrl.u32 %v6700, 7
    %v6702 = vsub.s32 0, %v6701
    %v6703 = vrot.slane %v6698, %v6702
    %v6741 = vunpack.c.l.b16 %v6662
    %v6742 = vunpack.c.l.b16 %v6663
    %v6743 = vunpack.c.l.b16 %v6664
    %v6744 = vunpack.c.l.b16 %v6665
    %v6745 = vunpack.c.l.b16 %v6666
    %v6746 = vunpack.c.l.b16 %v6667
    %v6747 = vunpack.c.l.b16 %v6668
    %v6748 = vunpack.c.l.b16 %v6669
    %v6749 = vunpack.c.l.b16 %v6670
    %v6750 = vunpack.c.l.b16 %v6671
    %v6751 = vunpack.c.l.b16 %v6672
    %v6752 = vunpack.c.l.b16 %v6673
    %v6753 = vunpack.c.l.b16 %v6674
    %v6754 = vunpack.c.l.b16 %v6675
    %v6755 = vunpack.c.l.b16 %v6676
    %v6756 = vunpack.c.l.b16 %v6677
    %v6757 = vunpack.c.l.b16 %v6678
    %v6758 = vunpack.c.l.b16 %v6679
    %v6759 = vunpack.c.l.b16 %v6680
    %v6760 = vunpack.c.l.b16 %v6681
    %v6761 = vunpack.c.l.b16 %v6682
    %v6762 = vunpack.c.l.b16 %v6683
    %v6763 = vunpack.c.l.b16 %v6684
    %v6764 = vunpack.c.l.b16 %v6685
    %v6765 = vunpack.c.l.b16 %v6686
    %v6766 = vunpack.c.l.b16 %v6687
    %v6767 = vunpack.c.l.b16 %v6688
    %v6768 = vunpack.c.l.b16 %v6689
    %v6769 = vunpack.c.l.b16 %v6690
    %v6770 = vunpack.c.l.b16 %v6691
    %v6771 = vunpack.c.l.b16 %v6692
    %v6772 = vunpack.c.l.b16 %v6693
    %v6773 = vunpack.c.l.b16 %v6694
    %v6774 = vunpack.c.l.b16 %v6695
    %v6775 = vunpack.c.l.b16 %v6696
    %v6776 = vunpack.c.l.b16 %v6697
    %v6777 = vpack.c.b16 %v6742, %v6741
    %v6778 = vpack.c.b16 %v6744, %v6743
    %v6779 = vpack.c.b16 %v6746, %v6745
    %v6780 = vpack.c.b16 %v6748, %v6747
    %v6781 = vpack.c.b16 %v6750, %v6749
    %v6782 = vpack.c.b16 %v6752, %v6751
    %v6783 = vpack.c.b16 %v6754, %v6753
    %v6784 = vpack.c.b16 %v6756, %v6755
    %v6785 = vpack.c.b16 %v6758, %v6757
    %v6786 = vpack.c.b16 %v6760, %v6759
    %v6787 = vpack.c.b16 %v6762, %v6761
    %v6788 = vpack.c.b16 %v6764, %v6763
    %v6789 = vpack.c.b16 %v6766, %v6765
    %v6790 = vpack.c.b16 %v6768, %v6767
    %v6791 = vpack.c.b16 %v6770, %v6769
    %v6792 = vpack.c.b16 %v6772, %v6771
    %v6793 = vpack.c.b16 %v6774, %v6773
    %v6794 = vpack.c.b16 %v6776, %v6775
    %v6814 = vsel %vm1808, %v3685, 0
    %v6817 = vsel %vm1808, %v3686, 0
    %v6820 = vsel %vm1808, %v3687, 0
    %v6823 = vsel %vm1808, %v3688, 0
    %v6826 = vsel %vm1808, %v3689, 0
    %v6829 = vsel %vm1808, %v3690, 0
    %v6832 = vsel %vm1808, %v3691, 0
    %v6835 = vsel %vm1808, %v3692, 0
    %v6838 = vsel %vm1808, %v3693, 0
    %v6841 = vsel %vm1808, %v3694, 0
    %v6844 = vsel %vm1808, %v3695, 0
    %v6847 = vsel %vm1808, %v3696, 0
    %v6850 = vsel %vm1808, %v3697, 0
    %v6853 = vsel %vm1808, %v3698, 0
    %v6856 = vsel %vm1808, %v3699, 0
    %v6859 = vsel %vm1808, %v3700, 0
    %v6862 = vsel %vm1808, %v3701, 0
    %v6865 = vsel %vm1808, %v3702, 0
    %v6868 = vsel %vm1808, %v3703, 0
    %v6871 = vsel %vm1808, %v3704, 0
    %v6874 = vsel %vm1808, %v3705, 0
    %v6877 = vsel %vm1808, %v3706, 0
    %v6880 = vsel %vm1808, %v3707, 0
    %v6883 = vsel %vm1808, %v3708, 0
    %v6886 = vsel %vm1808, %v3709, 0
    %v6889 = vsel %vm1808, %v3710, 0
    %v6892 = vsel %vm1808, %v3711, 0
    %v6895 = vsel %vm1808, %v3712, 0
    %v6898 = vsel %vm1808, %v3713, 0
    %v6901 = vsel %vm1808, %v3714, 0
    %v6904 = vsel %vm1808, %v3715, 0
    %v6907 = vsel %vm1808, %v3716, 0
    %v6910 = vsel %vm1808, %v3717, 0
    %v6913 = vsel %vm1808, %v3718, 0
    %v6916 = vsel %vm1808, %v3719, 0
    %v6919 = vsel %vm1808, %v3720, 0
    %v6922 = vsel %vm1808, %v3721, 0
    %v6925 = vsel %vm1808, %v3722, 0
    %v6928 = vsel %vm1808, %v3723, 0
    %v6931 = vsel %vm1808, %v3724, 0
    %v6934 = vsel %vm1808, %v3725, 0
    %v6937 = vsel %vm1808, %v3726, 0
    %v6940 = vsel %vm1808, %v3727, 0
    %v6943 = vsel %vm1808, %v3728, 0
    %v6946 = vsel %vm1808, %v3729, 0
    %v6949 = vsel %vm1808, %v3730, 0
    %v6952 = vsel %vm1808, %v3731, 0
    %v6955 = vsel %vm1808, %v3732, 0
    %v6958 = vsel %vm1808, %v3733, 0
    %v6961 = vsel %vm1808, %v3734, 0
    %v6964 = vsel %vm1808, %v3735, 0
    %v6967 = vsel %vm1808, %v3736, 0
    %v6970 = vsel %vm1808, %v3737, 0
    %v6973 = vsel %vm1808, %v3738, 0
    %v6976 = vsel %vm1808, %v3739, 0
    %v6979 = vsel %vm1808, %v3740, 0
    %v6982 = vsel %vm1808, %v3741, 0
    %v6985 = vsel %vm1808, %v3742, 0
    %v6988 = vsel %vm1808, %v3743, 0
    %v6991 = vsel %vm1808, %v3744, 0
    %v6994 = vsel %vm1808, %v3745, 0
    %v6997 = vsel %vm1808, %v3746, 0
    %v7000 = vsel %vm1808, %v3747, 0
    %v7003 = vsel %vm1808, %v3748, 0
    %v7006 = vsel %vm1808, %v3749, 0
    %v7009 = vsel %vm1808, %v3750, 0
    %v7012 = vsel %vm1808, %v3751, 0
    %v7015 = vsel %vm1808, %v3752, 0
    %v7018 = vsel %vm1808, %v3753, 0
    %v7021 = vsel %vm1808, %v3754, 0
    %v7024 = vsel %vm1808, %v3755, 0
    %v7027 = vsel %vm1808, %v3756, 0
    %v7030 = vsel %vm1808, %v3757, 0
    %v7033 = vsel %vm1808, %v3758, 0
    %v7036 = vsel %vm1808, %v3759, 0
    %v7039 = vsel %vm1808, %v3760, 0
    %v7042 = vsel %vm1808, %v3761, 0
    %v7045 = vsel %vm1808, %v3762, 0
    %v7048 = vsel %vm1808, %v3763, 0
    %v7051 = vsel %vm1808, %v3764, 0
    %v7054 = vsel %vm1808, %v3765, 0
    %v7057 = vsel %vm1808, %v3766, 0
    %v7060 = vsel %vm1808, %v3767, 0
    %v7063 = vsel %vm1808, %v3768, 0
    %v7066 = vsel %vm1808, %v3769, 0
    %7068 = vmatprep.subr.bf16.mxu0 0
    %7069 = vmatpush1.bf16.msra.mxu0 %v6784
    %7070 = vmatprep.subr.bf16.mxu0 0
    %7071 = vmatpush1.bf16.msra.mxu0 %v6783
    %7072 = vmatprep.subr.bf16.mxu0 0
    %7073 = vmatpush1.bf16.msra.mxu0 %v6782
    %7074 = vmatprep.subr.bf16.mxu0 0
    %7075 = vmatpush1.bf16.msra.mxu0 %v6781
    %7076 = vmatprep.subr.bf16.mxu0 0
    %7077 = vmatpush1.bf16.msra.mxu0 %v6780
    %7078 = vmatprep.subr.bf16.mxu0 0
    %7079 = vmatpush1.bf16.msra.mxu0 %v6779
    %7080 = vmatprep.subr.bf16.mxu0 0
    %7081 = vmatpush1.bf16.msra.mxu0 %v6778
    %7082 = vmatprep.subr.bf16.mxu0 0
    %7083 = vmatpush1.bf16.msra.mxu0 %v6777
    %7084 = vmatprep.subr.bf16.mxu0 0
    %7085 = vmatpush2.bf16.msra.mxu0 %v6792
    %7086 = vmatprep.subr.bf16.mxu0 0
    %7087 = vmatpush2.bf16.msra.mxu0 %v6791
    %7088 = vmatprep.subr.bf16.mxu0 0
    %7089 = vmatpush2.bf16.msra.mxu0 %v6790
    %7090 = vmatprep.subr.bf16.mxu0 0
    %7091 = vmatpush2.bf16.msra.mxu0 %v6789
    %7092 = vmatprep.subr.bf16.mxu0 0
    %7093 = vmatpush2.bf16.msra.mxu0 %v6788
    %7094 = vmatprep.subr.bf16.mxu0 0
    %7095 = vmatpush2.bf16.msra.mxu0 %v6787
    %7096 = vmatprep.subr.bf16.mxu0 0
    %7097 = vmatpush2.bf16.msra.mxu0 %v6786
    %7098 = vmatprep.subr.bf16.mxu0 0
    %7099 = vmatpush2.bf16.msra.mxu0 %v6785
    %7100 = vmatprep.mubr.bf16.mxu0 %v6408
    %7101 = vmatmul.mubr.bf16.gmra.mxu0 %v5728
    %v7102 = vpop.f32.mrf.mxu0
    %v7103 = vadd.f32 %v6703, %v7102
    %v7104 = vpop.f32.mrf.mxu0
    %v7105 = vpop.f32.mrf.mxu0
    %v7106 = vadd.f32 %v6703, %v7105
    %v7107 = vpop.f32.mrf.mxu0
    %7108 = vmatprep.mubr.bf16.mxu0 %v6411
    %7109 = vmatmul.mubr.bf16.gmra.mxu0 %v5731
    %v7110 = vpop.f32.mrf.mxu0
    %v7111 = vadd.f32 %v6703, %v7110
    %v7112 = vpop.f32.mrf.mxu0
    %v7113 = vpop.f32.mrf.mxu0
    %v7114 = vadd.f32 %v6703, %v7113
    %v7115 = vpop.f32.mrf.mxu0
    %7116 = vmatprep.mubr.bf16.mxu0 %v6414
    %7117 = vmatmul.mubr.bf16.gmra.mxu0 %v5734
    %v7118 = vpop.f32.mrf.mxu0
    %v7119 = vadd.f32 %v6703, %v7118
    %v7120 = vpop.f32.mrf.mxu0
    %v7121 = vpop.f32.mrf.mxu0
    %v7122 = vadd.f32 %v6703, %v7121
    %v7123 = vpop.f32.mrf.mxu0
    %7124 = vmatprep.mubr.bf16.mxu0 %v6417
    %7125 = vmatmul.mubr.bf16.gmra.mxu0 %v5737
    %v7126 = vpop.f32.mrf.mxu0
    %v7127 = vadd.f32 %v6703, %v7126
    %v7128 = vpop.f32.mrf.mxu0
    %v7129 = vpop.f32.mrf.mxu0
    %v7130 = vadd.f32 %v6703, %v7129
    %v7131 = vpop.f32.mrf.mxu0
    %7132 = vmatprep.mubr.bf16.mxu0 %v6420
    %7133 = vmatmul.mubr.bf16.gmra.mxu0 %v5740
    %v7134 = vpop.f32.mrf.mxu0
    %v7135 = vadd.f32 %v6703, %v7134
    %v7136 = vpop.f32.mrf.mxu0
    %v7137 = vpop.f32.mrf.mxu0
    %v7138 = vadd.f32 %v6703, %v7137
    %v7139 = vpop.f32.mrf.mxu0
    %7140 = vmatprep.mubr.bf16.mxu0 %v6423
    %7141 = vmatmul.mubr.bf16.gmra.mxu0 %v5743
    %v7142 = vpop.f32.mrf.mxu0
    %v7143 = vadd.f32 %v6703, %v7142
    %v7144 = vpop.f32.mrf.mxu0
    %v7145 = vpop.f32.mrf.mxu0
    %v7146 = vadd.f32 %v6703, %v7145
    %v7147 = vpop.f32.mrf.mxu0
    %7148 = vmatprep.mubr.bf16.mxu0 %v6426
    %7149 = vmatmul.mubr.bf16.gmra.mxu0 %v5746
    %v7150 = vpop.f32.mrf.mxu0
    %v7151 = vadd.f32 %v6703, %v7150
    %v7152 = vpop.f32.mrf.mxu0
    %v7153 = vpop.f32.mrf.mxu0
    %v7154 = vadd.f32 %v6703, %v7153
    %v7155 = vpop.f32.mrf.mxu0
    %7156 = vmatprep.mubr.bf16.mxu0 %v6429
    %7157 = vmatmul.mubr.bf16.gmra.mxu0 %v5749
    %v7158 = vpop.f32.mrf.mxu0
    %v7159 = vadd.f32 %v6703, %v7158
    %v7160 = vpop.f32.mrf.mxu0
    %v7161 = vpop.f32.mrf.mxu0
    %v7162 = vadd.f32 %v6703, %v7161
    %v7163 = vpop.f32.mrf.mxu0
    %7164 = vmatprep.mubr.bf16.mxu0 %v6432
    %7165 = vmatmul.mubr.bf16.gmra.mxu0 %v5752
    %v7166 = vpop.f32.mrf.mxu0
    %v7167 = vadd.f32 %v6703, %v7166
    %v7168 = vpop.f32.mrf.mxu0
    %v7169 = vpop.f32.mrf.mxu0
    %v7170 = vadd.f32 %v6703, %v7169
    %v7171 = vpop.f32.mrf.mxu0
    %7172 = vmatprep.mubr.bf16.mxu0 %v6435
    %7173 = vmatmul.mubr.bf16.gmra.mxu0 %v5755
    %v7174 = vpop.f32.mrf.mxu0
    %v7175 = vadd.f32 %v6703, %v7174
    %v7176 = vpop.f32.mrf.mxu0
    %v7177 = vpop.f32.mrf.mxu0
    %v7178 = vadd.f32 %v6703, %v7177
    %v7179 = vpop.f32.mrf.mxu0
    %7180 = vmatprep.mubr.bf16.mxu0 %v6438
    %7181 = vmatmul.mubr.bf16.gmra.mxu0 %v5758
    %v7182 = vpop.f32.mrf.mxu0
    %v7183 = vadd.f32 %v6703, %v7182
    %v7184 = vpop.f32.mrf.mxu0
    %v7185 = vpop.f32.mrf.mxu0
    %v7186 = vadd.f32 %v6703, %v7185
    %v7187 = vpop.f32.mrf.mxu0
    %7188 = vmatprep.mubr.bf16.mxu0 %v6441
    %7189 = vmatmul.mubr.bf16.gmra.mxu0 %v5761
    %v7190 = vpop.f32.mrf.mxu0
    %v7191 = vadd.f32 %v6703, %v7190
    %v7192 = vpop.f32.mrf.mxu0
    %v7193 = vpop.f32.mrf.mxu0
    %v7194 = vadd.f32 %v6703, %v7193
    %v7195 = vpop.f32.mrf.mxu0
    %7196 = vmatprep.mubr.bf16.mxu0 %v6444
    %7197 = vmatmul.mubr.bf16.gmra.mxu0 %v5764
    %v7198 = vpop.f32.mrf.mxu0
    %v7199 = vadd.f32 %v6703, %v7198
    %v7200 = vpop.f32.mrf.mxu0
    %v7201 = vpop.f32.mrf.mxu0
    %v7202 = vadd.f32 %v6703, %v7201
    %v7203 = vpop.f32.mrf.mxu0
    %7204 = vmatprep.mubr.bf16.mxu0 %v6447
    %7205 = vmatmul.mubr.bf16.gmra.mxu0 %v5767
    %v7206 = vpop.f32.mrf.mxu0
    %v7207 = vadd.f32 %v6703, %v7206
    %v7208 = vpop.f32.mrf.mxu0
    %v7209 = vpop.f32.mrf.mxu0
    %v7210 = vadd.f32 %v6703, %v7209
    %v7211 = vpop.f32.mrf.mxu0
    %7212 = vmatprep.mubr.bf16.mxu0 %v6450
    %7213 = vmatmul.mubr.bf16.gmra.mxu0 %v5770
    %v7214 = vpop.f32.mrf.mxu0
    %v7215 = vadd.f32 %v6703, %v7214
    %v7216 = vpop.f32.mrf.mxu0
    %v7217 = vpop.f32.mrf.mxu0
    %v7218 = vadd.f32 %v6703, %v7217
    %v7219 = vpop.f32.mrf.mxu0
    %7220 = vmatprep.mubr.bf16.mxu0 %v6453
    %7221 = vmatmul.mubr.bf16.gmra.mxu0 %v5773
    %v7222 = vpop.f32.mrf.mxu0
    %v7223 = vadd.f32 %v6703, %v7222
    %v7224 = vpop.f32.mrf.mxu0
    %v7225 = vpop.f32.mrf.mxu0
    %v7226 = vadd.f32 %v6703, %v7225
    %v7227 = vpop.f32.mrf.mxu0
    %7228 = vmatprep.mubr.bf16.mxu0 %v6456
    %7229 = vmatmul.mubr.bf16.gmra.mxu0 %v5776
    %v7230 = vpop.f32.mrf.mxu0
    %v7231 = vadd.f32 %v6703, %v7230
    %v7232 = vpop.f32.mrf.mxu0
    %v7233 = vpop.f32.mrf.mxu0
    %v7234 = vadd.f32 %v6703, %v7233
    %v7235 = vpop.f32.mrf.mxu0
    %7236 = vmatprep.mubr.bf16.mxu0 %v6459
    %7237 = vmatmul.mubr.bf16.gmra.mxu0 %v5779
    %v7238 = vpop.f32.mrf.mxu0
    %v7239 = vadd.f32 %v6703, %v7238
    %v7240 = vpop.f32.mrf.mxu0
    %v7241 = vpop.f32.mrf.mxu0
    %v7242 = vadd.f32 %v6703, %v7241
    %v7243 = vpop.f32.mrf.mxu0
    %7244 = vmatprep.mubr.bf16.mxu0 %v6462
    %7245 = vmatmul.mubr.bf16.gmra.mxu0 %v5782
    %v7246 = vpop.f32.mrf.mxu0
    %v7247 = vadd.f32 %v6703, %v7246
    %v7248 = vpop.f32.mrf.mxu0
    %v7249 = vpop.f32.mrf.mxu0
    %v7250 = vadd.f32 %v6703, %v7249
    %v7251 = vpop.f32.mrf.mxu0
    %7252 = vmatprep.mubr.bf16.mxu0 %v6465
    %7253 = vmatmul.mubr.bf16.gmra.mxu0 %v5785
    %v7254 = vpop.f32.mrf.mxu0
    %v7255 = vadd.f32 %v6703, %v7254
    %v7256 = vpop.f32.mrf.mxu0
    %v7257 = vpop.f32.mrf.mxu0
    %v7258 = vadd.f32 %v6703, %v7257
    %v7259 = vpop.f32.mrf.mxu0
    %7260 = vmatprep.mubr.bf16.mxu0 %v6468
    %7261 = vmatmul.mubr.bf16.gmra.mxu0 %v5788
    %v7262 = vpop.f32.mrf.mxu0
    %v7263 = vadd.f32 %v6703, %v7262
    %v7264 = vpop.f32.mrf.mxu0
    %v7265 = vpop.f32.mrf.mxu0
    %v7266 = vadd.f32 %v6703, %v7265
    %v7267 = vpop.f32.mrf.mxu0
    %7268 = vmatprep.mubr.bf16.mxu0 %v6471
    %7269 = vmatmul.mubr.bf16.gmra.mxu0 %v5791
    %v7270 = vpop.f32.mrf.mxu0
    %v7271 = vadd.f32 %v6703, %v7270
    %v7272 = vpop.f32.mrf.mxu0
    %v7273 = vpop.f32.mrf.mxu0
    %v7274 = vadd.f32 %v6703, %v7273
    %v7275 = vpop.f32.mrf.mxu0
    %7276 = vmatprep.mubr.bf16.mxu0 %v6474
    %7277 = vmatmul.mubr.bf16.gmra.mxu0 %v5794
    %v7278 = vpop.f32.mrf.mxu0
    %v7279 = vadd.f32 %v6703, %v7278
    %v7280 = vpop.f32.mrf.mxu0
    %v7281 = vpop.f32.mrf.mxu0
    %v7282 = vadd.f32 %v6703, %v7281
    %v7283 = vpop.f32.mrf.mxu0
    %7284 = vmatprep.mubr.bf16.mxu0 %v6477
    %7285 = vmatmul.mubr.bf16.gmra.mxu0 %v5797
    %v7286 = vpop.f32.mrf.mxu0
    %v7287 = vadd.f32 %v6703, %v7286
    %v7288 = vpop.f32.mrf.mxu0
    %v7289 = vpop.f32.mrf.mxu0
    %v7290 = vadd.f32 %v6703, %v7289
    %v7291 = vpop.f32.mrf.mxu0
    %7292 = vmatprep.mubr.bf16.mxu0 %v6480
    %7293 = vmatmul.mubr.bf16.gmra.mxu0 %v5800
    %v7294 = vpop.f32.mrf.mxu0
    %v7295 = vadd.f32 %v6703, %v7294
    %v7296 = vpop.f32.mrf.mxu0
    %v7297 = vpop.f32.mrf.mxu0
    %v7298 = vadd.f32 %v6703, %v7297
    %v7299 = vpop.f32.mrf.mxu0
    %7300 = vmatprep.mubr.bf16.mxu0 %v6483
    %7301 = vmatmul.mubr.bf16.gmra.mxu0 %v5803
    %v7302 = vpop.f32.mrf.mxu0
    %v7303 = vadd.f32 %v6703, %v7302
    %v7304 = vpop.f32.mrf.mxu0
    %v7305 = vpop.f32.mrf.mxu0
    %v7306 = vadd.f32 %v6703, %v7305
    %v7307 = vpop.f32.mrf.mxu0
    %7308 = vmatprep.mubr.bf16.mxu0 %v6486
    %7309 = vmatmul.mubr.bf16.gmra.mxu0 %v5806
    %v7310 = vpop.f32.mrf.mxu0
    %v7311 = vadd.f32 %v6703, %v7310
    %v7312 = vpop.f32.mrf.mxu0
    %v7313 = vpop.f32.mrf.mxu0
    %v7314 = vadd.f32 %v6703, %v7313
    %v7315 = vpop.f32.mrf.mxu0
    %7316 = vmatprep.mubr.bf16.mxu0 %v6489
    %7317 = vmatmul.mubr.bf16.gmra.mxu0 %v5809
    %v7318 = vpop.f32.mrf.mxu0
    %v7319 = vadd.f32 %v6703, %v7318
    %v7320 = vpop.f32.mrf.mxu0
    %v7321 = vpop.f32.mrf.mxu0
    %v7322 = vadd.f32 %v6703, %v7321
    %v7323 = vpop.f32.mrf.mxu0
    %7324 = vmatprep.mubr.bf16.mxu0 %v6492
    %7325 = vmatmul.mubr.bf16.gmra.mxu0 %v5812
    %v7326 = vpop.f32.mrf.mxu0
    %v7327 = vadd.f32 %v6703, %v7326
    %v7328 = vpop.f32.mrf.mxu0
    %v7329 = vpop.f32.mrf.mxu0
    %v7330 = vadd.f32 %v6703, %v7329
    %v7331 = vpop.f32.mrf.mxu0
    %7332 = vmatprep.mubr.bf16.mxu0 %v6495
    %7333 = vmatmul.mubr.bf16.gmra.mxu0 %v5815
    %v7334 = vpop.f32.mrf.mxu0
    %v7335 = vadd.f32 %v6703, %v7334
    %v7336 = vpop.f32.mrf.mxu0
    %v7337 = vpop.f32.mrf.mxu0
    %v7338 = vadd.f32 %v6703, %v7337
    %v7339 = vpop.f32.mrf.mxu0
    %7340 = vmatprep.mubr.bf16.mxu0 %v6498
    %7341 = vmatmul.mubr.bf16.gmra.mxu0 %v5818
    %v7342 = vpop.f32.mrf.mxu0
    %v7343 = vadd.f32 %v6703, %v7342
    %v7344 = vpop.f32.mrf.mxu0
    %v7345 = vpop.f32.mrf.mxu0
    %v7346 = vadd.f32 %v6703, %v7345
    %v7347 = vpop.f32.mrf.mxu0
    %7348 = vmatprep.mubr.bf16.mxu0 %v6501
    %7349 = vmatmul.mubr.bf16.gmra.mxu0 %v5821
    %v7350 = vpop.f32.mrf.mxu0
    %v7351 = vadd.f32 %v6703, %v7350
    %v7352 = vpop.f32.mrf.mxu0
    %v7353 = vpop.f32.mrf.mxu0
    %v7354 = vadd.f32 %v6703, %v7353
    %v7355 = vpop.f32.mrf.mxu0
    %7356 = vmatprep.mubr.bf16.mxu0 %v6504
    %7357 = vmatmul.mubr.bf16.gmra.mxu0 %v5824
    %v7358 = vpop.f32.mrf.mxu0
    %v7359 = vadd.f32 %v6703, %v7358
    %v7360 = vpop.f32.mrf.mxu0
    %v7361 = vpop.f32.mrf.mxu0
    %v7362 = vadd.f32 %v6703, %v7361
    %v7363 = vpop.f32.mrf.mxu0
    %7364 = vmatprep.mubr.bf16.mxu0 %v6507
    %7365 = vmatmul.mubr.bf16.gmra.mxu0 %v5827
    %v7366 = vpop.f32.mrf.mxu0
    %v7367 = vadd.f32 %v6703, %v7366
    %v7368 = vpop.f32.mrf.mxu0
    %v7369 = vpop.f32.mrf.mxu0
    %v7370 = vadd.f32 %v6703, %v7369
    %v7371 = vpop.f32.mrf.mxu0
    %7372 = vmatprep.mubr.bf16.mxu0 %v6510
    %7373 = vmatmul.mubr.bf16.gmra.mxu0 %v5830
    %v7374 = vpop.f32.mrf.mxu0
    %v7375 = vadd.f32 %v6703, %v7374
    %v7376 = vpop.f32.mrf.mxu0
    %v7377 = vpop.f32.mrf.mxu0
    %v7378 = vadd.f32 %v6703, %v7377
    %v7379 = vpop.f32.mrf.mxu0
    %7380 = vmatprep.mubr.bf16.mxu0 %v6513
    %7381 = vmatmul.mubr.bf16.gmra.mxu0 %v5833
    %v7382 = vpop.f32.mrf.mxu0
    %v7383 = vadd.f32 %v6703, %v7382
    %v7384 = vpop.f32.mrf.mxu0
    %v7385 = vpop.f32.mrf.mxu0
    %v7386 = vadd.f32 %v6703, %v7385
    %v7387 = vpop.f32.mrf.mxu0
    %7388 = vmatprep.mubr.bf16.mxu0 %v6516
    %7389 = vmatmul.mubr.bf16.gmra.mxu0 %v5836
    %v7390 = vpop.f32.mrf.mxu0
    %v7391 = vadd.f32 %v6703, %v7390
    %v7392 = vpop.f32.mrf.mxu0
    %v7393 = vpop.f32.mrf.mxu0
    %v7394 = vadd.f32 %v6703, %v7393
    %v7395 = vpop.f32.mrf.mxu0
    %7396 = vmatprep.mubr.bf16.mxu0 %v6519
    %7397 = vmatmul.mubr.bf16.gmra.mxu0 %v5839
    %v7398 = vpop.f32.mrf.mxu0
    %v7399 = vadd.f32 %v6703, %v7398
    %v7400 = vpop.f32.mrf.mxu0
    %v7401 = vpop.f32.mrf.mxu0
    %v7402 = vadd.f32 %v6703, %v7401
    %v7403 = vpop.f32.mrf.mxu0
    %7404 = vmatprep.mubr.bf16.mxu0 %v6522
    %7405 = vmatmul.mubr.bf16.gmra.mxu0 %v5842
    %v7406 = vpop.f32.mrf.mxu0
    %v7407 = vadd.f32 %v6703, %v7406
    %v7408 = vpop.f32.mrf.mxu0
    %v7409 = vpop.f32.mrf.mxu0
    %v7410 = vadd.f32 %v6703, %v7409
    %v7411 = vpop.f32.mrf.mxu0
    %7412 = vmatprep.mubr.bf16.mxu0 %v6525
    %7413 = vmatmul.mubr.bf16.gmra.mxu0 %v5845
    %v7414 = vpop.f32.mrf.mxu0
    %v7415 = vadd.f32 %v6703, %v7414
    %v7416 = vpop.f32.mrf.mxu0
    %v7417 = vpop.f32.mrf.mxu0
    %v7418 = vadd.f32 %v6703, %v7417
    %v7419 = vpop.f32.mrf.mxu0
    %7420 = vmatprep.mubr.bf16.mxu0 %v6528
    %7421 = vmatmul.mubr.bf16.gmra.mxu0 %v5848
    %v7422 = vpop.f32.mrf.mxu0
    %v7423 = vadd.f32 %v6703, %v7422
    %v7424 = vpop.f32.mrf.mxu0
    %v7425 = vpop.f32.mrf.mxu0
    %v7426 = vadd.f32 %v6703, %v7425
    %v7427 = vpop.f32.mrf.mxu0
    %7428 = vmatprep.mubr.bf16.mxu0 %v6531
    %7429 = vmatmul.mubr.bf16.gmra.mxu0 %v5851
    %v7430 = vpop.f32.mrf.mxu0
    %v7431 = vadd.f32 %v6703, %v7430
    %v7432 = vpop.f32.mrf.mxu0
    %v7433 = vpop.f32.mrf.mxu0
    %v7434 = vadd.f32 %v6703, %v7433
    %v7435 = vpop.f32.mrf.mxu0
    %7436 = vmatprep.mubr.bf16.mxu0 %v6534
    %7437 = vmatmul.mubr.bf16.gmra.mxu0 %v5854
    %v7438 = vpop.f32.mrf.mxu0
    %v7439 = vadd.f32 %v6703, %v7438
    %v7440 = vpop.f32.mrf.mxu0
    %v7441 = vpop.f32.mrf.mxu0
    %v7442 = vadd.f32 %v6703, %v7441
    %v7443 = vpop.f32.mrf.mxu0
    %7444 = vmatprep.mubr.bf16.mxu0 %v6537
    %7445 = vmatmul.mubr.bf16.gmra.mxu0 %v5857
    %v7446 = vpop.f32.mrf.mxu0
    %v7447 = vadd.f32 %v6703, %v7446
    %v7448 = vpop.f32.mrf.mxu0
    %v7449 = vpop.f32.mrf.mxu0
    %v7450 = vadd.f32 %v6703, %v7449
    %v7451 = vpop.f32.mrf.mxu0
    %7452 = vmatprep.mubr.bf16.mxu0 %v6540
    %7453 = vmatmul.mubr.bf16.gmra.mxu0 %v5860
    %v7454 = vpop.f32.mrf.mxu0
    %v7455 = vadd.f32 %v6703, %v7454
    %v7456 = vpop.f32.mrf.mxu0
    %v7457 = vpop.f32.mrf.mxu0
    %v7458 = vadd.f32 %v6703, %v7457
    %v7459 = vpop.f32.mrf.mxu0
    %7460 = vmatprep.mubr.bf16.mxu0 %v6543
    %7461 = vmatmul.mubr.bf16.gmra.mxu0 %v5863
    %v7462 = vpop.f32.mrf.mxu0
    %v7463 = vadd.f32 %v6703, %v7462
    %v7464 = vpop.f32.mrf.mxu0
    %v7465 = vpop.f32.mrf.mxu0
    %v7466 = vadd.f32 %v6703, %v7465
    %v7467 = vpop.f32.mrf.mxu0
    %7468 = vmatprep.mubr.bf16.mxu0 %v6546
    %7469 = vmatmul.mubr.bf16.gmra.mxu0 %v5866
    %v7470 = vpop.f32.mrf.mxu0
    %v7471 = vadd.f32 %v6703, %v7470
    %v7472 = vpop.f32.mrf.mxu0
    %v7473 = vpop.f32.mrf.mxu0
    %v7474 = vadd.f32 %v6703, %v7473
    %v7475 = vpop.f32.mrf.mxu0
    %7476 = vmatprep.mubr.bf16.mxu0 %v6549
    %7477 = vmatmul.mubr.bf16.gmra.mxu0 %v5869
    %v7478 = vpop.f32.mrf.mxu0
    %v7479 = vadd.f32 %v6703, %v7478
    %v7480 = vpop.f32.mrf.mxu0
    %v7481 = vpop.f32.mrf.mxu0
    %v7482 = vadd.f32 %v6703, %v7481
    %v7483 = vpop.f32.mrf.mxu0
    %7484 = vmatprep.mubr.bf16.mxu0 %v6552
    %7485 = vmatmul.mubr.bf16.gmra.mxu0 %v5872
    %v7486 = vpop.f32.mrf.mxu0
    %v7487 = vadd.f32 %v6703, %v7486
    %v7488 = vpop.f32.mrf.mxu0
    %v7489 = vpop.f32.mrf.mxu0
    %v7490 = vadd.f32 %v6703, %v7489
    %v7491 = vpop.f32.mrf.mxu0
    %7492 = vmatprep.mubr.bf16.mxu0 %v6555
    %7493 = vmatmul.mubr.bf16.gmra.mxu0 %v5875
    %v7494 = vpop.f32.mrf.mxu0
    %v7495 = vadd.f32 %v6703, %v7494
    %v7496 = vpop.f32.mrf.mxu0
    %v7497 = vpop.f32.mrf.mxu0
    %v7498 = vadd.f32 %v6703, %v7497
    %v7499 = vpop.f32.mrf.mxu0
    %7500 = vmatprep.mubr.bf16.mxu0 %v6558
    %7501 = vmatmul.mubr.bf16.gmra.mxu0 %v5878
    %v7502 = vpop.f32.mrf.mxu0
    %v7503 = vadd.f32 %v6703, %v7502
    %v7504 = vpop.f32.mrf.mxu0
    %v7505 = vpop.f32.mrf.mxu0
    %v7506 = vadd.f32 %v6703, %v7505
    %v7507 = vpop.f32.mrf.mxu0
    %7508 = vmatprep.mubr.bf16.mxu0 %v6561
    %7509 = vmatmul.mubr.bf16.gmra.mxu0 %v5881
    %v7510 = vpop.f32.mrf.mxu0
    %v7511 = vadd.f32 %v6703, %v7510
    %v7512 = vpop.f32.mrf.mxu0
    %v7513 = vpop.f32.mrf.mxu0
    %v7514 = vadd.f32 %v6703, %v7513
    %v7515 = vpop.f32.mrf.mxu0
    %7516 = vmatprep.mubr.bf16.mxu0 %v6564
    %7517 = vmatmul.mubr.bf16.gmra.mxu0 %v5884
    %v7518 = vpop.f32.mrf.mxu0
    %v7519 = vadd.f32 %v6703, %v7518
    %v7520 = vpop.f32.mrf.mxu0
    %v7521 = vpop.f32.mrf.mxu0
    %v7522 = vadd.f32 %v6703, %v7521
    %v7523 = vpop.f32.mrf.mxu0
    %7524 = vmatprep.mubr.bf16.mxu0 %v6567
    %7525 = vmatmul.mubr.bf16.gmra.mxu0 %v5887
    %v7526 = vpop.f32.mrf.mxu0
    %v7527 = vadd.f32 %v6703, %v7526
    %v7528 = vpop.f32.mrf.mxu0
    %v7529 = vpop.f32.mrf.mxu0
    %v7530 = vadd.f32 %v6703, %v7529
    %v7531 = vpop.f32.mrf.mxu0
    %7532 = vmatprep.mubr.bf16.mxu0 %v6570
    %7533 = vmatmul.mubr.bf16.gmra.mxu0 %v5890
    %v7534 = vpop.f32.mrf.mxu0
    %v7535 = vadd.f32 %v6703, %v7534
    %v7536 = vpop.f32.mrf.mxu0
    %v7537 = vpop.f32.mrf.mxu0
    %v7538 = vadd.f32 %v6703, %v7537
    %v7539 = vpop.f32.mrf.mxu0
    %7540 = vmatprep.mubr.bf16.mxu0 %v6573
    %7541 = vmatmul.mubr.bf16.gmra.mxu0 %v5893
    %v7542 = vpop.f32.mrf.mxu0
    %v7543 = vadd.f32 %v6703, %v7542
    %v7544 = vpop.f32.mrf.mxu0
    %v7545 = vpop.f32.mrf.mxu0
    %v7546 = vadd.f32 %v6703, %v7545
    %v7547 = vpop.f32.mrf.mxu0
    %7548 = vmatprep.mubr.bf16.mxu0 %v6576
    %7549 = vmatmul.mubr.bf16.gmra.mxu0 %v5896
    %v7550 = vpop.f32.mrf.mxu0
    %v7551 = vadd.f32 %v6703, %v7550
    %v7552 = vpop.f32.mrf.mxu0
    %v7553 = vpop.f32.mrf.mxu0
    %v7554 = vadd.f32 %v6703, %v7553
    %v7555 = vpop.f32.mrf.mxu0
    %7556 = vmatprep.mubr.bf16.mxu0 %v6579
    %7557 = vmatmul.mubr.bf16.gmra.mxu0 %v5899
    %v7558 = vpop.f32.mrf.mxu0
    %v7559 = vadd.f32 %v6703, %v7558
    %v7560 = vpop.f32.mrf.mxu0
    %v7561 = vpop.f32.mrf.mxu0
    %v7562 = vadd.f32 %v6703, %v7561
    %v7563 = vpop.f32.mrf.mxu0
    %7564 = vmatprep.mubr.bf16.mxu0 %v6582
    %7565 = vmatmul.mubr.bf16.gmra.mxu0 %v5902
    %v7566 = vpop.f32.mrf.mxu0
    %v7567 = vadd.f32 %v6703, %v7566
    %v7568 = vpop.f32.mrf.mxu0
    %v7569 = vpop.f32.mrf.mxu0
    %v7570 = vadd.f32 %v6703, %v7569
    %v7571 = vpop.f32.mrf.mxu0
    %7572 = vmatprep.mubr.bf16.mxu0 %v6585
    %7573 = vmatmul.mubr.bf16.gmra.mxu0 %v5905
    %v7574 = vpop.f32.mrf.mxu0
    %v7575 = vadd.f32 %v6703, %v7574
    %v7576 = vpop.f32.mrf.mxu0
    %v7577 = vpop.f32.mrf.mxu0
    %v7578 = vadd.f32 %v6703, %v7577
    %v7579 = vpop.f32.mrf.mxu0
    %7580 = vmatprep.mubr.bf16.mxu0 %v6588
    %7581 = vmatmul.mubr.bf16.gmra.mxu0 %v5908
    %v7582 = vpop.f32.mrf.mxu0
    %v7583 = vadd.f32 %v6703, %v7582
    %v7584 = vpop.f32.mrf.mxu0
    %v7585 = vpop.f32.mrf.mxu0
    %v7586 = vadd.f32 %v6703, %v7585
    %v7587 = vpop.f32.mrf.mxu0
    %7588 = vmatprep.mubr.bf16.mxu0 %v6591
    %7589 = vmatmul.mubr.bf16.gmra.mxu0 %v5911
    %v7590 = vpop.f32.mrf.mxu0
    %v7591 = vadd.f32 %v6703, %v7590
    %v7592 = vpop.f32.mrf.mxu0
    %v7593 = vpop.f32.mrf.mxu0
    %v7594 = vadd.f32 %v6703, %v7593
    %v7595 = vpop.f32.mrf.mxu0
    %7596 = vmatprep.mubr.bf16.mxu0 %v6594
    %7597 = vmatmul.mubr.bf16.gmra.mxu0 %v5914
    %v7598 = vpop.f32.mrf.mxu0
    %v7599 = vadd.f32 %v6703, %v7598
    %v7600 = vpop.f32.mrf.mxu0
    %v7601 = vpop.f32.mrf.mxu0
    %v7602 = vadd.f32 %v6703, %v7601
    %v7603 = vpop.f32.mrf.mxu0
    %7604 = vmatprep.mubr.bf16.mxu0 %v6597
    %7605 = vmatmul.mubr.bf16.gmra.mxu0 %v5917
    %v7606 = vpop.f32.mrf.mxu0
    %v7607 = vadd.f32 %v6703, %v7606
    %v7608 = vpop.f32.mrf.mxu0
    %v7609 = vpop.f32.mrf.mxu0
    %v7610 = vadd.f32 %v6703, %v7609
    %v7611 = vpop.f32.mrf.mxu0
    %7612 = vmatprep.mubr.bf16.mxu0 %v6600
    %7613 = vmatmul.mubr.bf16.gmra.mxu0 %v5920
    %v7614 = vpop.f32.mrf.mxu0
    %v7615 = vadd.f32 %v6703, %v7614
    %v7616 = vpop.f32.mrf.mxu0
    %v7617 = vpop.f32.mrf.mxu0
    %v7618 = vadd.f32 %v6703, %v7617
    %v7619 = vpop.f32.mrf.mxu0
    %7620 = vmatprep.mubr.bf16.mxu0 %v6603
    %7621 = vmatmul.mubr.bf16.gmra.mxu0 %v5923
    %v7622 = vpop.f32.mrf.mxu0
    %v7623 = vadd.f32 %v6703, %v7622
    %v7624 = vpop.f32.mrf.mxu0
    %v7625 = vpop.f32.mrf.mxu0
    %v7626 = vadd.f32 %v6703, %v7625
    %v7627 = vpop.f32.mrf.mxu0
    %7628 = vmatprep.mubr.bf16.mxu0 %v6606
    %7629 = vmatmul.mubr.bf16.gmra.mxu0 %v5926
    %v7630 = vpop.f32.mrf.mxu0
    %v7631 = vadd.f32 %v6703, %v7630
    %v7632 = vpop.f32.mrf.mxu0
    %v7633 = vpop.f32.mrf.mxu0
    %v7634 = vadd.f32 %v6703, %v7633
    %v7635 = vpop.f32.mrf.mxu0
    %7636 = vmatprep.mubr.bf16.mxu0 %v6609
    %7637 = vmatmul.mubr.bf16.gmra.mxu0 %v5929
    %v7638 = vpop.f32.mrf.mxu0
    %v7639 = vadd.f32 %v6703, %v7638
    %v7640 = vpop.f32.mrf.mxu0
    %v7641 = vpop.f32.mrf.mxu0
    %v7642 = vadd.f32 %v6703, %v7641
    %v7643 = vpop.f32.mrf.mxu0
    %7644 = vmatprep.mubr.bf16.mxu0 %v6612
    %7645 = vmatmul.mubr.bf16.gmra.mxu0 %v5932
    %v7646 = vpop.f32.mrf.mxu0
    %v7647 = vadd.f32 %v6703, %v7646
    %v7648 = vpop.f32.mrf.mxu0
    %v7649 = vpop.f32.mrf.mxu0
    %v7650 = vadd.f32 %v6703, %v7649
    %v7651 = vpop.f32.mrf.mxu0
    %7652 = vmatprep.mubr.bf16.mxu0 %v6615
    %7653 = vmatmul.mubr.bf16.gmra.mxu0 %v5935
    %v7654 = vpop.f32.mrf.mxu0
    %v7655 = vadd.f32 %v6703, %v7654
    %v7656 = vpop.f32.mrf.mxu0
    %v7657 = vpop.f32.mrf.mxu0
    %v7658 = vadd.f32 %v6703, %v7657
    %v7659 = vpop.f32.mrf.mxu0
    %7660 = vmatprep.mubr.bf16.mxu0 %v6618
    %7661 = vmatmul.mubr.bf16.gmra.mxu0 %v5938
    %v7662 = vpop.f32.mrf.mxu0
    %v7663 = vadd.f32 %v6703, %v7662
    %v7664 = vpop.f32.mrf.mxu0
    %v7665 = vpop.f32.mrf.mxu0
    %v7666 = vadd.f32 %v6703, %v7665
    %v7667 = vpop.f32.mrf.mxu0
    %7668 = vmatprep.mubr.bf16.mxu0 %v6621
    %7669 = vmatmul.mubr.bf16.gmra.mxu0 %v5941
    %v7670 = vpop.f32.mrf.mxu0
    %v7671 = vadd.f32 %v6703, %v7670
    %v7672 = vpop.f32.mrf.mxu0
    %v7673 = vpop.f32.mrf.mxu0
    %v7674 = vadd.f32 %v6703, %v7673
    %v7675 = vpop.f32.mrf.mxu0
    %7676 = vmatprep.mubr.bf16.mxu0 %v6624
    %7677 = vmatmul.mubr.bf16.gmra.mxu0 %v5944
    %v7678 = vpop.f32.mrf.mxu0
    %v7679 = vadd.f32 %v6703, %v7678
    %v7680 = vpop.f32.mrf.mxu0
    %v7681 = vpop.f32.mrf.mxu0
    %v7682 = vadd.f32 %v6703, %v7681
    %v7683 = vpop.f32.mrf.mxu0
    %7684 = vmatprep.mubr.bf16.mxu0 %v6627
    %7685 = vmatmul.mubr.bf16.gmra.mxu0 %v5947
    %v7686 = vpop.f32.mrf.mxu0
    %v7687 = vadd.f32 %v6703, %v7686
    %v7688 = vpop.f32.mrf.mxu0
    %v7689 = vpop.f32.mrf.mxu0
    %v7690 = vadd.f32 %v6703, %v7689
    %v7691 = vpop.f32.mrf.mxu0
    %7692 = vmatprep.mubr.bf16.mxu0 %v6630
    %7693 = vmatmul.mubr.bf16.gmra.mxu0 %v5950
    %v7694 = vpop.f32.mrf.mxu0
    %v7695 = vadd.f32 %v6703, %v7694
    %v7696 = vpop.f32.mrf.mxu0
    %v7697 = vpop.f32.mrf.mxu0
    %v7698 = vadd.f32 %v6703, %v7697
    %v7699 = vpop.f32.mrf.mxu0
    %7700 = vmatprep.mubr.bf16.mxu0 %v6633
    %7701 = vmatmul.mubr.bf16.gmra.mxu0 %v5953
    %v7702 = vpop.f32.mrf.mxu0
    %v7703 = vadd.f32 %v6703, %v7702
    %v7704 = vpop.f32.mrf.mxu0
    %v7705 = vpop.f32.mrf.mxu0
    %v7706 = vadd.f32 %v6703, %v7705
    %v7707 = vpop.f32.mrf.mxu0
    %7708 = vmatprep.mubr.bf16.mxu0 %v6636
    %7709 = vmatmul.mubr.bf16.gmra.mxu0 %v5956
    %v7710 = vpop.f32.mrf.mxu0
    %v7711 = vadd.f32 %v6703, %v7710
    %v7712 = vpop.f32.mrf.mxu0
    %v7713 = vpop.f32.mrf.mxu0
    %v7714 = vadd.f32 %v6703, %v7713
    %v7715 = vpop.f32.mrf.mxu0
    %7716 = vmatprep.mubr.bf16.mxu0 %v6639
    %7717 = vmatmul.mubr.bf16.gmra.mxu0 %v5959
    %v7718 = vpop.f32.mrf.mxu0
    %v7719 = vadd.f32 %v6703, %v7718
    %v7720 = vpop.f32.mrf.mxu0
    %v7721 = vpop.f32.mrf.mxu0
    %v7722 = vadd.f32 %v6703, %v7721
    %v7723 = vpop.f32.mrf.mxu0
    %7724 = vmatprep.mubr.bf16.mxu0 %v6642
    %7725 = vmatmul.mubr.bf16.gmra.mxu0 %v5962
    %v7726 = vpop.f32.mrf.mxu0
    %v7727 = vadd.f32 %v6703, %v7726
    %v7728 = vpop.f32.mrf.mxu0
    %v7729 = vpop.f32.mrf.mxu0
    %v7730 = vadd.f32 %v6703, %v7729
    %v7731 = vpop.f32.mrf.mxu0
    %7732 = vmatprep.mubr.bf16.mxu0 %v6645
    %7733 = vmatmul.mubr.bf16.gmra.mxu0 %v5965
    %v7734 = vpop.f32.mrf.mxu0
    %v7735 = vadd.f32 %v6703, %v7734
    %v7736 = vpop.f32.mrf.mxu0
    %v7737 = vpop.f32.mrf.mxu0
    %v7738 = vadd.f32 %v6703, %v7737
    %v7739 = vpop.f32.mrf.mxu0
    %7740 = vmatprep.mubr.bf16.mxu0 %v6648
    %7741 = vmatmul.mubr.bf16.gmra.mxu0 %v5968
    %v7742 = vpop.f32.mrf.mxu0
    %v7743 = vadd.f32 %v6703, %v7742
    %v7744 = vpop.f32.mrf.mxu0
    %v7745 = vpop.f32.mrf.mxu0
    %v7746 = vadd.f32 %v6703, %v7745
    %v7747 = vpop.f32.mrf.mxu0
    %7748 = vmatprep.mubr.bf16.mxu0 %v6651
    %7749 = vmatmul.mubr.bf16.gmra.mxu0 %v5971
    %v7750 = vpop.f32.mrf.mxu0
    %v7751 = vadd.f32 %v6703, %v7750
    %v7752 = vpop.f32.mrf.mxu0
    %v7753 = vpop.f32.mrf.mxu0
    %v7754 = vadd.f32 %v6703, %v7753
    %v7755 = vpop.f32.mrf.mxu0
    %7756 = vmatprep.mubr.bf16.mxu0 %v6654
    %7757 = vmatmul.mubr.bf16.gmra.mxu0 %v5974
    %v7758 = vpop.f32.mrf.mxu0
    %v7759 = vadd.f32 %v6703, %v7758
    %v7760 = vpop.f32.mrf.mxu0
    %v7761 = vpop.f32.mrf.mxu0
    %v7762 = vadd.f32 %v6703, %v7761
    %v7763 = vpop.f32.mrf.mxu0
    %7764 = vmatprep.mubr.bf16.mxu0 %v6657
    %7765 = vmatmul.mubr.bf16.gmra.mxu0 %v5977
    %v7766 = vpop.f32.mrf.mxu0
    %v7767 = vadd.f32 %v6703, %v7766
    %v7768 = vpop.f32.mrf.mxu0
    %v7769 = vpop.f32.mrf.mxu0
    %v7770 = vadd.f32 %v6703, %v7769
    %v7771 = vpop.f32.mrf.mxu0
    %7772 = vmatprep.mubr.bf16.mxu0 %v6660
    %7773 = vmatmul.mubr.bf16.gmra.mxu0 %v5980
    %v7774 = vpop.f32.mrf.mxu0
    %v7775 = vadd.f32 %v6703, %v7774
    %v7776 = vpop.f32.mrf.mxu0
    %v7777 = vpop.f32.mrf.mxu0
    %v7778 = vpop.f32.mrf.mxu0
    %7779 = vdwg.mxu0
    %7780 = vmatprep.subr.bf16.mxu0 0
    %7781 = vmatpush1.bf16.msra.mxu0 0
    %7782 = vmatprep.subr.bf16.mxu0 0
    %7783 = vmatpush1.bf16.msra.mxu0 0
    %7784 = vmatprep.subr.bf16.mxu0 0
    %7785 = vmatpush1.bf16.msra.mxu0 0
    %7786 = vmatprep.subr.bf16.mxu0 0
    %7787 = vmatpush1.bf16.msra.mxu0 0
    %7788 = vmatprep.subr.bf16.mxu0 0
    %7789 = vmatpush1.bf16.msra.mxu0 0
    %7790 = vmatprep.subr.bf16.mxu0 0
    %7791 = vmatpush1.bf16.msra.mxu0 0
    %7792 = vmatprep.subr.bf16.mxu0 0
    %7793 = vmatpush1.bf16.msra.mxu0 %v6794
    %7794 = vmatprep.subr.bf16.mxu0 0
    %7795 = vmatpush1.bf16.msra.mxu0 %v6793
    %7796 = vmatprep.subr.bf16.mxu0 0
    %7797 = vmatpush2.bf16.msra.mxu0 0
    %7798 = vmatprep.subr.bf16.mxu0 0
    %7799 = vmatpush2.bf16.msra.mxu0 0
    %7800 = vmatprep.subr.bf16.mxu0 0
    %7801 = vmatpush2.bf16.msra.mxu0 0
    %7802 = vmatprep.subr.bf16.mxu0 0
    %7803 = vmatpush2.bf16.msra.mxu0 0
    %7804 = vmatprep.subr.bf16.mxu0 0
    %7805 = vmatpush2.bf16.msra.mxu0 0
    %7806 = vmatprep.subr.bf16.mxu0 0
    %7807 = vmatpush2.bf16.msra.mxu0 0
    %7808 = vmatprep.subr.bf16.mxu0 0
    %7809 = vmatpush2.bf16.msra.mxu0 0
    %7810 = vmatprep.subr.bf16.mxu0 0
    %7811 = vmatpush2.bf16.msra.mxu0 0
    %7812 = vmatprep.mubr.bf16.mxu0 0
    %7813 = vmatmul.mubr.bf16.gmra.mxu0 %v6814
    %v7814 = vpop.f32.mrf.mxu0
    %v7815 = vadd.f32 %v7103, %v7814
    %v7816 = vpop.f32.mrf.mxu0
    %v7817 = vpop.f32.mrf.mxu0
    %v7818 = vadd.f32 %v7106, %v7817
    %v7819 = vpop.f32.mrf.mxu0
    %7820 = vmatprep.mubr.bf16.mxu0 0
    %7821 = vmatmul.mubr.bf16.gmra.mxu0 %v6817
    %v7822 = vpop.f32.mrf.mxu0
    %v7823 = vadd.f32 %v7111, %v7822
    %v7824 = vpop.f32.mrf.mxu0
    %v7825 = vpop.f32.mrf.mxu0
    %v7826 = vadd.f32 %v7114, %v7825
    %v7827 = vpop.f32.mrf.mxu0
    %7828 = vmatprep.mubr.bf16.mxu0 0
    %7829 = vmatmul.mubr.bf16.gmra.mxu0 %v6820
    %v7830 = vpop.f32.mrf.mxu0
    %v7831 = vadd.f32 %v7119, %v7830
    %v7832 = vpop.f32.mrf.mxu0
    %v7833 = vpop.f32.mrf.mxu0
    %v7834 = vadd.f32 %v7122, %v7833
    %v7835 = vpop.f32.mrf.mxu0
    %7836 = vmatprep.mubr.bf16.mxu0 0
    %7837 = vmatmul.mubr.bf16.gmra.mxu0 %v6823
    %v7838 = vpop.f32.mrf.mxu0
    %v7839 = vadd.f32 %v7127, %v7838
    %v7840 = vpop.f32.mrf.mxu0
    %v7841 = vpop.f32.mrf.mxu0
    %v7842 = vadd.f32 %v7130, %v7841
    %v7843 = vpop.f32.mrf.mxu0
    %7844 = vmatprep.mubr.bf16.mxu0 0
    %7845 = vmatmul.mubr.bf16.gmra.mxu0 %v6826
    %v7846 = vpop.f32.mrf.mxu0
    %v7847 = vadd.f32 %v7135, %v7846
    %v7848 = vpop.f32.mrf.mxu0
    %v7849 = vpop.f32.mrf.mxu0
    %v7850 = vadd.f32 %v7138, %v7849
    %v7851 = vpop.f32.mrf.mxu0
    %7852 = vmatprep.mubr.bf16.mxu0 0
    %7853 = vmatmul.mubr.bf16.gmra.mxu0 %v6829
    %v7854 = vpop.f32.mrf.mxu0
    %v7855 = vadd.f32 %v7143, %v7854
    %v7856 = vpop.f32.mrf.mxu0
    %v7857 = vpop.f32.mrf.mxu0
    %v7858 = vadd.f32 %v7146, %v7857
    %v7859 = vpop.f32.mrf.mxu0
    %7860 = vmatprep.mubr.bf16.mxu0 0
    %7861 = vmatmul.mubr.bf16.gmra.mxu0 %v6832
    %v7862 = vpop.f32.mrf.mxu0
    %v7863 = vadd.f32 %v7151, %v7862
    %v7864 = vpop.f32.mrf.mxu0
    %v7865 = vpop.f32.mrf.mxu0
    %v7866 = vadd.f32 %v7154, %v7865
    %v7867 = vpop.f32.mrf.mxu0
    %7868 = vmatprep.mubr.bf16.mxu0 0
    %7869 = vmatmul.mubr.bf16.gmra.mxu0 %v6835
    %v7870 = vpop.f32.mrf.mxu0
    %v7871 = vadd.f32 %v7159, %v7870
    %v7872 = vpop.f32.mrf.mxu0
    %v7873 = vpop.f32.mrf.mxu0
    %v7874 = vadd.f32 %v7162, %v7873
    %v7875 = vpop.f32.mrf.mxu0
    %7876 = vmatprep.mubr.bf16.mxu0 0
    %7877 = vmatmul.mubr.bf16.gmra.mxu0 %v6838
    %v7878 = vpop.f32.mrf.mxu0
    %v7879 = vadd.f32 %v7167, %v7878
    %v7880 = vpop.f32.mrf.mxu0
    %v7881 = vpop.f32.mrf.mxu0
    %v7882 = vadd.f32 %v7170, %v7881
    %v7883 = vpop.f32.mrf.mxu0
    %7884 = vmatprep.mubr.bf16.mxu0 0
    %7885 = vmatmul.mubr.bf16.gmra.mxu0 %v6841
    %v7886 = vpop.f32.mrf.mxu0
    %v7887 = vadd.f32 %v7175, %v7886
    %v7888 = vpop.f32.mrf.mxu0
    %v7889 = vpop.f32.mrf.mxu0
    %v7890 = vadd.f32 %v7178, %v7889
    %v7891 = vpop.f32.mrf.mxu0
    %7892 = vmatprep.mubr.bf16.mxu0 0
    %7893 = vmatmul.mubr.bf16.gmra.mxu0 %v6844
    %v7894 = vpop.f32.mrf.mxu0
    %v7895 = vadd.f32 %v7183, %v7894
    %v7896 = vpop.f32.mrf.mxu0
    %v7897 = vpop.f32.mrf.mxu0
    %v7898 = vadd.f32 %v7186, %v7897
    %v7899 = vpop.f32.mrf.mxu0
    %7900 = vmatprep.mubr.bf16.mxu0 0
    %7901 = vmatmul.mubr.bf16.gmra.mxu0 %v6847
    %v7902 = vpop.f32.mrf.mxu0
    %v7903 = vadd.f32 %v7191, %v7902
    %v7904 = vpop.f32.mrf.mxu0
    %v7905 = vpop.f32.mrf.mxu0
    %v7906 = vadd.f32 %v7194, %v7905
    %v7907 = vpop.f32.mrf.mxu0
    %7908 = vmatprep.mubr.bf16.mxu0 0
    %7909 = vmatmul.mubr.bf16.gmra.mxu0 %v6850
    %v7910 = vpop.f32.mrf.mxu0
    %v7911 = vadd.f32 %v7199, %v7910
    %v7912 = vpop.f32.mrf.mxu0
    %v7913 = vpop.f32.mrf.mxu0
    %v7914 = vadd.f32 %v7202, %v7913
    %v7915 = vpop.f32.mrf.mxu0
    %7916 = vmatprep.mubr.bf16.mxu0 0
    %7917 = vmatmul.mubr.bf16.gmra.mxu0 %v6853
    %v7918 = vpop.f32.mrf.mxu0
    %v7919 = vadd.f32 %v7207, %v7918
    %v7920 = vpop.f32.mrf.mxu0
    %v7921 = vpop.f32.mrf.mxu0
    %v7922 = vadd.f32 %v7210, %v7921
    %v7923 = vpop.f32.mrf.mxu0
    %7924 = vmatprep.mubr.bf16.mxu0 0
    %7925 = vmatmul.mubr.bf16.gmra.mxu0 %v6856
    %v7926 = vpop.f32.mrf.mxu0
    %v7927 = vadd.f32 %v7215, %v7926
    %v7928 = vpop.f32.mrf.mxu0
    %v7929 = vpop.f32.mrf.mxu0
    %v7930 = vadd.f32 %v7218, %v7929
    %v7931 = vpop.f32.mrf.mxu0
    %7932 = vmatprep.mubr.bf16.mxu0 0
    %7933 = vmatmul.mubr.bf16.gmra.mxu0 %v6859
    %v7934 = vpop.f32.mrf.mxu0
    %v7935 = vadd.f32 %v7223, %v7934
    %v7936 = vpop.f32.mrf.mxu0
    %v7937 = vpop.f32.mrf.mxu0
    %v7938 = vadd.f32 %v7226, %v7937
    %v7939 = vpop.f32.mrf.mxu0
    %7940 = vmatprep.mubr.bf16.mxu0 0
    %7941 = vmatmul.mubr.bf16.gmra.mxu0 %v6862
    %v7942 = vpop.f32.mrf.mxu0
    %v7943 = vadd.f32 %v7231, %v7942
    %v7944 = vpop.f32.mrf.mxu0
    %v7945 = vpop.f32.mrf.mxu0
    %v7946 = vadd.f32 %v7234, %v7945
    %v7947 = vpop.f32.mrf.mxu0
    %7948 = vmatprep.mubr.bf16.mxu0 0
    %7949 = vmatmul.mubr.bf16.gmra.mxu0 %v6865
    %v7950 = vpop.f32.mrf.mxu0
    %v7951 = vadd.f32 %v7239, %v7950
    %v7952 = vpop.f32.mrf.mxu0
    %v7953 = vpop.f32.mrf.mxu0
    %v7954 = vadd.f32 %v7242, %v7953
    %v7955 = vpop.f32.mrf.mxu0
    %7956 = vmatprep.mubr.bf16.mxu0 0
    %7957 = vmatmul.mubr.bf16.gmra.mxu0 %v6868
    %v7958 = vpop.f32.mrf.mxu0
    %v7959 = vadd.f32 %v7247, %v7958
    %v7960 = vpop.f32.mrf.mxu0
    %v7961 = vpop.f32.mrf.mxu0
    %v7962 = vadd.f32 %v7250, %v7961
    %v7963 = vpop.f32.mrf.mxu0
    %7964 = vmatprep.mubr.bf16.mxu0 0
    %7965 = vmatmul.mubr.bf16.gmra.mxu0 %v6871
    %v7966 = vpop.f32.mrf.mxu0
    %v7967 = vadd.f32 %v7255, %v7966
    %v7968 = vpop.f32.mrf.mxu0
    %v7969 = vpop.f32.mrf.mxu0
    %v7970 = vadd.f32 %v7258, %v7969
    %v7971 = vpop.f32.mrf.mxu0
    %7972 = vmatprep.mubr.bf16.mxu0 0
    %7973 = vmatmul.mubr.bf16.gmra.mxu0 %v6874
    %v7974 = vpop.f32.mrf.mxu0
    %v7975 = vadd.f32 %v7263, %v7974
    %v7976 = vpop.f32.mrf.mxu0
    %v7977 = vpop.f32.mrf.mxu0
    %v7978 = vadd.f32 %v7266, %v7977
    %v7979 = vpop.f32.mrf.mxu0
    %7980 = vmatprep.mubr.bf16.mxu0 0
    %7981 = vmatmul.mubr.bf16.gmra.mxu0 %v6877
    %v7982 = vpop.f32.mrf.mxu0
    %v7983 = vadd.f32 %v7271, %v7982
    %v7984 = vpop.f32.mrf.mxu0
    %v7985 = vpop.f32.mrf.mxu0
    %v7986 = vadd.f32 %v7274, %v7985
    %v7987 = vpop.f32.mrf.mxu0
    %7988 = vmatprep.mubr.bf16.mxu0 0
    %7989 = vmatmul.mubr.bf16.gmra.mxu0 %v6880
    %v7990 = vpop.f32.mrf.mxu0
    %v7991 = vadd.f32 %v7279, %v7990
    %v7992 = vpop.f32.mrf.mxu0
    %v7993 = vpop.f32.mrf.mxu0
    %v7994 = vadd.f32 %v7282, %v7993
    %v7995 = vpop.f32.mrf.mxu0
    %7996 = vmatprep.mubr.bf16.mxu0 0
    %7997 = vmatmul.mubr.bf16.gmra.mxu0 %v6883
    %v7998 = vpop.f32.mrf.mxu0
    %v7999 = vadd.f32 %v7287, %v7998
    %v8000 = vpop.f32.mrf.mxu0
    %v8001 = vpop.f32.mrf.mxu0
    %v8002 = vadd.f32 %v7290, %v8001
    %v8003 = vpop.f32.mrf.mxu0
    %8004 = vmatprep.mubr.bf16.mxu0 0
    %8005 = vmatmul.mubr.bf16.gmra.mxu0 %v6886
    %v8006 = vpop.f32.mrf.mxu0
    %v8007 = vadd.f32 %v7295, %v8006
    %v8008 = vpop.f32.mrf.mxu0
    %v8009 = vpop.f32.mrf.mxu0
    %v8010 = vadd.f32 %v7298, %v8009
    %v8011 = vpop.f32.mrf.mxu0
    %8012 = vmatprep.mubr.bf16.mxu0 0
    %8013 = vmatmul.mubr.bf16.gmra.mxu0 %v6889
    %v8014 = vpop.f32.mrf.mxu0
    %v8015 = vadd.f32 %v7303, %v8014
    %v8016 = vpop.f32.mrf.mxu0
    %v8017 = vpop.f32.mrf.mxu0
    %v8018 = vadd.f32 %v7306, %v8017
    %v8019 = vpop.f32.mrf.mxu0
    %8020 = vmatprep.mubr.bf16.mxu0 0
    %8021 = vmatmul.mubr.bf16.gmra.mxu0 %v6892
    %v8022 = vpop.f32.mrf.mxu0
    %v8023 = vadd.f32 %v7311, %v8022
    %v8024 = vpop.f32.mrf.mxu0
    %v8025 = vpop.f32.mrf.mxu0
    %v8026 = vadd.f32 %v7314, %v8025
    %v8027 = vpop.f32.mrf.mxu0
    %8028 = vmatprep.mubr.bf16.mxu0 0
    %8029 = vmatmul.mubr.bf16.gmra.mxu0 %v6895
    %v8030 = vpop.f32.mrf.mxu0
    %v8031 = vadd.f32 %v7319, %v8030
    %v8032 = vpop.f32.mrf.mxu0
    %v8033 = vpop.f32.mrf.mxu0
    %v8034 = vadd.f32 %v7322, %v8033
    %v8035 = vpop.f32.mrf.mxu0
    %8036 = vmatprep.mubr.bf16.mxu0 0
    %8037 = vmatmul.mubr.bf16.gmra.mxu0 %v6898
    %v8038 = vpop.f32.mrf.mxu0
    %v8039 = vadd.f32 %v7327, %v8038
    %v8040 = vpop.f32.mrf.mxu0
    %v8041 = vpop.f32.mrf.mxu0
    %v8042 = vadd.f32 %v7330, %v8041
    %v8043 = vpop.f32.mrf.mxu0
    %8044 = vmatprep.mubr.bf16.mxu0 0
    %8045 = vmatmul.mubr.bf16.gmra.mxu0 %v6901
    %v8046 = vpop.f32.mrf.mxu0
    %v8047 = vadd.f32 %v7335, %v8046
    %v8048 = vpop.f32.mrf.mxu0
    %v8049 = vpop.f32.mrf.mxu0
    %v8050 = vadd.f32 %v7338, %v8049
    %v8051 = vpop.f32.mrf.mxu0
    %8052 = vmatprep.mubr.bf16.mxu0 0
    %8053 = vmatmul.mubr.bf16.gmra.mxu0 %v6904
    %v8054 = vpop.f32.mrf.mxu0
    %v8055 = vadd.f32 %v7343, %v8054
    %v8056 = vpop.f32.mrf.mxu0
    %v8057 = vpop.f32.mrf.mxu0
    %v8058 = vadd.f32 %v7346, %v8057
    %v8059 = vpop.f32.mrf.mxu0
    %8060 = vmatprep.mubr.bf16.mxu0 0
    %8061 = vmatmul.mubr.bf16.gmra.mxu0 %v6907
    %v8062 = vpop.f32.mrf.mxu0
    %v8063 = vadd.f32 %v7351, %v8062
    %v8064 = vpop.f32.mrf.mxu0
    %v8065 = vpop.f32.mrf.mxu0
    %v8066 = vadd.f32 %v7354, %v8065
    %v8067 = vpop.f32.mrf.mxu0
    %8068 = vmatprep.mubr.bf16.mxu0 0
    %8069 = vmatmul.mubr.bf16.gmra.mxu0 %v6910
    %v8070 = vpop.f32.mrf.mxu0
    %v8071 = vadd.f32 %v7359, %v8070
    %v8072 = vpop.f32.mrf.mxu0
    %v8073 = vpop.f32.mrf.mxu0
    %v8074 = vadd.f32 %v7362, %v8073
    %v8075 = vpop.f32.mrf.mxu0
    %8076 = vmatprep.mubr.bf16.mxu0 0
    %8077 = vmatmul.mubr.bf16.gmra.mxu0 %v6913
    %v8078 = vpop.f32.mrf.mxu0
    %v8079 = vadd.f32 %v7367, %v8078
    %v8080 = vpop.f32.mrf.mxu0
    %v8081 = vpop.f32.mrf.mxu0
    %v8082 = vadd.f32 %v7370, %v8081
    %v8083 = vpop.f32.mrf.mxu0
    %8084 = vmatprep.mubr.bf16.mxu0 0
    %8085 = vmatmul.mubr.bf16.gmra.mxu0 %v6916
    %v8086 = vpop.f32.mrf.mxu0
    %v8087 = vadd.f32 %v7375, %v8086
    %v8088 = vpop.f32.mrf.mxu0
    %v8089 = vpop.f32.mrf.mxu0
    %v8090 = vadd.f32 %v7378, %v8089
    %v8091 = vpop.f32.mrf.mxu0
    %8092 = vmatprep.mubr.bf16.mxu0 0
    %8093 = vmatmul.mubr.bf16.gmra.mxu0 %v6919
    %v8094 = vpop.f32.mrf.mxu0
    %v8095 = vadd.f32 %v7383, %v8094
    %v8096 = vpop.f32.mrf.mxu0
    %v8097 = vpop.f32.mrf.mxu0
    %v8098 = vadd.f32 %v7386, %v8097
    %v8099 = vpop.f32.mrf.mxu0
    %8100 = vmatprep.mubr.bf16.mxu0 0
    %8101 = vmatmul.mubr.bf16.gmra.mxu0 %v6922
    %v8102 = vpop.f32.mrf.mxu0
    %v8103 = vadd.f32 %v7391, %v8102
    %v8104 = vpop.f32.mrf.mxu0
    %v8105 = vpop.f32.mrf.mxu0
    %v8106 = vadd.f32 %v7394, %v8105
    %v8107 = vpop.f32.mrf.mxu0
    %8108 = vmatprep.mubr.bf16.mxu0 0
    %8109 = vmatmul.mubr.bf16.gmra.mxu0 %v6925
    %v8110 = vpop.f32.mrf.mxu0
    %v8111 = vadd.f32 %v7399, %v8110
    %v8112 = vpop.f32.mrf.mxu0
    %v8113 = vpop.f32.mrf.mxu0
    %v8114 = vadd.f32 %v7402, %v8113
    %v8115 = vpop.f32.mrf.mxu0
    %8116 = vmatprep.mubr.bf16.mxu0 0
    %8117 = vmatmul.mubr.bf16.gmra.mxu0 %v6928
    %v8118 = vpop.f32.mrf.mxu0
    %v8119 = vadd.f32 %v7407, %v8118
    %v8120 = vpop.f32.mrf.mxu0
    %v8121 = vpop.f32.mrf.mxu0
    %v8122 = vadd.f32 %v7410, %v8121
    %v8123 = vpop.f32.mrf.mxu0
    %8124 = vmatprep.mubr.bf16.mxu0 0
    %8125 = vmatmul.mubr.bf16.gmra.mxu0 %v6931
    %v8126 = vpop.f32.mrf.mxu0
    %v8127 = vadd.f32 %v7415, %v8126
    %v8128 = vpop.f32.mrf.mxu0
    %v8129 = vpop.f32.mrf.mxu0
    %v8130 = vadd.f32 %v7418, %v8129
    %v8131 = vpop.f32.mrf.mxu0
    %8132 = vmatprep.mubr.bf16.mxu0 0
    %8133 = vmatmul.mubr.bf16.gmra.mxu0 %v6934
    %v8134 = vpop.f32.mrf.mxu0
    %v8135 = vadd.f32 %v7423, %v8134
    %v8136 = vpop.f32.mrf.mxu0
    %v8137 = vpop.f32.mrf.mxu0
    %v8138 = vadd.f32 %v7426, %v8137
    %v8139 = vpop.f32.mrf.mxu0
    %8140 = vmatprep.mubr.bf16.mxu0 0
    %8141 = vmatmul.mubr.bf16.gmra.mxu0 %v6937
    %v8142 = vpop.f32.mrf.mxu0
    %v8143 = vadd.f32 %v7431, %v8142
    %v8144 = vpop.f32.mrf.mxu0
    %v8145 = vpop.f32.mrf.mxu0
    %v8146 = vadd.f32 %v7434, %v8145
    %v8147 = vpop.f32.mrf.mxu0
    %8148 = vmatprep.mubr.bf16.mxu0 0
    %8149 = vmatmul.mubr.bf16.gmra.mxu0 %v6940
    %v8150 = vpop.f32.mrf.mxu0
    %v8151 = vadd.f32 %v7439, %v8150
    %v8152 = vpop.f32.mrf.mxu0
    %v8153 = vpop.f32.mrf.mxu0
    %v8154 = vadd.f32 %v7442, %v8153
    %v8155 = vpop.f32.mrf.mxu0
    %8156 = vmatprep.mubr.bf16.mxu0 0
    %8157 = vmatmul.mubr.bf16.gmra.mxu0 %v6943
    %v8158 = vpop.f32.mrf.mxu0
    %v8159 = vadd.f32 %v7447, %v8158
    %v8160 = vpop.f32.mrf.mxu0
    %v8161 = vpop.f32.mrf.mxu0
    %v8162 = vadd.f32 %v7450, %v8161
    %v8163 = vpop.f32.mrf.mxu0
    %8164 = vmatprep.mubr.bf16.mxu0 0
    %8165 = vmatmul.mubr.bf16.gmra.mxu0 %v6946
    %v8166 = vpop.f32.mrf.mxu0
    %v8167 = vadd.f32 %v7455, %v8166
    %v8168 = vpop.f32.mrf.mxu0
    %v8169 = vpop.f32.mrf.mxu0
    %v8170 = vadd.f32 %v7458, %v8169
    %v8171 = vpop.f32.mrf.mxu0
    %8172 = vmatprep.mubr.bf16.mxu0 0
    %8173 = vmatmul.mubr.bf16.gmra.mxu0 %v6949
    %v8174 = vpop.f32.mrf.mxu0
    %v8175 = vadd.f32 %v7463, %v8174
    %v8176 = vpop.f32.mrf.mxu0
    %v8177 = vpop.f32.mrf.mxu0
    %v8178 = vadd.f32 %v7466, %v8177
    %v8179 = vpop.f32.mrf.mxu0
    %8180 = vmatprep.mubr.bf16.mxu0 0
    %8181 = vmatmul.mubr.bf16.gmra.mxu0 %v6952
    %v8182 = vpop.f32.mrf.mxu0
    %v8183 = vadd.f32 %v7471, %v8182
    %v8184 = vpop.f32.mrf.mxu0
    %v8185 = vpop.f32.mrf.mxu0
    %v8186 = vadd.f32 %v7474, %v8185
    %v8187 = vpop.f32.mrf.mxu0
    %8188 = vmatprep.mubr.bf16.mxu0 0
    %8189 = vmatmul.mubr.bf16.gmra.mxu0 %v6955
    %v8190 = vpop.f32.mrf.mxu0
    %v8191 = vadd.f32 %v7479, %v8190
    %v8192 = vpop.f32.mrf.mxu0
    %v8193 = vpop.f32.mrf.mxu0
    %v8194 = vadd.f32 %v7482, %v8193
    %v8195 = vpop.f32.mrf.mxu0
    %8196 = vmatprep.mubr.bf16.mxu0 0
    %8197 = vmatmul.mubr.bf16.gmra.mxu0 %v6958
    %v8198 = vpop.f32.mrf.mxu0
    %v8199 = vadd.f32 %v7487, %v8198
    %v8200 = vpop.f32.mrf.mxu0
    %v8201 = vpop.f32.mrf.mxu0
    %v8202 = vadd.f32 %v7490, %v8201
    %v8203 = vpop.f32.mrf.mxu0
    %8204 = vmatprep.mubr.bf16.mxu0 0
    %8205 = vmatmul.mubr.bf16.gmra.mxu0 %v6961
    %v8206 = vpop.f32.mrf.mxu0
    %v8207 = vadd.f32 %v7495, %v8206
    %v8208 = vpop.f32.mrf.mxu0
    %v8209 = vpop.f32.mrf.mxu0
    %v8210 = vadd.f32 %v7498, %v8209
    %v8211 = vpop.f32.mrf.mxu0
    %8212 = vmatprep.mubr.bf16.mxu0 0
    %8213 = vmatmul.mubr.bf16.gmra.mxu0 %v6964
    %v8214 = vpop.f32.mrf.mxu0
    %v8215 = vadd.f32 %v7503, %v8214
    %v8216 = vpop.f32.mrf.mxu0
    %v8217 = vpop.f32.mrf.mxu0
    %v8218 = vadd.f32 %v7506, %v8217
    %v8219 = vpop.f32.mrf.mxu0
    %8220 = vmatprep.mubr.bf16.mxu0 0
    %8221 = vmatmul.mubr.bf16.gmra.mxu0 %v6967
    %v8222 = vpop.f32.mrf.mxu0
    %v8223 = vadd.f32 %v7511, %v8222
    %v8224 = vpop.f32.mrf.mxu0
    %v8225 = vpop.f32.mrf.mxu0
    %v8226 = vadd.f32 %v7514, %v8225
    %v8227 = vpop.f32.mrf.mxu0
    %8228 = vmatprep.mubr.bf16.mxu0 0
    %8229 = vmatmul.mubr.bf16.gmra.mxu0 %v6970
    %v8230 = vpop.f32.mrf.mxu0
    %v8231 = vadd.f32 %v7519, %v8230
    %v8232 = vpop.f32.mrf.mxu0
    %v8233 = vpop.f32.mrf.mxu0
    %v8234 = vadd.f32 %v7522, %v8233
    %v8235 = vpop.f32.mrf.mxu0
    %8236 = vmatprep.mubr.bf16.mxu0 0
    %8237 = vmatmul.mubr.bf16.gmra.mxu0 %v6973
    %v8238 = vpop.f32.mrf.mxu0
    %v8239 = vadd.f32 %v7527, %v8238
    %v8240 = vpop.f32.mrf.mxu0
    %v8241 = vpop.f32.mrf.mxu0
    %v8242 = vadd.f32 %v7530, %v8241
    %v8243 = vpop.f32.mrf.mxu0
    %8244 = vmatprep.mubr.bf16.mxu0 0
    %8245 = vmatmul.mubr.bf16.gmra.mxu0 %v6976
    %v8246 = vpop.f32.mrf.mxu0
    %v8247 = vadd.f32 %v7535, %v8246
    %v8248 = vpop.f32.mrf.mxu0
    %v8249 = vpop.f32.mrf.mxu0
    %v8250 = vadd.f32 %v7538, %v8249
    %v8251 = vpop.f32.mrf.mxu0
    %8252 = vmatprep.mubr.bf16.mxu0 0
    %8253 = vmatmul.mubr.bf16.gmra.mxu0 %v6979
    %v8254 = vpop.f32.mrf.mxu0
    %v8255 = vadd.f32 %v7543, %v8254
    %v8256 = vpop.f32.mrf.mxu0
    %v8257 = vpop.f32.mrf.mxu0
    %v8258 = vadd.f32 %v7546, %v8257
    %v8259 = vpop.f32.mrf.mxu0
    %8260 = vmatprep.mubr.bf16.mxu0 0
    %8261 = vmatmul.mubr.bf16.gmra.mxu0 %v6982
    %v8262 = vpop.f32.mrf.mxu0
    %v8263 = vadd.f32 %v7551, %v8262
    %v8264 = vpop.f32.mrf.mxu0
    %v8265 = vpop.f32.mrf.mxu0
    %v8266 = vadd.f32 %v7554, %v8265
    %v8267 = vpop.f32.mrf.mxu0
    %8268 = vmatprep.mubr.bf16.mxu0 0
    %8269 = vmatmul.mubr.bf16.gmra.mxu0 %v6985
    %v8270 = vpop.f32.mrf.mxu0
    %v8271 = vadd.f32 %v7559, %v8270
    %v8272 = vpop.f32.mrf.mxu0
    %v8273 = vpop.f32.mrf.mxu0
    %v8274 = vadd.f32 %v7562, %v8273
    %v8275 = vpop.f32.mrf.mxu0
    %8276 = vmatprep.mubr.bf16.mxu0 0
    %8277 = vmatmul.mubr.bf16.gmra.mxu0 %v6988
    %v8278 = vpop.f32.mrf.mxu0
    %v8279 = vadd.f32 %v7567, %v8278
    %v8280 = vpop.f32.mrf.mxu0
    %v8281 = vpop.f32.mrf.mxu0
    %v8282 = vadd.f32 %v7570, %v8281
    %v8283 = vpop.f32.mrf.mxu0
    %8284 = vmatprep.mubr.bf16.mxu0 0
    %8285 = vmatmul.mubr.bf16.gmra.mxu0 %v6991
    %v8286 = vpop.f32.mrf.mxu0
    %v8287 = vadd.f32 %v7575, %v8286
    %v8288 = vpop.f32.mrf.mxu0
    %v8289 = vpop.f32.mrf.mxu0
    %v8290 = vadd.f32 %v7578, %v8289
    %v8291 = vpop.f32.mrf.mxu0
    %8292 = vmatprep.mubr.bf16.mxu0 0
    %8293 = vmatmul.mubr.bf16.gmra.mxu0 %v6994
    %v8294 = vpop.f32.mrf.mxu0
    %v8295 = vadd.f32 %v7583, %v8294
    %v8296 = vpop.f32.mrf.mxu0
    %v8297 = vpop.f32.mrf.mxu0
    %v8298 = vadd.f32 %v7586, %v8297
    %v8299 = vpop.f32.mrf.mxu0
    %8300 = vmatprep.mubr.bf16.mxu0 0
    %8301 = vmatmul.mubr.bf16.gmra.mxu0 %v6997
    %v8302 = vpop.f32.mrf.mxu0
    %v8303 = vadd.f32 %v7591, %v8302
    %v8304 = vpop.f32.mrf.mxu0
    %v8305 = vpop.f32.mrf.mxu0
    %v8306 = vadd.f32 %v7594, %v8305
    %v8307 = vpop.f32.mrf.mxu0
    %8308 = vmatprep.mubr.bf16.mxu0 0
    %8309 = vmatmul.mubr.bf16.gmra.mxu0 %v7000
    %v8310 = vpop.f32.mrf.mxu0
    %v8311 = vadd.f32 %v7599, %v8310
    %v8312 = vpop.f32.mrf.mxu0
    %v8313 = vpop.f32.mrf.mxu0
    %v8314 = vadd.f32 %v7602, %v8313
    %v8315 = vpop.f32.mrf.mxu0
    %8316 = vmatprep.mubr.bf16.mxu0 0
    %8317 = vmatmul.mubr.bf16.gmra.mxu0 %v7003
    %v8318 = vpop.f32.mrf.mxu0
    %v8319 = vadd.f32 %v7607, %v8318
    %v8320 = vpop.f32.mrf.mxu0
    %v8321 = vpop.f32.mrf.mxu0
    %v8322 = vadd.f32 %v7610, %v8321
    %v8323 = vpop.f32.mrf.mxu0
    %8324 = vmatprep.mubr.bf16.mxu0 0
    %8325 = vmatmul.mubr.bf16.gmra.mxu0 %v7006
    %v8326 = vpop.f32.mrf.mxu0
    %v8327 = vadd.f32 %v7615, %v8326
    %v8328 = vpop.f32.mrf.mxu0
    %v8329 = vpop.f32.mrf.mxu0
    %v8330 = vadd.f32 %v7618, %v8329
    %v8331 = vpop.f32.mrf.mxu0
    %8332 = vmatprep.mubr.bf16.mxu0 0
    %8333 = vmatmul.mubr.bf16.gmra.mxu0 %v7009
    %v8334 = vpop.f32.mrf.mxu0
    %v8335 = vadd.f32 %v7623, %v8334
    %v8336 = vpop.f32.mrf.mxu0
    %v8337 = vpop.f32.mrf.mxu0
    %v8338 = vadd.f32 %v7626, %v8337
    %v8339 = vpop.f32.mrf.mxu0
    %8340 = vmatprep.mubr.bf16.mxu0 0
    %8341 = vmatmul.mubr.bf16.gmra.mxu0 %v7012
    %v8342 = vpop.f32.mrf.mxu0
    %v8343 = vadd.f32 %v7631, %v8342
    %v8344 = vpop.f32.mrf.mxu0
    %v8345 = vpop.f32.mrf.mxu0
    %v8346 = vadd.f32 %v7634, %v8345
    %v8347 = vpop.f32.mrf.mxu0
    %8348 = vmatprep.mubr.bf16.mxu0 0
    %8349 = vmatmul.mubr.bf16.gmra.mxu0 %v7015
    %v8350 = vpop.f32.mrf.mxu0
    %v8351 = vadd.f32 %v7639, %v8350
    %v8352 = vpop.f32.mrf.mxu0
    %v8353 = vpop.f32.mrf.mxu0
    %v8354 = vadd.f32 %v7642, %v8353
    %v8355 = vpop.f32.mrf.mxu0
    %8356 = vmatprep.mubr.bf16.mxu0 0
    %8357 = vmatmul.mubr.bf16.gmra.mxu0 %v7018
    %v8358 = vpop.f32.mrf.mxu0
    %v8359 = vadd.f32 %v7647, %v8358
    %v8360 = vpop.f32.mrf.mxu0
    %v8361 = vpop.f32.mrf.mxu0
    %v8362 = vadd.f32 %v7650, %v8361
    %v8363 = vpop.f32.mrf.mxu0
    %8364 = vmatprep.mubr.bf16.mxu0 0
    %8365 = vmatmul.mubr.bf16.gmra.mxu0 %v7021
    %v8366 = vpop.f32.mrf.mxu0
    %v8367 = vadd.f32 %v7655, %v8366
    %v8368 = vpop.f32.mrf.mxu0
    %v8369 = vpop.f32.mrf.mxu0
    %v8370 = vadd.f32 %v7658, %v8369
    %v8371 = vpop.f32.mrf.mxu0
    %8372 = vmatprep.mubr.bf16.mxu0 0
    %8373 = vmatmul.mubr.bf16.gmra.mxu0 %v7024
    %v8374 = vpop.f32.mrf.mxu0
    %v8375 = vadd.f32 %v7663, %v8374
    %v8376 = vpop.f32.mrf.mxu0
    %v8377 = vpop.f32.mrf.mxu0
    %v8378 = vadd.f32 %v7666, %v8377
    %v8379 = vpop.f32.mrf.mxu0
    %8380 = vmatprep.mubr.bf16.mxu0 0
    %8381 = vmatmul.mubr.bf16.gmra.mxu0 %v7027
    %v8382 = vpop.f32.mrf.mxu0
    %v8383 = vadd.f32 %v7671, %v8382
    %v8384 = vpop.f32.mrf.mxu0
    %v8385 = vpop.f32.mrf.mxu0
    %v8386 = vadd.f32 %v7674, %v8385
    %v8387 = vpop.f32.mrf.mxu0
    %8388 = vmatprep.mubr.bf16.mxu0 0
    %8389 = vmatmul.mubr.bf16.gmra.mxu0 %v7030
    %v8390 = vpop.f32.mrf.mxu0
    %v8391 = vadd.f32 %v7679, %v8390
    %v8392 = vpop.f32.mrf.mxu0
    %v8393 = vpop.f32.mrf.mxu0
    %v8394 = vadd.f32 %v7682, %v8393
    %v8395 = vpop.f32.mrf.mxu0
    %8396 = vmatprep.mubr.bf16.mxu0 0
    %8397 = vmatmul.mubr.bf16.gmra.mxu0 %v7033
    %v8398 = vpop.f32.mrf.mxu0
    %v8399 = vadd.f32 %v7687, %v8398
    %v8400 = vpop.f32.mrf.mxu0
    %v8401 = vpop.f32.mrf.mxu0
    %v8402 = vadd.f32 %v7690, %v8401
    %v8403 = vpop.f32.mrf.mxu0
    %8404 = vmatprep.mubr.bf16.mxu0 0
    %8405 = vmatmul.mubr.bf16.gmra.mxu0 %v7036
    %v8406 = vpop.f32.mrf.mxu0
    %v8407 = vadd.f32 %v7695, %v8406
    %v8408 = vpop.f32.mrf.mxu0
    %v8409 = vpop.f32.mrf.mxu0
    %v8410 = vadd.f32 %v7698, %v8409
    %v8411 = vpop.f32.mrf.mxu0
    %8412 = vmatprep.mubr.bf16.mxu0 0
    %8413 = vmatmul.mubr.bf16.gmra.mxu0 %v7039
    %v8414 = vpop.f32.mrf.mxu0
    %v8415 = vadd.f32 %v7703, %v8414
    %v8416 = vpop.f32.mrf.mxu0
    %v8417 = vpop.f32.mrf.mxu0
    %v8418 = vadd.f32 %v7706, %v8417
    %v8419 = vpop.f32.mrf.mxu0
    %8420 = vmatprep.mubr.bf16.mxu0 0
    %8421 = vmatmul.mubr.bf16.gmra.mxu0 %v7042
    %v8422 = vpop.f32.mrf.mxu0
    %v8423 = vadd.f32 %v7711, %v8422
    %v8424 = vpop.f32.mrf.mxu0
    %v8425 = vpop.f32.mrf.mxu0
    %v8426 = vadd.f32 %v7714, %v8425
    %v8427 = vpop.f32.mrf.mxu0
    %8428 = vmatprep.mubr.bf16.mxu0 0
    %8429 = vmatmul.mubr.bf16.gmra.mxu0 %v7045
    %v8430 = vpop.f32.mrf.mxu0
    %v8431 = vadd.f32 %v7719, %v8430
    %v8432 = vpop.f32.mrf.mxu0
    %v8433 = vpop.f32.mrf.mxu0
    %v8434 = vadd.f32 %v7722, %v8433
    %v8435 = vpop.f32.mrf.mxu0
    %8436 = vmatprep.mubr.bf16.mxu0 0
    %8437 = vmatmul.mubr.bf16.gmra.mxu0 %v7048
    %v8438 = vpop.f32.mrf.mxu0
    %v8439 = vadd.f32 %v7727, %v8438
    %v8440 = vpop.f32.mrf.mxu0
    %v8441 = vpop.f32.mrf.mxu0
    %v8442 = vadd.f32 %v7730, %v8441
    %v8443 = vpop.f32.mrf.mxu0
    %8444 = vmatprep.mubr.bf16.mxu0 0
    %8445 = vmatmul.mubr.bf16.gmra.mxu0 %v7051
    %v8446 = vpop.f32.mrf.mxu0
    %v8447 = vadd.f32 %v7735, %v8446
    %v8448 = vpop.f32.mrf.mxu0
    %v8449 = vpop.f32.mrf.mxu0
    %v8450 = vadd.f32 %v7738, %v8449
    %v8451 = vpop.f32.mrf.mxu0
    %8452 = vmatprep.mubr.bf16.mxu0 0
    %8453 = vmatmul.mubr.bf16.gmra.mxu0 %v7054
    %v8454 = vpop.f32.mrf.mxu0
    %v8455 = vadd.f32 %v7743, %v8454
    %v8456 = vpop.f32.mrf.mxu0
    %v8457 = vpop.f32.mrf.mxu0
    %v8458 = vadd.f32 %v7746, %v8457
    %v8459 = vpop.f32.mrf.mxu0
    %8460 = vmatprep.mubr.bf16.mxu0 0
    %8461 = vmatmul.mubr.bf16.gmra.mxu0 %v7057
    %v8462 = vpop.f32.mrf.mxu0
    %v8463 = vadd.f32 %v7751, %v8462
    %v8464 = vpop.f32.mrf.mxu0
    %v8465 = vpop.f32.mrf.mxu0
    %v8466 = vadd.f32 %v7754, %v8465
    %v8467 = vpop.f32.mrf.mxu0
    %8468 = vmatprep.mubr.bf16.mxu0 0
    %8469 = vmatmul.mubr.bf16.gmra.mxu0 %v7060
    %v8470 = vpop.f32.mrf.mxu0
    %v8471 = vadd.f32 %v7759, %v8470
    %v8472 = vpop.f32.mrf.mxu0
    %v8473 = vpop.f32.mrf.mxu0
    %v8474 = vadd.f32 %v7762, %v8473
    %v8475 = vpop.f32.mrf.mxu0
    %8476 = vmatprep.mubr.bf16.mxu0 0
    %8477 = vmatmul.mubr.bf16.gmra.mxu0 %v7063
    %v8478 = vpop.f32.mrf.mxu0
    %v8479 = vadd.f32 %v7767, %v8478
    %v8480 = vpop.f32.mrf.mxu0
    %v8481 = vpop.f32.mrf.mxu0
    %v8482 = vadd.f32 %v7770, %v8481
    %v8483 = vpop.f32.mrf.mxu0
    %8484 = vmatprep.mubr.bf16.mxu0 0
    %8485 = vmatmul.mubr.bf16.gmra.mxu0 %v7066
    %v8486 = vpop.f32.mrf.mxu0
    %v8487 = vadd.f32 %v7775, %v8486
    %v8488 = vpop.f32.mrf.mxu0
    %v8489 = vpop.f32.mrf.mxu0
    %v8490 = vpop.f32.mrf.mxu0
    %8491 = vdwg.mxu0
    %v8492 = vmax.f32 %v7815, 0.0
    %v8493 = vmax.f32 %v7818, 0.0
    %v8494 = vmax.f32 %v7823, 0.0
    %v8495 = vmax.f32 %v7826, 0.0
    %v8496 = vmax.f32 %v7831, 0.0
    %v8497 = vmax.f32 %v7834, 0.0
    %v8498 = vmax.f32 %v7839, 0.0
    %v8499 = vmax.f32 %v7842, 0.0
    %v8500 = vmax.f32 %v7847, 0.0
    %v8501 = vmax.f32 %v7850, 0.0
    %v8502 = vmax.f32 %v7855, 0.0
    %v8503 = vmax.f32 %v7858, 0.0
    %v8504 = vmax.f32 %v7863, 0.0
    %v8505 = vmax.f32 %v7866, 0.0
    %v8506 = vmax.f32 %v7871, 0.0
    %v8507 = vmax.f32 %v7874, 0.0
    %v8508 = vmax.f32 %v7879, 0.0
    %v8509 = vmax.f32 %v7882, 0.0
    %v8510 = vmax.f32 %v7887, 0.0
    %v8511 = vmax.f32 %v7890, 0.0
    %v8512 = vmax.f32 %v7895, 0.0
    %v8513 = vmax.f32 %v7898, 0.0
    %v8514 = vmax.f32 %v7903, 0.0
    %v8515 = vmax.f32 %v7906, 0.0
    %v8516 = vmax.f32 %v7911, 0.0
    %v8517 = vmax.f32 %v7914, 0.0
    %v8518 = vmax.f32 %v7919, 0.0
    %v8519 = vmax.f32 %v7922, 0.0
    %v8520 = vmax.f32 %v7927, 0.0
    %v8521 = vmax.f32 %v7930, 0.0
    %v8522 = vmax.f32 %v7935, 0.0
    %v8523 = vmax.f32 %v7938, 0.0
    %v8524 = vmax.f32 %v7943, 0.0
    %v8525 = vmax.f32 %v7946, 0.0
    %v8526 = vmax.f32 %v7951, 0.0
    %v8527 = vmax.f32 %v7954, 0.0
    %v8528 = vmax.f32 %v7959, 0.0
    %v8529 = vmax.f32 %v7962, 0.0
    %v8530 = vmax.f32 %v7967, 0.0
    %v8531 = vmax.f32 %v7970, 0.0
    %v8532 = vmax.f32 %v7975, 0.0
    %v8533 = vmax.f32 %v7978, 0.0
    %v8534 = vmax.f32 %v7983, 0.0
    %v8535 = vmax.f32 %v7986, 0.0
    %v8536 = vmax.f32 %v7991, 0.0
    %v8537 = vmax.f32 %v7994, 0.0
    %v8538 = vmax.f32 %v7999, 0.0
    %v8539 = vmax.f32 %v8002, 0.0
    %v8540 = vmax.f32 %v8007, 0.0
    %v8541 = vmax.f32 %v8010, 0.0
    %v8542 = vmax.f32 %v8015, 0.0
    %v8543 = vmax.f32 %v8018, 0.0
    %v8544 = vmax.f32 %v8023, 0.0
    %v8545 = vmax.f32 %v8026, 0.0
    %v8546 = vmax.f32 %v8031, 0.0
    %v8547 = vmax.f32 %v8034, 0.0
    %v8548 = vmax.f32 %v8039, 0.0
    %v8549 = vmax.f32 %v8042, 0.0
    %v8550 = vmax.f32 %v8047, 0.0
    %v8551 = vmax.f32 %v8050, 0.0
    %v8552 = vmax.f32 %v8055, 0.0
    %v8553 = vmax.f32 %v8058, 0.0
    %v8554 = vmax.f32 %v8063, 0.0
    %v8555 = vmax.f32 %v8066, 0.0
    %v8556 = vmax.f32 %v8071, 0.0
    %v8557 = vmax.f32 %v8074, 0.0
    %v8558 = vmax.f32 %v8079, 0.0
    %v8559 = vmax.f32 %v8082, 0.0
    %v8560 = vmax.f32 %v8087, 0.0
    %v8561 = vmax.f32 %v8090, 0.0
    %v8562 = vmax.f32 %v8095, 0.0
    %v8563 = vmax.f32 %v8098, 0.0
    %v8564 = vmax.f32 %v8103, 0.0
    %v8565 = vmax.f32 %v8106, 0.0
    %v8566 = vmax.f32 %v8111, 0.0
    %v8567 = vmax.f32 %v8114, 0.0
    %v8568 = vmax.f32 %v8119, 0.0
    %v8569 = vmax.f32 %v8122, 0.0
    %v8570 = vmax.f32 %v8127, 0.0
    %v8571 = vmax.f32 %v8130, 0.0
    %v8572 = vmax.f32 %v8135, 0.0
    %v8573 = vmax.f32 %v8138, 0.0
    %v8574 = vmax.f32 %v8143, 0.0
    %v8575 = vmax.f32 %v8146, 0.0
    %v8576 = vmax.f32 %v8151, 0.0
    %v8577 = vmax.f32 %v8154, 0.0
    %v8578 = vmax.f32 %v8159, 0.0
    %v8579 = vmax.f32 %v8162, 0.0
    %v8580 = vmax.f32 %v8167, 0.0
    %v8581 = vmax.f32 %v8170, 0.0
    %v8582 = vmax.f32 %v8175, 0.0
    %v8583 = vmax.f32 %v8178, 0.0
    %v8584 = vmax.f32 %v8183, 0.0
    %v8585 = vmax.f32 %v8186, 0.0
    %v8586 = vmax.f32 %v8191, 0.0
    %v8587 = vmax.f32 %v8194, 0.0
    %v8588 = vmax.f32 %v8199, 0.0
    %v8589 = vmax.f32 %v8202, 0.0
    %v8590 = vmax.f32 %v8207, 0.0
    %v8591 = vmax.f32 %v8210, 0.0
    %v8592 = vmax.f32 %v8215, 0.0
    %v8593 = vmax.f32 %v8218, 0.0
    %v8594 = vmax.f32 %v8223, 0.0
    %v8595 = vmax.f32 %v8226, 0.0
    %v8596 = vmax.f32 %v8231, 0.0
    %v8597 = vmax.f32 %v8234, 0.0
    %v8598 = vmax.f32 %v8239, 0.0
    %v8599 = vmax.f32 %v8242, 0.0
    %v8600 = vmax.f32 %v8247, 0.0
    %v8601 = vmax.f32 %v8250, 0.0
    %v8602 = vmax.f32 %v8255, 0.0
    %v8603 = vmax.f32 %v8258, 0.0
    %v8604 = vmax.f32 %v8263, 0.0
    %v8605 = vmax.f32 %v8266, 0.0
    %v8606 = vmax.f32 %v8271, 0.0
    %v8607 = vmax.f32 %v8274, 0.0
    %v8608 = vmax.f32 %v8279, 0.0
    %v8609 = vmax.f32 %v8282, 0.0
    %v8610 = vmax.f32 %v8287, 0.0
    %v8611 = vmax.f32 %v8290, 0.0
    %v8612 = vmax.f32 %v8295, 0.0
    %v8613 = vmax.f32 %v8298, 0.0
    %v8614 = vmax.f32 %v8303, 0.0
    %v8615 = vmax.f32 %v8306, 0.0
    %v8616 = vmax.f32 %v8311, 0.0
    %v8617 = vmax.f32 %v8314, 0.0
    %v8618 = vmax.f32 %v8319, 0.0
    %v8619 = vmax.f32 %v8322, 0.0
    %v8620 = vmax.f32 %v8327, 0.0
    %v8621 = vmax.f32 %v8330, 0.0
    %v8622 = vmax.f32 %v8335, 0.0
    %v8623 = vmax.f32 %v8338, 0.0
    %v8624 = vmax.f32 %v8343, 0.0
    %v8625 = vmax.f32 %v8346, 0.0
    %v8626 = vmax.f32 %v8351, 0.0
    %v8627 = vmax.f32 %v8354, 0.0
    %v8628 = vmax.f32 %v8359, 0.0
    %v8629 = vmax.f32 %v8362, 0.0
    %v8630 = vmax.f32 %v8367, 0.0
    %v8631 = vmax.f32 %v8370, 0.0
    %v8632 = vmax.f32 %v8375, 0.0
    %v8633 = vmax.f32 %v8378, 0.0
    %v8634 = vmax.f32 %v8383, 0.0
    %v8635 = vmax.f32 %v8386, 0.0
    %v8636 = vmax.f32 %v8391, 0.0
    %v8637 = vmax.f32 %v8394, 0.0
    %v8638 = vmax.f32 %v8399, 0.0
    %v8639 = vmax.f32 %v8402, 0.0
    %v8640 = vmax.f32 %v8407, 0.0
    %v8641 = vmax.f32 %v8410, 0.0
    %v8642 = vmax.f32 %v8415, 0.0
    %v8643 = vmax.f32 %v8418, 0.0
    %v8644 = vmax.f32 %v8423, 0.0
    %v8645 = vmax.f32 %v8426, 0.0
    %v8646 = vmax.f32 %v8431, 0.0
    %v8647 = vmax.f32 %v8434, 0.0
    %v8648 = vmax.f32 %v8439, 0.0
    %v8649 = vmax.f32 %v8442, 0.0
    %v8650 = vmax.f32 %v8447, 0.0
    %v8651 = vmax.f32 %v8450, 0.0
    %v8652 = vmax.f32 %v8455, 0.0
    %v8653 = vmax.f32 %v8458, 0.0
    %v8654 = vmax.f32 %v8463, 0.0
    %v8655 = vmax.f32 %v8466, 0.0
    %v8656 = vmax.f32 %v8471, 0.0
    %v8657 = vmax.f32 %v8474, 0.0
    %v8658 = vmax.f32 %v8479, 0.0
    %v8659 = vmax.f32 %v8482, 0.0
    %v8660 = vmax.f32 %v8487, 0.0
    %8661 = vst.msk [vmem:[#allocation3] sm:$0xff] %vm5555, %v8492
    %8662 = vst.msk [vmem:[#allocation3 + $0x8] sm:$0xff] %vm5555, %v8493
    %8663 = vst.msk [vmem:[#allocation3 + $0x10] sm:$0xff] %vm5555, %v8494
    %8664 = vst.msk [vmem:[#allocation3 + $0x18] sm:$0xff] %vm5555, %v8495
    %8665 = vst.msk [vmem:[#allocation3 + $0x20] sm:$0xff] %vm5555, %v8496
    %8666 = vst.msk [vmem:[#allocation3 + $0x28] sm:$0xff] %vm5555, %v8497
    %8667 = vst.msk [vmem:[#allocation3 + $0x30] sm:$0xff] %vm5555, %v8498
    %8668 = vst.msk [vmem:[#allocation3 + $0x38] sm:$0xff] %vm5555, %v8499
    %8669 = vst.msk [vmem:[#allocation3 + $0x40] sm:$0xff] %vm5555, %v8500
    %8670 = vst.msk [vmem:[#allocation3 + $0x48] sm:$0xff] %vm5555, %v8501
    %8671 = vst.msk [vmem:[#allocation3 + $0x50] sm:$0xff] %vm5555, %v8502
    %8672 = vst.msk [vmem:[#allocation3 + $0x58] sm:$0xff] %vm5555, %v8503
    %8673 = vst.msk [vmem:[#allocation3 + $0x60] sm:$0xff] %vm5555, %v8504
    %8674 = vst.msk [vmem:[#allocation3 + $0x68] sm:$0xff] %vm5555, %v8505
    %8675 = vst.msk [vmem:[#allocation3 + $0x70] sm:$0xff] %vm5555, %v8506
    %8676 = vst.msk [vmem:[#allocation3 + $0x78] sm:$0xff] %vm5555, %v8507
    %8677 = vst.msk [vmem:[#allocation3 + $0x80] sm:$0xff] %vm5555, %v8508
    %8678 = vst.msk [vmem:[#allocation3 + $0x88] sm:$0xff] %vm5555, %v8509
    %8679 = vst.msk [vmem:[#allocation3 + $0x90] sm:$0xff] %vm5555, %v8510
    %8680 = vst.msk [vmem:[#allocation3 + $0x98] sm:$0xff] %vm5555, %v8511
    %8681 = vst.msk [vmem:[#allocation3 + $0xa0] sm:$0xff] %vm5555, %v8512
    %8682 = vst.msk [vmem:[#allocation3 + $0xa8] sm:$0xff] %vm5555, %v8513
    %8683 = vst.msk [vmem:[#allocation3 + $0xb0] sm:$0xff] %vm5555, %v8514
    %8684 = vst.msk [vmem:[#allocation3 + $0xb8] sm:$0xff] %vm5555, %v8515
    %8685 = vst.msk [vmem:[#allocation3 + $0xc0] sm:$0xff] %vm5555, %v8516
    %8686 = vst.msk [vmem:[#allocation3 + $0xc8] sm:$0xff] %vm5555, %v8517
    %8687 = vst.msk [vmem:[#allocation3 + $0xd0] sm:$0xff] %vm5555, %v8518
    %8688 = vst.msk [vmem:[#allocation3 + $0xd8] sm:$0xff] %vm5555, %v8519
    %8689 = vst.msk [vmem:[#allocation3 + $0xe0] sm:$0xff] %vm5555, %v8520
    %8690 = vst.msk [vmem:[#allocation3 + $0xe8] sm:$0xff] %vm5555, %v8521
    %8691 = vst.msk [vmem:[#allocation3 + $0xf0] sm:$0xff] %vm5555, %v8522
    %8692 = vst.msk [vmem:[#allocation3 + $0xf8] sm:$0xff] %vm5555, %v8523
    %8693 = vst.msk [vmem:[#allocation3 + $0x100] sm:$0xff] %vm5555, %v8524
    %8694 = vst.msk [vmem:[#allocation3 + $0x108] sm:$0xff] %vm5555, %v8525
    %8695 = vst.msk [vmem:[#allocation3 + $0x110] sm:$0xff] %vm5555, %v8526
    %8696 = vst.msk [vmem:[#allocation3 + $0x118] sm:$0xff] %vm5555, %v8527
    %8697 = vst.msk [vmem:[#allocation3 + $0x120] sm:$0xff] %vm5555, %v8528
    %8698 = vst.msk [vmem:[#allocation3 + $0x128] sm:$0xff] %vm5555, %v8529
    %8699 = vst.msk [vmem:[#allocation3 + $0x130] sm:$0xff] %vm5555, %v8530
    %8700 = vst.msk [vmem:[#allocation3 + $0x138] sm:$0xff] %vm5555, %v8531
    %8701 = vst.msk [vmem:[#allocation3 + $0x140] sm:$0xff] %vm5555, %v8532
    %8702 = vst.msk [vmem:[#allocation3 + $0x148] sm:$0xff] %vm5555, %v8533
    %8703 = vst.msk [vmem:[#allocation3 + $0x150] sm:$0xff] %vm5555, %v8534
    %8704 = vst.msk [vmem:[#allocation3 + $0x158] sm:$0xff] %vm5555, %v8535
    %8705 = vst.msk [vmem:[#allocation3 + $0x160] sm:$0xff] %vm5555, %v8536
    %8706 = vst.msk [vmem:[#allocation3 + $0x168] sm:$0xff] %vm5555, %v8537
    %8707 = vst.msk [vmem:[#allocation3 + $0x170] sm:$0xff] %vm5555, %v8538
    %8708 = vst.msk [vmem:[#allocation3 + $0x178] sm:$0xff] %vm5555, %v8539
    %8709 = vst.msk [vmem:[#allocation3 + $0x180] sm:$0xff] %vm5555, %v8540
    %8710 = vst.msk [vmem:[#allocation3 + $0x188] sm:$0xff] %vm5555, %v8541
    %8711 = vst.msk [vmem:[#allocation3 + $0x190] sm:$0xff] %vm5555, %v8542
    %8712 = vst.msk [vmem:[#allocation3 + $0x198] sm:$0xff] %vm5555, %v8543
    %8713 = vst.msk [vmem:[#allocation3 + $0x1a0] sm:$0xff] %vm5555, %v8544
    %8714 = vst.msk [vmem:[#allocation3 + $0x1a8] sm:$0xff] %vm5555, %v8545
    %8715 = vst.msk [vmem:[#allocation3 + $0x1b0] sm:$0xff] %vm5555, %v8546
    %8716 = vst.msk [vmem:[#allocation3 + $0x1b8] sm:$0xff] %vm5555, %v8547
    %8717 = vst.msk [vmem:[#allocation3 + $0x1c0] sm:$0xff] %vm5555, %v8548
    %8718 = vst.msk [vmem:[#allocation3 + $0x1c8] sm:$0xff] %vm5555, %v8549
    %8719 = vst.msk [vmem:[#allocation3 + $0x1d0] sm:$0xff] %vm5555, %v8550
    %8720 = vst.msk [vmem:[#allocation3 + $0x1d8] sm:$0xff] %vm5555, %v8551
    %8721 = vst.msk [vmem:[#allocation3 + $0x1e0] sm:$0xff] %vm5555, %v8552
    %8722 = vst.msk [vmem:[#allocation3 + $0x1e8] sm:$0xff] %vm5555, %v8553
    %8723 = vst.msk [vmem:[#allocation3 + $0x1f0] sm:$0xff] %vm5555, %v8554
    %8724 = vst.msk [vmem:[#allocation3 + $0x1f8] sm:$0xff] %vm5555, %v8555
    %8725 = vst.msk [vmem:[#allocation3 + $0x200] sm:$0xff] %vm5555, %v8556
    %8726 = vst.msk [vmem:[#allocation3 + $0x208] sm:$0xff] %vm5555, %v8557
    %8727 = vst.msk [vmem:[#allocation3 + $0x210] sm:$0xff] %vm5555, %v8558
    %8728 = vst.msk [vmem:[#allocation3 + $0x218] sm:$0xff] %vm5555, %v8559
    %8729 = vst.msk [vmem:[#allocation3 + $0x220] sm:$0xff] %vm5555, %v8560
    %8730 = vst.msk [vmem:[#allocation3 + $0x228] sm:$0xff] %vm5555, %v8561
    %8731 = vst.msk [vmem:[#allocation3 + $0x230] sm:$0xff] %vm5555, %v8562
    %8732 = vst.msk [vmem:[#allocation3 + $0x238] sm:$0xff] %vm5555, %v8563
    %8733 = vst.msk [vmem:[#allocation3 + $0x240] sm:$0xff] %vm5555, %v8564
    %8734 = vst.msk [vmem:[#allocation3 + $0x248] sm:$0xff] %vm5555, %v8565
    %8735 = vst.msk [vmem:[#allocation3 + $0x250] sm:$0xff] %vm5555, %v8566
    %8736 = vst.msk [vmem:[#allocation3 + $0x258] sm:$0xff] %vm5555, %v8567
    %8737 = vst.msk [vmem:[#allocation3 + $0x260] sm:$0xff] %vm5555, %v8568
    %8738 = vst.msk [vmem:[#allocation3 + $0x268] sm:$0xff] %vm5555, %v8569
    %8739 = vst.msk [vmem:[#allocation3 + $0x270] sm:$0xff] %vm5555, %v8570
    %8740 = vst.msk [vmem:[#allocation3 + $0x278] sm:$0xff] %vm5555, %v8571
    %8741 = vst.msk [vmem:[#allocation3 + $0x280] sm:$0xff] %vm5555, %v8572
    %8742 = vst.msk [vmem:[#allocation3 + $0x288] sm:$0xff] %vm5555, %v8573
    %8743 = vst.msk [vmem:[#allocation3 + $0x290] sm:$0xff] %vm5555, %v8574
    %8744 = vst.msk [vmem:[#allocation3 + $0x298] sm:$0xff] %vm5555, %v8575
    %8745 = vst.msk [vmem:[#allocation3 + $0x2a0] sm:$0xff] %vm5555, %v8576
    %8746 = vst.msk [vmem:[#allocation3 + $0x2a8] sm:$0xff] %vm5555, %v8577
    %8747 = vst.msk [vmem:[#allocation3 + $0x2b0] sm:$0xff] %vm5555, %v8578
    %8748 = vst.msk [vmem:[#allocation3 + $0x2b8] sm:$0xff] %vm5555, %v8579
    %8749 = vst.msk [vmem:[#allocation3 + $0x2c0] sm:$0xff] %vm5555, %v8580
    %8750 = vst.msk [vmem:[#allocation3 + $0x2c8] sm:$0xff] %vm5555, %v8581
    %8751 = vst.msk [vmem:[#allocation3 + $0x2d0] sm:$0xff] %vm5555, %v8582
    %8752 = vst.msk [vmem:[#allocation3 + $0x2d8] sm:$0xff] %vm5555, %v8583
    %8753 = vst.msk [vmem:[#allocation3 + $0x2e0] sm:$0xff] %vm5555, %v8584
    %8754 = vst.msk [vmem:[#allocation3 + $0x2e8] sm:$0xff] %vm5555, %v8585
    %8755 = vst.msk [vmem:[#allocation3 + $0x2f0] sm:$0xff] %vm5555, %v8586
    %8756 = vst.msk [vmem:[#allocation3 + $0x2f8] sm:$0xff] %vm5555, %v8587
    %8757 = vst.msk [vmem:[#allocation3 + $0x300] sm:$0xff] %vm5555, %v8588
    %8758 = vst.msk [vmem:[#allocation3 + $0x308] sm:$0xff] %vm5555, %v8589
    %8759 = vst.msk [vmem:[#allocation3 + $0x310] sm:$0xff] %vm5555, %v8590
    %8760 = vst.msk [vmem:[#allocation3 + $0x318] sm:$0xff] %vm5555, %v8591
    %8761 = vst.msk [vmem:[#allocation3 + $0x320] sm:$0xff] %vm5555, %v8592
    %8762 = vst.msk [vmem:[#allocation3 + $0x328] sm:$0xff] %vm5555, %v8593
    %8763 = vst.msk [vmem:[#allocation3 + $0x330] sm:$0xff] %vm5555, %v8594
    %8764 = vst.msk [vmem:[#allocation3 + $0x338] sm:$0xff] %vm5555, %v8595
    %8765 = vst.msk [vmem:[#allocation3 + $0x340] sm:$0xff] %vm5555, %v8596
    %8766 = vst.msk [vmem:[#allocation3 + $0x348] sm:$0xff] %vm5555, %v8597
    %8767 = vst.msk [vmem:[#allocation3 + $0x350] sm:$0xff] %vm5555, %v8598
    %8768 = vst.msk [vmem:[#allocation3 + $0x358] sm:$0xff] %vm5555, %v8599
    %8769 = vst.msk [vmem:[#allocation3 + $0x360] sm:$0xff] %vm5555, %v8600
    %8770 = vst.msk [vmem:[#allocation3 + $0x368] sm:$0xff] %vm5555, %v8601
    %8771 = vst.msk [vmem:[#allocation3 + $0x370] sm:$0xff] %vm5555, %v8602
    %8772 = vst.msk [vmem:[#allocation3 + $0x378] sm:$0xff] %vm5555, %v8603
    %8773 = vst.msk [vmem:[#allocation3 + $0x380] sm:$0xff] %vm5555, %v8604
    %8774 = vst.msk [vmem:[#allocation3 + $0x388] sm:$0xff] %vm5555, %v8605
    %8775 = vst.msk [vmem:[#allocation3 + $0x390] sm:$0xff] %vm5555, %v8606
    %8776 = vst.msk [vmem:[#allocation3 + $0x398] sm:$0xff] %vm5555, %v8607
    %8777 = vst.msk [vmem:[#allocation3 + $0x3a0] sm:$0xff] %vm5555, %v8608
    %8778 = vst.msk [vmem:[#allocation3 + $0x3a8] sm:$0xff] %vm5555, %v8609
    %8779 = vst.msk [vmem:[#allocation3 + $0x3b0] sm:$0xff] %vm5555, %v8610
    %8780 = vst.msk [vmem:[#allocation3 + $0x3b8] sm:$0xff] %vm5555, %v8611
    %8781 = vst.msk [vmem:[#allocation3 + $0x3c0] sm:$0xff] %vm5555, %v8612
    %8782 = vst.msk [vmem:[#allocation3 + $0x3c8] sm:$0xff] %vm5555, %v8613
    %8783 = vst.msk [vmem:[#allocation3 + $0x3d0] sm:$0xff] %vm5555, %v8614
    %8784 = vst.msk [vmem:[#allocation3 + $0x3d8] sm:$0xff] %vm5555, %v8615
    %8785 = vst.msk [vmem:[#allocation3 + $0x3e0] sm:$0xff] %vm5555, %v8616
    %8786 = vst.msk [vmem:[#allocation3 + $0x3e8] sm:$0xff] %vm5555, %v8617
    %8787 = vst.msk [vmem:[#allocation3 + $0x3f0] sm:$0xff] %vm5555, %v8618
    %8788 = vst.msk [vmem:[#allocation3 + $0x3f8] sm:$0xff] %vm5555, %v8619
    %8789 = vst.msk [vmem:[#allocation3 + $0x400] sm:$0xff] %vm5555, %v8620
    %8790 = vst.msk [vmem:[#allocation3 + $0x408] sm:$0xff] %vm5555, %v8621
    %8791 = vst.msk [vmem:[#allocation3 + $0x410] sm:$0xff] %vm5555, %v8622
    %8792 = vst.msk [vmem:[#allocation3 + $0x418] sm:$0xff] %vm5555, %v8623
    %8793 = vst.msk [vmem:[#allocation3 + $0x420] sm:$0xff] %vm5555, %v8624
    %8794 = vst.msk [vmem:[#allocation3 + $0x428] sm:$0xff] %vm5555, %v8625
    %8795 = vst.msk [vmem:[#allocation3 + $0x430] sm:$0xff] %vm5555, %v8626
    %8796 = vst.msk [vmem:[#allocation3 + $0x438] sm:$0xff] %vm5555, %v8627
    %8797 = vst.msk [vmem:[#allocation3 + $0x440] sm:$0xff] %vm5555, %v8628
    %8798 = vst.msk [vmem:[#allocation3 + $0x448] sm:$0xff] %vm5555, %v8629
    %8799 = vst.msk [vmem:[#allocation3 + $0x450] sm:$0xff] %vm5555, %v8630
    %8800 = vst.msk [vmem:[#allocation3 + $0x458] sm:$0xff] %vm5555, %v8631
    %8801 = vst.msk [vmem:[#allocation3 + $0x460] sm:$0xff] %vm5555, %v8632
    %8802 = vst.msk [vmem:[#allocation3 + $0x468] sm:$0xff] %vm5555, %v8633
    %8803 = vst.msk [vmem:[#allocation3 + $0x470] sm:$0xff] %vm5555, %v8634
    %8804 = vst.msk [vmem:[#allocation3 + $0x478] sm:$0xff] %vm5555, %v8635
    %8805 = vst.msk [vmem:[#allocation3 + $0x480] sm:$0xff] %vm5555, %v8636
    %8806 = vst.msk [vmem:[#allocation3 + $0x488] sm:$0xff] %vm5555, %v8637
    %8807 = vst.msk [vmem:[#allocation3 + $0x490] sm:$0xff] %vm5555, %v8638
    %8808 = vst.msk [vmem:[#allocation3 + $0x498] sm:$0xff] %vm5555, %v8639
    %8809 = vst.msk [vmem:[#allocation3 + $0x4a0] sm:$0xff] %vm5555, %v8640
    %8810 = vst.msk [vmem:[#allocation3 + $0x4a8] sm:$0xff] %vm5555, %v8641
    %8811 = vst.msk [vmem:[#allocation3 + $0x4b0] sm:$0xff] %vm5555, %v8642
    %8812 = vst.msk [vmem:[#allocation3 + $0x4b8] sm:$0xff] %vm5555, %v8643
    %8813 = vst.msk [vmem:[#allocation3 + $0x4c0] sm:$0xff] %vm5555, %v8644
    %8814 = vst.msk [vmem:[#allocation3 + $0x4c8] sm:$0xff] %vm5555, %v8645
    %8815 = vst.msk [vmem:[#allocation3 + $0x4d0] sm:$0xff] %vm5555, %v8646
    %8816 = vst.msk [vmem:[#allocation3 + $0x4d8] sm:$0xff] %vm5555, %v8647
    %8817 = vst.msk [vmem:[#allocation3 + $0x4e0] sm:$0xff] %vm5555, %v8648
    %8818 = vst.msk [vmem:[#allocation3 + $0x4e8] sm:$0xff] %vm5555, %v8649
    %8819 = vst.msk [vmem:[#allocation3 + $0x4f0] sm:$0xff] %vm5555, %v8650
    %8820 = vst.msk [vmem:[#allocation3 + $0x4f8] sm:$0xff] %vm5555, %v8651
    %8821 = vst.msk [vmem:[#allocation3 + $0x500] sm:$0xff] %vm5555, %v8652
    %8822 = vst.msk [vmem:[#allocation3 + $0x508] sm:$0xff] %vm5555, %v8653
    %8823 = vst.msk [vmem:[#allocation3 + $0x510] sm:$0xff] %vm5555, %v8654
    %8824 = vst.msk [vmem:[#allocation3 + $0x518] sm:$0xff] %vm5555, %v8655
    %8825 = vst.msk [vmem:[#allocation3 + $0x520] sm:$0xff] %vm5555, %v8656
    %8826 = vst.msk [vmem:[#allocation3 + $0x528] sm:$0xff] %vm5555, %v8657
    %8827 = vst.msk [vmem:[#allocation3 + $0x530] sm:$0xff] %vm5555, %v8658
    %8828 = vst.msk [vmem:[#allocation3 + $0x538] sm:$0xff] %vm5555, %v8659
    %8829 = vst.msk [vmem:[#allocation3 + $0x540] sm:$0xff] %vm5555, %v8660
    %8830 = vst.msk [vmem:[#allocation3 + $0x548] sm:$0xff] %vm5555, 0.0
    %8831 = vst.msk [vmem:[#allocation3 + $0x550] sm:$0xff] %vm5555, 0.0
    %8832 = vst.msk [vmem:[#allocation3 + $0x558] sm:$0xff] %vm5555, 0.0
    %8833 = vst.msk [vmem:[#allocation3 + $0x560] sm:$0xff] %vm5555, 0.0
    %v8834 = vld [vmem:[#allocation3] ss:$2 sm:$0xff]
    %s8835 = scalar_lea.vmem [#allocation3], 16
    %v8836 = vld [vmem:[%s8835] ss:$2 sm:$0xff]
    %s8837 = scalar_lea.vmem [#allocation3], 32
    %v8838 = vld [vmem:[%s8837] ss:$2 sm:$0xff]
    %s8839 = scalar_lea.vmem [#allocation3], 48
    %v8840 = vld [vmem:[%s8839] ss:$2 sm:$0xff]
    %s8841 = scalar_lea.vmem [#allocation3], 64
    %v8842 = vld [vmem:[%s8841] ss:$2 sm:$0xff]
    %s8843 = scalar_lea.vmem [#allocation3], 80
    %v8844 = vld [vmem:[%s8843] ss:$2 sm:$0xff]
    %s8845 = scalar_lea.vmem [#allocation3], 96
    %v8846 = vld [vmem:[%s8845] ss:$2 sm:$0xff]
    %s8847 = scalar_lea.vmem [#allocation3], 112
    %v8848 = vld [vmem:[%s8847] ss:$2 sm:$0xff]
    %s8849 = scalar_lea.vmem [#allocation3], 128
    %v8850 = vld [vmem:[%s8849] ss:$2 sm:$0xff]
    %s8851 = scalar_lea.vmem [#allocation3], 144
    %v8852 = vld [vmem:[%s8851] ss:$2 sm:$0xff]
    %s8853 = scalar_lea.vmem [#allocation3], 160
    %v8854 = vld [vmem:[%s8853] ss:$2 sm:$0xff]
    %s8855 = scalar_lea.vmem [#allocation3], 176
    %v8856 = vld [vmem:[%s8855] ss:$2 sm:$0xff]
    %s8857 = scalar_lea.vmem [#allocation3], 192
    %v8858 = vld [vmem:[%s8857] ss:$2 sm:$0xff]
    %s8859 = scalar_lea.vmem [#allocation3], 208
    %v8860 = vld [vmem:[%s8859] ss:$2 sm:$0xff]
    %s8861 = scalar_lea.vmem [#allocation3], 224
    %v8862 = vld [vmem:[%s8861] ss:$2 sm:$0xff]
    %s8863 = scalar_lea.vmem [#allocation3], 240
    %v8864 = vld [vmem:[%s8863] ss:$2 sm:$0xff]
    %s8865 = scalar_lea.vmem [#allocation3], 256
    %v8866 = vld [vmem:[%s8865] ss:$2 sm:$0xff]
    %s8867 = scalar_lea.vmem [#allocation3], 272
    %v8868 = vld [vmem:[%s8867] ss:$2 sm:$0xff]
    %s8869 = scalar_lea.vmem [#allocation3], 288
    %v8870 = vld [vmem:[%s8869] ss:$2 sm:$0xff]
    %s8871 = scalar_lea.vmem [#allocation3], 304
    %v8872 = vld [vmem:[%s8871] ss:$2 sm:$0xff]
    %s8873 = scalar_lea.vmem [#allocation3], 320
    %v8874 = vld [vmem:[%s8873] ss:$2 sm:$0xff]
    %s8875 = scalar_lea.vmem [#allocation3], 336
    %v8876 = vld [vmem:[%s8875] ss:$2 sm:$0xff]
    %s8877 = scalar_lea.vmem [#allocation3], 352
    %v8878 = vld [vmem:[%s8877] ss:$2 sm:$0xff]
    %s8879 = scalar_lea.vmem [#allocation3], 368
    %v8880 = vld [vmem:[%s8879] ss:$2 sm:$0xff]
    %s8881 = scalar_lea.vmem [#allocation3], 384
    %v8882 = vld [vmem:[%s8881] ss:$2 sm:$0xff]
    %s8883 = scalar_lea.vmem [#allocation3], 400
    %v8884 = vld [vmem:[%s8883] ss:$2 sm:$0xff]
    %s8885 = scalar_lea.vmem [#allocation3], 416
    %v8886 = vld [vmem:[%s8885] ss:$2 sm:$0xff]
    %s8887 = scalar_lea.vmem [#allocation3], 432
    %v8888 = vld [vmem:[%s8887] ss:$2 sm:$0xff]
    %s8889 = scalar_lea.vmem [#allocation3], 448
    %v8890 = vld [vmem:[%s8889] ss:$2 sm:$0xff]
    %s8891 = scalar_lea.vmem [#allocation3], 464
    %v8892 = vld [vmem:[%s8891] ss:$2 sm:$0xff]
    %s8893 = scalar_lea.vmem [#allocation3], 480
    %v8894 = vld [vmem:[%s8893] ss:$2 sm:$0xff]
    %s8895 = scalar_lea.vmem [#allocation3], 496
    %v8896 = vld [vmem:[%s8895] ss:$2 sm:$0xff]
    %s8897 = scalar_lea.vmem [#allocation3], 512
    %v8898 = vld [vmem:[%s8897] ss:$2 sm:$0xff]
    %s8899 = scalar_lea.vmem [#allocation3], 528
    %v8900 = vld [vmem:[%s8899] ss:$2 sm:$0xff]
    %s8901 = scalar_lea.vmem [#allocation3], 544
    %v8902 = vld [vmem:[%s8901] ss:$2 sm:$0xff]
    %s8903 = scalar_lea.vmem [#allocation3], 560
    %v8904 = vld [vmem:[%s8903] ss:$2 sm:$0xff]
    %s8905 = scalar_lea.vmem [#allocation3], 576
    %v8906 = vld [vmem:[%s8905] ss:$2 sm:$0xff]
    %s8907 = scalar_lea.vmem [#allocation3], 592
    %v8908 = vld [vmem:[%s8907] ss:$2 sm:$0xff]
    %s8909 = scalar_lea.vmem [#allocation3], 608
    %v8910 = vld [vmem:[%s8909] ss:$2 sm:$0xff]
    %s8911 = scalar_lea.vmem [#allocation3], 624
    %v8912 = vld [vmem:[%s8911] ss:$2 sm:$0xff]
    %s8913 = scalar_lea.vmem [#allocation3], 640
    %v8914 = vld [vmem:[%s8913] ss:$2 sm:$0xff]
    %s8915 = scalar_lea.vmem [#allocation3], 656
    %v8916 = vld [vmem:[%s8915] ss:$2 sm:$0xff]
    %s8917 = scalar_lea.vmem [#allocation3], 672
    %v8918 = vld [vmem:[%s8917] ss:$2 sm:$0xff]
    %s8919 = scalar_lea.vmem [#allocation3], 688
    %v8920 = vld [vmem:[%s8919] ss:$2 sm:$0xff]
    %s8921 = scalar_lea.vmem [#allocation3], 704
    %v8922 = vld [vmem:[%s8921] ss:$2 sm:$0xff]
    %s8923 = scalar_lea.vmem [#allocation3], 720
    %v8924 = vld [vmem:[%s8923] ss:$2 sm:$0xff]
    %s8925 = scalar_lea.vmem [#allocation3], 736
    %v8926 = vld [vmem:[%s8925] ss:$2 sm:$0xff]
    %s8927 = scalar_lea.vmem [#allocation3], 752
    %v8928 = vld [vmem:[%s8927] ss:$2 sm:$0xff]
    %s8929 = scalar_lea.vmem [#allocation3], 768
    %v8930 = vld [vmem:[%s8929] ss:$2 sm:$0xff]
    %s8931 = scalar_lea.vmem [#allocation3], 784
    %v8932 = vld [vmem:[%s8931] ss:$2 sm:$0xff]
    %s8933 = scalar_lea.vmem [#allocation3], 800
    %v8934 = vld [vmem:[%s8933] ss:$2 sm:$0xff]
    %s8935 = scalar_lea.vmem [#allocation3], 816
    %v8936 = vld [vmem:[%s8935] ss:$2 sm:$0xff]
    %s8937 = scalar_lea.vmem [#allocation3], 832
    %v8938 = vld [vmem:[%s8937] ss:$2 sm:$0xff]
    %s8939 = scalar_lea.vmem [#allocation3], 848
    %v8940 = vld [vmem:[%s8939] ss:$2 sm:$0xff]
    %s8941 = scalar_lea.vmem [#allocation3], 864
    %v8942 = vld [vmem:[%s8941] ss:$2 sm:$0xff]
    %s8943 = scalar_lea.vmem [#allocation3], 880
    %v8944 = vld [vmem:[%s8943] ss:$2 sm:$0xff]
    %s8945 = scalar_lea.vmem [#allocation3], 896
    %v8946 = vld [vmem:[%s8945] ss:$2 sm:$0xff]
    %s8947 = scalar_lea.vmem [#allocation3], 912
    %v8948 = vld [vmem:[%s8947] ss:$2 sm:$0xff]
    %s8949 = scalar_lea.vmem [#allocation3], 928
    %v8950 = vld [vmem:[%s8949] ss:$2 sm:$0xff]
    %s8951 = scalar_lea.vmem [#allocation3], 944
    %v8952 = vld [vmem:[%s8951] ss:$2 sm:$0xff]
    %s8953 = scalar_lea.vmem [#allocation3], 960
    %v8954 = vld [vmem:[%s8953] ss:$2 sm:$0xff]
    %s8955 = scalar_lea.vmem [#allocation3], 976
    %v8956 = vld [vmem:[%s8955] ss:$2 sm:$0xff]
    %s8957 = scalar_lea.vmem [#allocation3], 992
    %v8958 = vld [vmem:[%s8957] ss:$2 sm:$0xff]
    %s8959 = scalar_lea.vmem [#allocation3], 1008
    %v8960 = vld [vmem:[%s8959] ss:$2 sm:$0xff]
    %s8961 = scalar_lea.vmem [#allocation3], 1024
    %v8962 = vld [vmem:[%s8961] ss:$2 sm:$0xff]
    %s8963 = scalar_lea.vmem [#allocation3], 1040
    %v8964 = vld [vmem:[%s8963] ss:$2 sm:$0xff]
    %s8965 = scalar_lea.vmem [#allocation3], 1056
    %v8966 = vld [vmem:[%s8965] ss:$2 sm:$0xff]
    %s8967 = scalar_lea.vmem [#allocation3], 1072
    %v8968 = vld [vmem:[%s8967] ss:$2 sm:$0xff]
    %s8969 = scalar_lea.vmem [#allocation3], 1088
    %v8970 = vld [vmem:[%s8969] ss:$2 sm:$0xff]
    %s8971 = scalar_lea.vmem [#allocation3], 1104
    %v8972 = vld [vmem:[%s8971] ss:$2 sm:$0xff]
    %s8973 = scalar_lea.vmem [#allocation3], 1120
    %v8974 = vld [vmem:[%s8973] ss:$2 sm:$0xff]
    %s8975 = scalar_lea.vmem [#allocation3], 1136
    %v8976 = vld [vmem:[%s8975] ss:$2 sm:$0xff]
    %s8977 = scalar_lea.vmem [#allocation3], 1152
    %v8978 = vld [vmem:[%s8977] ss:$2 sm:$0xff]
    %s8979 = scalar_lea.vmem [#allocation3], 1168
    %v8980 = vld [vmem:[%s8979] ss:$2 sm:$0xff]
    %s8981 = scalar_lea.vmem [#allocation3], 1184
    %v8982 = vld [vmem:[%s8981] ss:$2 sm:$0xff]
    %s8983 = scalar_lea.vmem [#allocation3], 1200
    %v8984 = vld [vmem:[%s8983] ss:$2 sm:$0xff]
    %s8985 = scalar_lea.vmem [#allocation3], 1216
    %v8986 = vld [vmem:[%s8985] ss:$2 sm:$0xff]
    %s8987 = scalar_lea.vmem [#allocation3], 1232
    %v8988 = vld [vmem:[%s8987] ss:$2 sm:$0xff]
    %s8989 = scalar_lea.vmem [#allocation3], 1248
    %v8990 = vld [vmem:[%s8989] ss:$2 sm:$0xff]
    %s8991 = scalar_lea.vmem [#allocation3], 1264
    %v8992 = vld [vmem:[%s8991] ss:$2 sm:$0xff]
    %s8993 = scalar_lea.vmem [#allocation3], 1280
    %v8994 = vld [vmem:[%s8993] ss:$2 sm:$0xff]
    %s8995 = scalar_lea.vmem [#allocation3], 1296
    %v8996 = vld [vmem:[%s8995] ss:$2 sm:$0xff]
    %s8997 = scalar_lea.vmem [#allocation3], 1312
    %v8998 = vld [vmem:[%s8997] ss:$2 sm:$0xff]
    %s8999 = scalar_lea.vmem [#allocation3], 1328
    %v9000 = vld [vmem:[%s8999] ss:$2 sm:$0xff]
    %s9001 = scalar_lea.vmem [#allocation3], 1344
    %v9002 = vld [vmem:[%s9001] ss:$2 sm:$0xf]
    %s9003 = scalar_lea.vmem [#allocation3], 1
    %v9004 = vld [vmem:[%s9003] ss:$2 sm:$0xff]
    %s9005 = scalar_lea.vmem [#allocation3], 17
    %v9006 = vld [vmem:[%s9005] ss:$2 sm:$0xff]
    %s9007 = scalar_lea.vmem [#allocation3], 33
    %v9008 = vld [vmem:[%s9007] ss:$2 sm:$0xff]
    %s9009 = scalar_lea.vmem [#allocation3], 49
    %v9010 = vld [vmem:[%s9009] ss:$2 sm:$0xff]
    %s9011 = scalar_lea.vmem [#allocation3], 65
    %v9012 = vld [vmem:[%s9011] ss:$2 sm:$0xff]
    %s9013 = scalar_lea.vmem [#allocation3], 81
    %v9014 = vld [vmem:[%s9013] ss:$2 sm:$0xff]
    %s9015 = scalar_lea.vmem [#allocation3], 97
    %v9016 = vld [vmem:[%s9015] ss:$2 sm:$0xff]
    %s9017 = scalar_lea.vmem [#allocation3], 113
    %v9018 = vld [vmem:[%s9017] ss:$2 sm:$0xff]
    %s9019 = scalar_lea.vmem [#allocation3], 129
    %v9020 = vld [vmem:[%s9019] ss:$2 sm:$0xff]
    %s9021 = scalar_lea.vmem [#allocation3], 145
    %v9022 = vld [vmem:[%s9021] ss:$2 sm:$0xff]
    %s9023 = scalar_lea.vmem [#allocation3], 161
    %v9024 = vld [vmem:[%s9023] ss:$2 sm:$0xff]
    %s9025 = scalar_lea.vmem [#allocation3], 177
    %v9026 = vld [vmem:[%s9025] ss:$2 sm:$0xff]
    %s9027 = scalar_lea.vmem [#allocation3], 193
    %v9028 = vld [vmem:[%s9027] ss:$2 sm:$0xff]
    %s9029 = scalar_lea.vmem [#allocation3], 209
    %v9030 = vld [vmem:[%s9029] ss:$2 sm:$0xff]
    %s9031 = scalar_lea.vmem [#allocation3], 225
    %v9032 = vld [vmem:[%s9031] ss:$2 sm:$0xff]
    %s9033 = scalar_lea.vmem [#allocation3], 241
    %v9034 = vld [vmem:[%s9033] ss:$2 sm:$0xff]
    %s9035 = scalar_lea.vmem [#allocation3], 257
    %v9036 = vld [vmem:[%s9035] ss:$2 sm:$0xff]
    %s9037 = scalar_lea.vmem [#allocation3], 273
    %v9038 = vld [vmem:[%s9037] ss:$2 sm:$0xff]
    %s9039 = scalar_lea.vmem [#allocation3], 289
    %v9040 = vld [vmem:[%s9039] ss:$2 sm:$0xff]
    %s9041 = scalar_lea.vmem [#allocation3], 305
    %v9042 = vld [vmem:[%s9041] ss:$2 sm:$0xff]
    %s9043 = scalar_lea.vmem [#allocation3], 321
    %v9044 = vld [vmem:[%s9043] ss:$2 sm:$0xff]
    %s9045 = scalar_lea.vmem [#allocation3], 337
    %v9046 = vld [vmem:[%s9045] ss:$2 sm:$0xff]
    %s9047 = scalar_lea.vmem [#allocation3], 353
    %v9048 = vld [vmem:[%s9047] ss:$2 sm:$0xff]
    %s9049 = scalar_lea.vmem [#allocation3], 369
    %v9050 = vld [vmem:[%s9049] ss:$2 sm:$0xff]
    %s9051 = scalar_lea.vmem [#allocation3], 385
    %v9052 = vld [vmem:[%s9051] ss:$2 sm:$0xff]
    %s9053 = scalar_lea.vmem [#allocation3], 401
    %v9054 = vld [vmem:[%s9053] ss:$2 sm:$0xff]
    %s9055 = scalar_lea.vmem [#allocation3], 417
    %v9056 = vld [vmem:[%s9055] ss:$2 sm:$0xff]
    %s9057 = scalar_lea.vmem [#allocation3], 433
    %v9058 = vld [vmem:[%s9057] ss:$2 sm:$0xff]
    %s9059 = scalar_lea.vmem [#allocation3], 449
    %v9060 = vld [vmem:[%s9059] ss:$2 sm:$0xff]
    %s9061 = scalar_lea.vmem [#allocation3], 465
    %v9062 = vld [vmem:[%s9061] ss:$2 sm:$0xff]
    %s9063 = scalar_lea.vmem [#allocation3], 481
    %v9064 = vld [vmem:[%s9063] ss:$2 sm:$0xff]
    %s9065 = scalar_lea.vmem [#allocation3], 497
    %v9066 = vld [vmem:[%s9065] ss:$2 sm:$0xff]
    %s9067 = scalar_lea.vmem [#allocation3], 513
    %v9068 = vld [vmem:[%s9067] ss:$2 sm:$0xff]
    %s9069 = scalar_lea.vmem [#allocation3], 529
    %v9070 = vld [vmem:[%s9069] ss:$2 sm:$0xff]
    %s9071 = scalar_lea.vmem [#allocation3], 545
    %v9072 = vld [vmem:[%s9071] ss:$2 sm:$0xff]
    %s9073 = scalar_lea.vmem [#allocation3], 561
    %v9074 = vld [vmem:[%s9073] ss:$2 sm:$0xff]
    %s9075 = scalar_lea.vmem [#allocation3], 577
    %v9076 = vld [vmem:[%s9075] ss:$2 sm:$0xff]
    %s9077 = scalar_lea.vmem [#allocation3], 593
    %v9078 = vld [vmem:[%s9077] ss:$2 sm:$0xff]
    %s9079 = scalar_lea.vmem [#allocation3], 609
    %v9080 = vld [vmem:[%s9079] ss:$2 sm:$0xff]
    %s9081 = scalar_lea.vmem [#allocation3], 625
    %v9082 = vld [vmem:[%s9081] ss:$2 sm:$0xff]
    %s9083 = scalar_lea.vmem [#allocation3], 641
    %v9084 = vld [vmem:[%s9083] ss:$2 sm:$0xff]
    %s9085 = scalar_lea.vmem [#allocation3], 657
    %v9086 = vld [vmem:[%s9085] ss:$2 sm:$0xff]
    %s9087 = scalar_lea.vmem [#allocation3], 673
    %v9088 = vld [vmem:[%s9087] ss:$2 sm:$0xff]
    %s9089 = scalar_lea.vmem [#allocation3], 689
    %v9090 = vld [vmem:[%s9089] ss:$2 sm:$0xff]
    %s9091 = scalar_lea.vmem [#allocation3], 705
    %v9092 = vld [vmem:[%s9091] ss:$2 sm:$0xff]
    %s9093 = scalar_lea.vmem [#allocation3], 721
    %v9094 = vld [vmem:[%s9093] ss:$2 sm:$0xff]
    %s9095 = scalar_lea.vmem [#allocation3], 737
    %v9096 = vld [vmem:[%s9095] ss:$2 sm:$0xff]
    %s9097 = scalar_lea.vmem [#allocation3], 753
    %v9098 = vld [vmem:[%s9097] ss:$2 sm:$0xff]
    %s9099 = scalar_lea.vmem [#allocation3], 769
    %v9100 = vld [vmem:[%s9099] ss:$2 sm:$0xff]
    %s9101 = scalar_lea.vmem [#allocation3], 785
    %v9102 = vld [vmem:[%s9101] ss:$2 sm:$0xff]
    %s9103 = scalar_lea.vmem [#allocation3], 801
    %v9104 = vld [vmem:[%s9103] ss:$2 sm:$0xff]
    %s9105 = scalar_lea.vmem [#allocation3], 817
    %v9106 = vld [vmem:[%s9105] ss:$2 sm:$0xff]
    %s9107 = scalar_lea.vmem [#allocation3], 833
    %v9108 = vld [vmem:[%s9107] ss:$2 sm:$0xff]
    %s9109 = scalar_lea.vmem [#allocation3], 849
    %v9110 = vld [vmem:[%s9109] ss:$2 sm:$0xff]
    %s9111 = scalar_lea.vmem [#allocation3], 865
    %v9112 = vld [vmem:[%s9111] ss:$2 sm:$0xff]
    %s9113 = scalar_lea.vmem [#allocation3], 881
    %v9114 = vld [vmem:[%s9113] ss:$2 sm:$0xff]
    %s9115 = scalar_lea.vmem [#allocation3], 897
    %v9116 = vld [vmem:[%s9115] ss:$2 sm:$0xff]
    %s9117 = scalar_lea.vmem [#allocation3], 913
    %v9118 = vld [vmem:[%s9117] ss:$2 sm:$0xff]
    %s9119 = scalar_lea.vmem [#allocation3], 929
    %v9120 = vld [vmem:[%s9119] ss:$2 sm:$0xff]
    %s9121 = scalar_lea.vmem [#allocation3], 945
    %v9122 = vld [vmem:[%s9121] ss:$2 sm:$0xff]
    %s9123 = scalar_lea.vmem [#allocation3], 961
    %v9124 = vld [vmem:[%s9123] ss:$2 sm:$0xff]
    %s9125 = scalar_lea.vmem [#allocation3], 977
    %v9126 = vld [vmem:[%s9125] ss:$2 sm:$0xff]
    %s9127 = scalar_lea.vmem [#allocation3], 993
    %v9128 = vld [vmem:[%s9127] ss:$2 sm:$0xff]
    %s9129 = scalar_lea.vmem [#allocation3], 1009
    %v9130 = vld [vmem:[%s9129] ss:$2 sm:$0xff]
    %s9131 = scalar_lea.vmem [#allocation3], 1025
    %v9132 = vld [vmem:[%s9131] ss:$2 sm:$0xff]
    %s9133 = scalar_lea.vmem [#allocation3], 1041
    %v9134 = vld [vmem:[%s9133] ss:$2 sm:$0xff]
    %s9135 = scalar_lea.vmem [#allocation3], 1057
    %v9136 = vld [vmem:[%s9135] ss:$2 sm:$0xff]
    %s9137 = scalar_lea.vmem [#allocation3], 1073
    %v9138 = vld [vmem:[%s9137] ss:$2 sm:$0xff]
    %s9139 = scalar_lea.vmem [#allocation3], 1089
    %v9140 = vld [vmem:[%s9139] ss:$2 sm:$0xff]
    %s9141 = scalar_lea.vmem [#allocation3], 1105
    %v9142 = vld [vmem:[%s9141] ss:$2 sm:$0xff]
    %s9143 = scalar_lea.vmem [#allocation3], 1121
    %v9144 = vld [vmem:[%s9143] ss:$2 sm:$0xff]
    %s9145 = scalar_lea.vmem [#allocation3], 1137
    %v9146 = vld [vmem:[%s9145] ss:$2 sm:$0xff]
    %s9147 = scalar_lea.vmem [#allocation3], 1153
    %v9148 = vld [vmem:[%s9147] ss:$2 sm:$0xff]
    %s9149 = scalar_lea.vmem [#allocation3], 1169
    %v9150 = vld [vmem:[%s9149] ss:$2 sm:$0xff]
    %s9151 = scalar_lea.vmem [#allocation3], 1185
    %v9152 = vld [vmem:[%s9151] ss:$2 sm:$0xff]
    %s9153 = scalar_lea.vmem [#allocation3], 1201
    %v9154 = vld [vmem:[%s9153] ss:$2 sm:$0xff]
    %s9155 = scalar_lea.vmem [#allocation3], 1217
    %v9156 = vld [vmem:[%s9155] ss:$2 sm:$0xff]
    %s9157 = scalar_lea.vmem [#allocation3], 1233
    %v9158 = vld [vmem:[%s9157] ss:$2 sm:$0xff]
    %s9159 = scalar_lea.vmem [#allocation3], 1249
    %v9160 = vld [vmem:[%s9159] ss:$2 sm:$0xff]
    %s9161 = scalar_lea.vmem [#allocation3], 1265
    %v9162 = vld [vmem:[%s9161] ss:$2 sm:$0xff]
    %s9163 = scalar_lea.vmem [#allocation3], 1281
    %v9164 = vld [vmem:[%s9163] ss:$2 sm:$0xff]
    %s9165 = scalar_lea.vmem [#allocation3], 1297
    %v9166 = vld [vmem:[%s9165] ss:$2 sm:$0xff]
    %s9167 = scalar_lea.vmem [#allocation3], 1313
    %v9168 = vld [vmem:[%s9167] ss:$2 sm:$0xff]
    %s9169 = scalar_lea.vmem [#allocation3], 1329
    %v9170 = vld [vmem:[%s9169] ss:$2 sm:$0xff]
    %s9171 = scalar_lea.vmem [#allocation3], 1345
    %v9172 = vld [vmem:[%s9171] ss:$2 sm:$0xf]
    %v9173 = vmax.f32 %v8834, %v9004
    %v9174 = vmax.f32 %v8836, %v9006
    %v9175 = vmax.f32 %v8838, %v9008
    %v9176 = vmax.f32 %v8840, %v9010
    %v9177 = vmax.f32 %v8842, %v9012
    %v9178 = vmax.f32 %v8844, %v9014
    %v9179 = vmax.f32 %v8846, %v9016
    %v9180 = vmax.f32 %v8848, %v9018
    %v9181 = vmax.f32 %v8850, %v9020
    %v9182 = vmax.f32 %v8852, %v9022
    %v9183 = vmax.f32 %v8854, %v9024
    %v9184 = vmax.f32 %v8856, %v9026
    %v9185 = vmax.f32 %v8858, %v9028
    %v9186 = vmax.f32 %v8860, %v9030
    %v9187 = vmax.f32 %v8862, %v9032
    %v9188 = vmax.f32 %v8864, %v9034
    %v9189 = vmax.f32 %v8866, %v9036
    %v9190 = vmax.f32 %v8868, %v9038
    %v9191 = vmax.f32 %v8870, %v9040
    %v9192 = vmax.f32 %v8872, %v9042
    %v9193 = vmax.f32 %v8874, %v9044
    %v9194 = vmax.f32 %v8876, %v9046
    %v9195 = vmax.f32 %v8878, %v9048
    %v9196 = vmax.f32 %v8880, %v9050
    %v9197 = vmax.f32 %v8882, %v9052
    %v9198 = vmax.f32 %v8884, %v9054
    %v9199 = vmax.f32 %v8886, %v9056
    %v9200 = vmax.f32 %v8888, %v9058
    %v9201 = vmax.f32 %v8890, %v9060
    %v9202 = vmax.f32 %v8892, %v9062
    %v9203 = vmax.f32 %v8894, %v9064
    %v9204 = vmax.f32 %v8896, %v9066
    %v9205 = vmax.f32 %v8898, %v9068
    %v9206 = vmax.f32 %v8900, %v9070
    %v9207 = vmax.f32 %v8902, %v9072
    %v9208 = vmax.f32 %v8904, %v9074
    %v9209 = vmax.f32 %v8906, %v9076
    %v9210 = vmax.f32 %v8908, %v9078
    %v9211 = vmax.f32 %v8910, %v9080
    %v9212 = vmax.f32 %v8912, %v9082
    %v9213 = vmax.f32 %v8914, %v9084
    %v9214 = vmax.f32 %v8916, %v9086
    %v9215 = vmax.f32 %v8918, %v9088
    %v9216 = vmax.f32 %v8920, %v9090
    %v9217 = vmax.f32 %v8922, %v9092
    %v9218 = vmax.f32 %v8924, %v9094
    %v9219 = vmax.f32 %v8926, %v9096
    %v9220 = vmax.f32 %v8928, %v9098
    %v9221 = vmax.f32 %v8930, %v9100
    %v9222 = vmax.f32 %v8932, %v9102
    %v9223 = vmax.f32 %v8934, %v9104
    %v9224 = vmax.f32 %v8936, %v9106
    %v9225 = vmax.f32 %v8938, %v9108
    %v9226 = vmax.f32 %v8940, %v9110
    %v9227 = vmax.f32 %v8942, %v9112
    %v9228 = vmax.f32 %v8944, %v9114
    %v9229 = vmax.f32 %v8946, %v9116
    %v9230 = vmax.f32 %v8948, %v9118
    %v9231 = vmax.f32 %v8950, %v9120
    %v9232 = vmax.f32 %v8952, %v9122
    %v9233 = vmax.f32 %v8954, %v9124
    %v9234 = vmax.f32 %v8956, %v9126
    %v9235 = vmax.f32 %v8958, %v9128
    %v9236 = vmax.f32 %v8960, %v9130
    %v9237 = vmax.f32 %v8962, %v9132
    %v9238 = vmax.f32 %v8964, %v9134
    %v9239 = vmax.f32 %v8966, %v9136
    %v9240 = vmax.f32 %v8968, %v9138
    %v9241 = vmax.f32 %v8970, %v9140
    %v9242 = vmax.f32 %v8972, %v9142
    %v9243 = vmax.f32 %v8974, %v9144
    %v9244 = vmax.f32 %v8976, %v9146
    %v9245 = vmax.f32 %v8978, %v9148
    %v9246 = vmax.f32 %v8980, %v9150
    %v9247 = vmax.f32 %v8982, %v9152
    %v9248 = vmax.f32 %v8984, %v9154
    %v9249 = vmax.f32 %v8986, %v9156
    %v9250 = vmax.f32 %v8988, %v9158
    %v9251 = vmax.f32 %v8990, %v9160
    %v9252 = vmax.f32 %v8992, %v9162
    %v9253 = vmax.f32 %v8994, %v9164
    %v9254 = vmax.f32 %v8996, %v9166
    %v9255 = vmax.f32 %v8998, %v9168
    %v9256 = vmax.f32 %v9000, %v9170
    %v9257 = vmax.f32 %v9002, %v9172
    %s9258 = scalar_lea.vmem [#allocation3], 26
    %v9259 = vld [vmem:[%s9258] ss:$2 sm:$0xff]
    %s9260 = scalar_lea.vmem [#allocation3], 42
    %v9261 = vld [vmem:[%s9260] ss:$2 sm:$0xff]
    %s9262 = scalar_lea.vmem [#allocation3], 58
    %v9263 = vld [vmem:[%s9262] ss:$2 sm:$0xff]
    %s9264 = scalar_lea.vmem [#allocation3], 74
    %v9265 = vld [vmem:[%s9264] ss:$2 sm:$0xff]
    %s9266 = scalar_lea.vmem [#allocation3], 90
    %v9267 = vld [vmem:[%s9266] ss:$2 sm:$0xff]
    %s9268 = scalar_lea.vmem [#allocation3], 106
    %v9269 = vld [vmem:[%s9268] ss:$2 sm:$0xff]
    %s9270 = scalar_lea.vmem [#allocation3], 122
    %v9271 = vld [vmem:[%s9270] ss:$2 sm:$0xff]
    %s9272 = scalar_lea.vmem [#allocation3], 138
    %v9273 = vld [vmem:[%s9272] ss:$2 sm:$0xff]
    %s9274 = scalar_lea.vmem [#allocation3], 154
    %v9275 = vld [vmem:[%s9274] ss:$2 sm:$0xff]
    %s9276 = scalar_lea.vmem [#allocation3], 170
    %v9277 = vld [vmem:[%s9276] ss:$2 sm:$0xff]
    %s9278 = scalar_lea.vmem [#allocation3], 186
    %v9279 = vld [vmem:[%s9278] ss:$2 sm:$0xff]
    %s9280 = scalar_lea.vmem [#allocation3], 202
    %v9281 = vld [vmem:[%s9280] ss:$2 sm:$0xff]
    %s9282 = scalar_lea.vmem [#allocation3], 218
    %v9283 = vld [vmem:[%s9282] ss:$2 sm:$0xff]
    %s9284 = scalar_lea.vmem [#allocation3], 234
    %v9285 = vld [vmem:[%s9284] ss:$2 sm:$0xff]
    %s9286 = scalar_lea.vmem [#allocation3], 250
    %v9287 = vld [vmem:[%s9286] ss:$2 sm:$0xff]
    %s9288 = scalar_lea.vmem [#allocation3], 266
    %v9289 = vld [vmem:[%s9288] ss:$2 sm:$0xff]
    %s9290 = scalar_lea.vmem [#allocation3], 282
    %v9291 = vld [vmem:[%s9290] ss:$2 sm:$0xff]
    %s9292 = scalar_lea.vmem [#allocation3], 298
    %v9293 = vld [vmem:[%s9292] ss:$2 sm:$0xff]
    %s9294 = scalar_lea.vmem [#allocation3], 314
    %v9295 = vld [vmem:[%s9294] ss:$2 sm:$0xff]
    %s9296 = scalar_lea.vmem [#allocation3], 330
    %v9297 = vld [vmem:[%s9296] ss:$2 sm:$0xff]
    %s9298 = scalar_lea.vmem [#allocation3], 346
    %v9299 = vld [vmem:[%s9298] ss:$2 sm:$0xff]
    %s9300 = scalar_lea.vmem [#allocation3], 362
    %v9301 = vld [vmem:[%s9300] ss:$2 sm:$0xff]
    %s9302 = scalar_lea.vmem [#allocation3], 378
    %v9303 = vld [vmem:[%s9302] ss:$2 sm:$0xff]
    %s9304 = scalar_lea.vmem [#allocation3], 394
    %v9305 = vld [vmem:[%s9304] ss:$2 sm:$0xff]
    %s9306 = scalar_lea.vmem [#allocation3], 410
    %v9307 = vld [vmem:[%s9306] ss:$2 sm:$0xff]
    %s9308 = scalar_lea.vmem [#allocation3], 426
    %v9309 = vld [vmem:[%s9308] ss:$2 sm:$0xff]
    %s9310 = scalar_lea.vmem [#allocation3], 442
    %v9311 = vld [vmem:[%s9310] ss:$2 sm:$0xff]
    %s9312 = scalar_lea.vmem [#allocation3], 458
    %v9313 = vld [vmem:[%s9312] ss:$2 sm:$0xff]
    %s9314 = scalar_lea.vmem [#allocation3], 474
    %v9315 = vld [vmem:[%s9314] ss:$2 sm:$0xff]
    %s9316 = scalar_lea.vmem [#allocation3], 490
    %v9317 = vld [vmem:[%s9316] ss:$2 sm:$0xff]
    %s9318 = scalar_lea.vmem [#allocation3], 506
    %v9319 = vld [vmem:[%s9318] ss:$2 sm:$0xff]
    %s9320 = scalar_lea.vmem [#allocation3], 522
    %v9321 = vld [vmem:[%s9320] ss:$2 sm:$0xff]
    %s9322 = scalar_lea.vmem [#allocation3], 538
    %v9323 = vld [vmem:[%s9322] ss:$2 sm:$0xff]
    %s9324 = scalar_lea.vmem [#allocation3], 554
    %v9325 = vld [vmem:[%s9324] ss:$2 sm:$0xff]
    %s9326 = scalar_lea.vmem [#allocation3], 570
    %v9327 = vld [vmem:[%s9326] ss:$2 sm:$0xff]
    %s9328 = scalar_lea.vmem [#allocation3], 586
    %v9329 = vld [vmem:[%s9328] ss:$2 sm:$0xff]
    %s9330 = scalar_lea.vmem [#allocation3], 602
    %v9331 = vld [vmem:[%s9330] ss:$2 sm:$0xff]
    %s9332 = scalar_lea.vmem [#allocation3], 618
    %v9333 = vld [vmem:[%s9332] ss:$2 sm:$0xff]
    %s9334 = scalar_lea.vmem [#allocation3], 634
    %v9335 = vld [vmem:[%s9334] ss:$2 sm:$0xff]
    %s9336 = scalar_lea.vmem [#allocation3], 650
    %v9337 = vld [vmem:[%s9336] ss:$2 sm:$0xff]
    %s9338 = scalar_lea.vmem [#allocation3], 666
    %v9339 = vld [vmem:[%s9338] ss:$2 sm:$0xff]
    %s9340 = scalar_lea.vmem [#allocation3], 682
    %v9341 = vld [vmem:[%s9340] ss:$2 sm:$0xff]
    %s9342 = scalar_lea.vmem [#allocation3], 698
    %v9343 = vld [vmem:[%s9342] ss:$2 sm:$0xff]
    %s9344 = scalar_lea.vmem [#allocation3], 714
    %v9345 = vld [vmem:[%s9344] ss:$2 sm:$0xff]
    %s9346 = scalar_lea.vmem [#allocation3], 730
    %v9347 = vld [vmem:[%s9346] ss:$2 sm:$0xff]
    %s9348 = scalar_lea.vmem [#allocation3], 746
    %v9349 = vld [vmem:[%s9348] ss:$2 sm:$0xff]
    %s9350 = scalar_lea.vmem [#allocation3], 762
    %v9351 = vld [vmem:[%s9350] ss:$2 sm:$0xff]
    %s9352 = scalar_lea.vmem [#allocation3], 778
    %v9353 = vld [vmem:[%s9352] ss:$2 sm:$0xff]
    %s9354 = scalar_lea.vmem [#allocation3], 794
    %v9355 = vld [vmem:[%s9354] ss:$2 sm:$0xff]
    %s9356 = scalar_lea.vmem [#allocation3], 810
    %v9357 = vld [vmem:[%s9356] ss:$2 sm:$0xff]
    %s9358 = scalar_lea.vmem [#allocation3], 826
    %v9359 = vld [vmem:[%s9358] ss:$2 sm:$0xff]
    %s9360 = scalar_lea.vmem [#allocation3], 842
    %v9361 = vld [vmem:[%s9360] ss:$2 sm:$0xff]
    %s9362 = scalar_lea.vmem [#allocation3], 858
    %v9363 = vld [vmem:[%s9362] ss:$2 sm:$0xff]
    %s9364 = scalar_lea.vmem [#allocation3], 874
    %v9365 = vld [vmem:[%s9364] ss:$2 sm:$0xff]
    %s9366 = scalar_lea.vmem [#allocation3], 890
    %v9367 = vld [vmem:[%s9366] ss:$2 sm:$0xff]
    %s9368 = scalar_lea.vmem [#allocation3], 906
    %v9369 = vld [vmem:[%s9368] ss:$2 sm:$0xff]
    %s9370 = scalar_lea.vmem [#allocation3], 922
    %v9371 = vld [vmem:[%s9370] ss:$2 sm:$0xff]
    %s9372 = scalar_lea.vmem [#allocation3], 938
    %v9373 = vld [vmem:[%s9372] ss:$2 sm:$0xff]
    %s9374 = scalar_lea.vmem [#allocation3], 954
    %v9375 = vld [vmem:[%s9374] ss:$2 sm:$0xff]
    %s9376 = scalar_lea.vmem [#allocation3], 970
    %v9377 = vld [vmem:[%s9376] ss:$2 sm:$0xff]
    %s9378 = scalar_lea.vmem [#allocation3], 986
    %v9379 = vld [vmem:[%s9378] ss:$2 sm:$0xff]
    %s9380 = scalar_lea.vmem [#allocation3], 1002
    %v9381 = vld [vmem:[%s9380] ss:$2 sm:$0xff]
    %s9382 = scalar_lea.vmem [#allocation3], 1018
    %v9383 = vld [vmem:[%s9382] ss:$2 sm:$0xff]
    %s9384 = scalar_lea.vmem [#allocation3], 1034
    %v9385 = vld [vmem:[%s9384] ss:$2 sm:$0xff]
    %s9386 = scalar_lea.vmem [#allocation3], 1050
    %v9387 = vld [vmem:[%s9386] ss:$2 sm:$0xff]
    %s9388 = scalar_lea.vmem [#allocation3], 1066
    %v9389 = vld [vmem:[%s9388] ss:$2 sm:$0xff]
    %s9390 = scalar_lea.vmem [#allocation3], 1082
    %v9391 = vld [vmem:[%s9390] ss:$2 sm:$0xff]
    %s9392 = scalar_lea.vmem [#allocation3], 1098
    %v9393 = vld [vmem:[%s9392] ss:$2 sm:$0xff]
    %s9394 = scalar_lea.vmem [#allocation3], 1114
    %v9395 = vld [vmem:[%s9394] ss:$2 sm:$0xff]
    %s9396 = scalar_lea.vmem [#allocation3], 1130
    %v9397 = vld [vmem:[%s9396] ss:$2 sm:$0xff]
    %s9398 = scalar_lea.vmem [#allocation3], 1146
    %v9399 = vld [vmem:[%s9398] ss:$2 sm:$0xff]
    %s9400 = scalar_lea.vmem [#allocation3], 1162
    %v9401 = vld [vmem:[%s9400] ss:$2 sm:$0xff]
    %s9402 = scalar_lea.vmem [#allocation3], 1178
    %v9403 = vld [vmem:[%s9402] ss:$2 sm:$0xff]
    %s9404 = scalar_lea.vmem [#allocation3], 1194
    %v9405 = vld [vmem:[%s9404] ss:$2 sm:$0xff]
    %s9406 = scalar_lea.vmem [#allocation3], 1210
    %v9407 = vld [vmem:[%s9406] ss:$2 sm:$0xff]
    %s9408 = scalar_lea.vmem [#allocation3], 1226
    %v9409 = vld [vmem:[%s9408] ss:$2 sm:$0xff]
    %s9410 = scalar_lea.vmem [#allocation3], 1242
    %v9411 = vld [vmem:[%s9410] ss:$2 sm:$0xff]
    %s9412 = scalar_lea.vmem [#allocation3], 1258
    %v9413 = vld [vmem:[%s9412] ss:$2 sm:$0xff]
    %s9414 = scalar_lea.vmem [#allocation3], 1274
    %v9415 = vld [vmem:[%s9414] ss:$2 sm:$0xff]
    %s9416 = scalar_lea.vmem [#allocation3], 1290
    %v9417 = vld [vmem:[%s9416] ss:$2 sm:$0xff]
    %s9418 = scalar_lea.vmem [#allocation3], 1306
    %v9419 = vld [vmem:[%s9418] ss:$2 sm:$0xff]
    %s9420 = scalar_lea.vmem [#allocation3], 1322
    %v9421 = vld [vmem:[%s9420] ss:$2 sm:$0xff]
    %s9422 = scalar_lea.vmem [#allocation3], 1338
    %v9423 = vld [vmem:[%s9422] ss:$2 sm:$0xff]
    %s9424 = scalar_lea.vmem [#allocation3], 1354
    %v9425 = vld [vmem:[%s9424] ss:$2 sm:$0xff]
    %s9426 = scalar_lea.vmem [#allocation3], 1370
    %v9427 = vld [vmem:[%s9426] ss:$2 sm:$0xf]
    %s9428 = scalar_lea.vmem [#allocation3], 27
    %v9429 = vld [vmem:[%s9428] ss:$2 sm:$0xff]
    %s9430 = scalar_lea.vmem [#allocation3], 43
    %v9431 = vld [vmem:[%s9430] ss:$2 sm:$0xff]
    %s9432 = scalar_lea.vmem [#allocation3], 59
    %v9433 = vld [vmem:[%s9432] ss:$2 sm:$0xff]
    %s9434 = scalar_lea.vmem [#allocation3], 75
    %v9435 = vld [vmem:[%s9434] ss:$2 sm:$0xff]
    %s9436 = scalar_lea.vmem [#allocation3], 91
    %v9437 = vld [vmem:[%s9436] ss:$2 sm:$0xff]
    %s9438 = scalar_lea.vmem [#allocation3], 107
    %v9439 = vld [vmem:[%s9438] ss:$2 sm:$0xff]
    %s9440 = scalar_lea.vmem [#allocation3], 123
    %v9441 = vld [vmem:[%s9440] ss:$2 sm:$0xff]
    %s9442 = scalar_lea.vmem [#allocation3], 139
    %v9443 = vld [vmem:[%s9442] ss:$2 sm:$0xff]
    %s9444 = scalar_lea.vmem [#allocation3], 155
    %v9445 = vld [vmem:[%s9444] ss:$2 sm:$0xff]
    %s9446 = scalar_lea.vmem [#allocation3], 171
    %v9447 = vld [vmem:[%s9446] ss:$2 sm:$0xff]
    %s9448 = scalar_lea.vmem [#allocation3], 187
    %v9449 = vld [vmem:[%s9448] ss:$2 sm:$0xff]
    %s9450 = scalar_lea.vmem [#allocation3], 203
    %v9451 = vld [vmem:[%s9450] ss:$2 sm:$0xff]
    %s9452 = scalar_lea.vmem [#allocation3], 219
    %v9453 = vld [vmem:[%s9452] ss:$2 sm:$0xff]
    %s9454 = scalar_lea.vmem [#allocation3], 235
    %v9455 = vld [vmem:[%s9454] ss:$2 sm:$0xff]
    %s9456 = scalar_lea.vmem [#allocation3], 251
    %v9457 = vld [vmem:[%s9456] ss:$2 sm:$0xff]
    %s9458 = scalar_lea.vmem [#allocation3], 267
    %v9459 = vld [vmem:[%s9458] ss:$2 sm:$0xff]
    %s9460 = scalar_lea.vmem [#allocation3], 283
    %v9461 = vld [vmem:[%s9460] ss:$2 sm:$0xff]
    %s9462 = scalar_lea.vmem [#allocation3], 299
    %v9463 = vld [vmem:[%s9462] ss:$2 sm:$0xff]
    %s9464 = scalar_lea.vmem [#allocation3], 315
    %v9465 = vld [vmem:[%s9464] ss:$2 sm:$0xff]
    %s9466 = scalar_lea.vmem [#allocation3], 331
    %v9467 = vld [vmem:[%s9466] ss:$2 sm:$0xff]
    %s9468 = scalar_lea.vmem [#allocation3], 347
    %v9469 = vld [vmem:[%s9468] ss:$2 sm:$0xff]
    %s9470 = scalar_lea.vmem [#allocation3], 363
    %v9471 = vld [vmem:[%s9470] ss:$2 sm:$0xff]
    %s9472 = scalar_lea.vmem [#allocation3], 379
    %v9473 = vld [vmem:[%s9472] ss:$2 sm:$0xff]
    %s9474 = scalar_lea.vmem [#allocation3], 395
    %v9475 = vld [vmem:[%s9474] ss:$2 sm:$0xff]
    %s9476 = scalar_lea.vmem [#allocation3], 411
    %v9477 = vld [vmem:[%s9476] ss:$2 sm:$0xff]
    %s9478 = scalar_lea.vmem [#allocation3], 427
    %v9479 = vld [vmem:[%s9478] ss:$2 sm:$0xff]
    %s9480 = scalar_lea.vmem [#allocation3], 443
    %v9481 = vld [vmem:[%s9480] ss:$2 sm:$0xff]
    %s9482 = scalar_lea.vmem [#allocation3], 459
    %v9483 = vld [vmem:[%s9482] ss:$2 sm:$0xff]
    %s9484 = scalar_lea.vmem [#allocation3], 475
    %v9485 = vld [vmem:[%s9484] ss:$2 sm:$0xff]
    %s9486 = scalar_lea.vmem [#allocation3], 491
    %v9487 = vld [vmem:[%s9486] ss:$2 sm:$0xff]
    %s9488 = scalar_lea.vmem [#allocation3], 507
    %v9489 = vld [vmem:[%s9488] ss:$2 sm:$0xff]
    %s9490 = scalar_lea.vmem [#allocation3], 523
    %v9491 = vld [vmem:[%s9490] ss:$2 sm:$0xff]
    %s9492 = scalar_lea.vmem [#allocation3], 539
    %v9493 = vld [vmem:[%s9492] ss:$2 sm:$0xff]
    %s9494 = scalar_lea.vmem [#allocation3], 555
    %v9495 = vld [vmem:[%s9494] ss:$2 sm:$0xff]
    %s9496 = scalar_lea.vmem [#allocation3], 571
    %v9497 = vld [vmem:[%s9496] ss:$2 sm:$0xff]
    %s9498 = scalar_lea.vmem [#allocation3], 587
    %v9499 = vld [vmem:[%s9498] ss:$2 sm:$0xff]
    %s9500 = scalar_lea.vmem [#allocation3], 603
    %v9501 = vld [vmem:[%s9500] ss:$2 sm:$0xff]
    %s9502 = scalar_lea.vmem [#allocation3], 619
    %v9503 = vld [vmem:[%s9502] ss:$2 sm:$0xff]
    %s9504 = scalar_lea.vmem [#allocation3], 635
    %v9505 = vld [vmem:[%s9504] ss:$2 sm:$0xff]
    %s9506 = scalar_lea.vmem [#allocation3], 651
    %v9507 = vld [vmem:[%s9506] ss:$2 sm:$0xff]
    %s9508 = scalar_lea.vmem [#allocation3], 667
    %v9509 = vld [vmem:[%s9508] ss:$2 sm:$0xff]
    %s9510 = scalar_lea.vmem [#allocation3], 683
    %v9511 = vld [vmem:[%s9510] ss:$2 sm:$0xff]
    %s9512 = scalar_lea.vmem [#allocation3], 699
    %v9513 = vld [vmem:[%s9512] ss:$2 sm:$0xff]
    %s9514 = scalar_lea.vmem [#allocation3], 715
    %v9515 = vld [vmem:[%s9514] ss:$2 sm:$0xff]
    %s9516 = scalar_lea.vmem [#allocation3], 731
    %v9517 = vld [vmem:[%s9516] ss:$2 sm:$0xff]
    %s9518 = scalar_lea.vmem [#allocation3], 747
    %v9519 = vld [vmem:[%s9518] ss:$2 sm:$0xff]
    %s9520 = scalar_lea.vmem [#allocation3], 763
    %v9521 = vld [vmem:[%s9520] ss:$2 sm:$0xff]
    %s9522 = scalar_lea.vmem [#allocation3], 779
    %v9523 = vld [vmem:[%s9522] ss:$2 sm:$0xff]
    %s9524 = scalar_lea.vmem [#allocation3], 795
    %v9525 = vld [vmem:[%s9524] ss:$2 sm:$0xff]
    %s9526 = scalar_lea.vmem [#allocation3], 811
    %v9527 = vld [vmem:[%s9526] ss:$2 sm:$0xff]
    %s9528 = scalar_lea.vmem [#allocation3], 827
    %v9529 = vld [vmem:[%s9528] ss:$2 sm:$0xff]
    %s9530 = scalar_lea.vmem [#allocation3], 843
    %v9531 = vld [vmem:[%s9530] ss:$2 sm:$0xff]
    %s9532 = scalar_lea.vmem [#allocation3], 859
    %v9533 = vld [vmem:[%s9532] ss:$2 sm:$0xff]
    %s9534 = scalar_lea.vmem [#allocation3], 875
    %v9535 = vld [vmem:[%s9534] ss:$2 sm:$0xff]
    %s9536 = scalar_lea.vmem [#allocation3], 891
    %v9537 = vld [vmem:[%s9536] ss:$2 sm:$0xff]
    %s9538 = scalar_lea.vmem [#allocation3], 907
    %v9539 = vld [vmem:[%s9538] ss:$2 sm:$0xff]
    %s9540 = scalar_lea.vmem [#allocation3], 923
    %v9541 = vld [vmem:[%s9540] ss:$2 sm:$0xff]
    %s9542 = scalar_lea.vmem [#allocation3], 939
    %v9543 = vld [vmem:[%s9542] ss:$2 sm:$0xff]
    %s9544 = scalar_lea.vmem [#allocation3], 955
    %v9545 = vld [vmem:[%s9544] ss:$2 sm:$0xff]
    %s9546 = scalar_lea.vmem [#allocation3], 971
    %v9547 = vld [vmem:[%s9546] ss:$2 sm:$0xff]
    %s9548 = scalar_lea.vmem [#allocation3], 987
    %v9549 = vld [vmem:[%s9548] ss:$2 sm:$0xff]
    %s9550 = scalar_lea.vmem [#allocation3], 1003
    %v9551 = vld [vmem:[%s9550] ss:$2 sm:$0xff]
    %s9552 = scalar_lea.vmem [#allocation3], 1019
    %v9553 = vld [vmem:[%s9552] ss:$2 sm:$0xff]
    %s9554 = scalar_lea.vmem [#allocation3], 1035
    %v9555 = vld [vmem:[%s9554] ss:$2 sm:$0xff]
    %s9556 = scalar_lea.vmem [#allocation3], 1051
    %v9557 = vld [vmem:[%s9556] ss:$2 sm:$0xff]
    %s9558 = scalar_lea.vmem [#allocation3], 1067
    %v9559 = vld [vmem:[%s9558] ss:$2 sm:$0xff]
    %s9560 = scalar_lea.vmem [#allocation3], 1083
    %v9561 = vld [vmem:[%s9560] ss:$2 sm:$0xff]
    %s9562 = scalar_lea.vmem [#allocation3], 1099
    %v9563 = vld [vmem:[%s9562] ss:$2 sm:$0xff]
    %s9564 = scalar_lea.vmem [#allocation3], 1115
    %v9565 = vld [vmem:[%s9564] ss:$2 sm:$0xff]
    %s9566 = scalar_lea.vmem [#allocation3], 1131
    %v9567 = vld [vmem:[%s9566] ss:$2 sm:$0xff]
    %s9568 = scalar_lea.vmem [#allocation3], 1147
    %v9569 = vld [vmem:[%s9568] ss:$2 sm:$0xff]
    %s9570 = scalar_lea.vmem [#allocation3], 1163
    %v9571 = vld [vmem:[%s9570] ss:$2 sm:$0xff]
    %s9572 = scalar_lea.vmem [#allocation3], 1179
    %v9573 = vld [vmem:[%s9572] ss:$2 sm:$0xff]
    %s9574 = scalar_lea.vmem [#allocation3], 1195
    %v9575 = vld [vmem:[%s9574] ss:$2 sm:$0xff]
    %s9576 = scalar_lea.vmem [#allocation3], 1211
    %v9577 = vld [vmem:[%s9576] ss:$2 sm:$0xff]
    %s9578 = scalar_lea.vmem [#allocation3], 1227
    %v9579 = vld [vmem:[%s9578] ss:$2 sm:$0xff]
    %s9580 = scalar_lea.vmem [#allocation3], 1243
    %v9581 = vld [vmem:[%s9580] ss:$2 sm:$0xff]
    %s9582 = scalar_lea.vmem [#allocation3], 1259
    %v9583 = vld [vmem:[%s9582] ss:$2 sm:$0xff]
    %s9584 = scalar_lea.vmem [#allocation3], 1275
    %v9585 = vld [vmem:[%s9584] ss:$2 sm:$0xff]
    %s9586 = scalar_lea.vmem [#allocation3], 1291
    %v9587 = vld [vmem:[%s9586] ss:$2 sm:$0xff]
    %s9588 = scalar_lea.vmem [#allocation3], 1307
    %v9589 = vld [vmem:[%s9588] ss:$2 sm:$0xff]
    %s9590 = scalar_lea.vmem [#allocation3], 1323
    %v9591 = vld [vmem:[%s9590] ss:$2 sm:$0xff]
    %s9592 = scalar_lea.vmem [#allocation3], 1339
    %v9593 = vld [vmem:[%s9592] ss:$2 sm:$0xff]
    %s9594 = scalar_lea.vmem [#allocation3], 1355
    %v9595 = vld [vmem:[%s9594] ss:$2 sm:$0xff]
    %s9596 = scalar_lea.vmem [#allocation3], 1371
    %v9597 = vld [vmem:[%s9596] ss:$2 sm:$0xf]
    %v9598 = vmax.f32 %v9259, %v9429
    %v9599 = vmax.f32 %v9261, %v9431
    %v9600 = vmax.f32 %v9263, %v9433
    %v9601 = vmax.f32 %v9265, %v9435
    %v9602 = vmax.f32 %v9267, %v9437
    %v9603 = vmax.f32 %v9269, %v9439
    %v9604 = vmax.f32 %v9271, %v9441
    %v9605 = vmax.f32 %v9273, %v9443
    %v9606 = vmax.f32 %v9275, %v9445
    %v9607 = vmax.f32 %v9277, %v9447
    %v9608 = vmax.f32 %v9279, %v9449
    %v9609 = vmax.f32 %v9281, %v9451
    %v9610 = vmax.f32 %v9283, %v9453
    %v9611 = vmax.f32 %v9285, %v9455
    %v9612 = vmax.f32 %v9287, %v9457
    %v9613 = vmax.f32 %v9289, %v9459
    %v9614 = vmax.f32 %v9291, %v9461
    %v9615 = vmax.f32 %v9293, %v9463
    %v9616 = vmax.f32 %v9295, %v9465
    %v9617 = vmax.f32 %v9297, %v9467
    %v9618 = vmax.f32 %v9299, %v9469
    %v9619 = vmax.f32 %v9301, %v9471
    %v9620 = vmax.f32 %v9303, %v9473
    %v9621 = vmax.f32 %v9305, %v9475
    %v9622 = vmax.f32 %v9307, %v9477
    %v9623 = vmax.f32 %v9309, %v9479
    %v9624 = vmax.f32 %v9311, %v9481
    %v9625 = vmax.f32 %v9313, %v9483
    %v9626 = vmax.f32 %v9315, %v9485
    %v9627 = vmax.f32 %v9317, %v9487
    %v9628 = vmax.f32 %v9319, %v9489
    %v9629 = vmax.f32 %v9321, %v9491
    %v9630 = vmax.f32 %v9323, %v9493
    %v9631 = vmax.f32 %v9325, %v9495
    %v9632 = vmax.f32 %v9327, %v9497
    %v9633 = vmax.f32 %v9329, %v9499
    %v9634 = vmax.f32 %v9331, %v9501
    %v9635 = vmax.f32 %v9333, %v9503
    %v9636 = vmax.f32 %v9335, %v9505
    %v9637 = vmax.f32 %v9337, %v9507
    %v9638 = vmax.f32 %v9339, %v9509
    %v9639 = vmax.f32 %v9341, %v9511
    %v9640 = vmax.f32 %v9343, %v9513
    %v9641 = vmax.f32 %v9345, %v9515
    %v9642 = vmax.f32 %v9347, %v9517
    %v9643 = vmax.f32 %v9349, %v9519
    %v9644 = vmax.f32 %v9351, %v9521
    %v9645 = vmax.f32 %v9353, %v9523
    %v9646 = vmax.f32 %v9355, %v9525
    %v9647 = vmax.f32 %v9357, %v9527
    %v9648 = vmax.f32 %v9359, %v9529
    %v9649 = vmax.f32 %v9361, %v9531
    %v9650 = vmax.f32 %v9363, %v9533
    %v9651 = vmax.f32 %v9365, %v9535
    %v9652 = vmax.f32 %v9367, %v9537
    %v9653 = vmax.f32 %v9369, %v9539
    %v9654 = vmax.f32 %v9371, %v9541
    %v9655 = vmax.f32 %v9373, %v9543
    %v9656 = vmax.f32 %v9375, %v9545
    %v9657 = vmax.f32 %v9377, %v9547
    %v9658 = vmax.f32 %v9379, %v9549
    %v9659 = vmax.f32 %v9381, %v9551
    %v9660 = vmax.f32 %v9383, %v9553
    %v9661 = vmax.f32 %v9385, %v9555
    %v9662 = vmax.f32 %v9387, %v9557
    %v9663 = vmax.f32 %v9389, %v9559
    %v9664 = vmax.f32 %v9391, %v9561
    %v9665 = vmax.f32 %v9393, %v9563
    %v9666 = vmax.f32 %v9395, %v9565
    %v9667 = vmax.f32 %v9397, %v9567
    %v9668 = vmax.f32 %v9399, %v9569
    %v9669 = vmax.f32 %v9401, %v9571
    %v9670 = vmax.f32 %v9403, %v9573
    %v9671 = vmax.f32 %v9405, %v9575
    %v9672 = vmax.f32 %v9407, %v9577
    %v9673 = vmax.f32 %v9409, %v9579
    %v9674 = vmax.f32 %v9411, %v9581
    %v9675 = vmax.f32 %v9413, %v9583
    %v9676 = vmax.f32 %v9415, %v9585
    %v9677 = vmax.f32 %v9417, %v9587
    %v9678 = vmax.f32 %v9419, %v9589
    %v9679 = vmax.f32 %v9421, %v9591
    %v9680 = vmax.f32 %v9423, %v9593
    %v9681 = vmax.f32 %v9425, %v9595
    %v9682 = vmax.f32 %v9427, %v9597
    %v9683 = vmax.f32 %v9173, %v9598
    %v9684 = vmax.f32 %v9174, %v9599
    %v9685 = vmax.f32 %v9175, %v9600
    %v9686 = vmax.f32 %v9176, %v9601
    %v9687 = vmax.f32 %v9177, %v9602
    %v9688 = vmax.f32 %v9178, %v9603
    %v9689 = vmax.f32 %v9179, %v9604
    %v9690 = vmax.f32 %v9180, %v9605
    %v9691 = vmax.f32 %v9181, %v9606
    %v9692 = vmax.f32 %v9182, %v9607
    %v9693 = vmax.f32 %v9183, %v9608
    %v9694 = vmax.f32 %v9184, %v9609
    %v9695 = vmax.f32 %v9185, %v9610
    %v9696 = vmax.f32 %v9186, %v9611
    %v9697 = vmax.f32 %v9187, %v9612
    %v9698 = vmax.f32 %v9188, %v9613
    %v9699 = vmax.f32 %v9189, %v9614
    %v9700 = vmax.f32 %v9190, %v9615
    %v9701 = vmax.f32 %v9191, %v9616
    %v9702 = vmax.f32 %v9192, %v9617
    %v9703 = vmax.f32 %v9193, %v9618
    %v9704 = vmax.f32 %v9194, %v9619
    %v9705 = vmax.f32 %v9195, %v9620
    %v9706 = vmax.f32 %v9196, %v9621
    %v9707 = vmax.f32 %v9197, %v9622
    %v9708 = vmax.f32 %v9198, %v9623
    %v9709 = vmax.f32 %v9199, %v9624
    %v9710 = vmax.f32 %v9200, %v9625
    %v9711 = vmax.f32 %v9201, %v9626
    %v9712 = vmax.f32 %v9202, %v9627
    %v9713 = vmax.f32 %v9203, %v9628
    %v9714 = vmax.f32 %v9204, %v9629
    %v9715 = vmax.f32 %v9205, %v9630
    %v9716 = vmax.f32 %v9206, %v9631
    %v9717 = vmax.f32 %v9207, %v9632
    %v9718 = vmax.f32 %v9208, %v9633
    %v9719 = vmax.f32 %v9209, %v9634
    %v9720 = vmax.f32 %v9210, %v9635
    %v9721 = vmax.f32 %v9211, %v9636
    %v9722 = vmax.f32 %v9212, %v9637
    %v9723 = vmax.f32 %v9213, %v9638
    %v9724 = vmax.f32 %v9214, %v9639
    %v9725 = vmax.f32 %v9215, %v9640
    %v9726 = vmax.f32 %v9216, %v9641
    %v9727 = vmax.f32 %v9217, %v9642
    %v9728 = vmax.f32 %v9218, %v9643
    %v9729 = vmax.f32 %v9219, %v9644
    %v9730 = vmax.f32 %v9220, %v9645
    %v9731 = vmax.f32 %v9221, %v9646
    %v9732 = vmax.f32 %v9222, %v9647
    %v9733 = vmax.f32 %v9223, %v9648
    %v9734 = vmax.f32 %v9224, %v9649
    %v9735 = vmax.f32 %v9225, %v9650
    %v9736 = vmax.f32 %v9226, %v9651
    %v9737 = vmax.f32 %v9227, %v9652
    %v9738 = vmax.f32 %v9228, %v9653
    %v9739 = vmax.f32 %v9229, %v9654
    %v9740 = vmax.f32 %v9230, %v9655
    %v9741 = vmax.f32 %v9231, %v9656
    %v9742 = vmax.f32 %v9232, %v9657
    %v9743 = vmax.f32 %v9233, %v9658
    %v9744 = vmax.f32 %v9234, %v9659
    %v9745 = vmax.f32 %v9235, %v9660
    %v9746 = vmax.f32 %v9236, %v9661
    %v9747 = vmax.f32 %v9237, %v9662
    %v9748 = vmax.f32 %v9238, %v9663
    %v9749 = vmax.f32 %v9239, %v9664
    %v9750 = vmax.f32 %v9240, %v9665
    %v9751 = vmax.f32 %v9241, %v9666
    %v9752 = vmax.f32 %v9242, %v9667
    %v9753 = vmax.f32 %v9243, %v9668
    %v9754 = vmax.f32 %v9244, %v9669
    %v9755 = vmax.f32 %v9245, %v9670
    %v9756 = vmax.f32 %v9246, %v9671
    %v9757 = vmax.f32 %v9247, %v9672
    %v9758 = vmax.f32 %v9248, %v9673
    %v9759 = vmax.f32 %v9249, %v9674
    %v9760 = vmax.f32 %v9250, %v9675
    %v9761 = vmax.f32 %v9251, %v9676
    %v9762 = vmax.f32 %v9252, %v9677
    %v9763 = vmax.f32 %v9253, %v9678
    %v9764 = vmax.f32 %v9254, %v9679
    %v9765 = vmax.f32 %v9255, %v9680
    %v9766 = vmax.f32 %v9256, %v9681
    %v9767 = vmax.f32 %v9257, %v9682
    %9768 = vst.msk [vmem:[#allocation4] sm:$0xff] %vm5555, %v9683
    %9769 = vst.msk [vmem:[#allocation4 + $0x8] sm:$0xff] %vm5555, %v9684
    %9770 = vst.msk [vmem:[#allocation4 + $0x10] sm:$0xff] %vm5555, %v9685
    %9771 = vst.msk [vmem:[#allocation4 + $0x18] sm:$0xff] %vm5555, %v9686
    %9772 = vst.msk [vmem:[#allocation4 + $0x20] sm:$0xff] %vm5555, %v9687
    %9773 = vst.msk [vmem:[#allocation4 + $0x28] sm:$0xff] %vm5555, %v9688
    %9774 = vst.msk [vmem:[#allocation4 + $0x30] sm:$0xff] %vm5555, %v9689
    %9775 = vst.msk [vmem:[#allocation4 + $0x38] sm:$0xff] %vm5555, %v9690
    %9776 = vst.msk [vmem:[#allocation4 + $0x40] sm:$0xff] %vm5555, %v9691
    %9777 = vst.msk [vmem:[#allocation4 + $0x48] sm:$0xff] %vm5555, %v9692
    %9778 = vst.msk [vmem:[#allocation4 + $0x50] sm:$0xff] %vm5555, %v9693
    %9779 = vst.msk [vmem:[#allocation4 + $0x58] sm:$0xff] %vm5555, %v9694
    %9780 = vst.msk [vmem:[#allocation4 + $0x60] sm:$0xff] %vm5555, %v9695
    %9781 = vst.msk [vmem:[#allocation4 + $0x68] sm:$0xff] %vm5555, %v9696
    %9782 = vst.msk [vmem:[#allocation4 + $0x70] sm:$0xff] %vm5555, %v9697
    %9783 = vst.msk [vmem:[#allocation4 + $0x78] sm:$0xff] %vm5555, %v9698
    %9784 = vst.msk [vmem:[#allocation4 + $0x80] sm:$0xff] %vm5555, %v9699
    %9785 = vst.msk [vmem:[#allocation4 + $0x88] sm:$0xff] %vm5555, %v9700
    %9786 = vst.msk [vmem:[#allocation4 + $0x90] sm:$0xff] %vm5555, %v9701
    %9787 = vst.msk [vmem:[#allocation4 + $0x98] sm:$0xff] %vm5555, %v9702
    %9788 = vst.msk [vmem:[#allocation4 + $0xa0] sm:$0xff] %vm5555, %v9703
    %9789 = vst.msk [vmem:[#allocation4 + $0xa8] sm:$0xff] %vm5555, %v9704
    %9790 = vst.msk [vmem:[#allocation4 + $0xb0] sm:$0xff] %vm5555, %v9705
    %9791 = vst.msk [vmem:[#allocation4 + $0xb8] sm:$0xff] %vm5555, %v9706
    %9792 = vst.msk [vmem:[#allocation4 + $0xc0] sm:$0xff] %vm5555, %v9707
    %9793 = vst.msk [vmem:[#allocation4 + $0xc8] sm:$0xff] %vm5555, %v9708
    %9794 = vst.msk [vmem:[#allocation4 + $0xd0] sm:$0xff] %vm5555, %v9709
    %9795 = vst.msk [vmem:[#allocation4 + $0xd8] sm:$0xff] %vm5555, %v9710
    %9796 = vst.msk [vmem:[#allocation4 + $0xe0] sm:$0xff] %vm5555, %v9711
    %9797 = vst.msk [vmem:[#allocation4 + $0xe8] sm:$0xff] %vm5555, %v9712
    %9798 = vst.msk [vmem:[#allocation4 + $0xf0] sm:$0xff] %vm5555, %v9713
    %9799 = vst.msk [vmem:[#allocation4 + $0xf8] sm:$0xff] %vm5555, %v9714
    %9800 = vst.msk [vmem:[#allocation4 + $0x100] sm:$0xff] %vm5555, %v9715
    %9801 = vst.msk [vmem:[#allocation4 + $0x108] sm:$0xff] %vm5555, %v9716
    %9802 = vst.msk [vmem:[#allocation4 + $0x110] sm:$0xff] %vm5555, %v9717
    %9803 = vst.msk [vmem:[#allocation4 + $0x118] sm:$0xff] %vm5555, %v9718
    %9804 = vst.msk [vmem:[#allocation4 + $0x120] sm:$0xff] %vm5555, %v9719
    %9805 = vst.msk [vmem:[#allocation4 + $0x128] sm:$0xff] %vm5555, %v9720
    %9806 = vst.msk [vmem:[#allocation4 + $0x130] sm:$0xff] %vm5555, %v9721
    %9807 = vst.msk [vmem:[#allocation4 + $0x138] sm:$0xff] %vm5555, %v9722
    %9808 = vst.msk [vmem:[#allocation4 + $0x140] sm:$0xff] %vm5555, %v9723
    %9809 = vst.msk [vmem:[#allocation4 + $0x148] sm:$0xff] %vm5555, %v9724
    %9810 = vst.msk [vmem:[#allocation4 + $0x150] sm:$0xff] %vm5555, %v9725
    %9811 = vst.msk [vmem:[#allocation4 + $0x158] sm:$0xff] %vm5555, %v9726
    %9812 = vst.msk [vmem:[#allocation4 + $0x160] sm:$0xff] %vm5555, %v9727
    %9813 = vst.msk [vmem:[#allocation4 + $0x168] sm:$0xff] %vm5555, %v9728
    %9814 = vst.msk [vmem:[#allocation4 + $0x170] sm:$0xff] %vm5555, %v9729
    %9815 = vst.msk [vmem:[#allocation4 + $0x178] sm:$0xff] %vm5555, %v9730
    %9816 = vst.msk [vmem:[#allocation4 + $0x180] sm:$0xff] %vm5555, %v9731
    %9817 = vst.msk [vmem:[#allocation4 + $0x188] sm:$0xff] %vm5555, %v9732
    %9818 = vst.msk [vmem:[#allocation4 + $0x190] sm:$0xff] %vm5555, %v9733
    %9819 = vst.msk [vmem:[#allocation4 + $0x198] sm:$0xff] %vm5555, %v9734
    %9820 = vst.msk [vmem:[#allocation4 + $0x1a0] sm:$0xff] %vm5555, %v9735
    %9821 = vst.msk [vmem:[#allocation4 + $0x1a8] sm:$0xff] %vm5555, %v9736
    %9822 = vst.msk [vmem:[#allocation4 + $0x1b0] sm:$0xff] %vm5555, %v9737
    %9823 = vst.msk [vmem:[#allocation4 + $0x1b8] sm:$0xff] %vm5555, %v9738
    %9824 = vst.msk [vmem:[#allocation4 + $0x1c0] sm:$0xff] %vm5555, %v9739
    %9825 = vst.msk [vmem:[#allocation4 + $0x1c8] sm:$0xff] %vm5555, %v9740
    %9826 = vst.msk [vmem:[#allocation4 + $0x1d0] sm:$0xff] %vm5555, %v9741
    %9827 = vst.msk [vmem:[#allocation4 + $0x1d8] sm:$0xff] %vm5555, %v9742
    %9828 = vst.msk [vmem:[#allocation4 + $0x1e0] sm:$0xff] %vm5555, %v9743
    %9829 = vst.msk [vmem:[#allocation4 + $0x1e8] sm:$0xff] %vm5555, %v9744
    %9830 = vst.msk [vmem:[#allocation4 + $0x1f0] sm:$0xff] %vm5555, %v9745
    %9831 = vst.msk [vmem:[#allocation4 + $0x1f8] sm:$0xff] %vm5555, %v9746
    %9832 = vst.msk [vmem:[#allocation4 + $0x200] sm:$0xff] %vm5555, %v9747
    %9833 = vst.msk [vmem:[#allocation4 + $0x208] sm:$0xff] %vm5555, %v9748
    %9834 = vst.msk [vmem:[#allocation4 + $0x210] sm:$0xff] %vm5555, %v9749
    %9835 = vst.msk [vmem:[#allocation4 + $0x218] sm:$0xff] %vm5555, %v9750
    %9836 = vst.msk [vmem:[#allocation4 + $0x220] sm:$0xff] %vm5555, %v9751
    %9837 = vst.msk [vmem:[#allocation4 + $0x228] sm:$0xff] %vm5555, %v9752
    %9838 = vst.msk [vmem:[#allocation4 + $0x230] sm:$0xff] %vm5555, %v9753
    %9839 = vst.msk [vmem:[#allocation4 + $0x238] sm:$0xff] %vm5555, %v9754
    %9840 = vst.msk [vmem:[#allocation4 + $0x240] sm:$0xff] %vm5555, %v9755
    %9841 = vst.msk [vmem:[#allocation4 + $0x248] sm:$0xff] %vm5555, %v9756
    %9842 = vst.msk [vmem:[#allocation4 + $0x250] sm:$0xff] %vm5555, %v9757
    %9843 = vst.msk [vmem:[#allocation4 + $0x258] sm:$0xff] %vm5555, %v9758
    %9844 = vst.msk [vmem:[#allocation4 + $0x260] sm:$0xff] %vm5555, %v9759
    %9845 = vst.msk [vmem:[#allocation4 + $0x268] sm:$0xff] %vm5555, %v9760
    %9846 = vst.msk [vmem:[#allocation4 + $0x270] sm:$0xff] %vm5555, %v9761
    %9847 = vst.msk [vmem:[#allocation4 + $0x278] sm:$0xff] %vm5555, %v9762
    %9848 = vst.msk [vmem:[#allocation4 + $0x280] sm:$0xff] %vm5555, %v9763
    %9849 = vst.msk [vmem:[#allocation4 + $0x288] sm:$0xff] %vm5555, %v9764
    %9850 = vst.msk [vmem:[#allocation4 + $0x290] sm:$0xff] %vm5555, %v9765
    %9851 = vst.msk [vmem:[#allocation4 + $0x298] sm:$0xff] %vm5555, %v9766
    %vm9852 = vcmask 519168
    %9853 = vst.msk [vmem:[#allocation4 + $0x2a0] sm:$0xf] %vm9852, %v9767
    %v9854 = vld [vmem:[#allocation4] sm:$0xff]
    %v9855 = vld [vmem:[#allocation4 + $0x8] sm:$0xf]
    %9856 = vst.msk [vmem:[%s5] sm:$0xff] %vm5555, %v9854
    %9857 = vst.msk [vmem:[%s5 + $0x8] sm:$0xf] %vm9852, %v9855
    %v9858 = vld [vmem:[#allocation4 + $0x1a] sm:$0xff]
    %v9859 = vld [vmem:[#allocation4 + $0x22] sm:$0xf]
    %9860 = vst.msk [vmem:[%s5 + $0xc] sm:$0xff] %vm5555, %v9858
    %9861 = vst.msk [vmem:[%s5 + $0x14] sm:$0xf] %vm9852, %v9859
    %v9862 = vld [vmem:[#allocation4 + $0x34] sm:$0xff]
    %v9863 = vld [vmem:[#allocation4 + $0x3c] sm:$0xf]
    %9864 = vst.msk [vmem:[%s5 + $0x18] sm:$0xff] %vm5555, %v9862
    %9865 = vst.msk [vmem:[%s5 + $0x20] sm:$0xf] %vm9852, %v9863
    %v9866 = vld [vmem:[#allocation4 + $0x4e] sm:$0xff]
    %v9867 = vld [vmem:[#allocation4 + $0x56] sm:$0xf]
    %9868 = vst.msk [vmem:[%s5 + $0x24] sm:$0xff] %vm5555, %v9866
    %9869 = vst.msk [vmem:[%s5 + $0x2c] sm:$0xf] %vm9852, %v9867
    %v9870 = vld [vmem:[#allocation4 + $0x68] sm:$0xff]
    %v9871 = vld [vmem:[#allocation4 + $0x70] sm:$0xf]
    %9872 = vst.msk [vmem:[%s5 + $0x30] sm:$0xff] %vm5555, %v9870
    %9873 = vst.msk [vmem:[%s5 + $0x38] sm:$0xf] %vm9852, %v9871
    %v9874 = vld [vmem:[#allocation4 + $0x82] sm:$0xff]
    %v9875 = vld [vmem:[#allocation4 + $0x8a] sm:$0xf]
    %9876 = vst.msk [vmem:[%s5 + $0x3c] sm:$0xff] %vm5555, %v9874
    %9877 = vst.msk [vmem:[%s5 + $0x44] sm:$0xf] %vm9852, %v9875
    %v9878 = vld [vmem:[#allocation4 + $0x9c] sm:$0xff]
    %v9879 = vld [vmem:[#allocation4 + $0xa4] sm:$0xf]
    %9880 = vst.msk [vmem:[%s5 + $0x48] sm:$0xff] %vm5555, %v9878
    %9881 = vst.msk [vmem:[%s5 + $0x50] sm:$0xf] %vm9852, %v9879
    %v9882 = vld [vmem:[#allocation4 + $0xb6] sm:$0xff]
    %v9883 = vld [vmem:[#allocation4 + $0xbe] sm:$0xf]
    %9884 = vst.msk [vmem:[%s5 + $0x54] sm:$0xff] %vm5555, %v9882
    %9885 = vst.msk [vmem:[%s5 + $0x5c] sm:$0xf] %vm9852, %v9883
    %v9886 = vld [vmem:[#allocation4 + $0xd0] sm:$0xff]
    %v9887 = vld [vmem:[#allocation4 + $0xd8] sm:$0xf]
    %9888 = vst.msk [vmem:[%s5 + $0x60] sm:$0xff] %vm5555, %v9886
    %9889 = vst.msk [vmem:[%s5 + $0x68] sm:$0xf] %vm9852, %v9887
    %v9890 = vld [vmem:[#allocation4 + $0xea] sm:$0xff]
    %v9891 = vld [vmem:[#allocation4 + $0xf2] sm:$0xf]
    %9892 = vst.msk [vmem:[%s5 + $0x6c] sm:$0xff] %vm5555, %v9890
    %9893 = vst.msk [vmem:[%s5 + $0x74] sm:$0xf] %vm9852, %v9891
    %v9894 = vld [vmem:[#allocation4 + $0x104] sm:$0xff]
    %v9895 = vld [vmem:[#allocation4 + $0x10c] sm:$0xf]
    %9896 = vst.msk [vmem:[%s5 + $0x78] sm:$0xff] %vm5555, %v9894
    %9897 = vst.msk [vmem:[%s5 + $0x80] sm:$0xf] %vm9852, %v9895
    %v9898 = vld [vmem:[#allocation4 + $0x11e] sm:$0xff]
    %v9899 = vld [vmem:[#allocation4 + $0x126] sm:$0xf]
    %9900 = vst.msk [vmem:[%s5 + $0x84] sm:$0xff] %vm5555, %v9898
    %9901 = vst.msk [vmem:[%s5 + $0x8c] sm:$0xf] %vm9852, %v9899
    %v9902 = vld [vmem:[#allocation4 + $0x152] sm:$0xff]
    %v9903 = vld [vmem:[#allocation4 + $0x15a] sm:$0xf]
    %9904 = vst.msk [vmem:[%s5 + $0x90] sm:$0xff] %vm5555, %v9902
    %9905 = vst.msk [vmem:[%s5 + $0x98] sm:$0xf] %vm9852, %v9903
    %v9906 = vld [vmem:[#allocation4 + $0x16c] sm:$0xff]
    %v9907 = vld [vmem:[#allocation4 + $0x174] sm:$0xf]
    %9908 = vst.msk [vmem:[%s5 + $0x9c] sm:$0xff] %vm5555, %v9906
    %9909 = vst.msk [vmem:[%s5 + $0xa4] sm:$0xf] %vm9852, %v9907
    %v9910 = vld [vmem:[#allocation4 + $0x186] sm:$0xff]
    %v9911 = vld [vmem:[#allocation4 + $0x18e] sm:$0xf]
    %9912 = vst.msk [vmem:[%s5 + $0xa8] sm:$0xff] %vm5555, %v9910
    %9913 = vst.msk [vmem:[%s5 + $0xb0] sm:$0xf] %vm9852, %v9911
    %v9914 = vld [vmem:[#allocation4 + $0x1a0] sm:$0xff]
    %v9915 = vld [vmem:[#allocation4 + $0x1a8] sm:$0xf]
    %9916 = vst.msk [vmem:[%s5 + $0xb4] sm:$0xff] %vm5555, %v9914
    %9917 = vst.msk [vmem:[%s5 + $0xbc] sm:$0xf] %vm9852, %v9915
    %v9918 = vld [vmem:[#allocation4 + $0x1ba] sm:$0xff]
    %v9919 = vld [vmem:[#allocation4 + $0x1c2] sm:$0xf]
    %9920 = vst.msk [vmem:[%s5 + $0xc0] sm:$0xff] %vm5555, %v9918
    %9921 = vst.msk [vmem:[%s5 + $0xc8] sm:$0xf] %vm9852, %v9919
    %v9922 = vld [vmem:[#allocation4 + $0x1d4] sm:$0xff]
    %v9923 = vld [vmem:[#allocation4 + $0x1dc] sm:$0xf]
    %9924 = vst.msk [vmem:[%s5 + $0xcc] sm:$0xff] %vm5555, %v9922
    %9925 = vst.msk [vmem:[%s5 + $0xd4] sm:$0xf] %vm9852, %v9923
    %v9926 = vld [vmem:[#allocation4 + $0x1ee] sm:$0xff]
    %v9927 = vld [vmem:[#allocation4 + $0x1f6] sm:$0xf]
    %9928 = vst.msk [vmem:[%s5 + $0xd8] sm:$0xff] %vm5555, %v9926
    %9929 = vst.msk [vmem:[%s5 + $0xe0] sm:$0xf] %vm9852, %v9927
    %v9930 = vld [vmem:[#allocation4 + $0x208] sm:$0xff]
    %v9931 = vld [vmem:[#allocation4 + $0x210] sm:$0xf]
    %9932 = vst.msk [vmem:[%s5 + $0xe4] sm:$0xff] %vm5555, %v9930
    %9933 = vst.msk [vmem:[%s5 + $0xec] sm:$0xf] %vm9852, %v9931
    %v9934 = vld [vmem:[#allocation4 + $0x222] sm:$0xff]
    %v9935 = vld [vmem:[#allocation4 + $0x22a] sm:$0xf]
    %9936 = vst.msk [vmem:[%s5 + $0xf0] sm:$0xff] %vm5555, %v9934
    %9937 = vst.msk [vmem:[%s5 + $0xf8] sm:$0xf] %vm9852, %v9935
    %v9938 = vld [vmem:[#allocation4 + $0x23c] sm:$0xff]
    %v9939 = vld [vmem:[#allocation4 + $0x244] sm:$0xf]
    %9940 = vst.msk [vmem:[%s5 + $0xfc] sm:$0xff] %vm5555, %v9938
    %9941 = vst.msk [vmem:[%s5 + $0x104] sm:$0xf] %vm9852, %v9939
    %v9942 = vld [vmem:[#allocation4 + $0x256] sm:$0xff]
    %v9943 = vld [vmem:[#allocation4 + $0x25e] sm:$0xf]
    %9944 = vst.msk [vmem:[%s5 + $0x108] sm:$0xff] %vm5555, %v9942
    %9945 = vst.msk [vmem:[%s5 + $0x110] sm:$0xf] %vm9852, %v9943
    %v9946 = vld [vmem:[#allocation4 + $0x270] sm:$0xff]
    %v9947 = vld [vmem:[#allocation4 + $0x278] sm:$0xf]
    %9948 = vst.msk [vmem:[%s5 + $0x114] sm:$0xff] %vm5555, %v9946
    %9949 = vst.msk [vmem:[%s5 + $0x11c] sm:$0xf] %vm9852, %v9947
    // Predicated region
    $region34: #{cnn_dropout_forward.2} parent=1 // pred_check
      _
    $region35: #{cnn_dropout_forward.2} parent=1 // pred_check_branch
      %9951 = sbr.rel (0) target = $region37
    $region36: #{cnn_dropout_forward.2} parent=1 // pred_region
      _
    $region37: #{cnn_dropout_forward.2} parent=1 // pred_fallthru
      _
    // Predicated region
    $region38: #{cnn_dropout_forward.2} parent=1 // pred_check
      _
    $region39: #{cnn_dropout_forward.2} parent=1 // pred_check_branch
      %9953 = sbr.rel (0) target = $region41
    $region40: #{cnn_dropout_forward.2} parent=1 // pred_region
      _
    $region41: #{cnn_dropout_forward.2} parent=1 // pred_fallthru
      _
    %9954 = vsyncpa [#allocation6], 1
    %9955 = vsyncpa [#allocation8], 1

</llo_original>
